<compile_context>
chip_gen: v7x
topology: tpu7x:2x2x1
jax: 0.10.0
libtpu: 0.0.40
codegen_flags: <defaults>
</compile_context>

<pallas_src>
import math

import jax
import jax.numpy as jnp
from jax.experimental import pallas as pl
from jax.experimental.pallas import tpu as pltpu

# ----------------------------- configuration --------------------------------
PATCH = 16
IMG = 32                       # small test image -> 2x2 = 4 patches per image
IN_CH = 3
OUT_CH = 2                     # backward map has (x, y) channels
ENC_DIM = 64
ENC_DEPTH = 2
ENC_HEADS = 4
DEC_DIM = 128                  # scaled down from dec512
DEC_DEPTH = 2                  # scaled down from d8
DEC_HEADS = 4
MLP_RATIO = 4
LN_EPS = 1e-6
BATCH = 2

NUM_PATCHES = (IMG // PATCH) ** 2        # 4
SEQ = NUM_PATCHES + 1                    # 5  (cls + patches)
TOKENS = BATCH * SEQ                     # 10 rows in the fused token matrix
PATCH_DIM = IN_CH * PATCH * PATCH        # 768
PRED_DIM = PATCH * PATCH * OUT_CH        # 512 (lane-dense output)

_INV_SQRT2 = 1.0 / math.sqrt(2.0)
# LayerNorm affines are folded into the following linear, so blocks carry only:
_BLOCK_KEYS = ('qkv_w', 'qkv_b', 'proj_w', 'proj_b',
               'fc1_w', 'fc1_b', 'fc2_w', 'fc2_b')


# ----------------------------- in-kernel helpers ----------------------------
def _norm(x):
    # affine-free f32 LayerNorm (biased variance, matches torch.nn.LayerNorm);
    # gamma/beta are pre-folded into the next linear layer's weights/bias.
    mean = jnp.mean(x, axis=-1, keepdims=True)
    c = x - mean
    var = jnp.mean(c * c, axis=-1, keepdims=True)
    return c * jax.lax.rsqrt(var + LN_EPS)


def _linear(x, w_ref, b_ref):
    # bf16 operands on the MXU, f32 accumulation, f32 bias add on the VPU.
    y = jnp.dot(x.astype(w_ref.dtype), w_ref[...],
                preferred_element_type=jnp.float32)
    return y + b_ref[...]


def _gelu(x):
    # exact (erf) GELU, matching torch.nn.GELU() default
    return 0.5 * x * (1.0 + jax.lax.erf(x * _INV_SQRT2))


def _attention(x_norm, p, attn_bias, num_heads, dim):
    # x_norm: (TOKENS, dim); attn_bias: (TOKENS, TOKENS) block-diagonal bias so
    # tokens only attend within their own image (all batches fused in one tile).
    dh = dim // num_heads
    scale = dh ** -0.5
    qkv = _linear(x_norm, p['qkv_w'], p['qkv_b'])        # (TOKENS, 3*dim) f32
    heads = []
    for h in range(num_heads):
        c0 = h * dh
        q = qkv[:, c0:c0 + dh]
        k = qkv[:, dim + c0:dim + c0 + dh]
        v = qkv[:, 2 * dim + c0:2 * dim + c0 + dh]
        s = jnp.dot(q, k.T, preferred_element_type=jnp.float32) * scale
        s = s + attn_bias
        s = s - jnp.max(s, axis=-1, keepdims=True)
        e = jnp.exp(s)
        w = e / jnp.sum(e, axis=-1, keepdims=True)
        heads.append(jnp.dot(w, v, preferred_element_type=jnp.float32))
    return jnp.concatenate(heads, axis=-1)               # (TOKENS, dim)


def _block(x, p, attn_bias, num_heads, dim):
    a = _attention(_norm(x), p, attn_bias, num_heads, dim)
    x = x + _linear(a, p['proj_w'], p['proj_b'])
    m = _gelu(_linear(_norm(x), p['fc1_w'], p['fc1_b']))
    x = x + _linear(m, p['fc2_w'], p['fc2_b'])
    return x


# ----------------------------- fused kernel ---------------------------------
def _mae_fused_kernel(patches_ref, *refs):
    out_ref = refs[-1]
    it = iter(refs[:-1])

    def nxt():
        return next(it)

    def take_block():
        return {k: nxt() for k in _BLOCK_KEYS}

    attn_bias_ref = nxt()
    patch_w = nxt()
    enc_bias = nxt()                 # cls token + pos embed + patch bias, per row
    enc_blocks = [take_block() for _ in range(ENC_DEPTH)]
    dec_embed_w = nxt()              # encoder-norm affine folded in
    dec_bias = nxt()                 # decoder pos embed + decoder-embed bias rows
    dec_blocks = [take_block() for _ in range(DEC_DEPTH)]
    pred_w, pred_b = nxt(), nxt()    # decoder-norm affine + 2*(x/255)-1 folded in

    attn_bias = attn_bias_ref[...]   # (TOKENS, TOKENS) f32

    # patch embed (+ cls/pos folded into enc_bias rows) -> (TOKENS, ENC_DIM)
    tok = _linear(patches_ref[...], patch_w, enc_bias)
    for d in range(ENC_DEPTH):
        tok = _block(tok, enc_blocks[d], attn_bias, ENC_HEADS, ENC_DIM)

    # encoder final norm (affine folded into dec_embed) + decoder embed
    dtok = _linear(_norm(tok), dec_embed_w, dec_bias)    # (TOKENS, DEC_DIM)
    for d in range(DEC_DEPTH):
        dtok = _block(dtok, dec_blocks[d], attn_bias, DEC_HEADS, DEC_DIM)

    # decoder final norm + prediction head; output lane-dense (512 = 4*128)
    out_ref[...] = _linear(_norm(dtok), pred_w, pred_b)


def _whole(a):
    return pl.BlockSpec(a.shape, lambda i: (0,) * a.ndim)


def mae_fused_forward(flat_params, patches_full):
    inputs = (patches_full,) + tuple(flat_params)
    return pl.pallas_call(
        _mae_fused_kernel,
        out_shape=jax.ShapeDtypeStruct((TOKENS, PRED_DIM), jnp.float32),
        grid=(1,),
        in_specs=[_whole(a) for a in inputs],
        out_specs=pl.BlockSpec((TOKENS, PRED_DIM), lambda i: (0, 0)),
        compiler_params=pltpu.CompilerParams(
            dimension_semantics=("arbitrary",)),
    )(*inputs)


# ----------------------------- model glue -----------------------------------
def net_forward(flat_params, x):
    """Net.forward: bm = 2 * (mae(x) / 255) - 1   (scale folded into pred head)."""
    B, C, H, W = x.shape
    p = PATCH
    h, w = H // p, W // p
    L = h * w

    # patch embed == Conv2d(3, E, k=16, s=16): patchify with (C, p, p) order
    patches = x.reshape(B, C, h, p, w, p)
    patches = jnp.transpose(patches, (0, 2, 4, 1, 3, 5)).reshape(B, L, C * p * p)
    # prepend a zero row per image where the cls token sits (its value lives in
    # the additive enc_bias row table inside the kernel)
    patches_full = jnp.concatenate(
        [jnp.zeros((B, 1, C * p * p), jnp.float32), patches], axis=1
    ).reshape(B * (L + 1), C * p * p)

    pred = mae_fused_forward(flat_params, patches_full)       # (B*(L+1), 512)
    pred = pred.reshape(B, L + 1, p * p * OUT_CH)[:, 1:, :]   # drop cls token

    # unpatchify (MAE convention) -> (B, OUT_CH, H, W)
    bm = pred.reshape(B, h, w, p, p, OUT_CH)
    bm = jnp.einsum('nhwpqc->nchpwq', bm).reshape(B, OUT_CH, h * p, w * p)
    return bm


# ----------------------------- params ----------------------------------------
def init_params(key):
    keys = iter(jax.random.split(key, 64))

    def nrm(shape, std=0.02):
        return (std * jax.random.normal(next(keys), shape)).astype(jnp.float32)

    def zeros(shape):
        return jnp.zeros(shape, jnp.float32)

    def ones(shape):
        return jnp.ones(shape, jnp.float32)

    def block_params(dim):
        hdim = dim * MLP_RATIO
        return dict(
            ln1_g=ones((1, dim)), ln1_b=zeros((1, dim)),
            qkv_w=nrm((dim, 3 * dim)), qkv_b=zeros((1, 3 * dim)),
            proj_w=nrm((dim, dim)), proj_b=zeros((1, dim)),
            ln2_g=ones((1, dim)), ln2_b=zeros((1, dim)),
            fc1_w=nrm((dim, hdim)), fc1_b=zeros((1, hdim)),
            fc2_w=nrm((hdim, dim)), fc2_b=zeros((1, dim)),
        )

    return dict(
        patch_w=nrm((PATCH_DIM, ENC_DIM)), patch_b=zeros((1, ENC_DIM)),
        cls_token=nrm((1, ENC_DIM)),
        pos_embed=nrm((SEQ, ENC_DIM)),
        enc_blocks=[block_params(ENC_DIM) for _ in range(ENC_DEPTH)],
        enc_norm_g=ones((1, ENC_DIM)), enc_norm_b=zeros((1, ENC_DIM)),
        dec_embed_w=nrm((ENC_DIM, DEC_DIM)), dec_embed_b=zeros((1, DEC_DIM)),
        dec_pos_embed=nrm((SEQ, DEC_DIM)),
        dec_blocks=[block_params(DEC_DIM) for _ in range(DEC_DEPTH)],
        dec_norm_g=ones((1, DEC_DIM)), dec_norm_b=zeros((1, DEC_DIM)),
        dec_pred_w=nrm((DEC_DIM, PRED_DIM)), dec_pred_b=zeros((1, PRED_DIM)),
    )


def _fold_ln(g, b, w, bias):
    """LN(x)@W + bias == norm(x) @ (g.T * W) + (b @ W + bias)."""
    return g.reshape(-1, 1) * w, b @ w + bias


def prepare_fused(params, batch):
    """Fold constants / LN affines, cast matmul weights to bf16, flatten."""
    wdt = jnp.bfloat16            # MXU-operand dtype (bf16 native on v5e/v6e/v7x)

    # block-diagonal attention bias: tokens attend only within their own image
    tok_img = jnp.repeat(jnp.arange(batch), SEQ)
    attn_bias = jnp.where(tok_img[:, None] == tok_img[None, :],
                          0.0, -1e30).astype(jnp.float32)        # (TOKENS, TOKENS)

    # cls token + positional embedding + patch-embed bias -> one additive table
    cls_row = params['cls_token'] + params['pos_embed'][:1, :]           # (1, E)
    patch_rows = params['pos_embed'][1:, :] + params['patch_b']          # (L, E)
    enc_bias = jnp.tile(jnp.concatenate([cls_row, patch_rows], axis=0),
                        (batch, 1))                                      # (TOKENS, E)

    # encoder final LayerNorm affine folded into the decoder embed
    dec_embed_w, dec_embed_b = _fold_ln(
        params['enc_norm_g'], params['enc_norm_b'],
        params['dec_embed_w'], params['dec_embed_b'])
    dec_bias = jnp.tile(params['dec_pos_embed'] + dec_embed_b,
                        (batch, 1))                                      # (TOKENS, DD)

    # decoder final LayerNorm affine + bm = 2*(bm/255) - 1 folded into pred head
    scale = 2.0 / 255.0
    pw, pb = _fold_ln(params['dec_norm_g'], params['dec_norm_b'],
                      params['dec_pred_w'], params['dec_pred_b'])
    pred_w = (pw * scale).astype(wdt)
    pred_b = pb * scale - 1.0

    def block_flat(blk):
        qkv_w, qkv_b = _fold_ln(blk['ln1_g'], blk['ln1_b'],
                                blk['qkv_w'], blk['qkv_b'])
        fc1_w, fc1_b = _fold_ln(blk['ln2_g'], blk['ln2_b'],
                                blk['fc1_w'], blk['fc1_b'])
        return [qkv_w.astype(wdt), qkv_b,
                blk['proj_w'].astype(wdt), blk['proj_b'],
                fc1_w.astype(wdt), fc1_b,
                blk['fc2_w'].astype(wdt), blk['fc2_b']]

    flat = [attn_bias, params['patch_w'].astype(wdt), enc_bias]
    for blk in params['enc_blocks']:
        flat += block_flat(blk)
    flat += [dec_embed_w.astype(wdt), dec_bias]
    for blk in params['dec_blocks']:
        flat += block_flat(blk)
    flat += [pred_w, pred_b]
    return flat


# ----------------------------- main ------------------------------------------
if __name__ == "__main__":
    key = jax.random.PRNGKey(0)
    k_param, k_x = jax.random.split(key)
    params = init_params(k_param)
    flat_params = prepare_fused(params, BATCH)

    # image-like input in [0, 255), NCHW, small shape (B=2, C=3, H=W=32)
    x = jax.random.uniform(k_x, (BATCH, IN_CH, IMG, IMG),
                           dtype=jnp.float32, minval=0.0, maxval=255.0)

    fwd = jax.jit(lambda inp: net_forward(flat_params, inp))
    bm = fwd(x)
    jax.block_until_ready(bm)

    assert bm.shape == (BATCH, OUT_CH, IMG, IMG)
    assert bm.dtype == jnp.float32
    assert bool(jnp.all(jnp.isfinite(bm)))
    print("KERNEL_OK")
</pallas_src>

<mosaic_0001>
module attributes {stable_mosaic.version = 11 : i64} {
  func.func @_mae_fused_kernel(%arg0: i32, %arg1: memref<10x768xf32, #tpu.memory_space<vmem>>, %arg2: memref<10x10xf32, #tpu.memory_space<vmem>>, %arg3: memref<768x64xbf16, #tpu.memory_space<vmem>>, %arg4: memref<10x64xf32, #tpu.memory_space<vmem>>, %arg5: memref<64x192xbf16, #tpu.memory_space<vmem>>, %arg6: memref<1x192xf32, #tpu.memory_space<vmem>>, %arg7: memref<64x64xbf16, #tpu.memory_space<vmem>>, %arg8: memref<1x64xf32, #tpu.memory_space<vmem>>, %arg9: memref<64x256xbf16, #tpu.memory_space<vmem>>, %arg10: memref<1x256xf32, #tpu.memory_space<vmem>>, %arg11: memref<256x64xbf16, #tpu.memory_space<vmem>>, %arg12: memref<1x64xf32, #tpu.memory_space<vmem>>, %arg13: memref<64x192xbf16, #tpu.memory_space<vmem>>, %arg14: memref<1x192xf32, #tpu.memory_space<vmem>>, %arg15: memref<64x64xbf16, #tpu.memory_space<vmem>>, %arg16: memref<1x64xf32, #tpu.memory_space<vmem>>, %arg17: memref<64x256xbf16, #tpu.memory_space<vmem>>, %arg18: memref<1x256xf32, #tpu.memory_space<vmem>>, %arg19: memref<256x64xbf16, #tpu.memory_space<vmem>>, %arg20: memref<1x64xf32, #tpu.memory_space<vmem>>, %arg21: memref<64x128xbf16, #tpu.memory_space<vmem>>, %arg22: memref<10x128xf32, #tpu.memory_space<vmem>>, %arg23: memref<128x384xbf16, #tpu.memory_space<vmem>>, %arg24: memref<1x384xf32, #tpu.memory_space<vmem>>, %arg25: memref<128x128xbf16, #tpu.memory_space<vmem>>, %arg26: memref<1x128xf32, #tpu.memory_space<vmem>>, %arg27: memref<128x512xbf16, #tpu.memory_space<vmem>>, %arg28: memref<1x512xf32, #tpu.memory_space<vmem>>, %arg29: memref<512x128xbf16, #tpu.memory_space<vmem>>, %arg30: memref<1x128xf32, #tpu.memory_space<vmem>>, %arg31: memref<128x384xbf16, #tpu.memory_space<vmem>>, %arg32: memref<1x384xf32, #tpu.memory_space<vmem>>, %arg33: memref<128x128xbf16, #tpu.memory_space<vmem>>, %arg34: memref<1x128xf32, #tpu.memory_space<vmem>>, %arg35: memref<128x512xbf16, #tpu.memory_space<vmem>>, %arg36: memref<1x512xf32, #tpu.memory_space<vmem>>, %arg37: memref<512x128xbf16, #tpu.memory_space<vmem>>, %arg38: memref<1x128xf32, #tpu.memory_space<vmem>>, %arg39: memref<128x512xbf16, #tpu.memory_space<vmem>>, %arg40: memref<1x512xf32, #tpu.memory_space<vmem>>, %arg41: memref<10x512xf32, #tpu.memory_space<vmem>>) attributes {dimension_semantics = [#tpu.dimension_semantics<arbitrary>], iteration_bounds = array<i64: 1>, scalar_prefetch = 0 : i64, scratch_operands = 0 : i64, tpu.core_type = #tpu.core_type<tc>, window_params = [{pipeline_mode = #tpu.pipeline_mode<synchronous>, transform_indices = @transform_0, window_bounds = array<i64: 10, 768>}, {pipeline_mode = #tpu.pipeline_mode<synchronous>, transform_indices = @transform_1, window_bounds = array<i64: 10, 10>}, {pipeline_mode = #tpu.pipeline_mode<synchronous>, transform_indices = @transform_2, window_bounds = array<i64: 768, 64>}, {pipeline_mode = #tpu.pipeline_mode<synchronous>, transform_indices = @transform_3, window_bounds = array<i64: 10, 64>}, {pipeline_mode = #tpu.pipeline_mode<synchronous>, transform_indices = @transform_4, window_bounds = array<i64: 64, 192>}, {pipeline_mode = #tpu.pipeline_mode<synchronous>, transform_indices = @transform_5, window_bounds = array<i64: 1, 192>}, {pipeline_mode = #tpu.pipeline_mode<synchronous>, transform_indices = @transform_6, window_bounds = array<i64: 64, 64>}, {pipeline_mode = #tpu.pipeline_mode<synchronous>, transform_indices = @transform_7, window_bounds = array<i64: 1, 64>}, {pipeline_mode = #tpu.pipeline_mode<synchronous>, transform_indices = @transform_8, window_bounds = array<i64: 64, 256>}, {pipeline_mode = #tpu.pipeline_mode<synchronous>, transform_indices = @transform_9, window_bounds = array<i64: 1, 256>}, {pipeline_mode = #tpu.pipeline_mode<synchronous>, transform_indices = @transform_10, window_bounds = array<i64: 256, 64>}, {pipeline_mode = #tpu.pipeline_mode<synchronous>, transform_indices = @transform_11, window_bounds = array<i64: 1, 64>}, {pipeline_mode = #tpu.pipeline_mode<synchronous>, transform_indices = @transform_12, window_bounds = array<i64: 64, 192>}, {pipeline_mode = #tpu.pipeline_mode<synchronous>, transform_indices = @transform_13, window_bounds = array<i64: 1, 192>}, {pipeline_mode = #tpu.pipeline_mode<synchronous>, transform_indices = @transform_14, window_bounds = array<i64: 64, 64>}, {pipeline_mode = #tpu.pipeline_mode<synchronous>, transform_indices = @transform_15, window_bounds = array<i64: 1, 64>}, {pipeline_mode = #tpu.pipeline_mode<synchronous>, transform_indices = @transform_16, window_bounds = array<i64: 64, 256>}, {pipeline_mode = #tpu.pipeline_mode<synchronous>, transform_indices = @transform_17, window_bounds = array<i64: 1, 256>}, {pipeline_mode = #tpu.pipeline_mode<synchronous>, transform_indices = @transform_18, window_bounds = array<i64: 256, 64>}, {pipeline_mode = #tpu.pipeline_mode<synchronous>, transform_indices = @transform_19, window_bounds = array<i64: 1, 64>}, {pipeline_mode = #tpu.pipeline_mode<synchronous>, transform_indices = @transform_20, window_bounds = array<i64: 64, 128>}, {pipeline_mode = #tpu.pipeline_mode<synchronous>, transform_indices = @transform_21, window_bounds = array<i64: 10, 128>}, {pipeline_mode = #tpu.pipeline_mode<synchronous>, transform_indices = @transform_22, window_bounds = array<i64: 128, 384>}, {pipeline_mode = #tpu.pipeline_mode<synchronous>, transform_indices = @transform_23, window_bounds = array<i64: 1, 384>}, {pipeline_mode = #tpu.pipeline_mode<synchronous>, transform_indices = @transform_24, window_bounds = array<i64: 128, 128>}, {pipeline_mode = #tpu.pipeline_mode<synchronous>, transform_indices = @transform_25, window_bounds = array<i64: 1, 128>}, {pipeline_mode = #tpu.pipeline_mode<synchronous>, transform_indices = @transform_26, window_bounds = array<i64: 128, 512>}, {pipeline_mode = #tpu.pipeline_mode<synchronous>, transform_indices = @transform_27, window_bounds = array<i64: 1, 512>}, {pipeline_mode = #tpu.pipeline_mode<synchronous>, transform_indices = @transform_28, window_bounds = array<i64: 512, 128>}, {pipeline_mode = #tpu.pipeline_mode<synchronous>, transform_indices = @transform_29, window_bounds = array<i64: 1, 128>}, {pipeline_mode = #tpu.pipeline_mode<synchronous>, transform_indices = @transform_30, window_bounds = array<i64: 128, 384>}, {pipeline_mode = #tpu.pipeline_mode<synchronous>, transform_indices = @transform_31, window_bounds = array<i64: 1, 384>}, {pipeline_mode = #tpu.pipeline_mode<synchronous>, transform_indices = @transform_32, window_bounds = array<i64: 128, 128>}, {pipeline_mode = #tpu.pipeline_mode<synchronous>, transform_indices = @transform_33, window_bounds = array<i64: 1, 128>}, {pipeline_mode = #tpu.pipeline_mode<synchronous>, transform_indices = @transform_34, window_bounds = array<i64: 128, 512>}, {pipeline_mode = #tpu.pipeline_mode<synchronous>, transform_indices = @transform_35, window_bounds = array<i64: 1, 512>}, {pipeline_mode = #tpu.pipeline_mode<synchronous>, transform_indices = @transform_36, window_bounds = array<i64: 512, 128>}, {pipeline_mode = #tpu.pipeline_mode<synchronous>, transform_indices = @transform_37, window_bounds = array<i64: 1, 128>}, {pipeline_mode = #tpu.pipeline_mode<synchronous>, transform_indices = @transform_38, window_bounds = array<i64: 128, 512>}, {pipeline_mode = #tpu.pipeline_mode<synchronous>, transform_indices = @transform_39, window_bounds = array<i64: 1, 512>}, {pipeline_mode = #tpu.pipeline_mode<synchronous>, transform_indices = @transform_40, window_bounds = array<i64: 10, 512>}]} {
    %c0 = arith.constant 0 : index
    %c0_0 = arith.constant 0 : index
    %0 = vector.load %arg2[%c0, %c0_0] : memref<10x10xf32, #tpu.memory_space<vmem>>, vector<10x10xf32>
    %c0_1 = arith.constant 0 : index
    %c0_2 = arith.constant 0 : index
    %1 = vector.load %arg1[%c0_1, %c0_2] : memref<10x768xf32, #tpu.memory_space<vmem>>, vector<10x768xf32>
    %2 = arith.truncf %1 : vector<10x768xf32> to vector<10x768xbf16>
    %c0_3 = arith.constant 0 : index
    %c0_4 = arith.constant 0 : index
    %3 = vector.load %arg3[%c0_3, %c0_4] : memref<768x64xbf16, #tpu.memory_space<vmem>>, vector<768x64xbf16>
    %cst = arith.constant dense<0.000000e+00> : vector<10x64xf32>
    %4 = tpu.matmul %2, %3, %cst {dimension_numbers = #tpu.dot_dimension_numbers<[1], [0], [0], [1], [0, 0, 1, 1], [], []>} : vector<10x768xbf16>, vector<768x64xbf16>, vector<10x64xf32> -> vector<10x64xf32>
    %c0_5 = arith.constant 0 : index
    %c0_6 = arith.constant 0 : index
    %5 = vector.load %arg4[%c0_5, %c0_6] : memref<10x64xf32, #tpu.memory_space<vmem>>, vector<10x64xf32>
    %6 = arith.addf %4, %5 : vector<10x64xf32>
    %cst_7 = arith.constant dense<0.000000e+00> : vector<10xf32>
    %7 = vector.multi_reduction <add>, %6, %cst_7 [1] : vector<10x64xf32> to vector<10xf32>
    %8 = vector.shape_cast %7 : vector<10xf32> to vector<10x1xf32>
    %cst_8 = arith.constant 6.400000e+01 : f32
    %9 = vector.broadcast %cst_8 : f32 to vector<10x1xf32>
    %10 = arith.divf %8, %9 : vector<10x1xf32>
    %11 = vector.broadcast %10 : vector<10x1xf32> to vector<10x64xf32>
    %12 = arith.subf %6, %11 : vector<10x64xf32>
    %13 = arith.mulf %12, %12 : vector<10x64xf32>
    %cst_9 = arith.constant dense<0.000000e+00> : vector<10xf32>
    %14 = vector.multi_reduction <add>, %13, %cst_9 [1] : vector<10x64xf32> to vector<10xf32>
    %15 = vector.shape_cast %14 : vector<10xf32> to vector<10x1xf32>
    %cst_10 = arith.constant 6.400000e+01 : f32
    %16 = vector.broadcast %cst_10 : f32 to vector<10x1xf32>
    %17 = arith.divf %15, %16 : vector<10x1xf32>
    %cst_11 = arith.constant 9.99999997E-7 : f32
    %18 = vector.broadcast %cst_11 : f32 to vector<10x1xf32>
    %19 = arith.addf %17, %18 : vector<10x1xf32>
    %20 = math.rsqrt %19 : vector<10x1xf32>
    %21 = vector.broadcast %20 : vector<10x1xf32> to vector<10x64xf32>
    %22 = arith.mulf %12, %21 : vector<10x64xf32>
    %23 = arith.truncf %22 : vector<10x64xf32> to vector<10x64xbf16>
    %c0_12 = arith.constant 0 : index
    %c0_13 = arith.constant 0 : index
    %24 = vector.load %arg5[%c0_12, %c0_13] : memref<64x192xbf16, #tpu.memory_space<vmem>>, vector<64x192xbf16>
    %cst_14 = arith.constant dense<0.000000e+00> : vector<10x192xf32>
    %25 = tpu.matmul %23, %24, %cst_14 {dimension_numbers = #tpu.dot_dimension_numbers<[1], [0], [0], [1], [0, 0, 1, 1], [], []>} : vector<10x64xbf16>, vector<64x192xbf16>, vector<10x192xf32> -> vector<10x192xf32>
    %c0_15 = arith.constant 0 : index
    %c0_16 = arith.constant 0 : index
    %26 = vector.load %arg6[%c0_15, %c0_16] : memref<1x192xf32, #tpu.memory_space<vmem>>, vector<1x192xf32>
    %27 = vector.broadcast %26 : vector<1x192xf32> to vector<10x192xf32>
    %28 = arith.addf %25, %27 : vector<10x192xf32>
    %29 = vector.extract_strided_slice %28 {offsets = [0, 0], sizes = [10, 16], strides = [1, 1]} : vector<10x192xf32> to vector<10x16xf32>
    %30 = vector.extract_strided_slice %28 {offsets = [0, 64], sizes = [10, 16], strides = [1, 1]} : vector<10x192xf32> to vector<10x16xf32>
    %31 = vector.extract_strided_slice %28 {offsets = [0, 128], sizes = [10, 16], strides = [1, 1]} : vector<10x192xf32> to vector<10x16xf32>
    %32 = tpu.transpose %30, [1, 0] : vector<10x16xf32> -> vector<16x10xf32>
    %cst_17 = arith.constant dense<0.000000e+00> : vector<10x10xf32>
    %33 = tpu.matmul %29, %32, %cst_17 {dimension_numbers = #tpu.dot_dimension_numbers<[1], [0], [0], [1], [0, 0, 1, 1], [], []>} : vector<10x16xf32>, vector<16x10xf32>, vector<10x10xf32> -> vector<10x10xf32>
    %cst_18 = arith.constant 2.500000e-01 : f32
    %34 = vector.broadcast %cst_18 : f32 to vector<10x10xf32>
    %35 = arith.mulf %33, %34 : vector<10x10xf32>
    %36 = arith.addf %35, %0 : vector<10x10xf32>
    %cst_19 = arith.constant dense<0xFF800000> : vector<10xf32>
    %37 = vector.multi_reduction <maximumf>, %36, %cst_19 [1] : vector<10x10xf32> to vector<10xf32>
    %38 = vector.shape_cast %37 : vector<10xf32> to vector<10x1xf32>
    %39 = vector.broadcast %38 : vector<10x1xf32> to vector<10x10xf32>
    %40 = arith.subf %36, %39 : vector<10x10xf32>
    %41 = math.exp %40 : vector<10x10xf32>
    %cst_20 = arith.constant dense<0.000000e+00> : vector<10xf32>
    %42 = vector.multi_reduction <add>, %41, %cst_20 [1] : vector<10x10xf32> to vector<10xf32>
    %43 = vector.shape_cast %42 : vector<10xf32> to vector<10x1xf32>
    %44 = vector.broadcast %43 : vector<10x1xf32> to vector<10x10xf32>
    %45 = arith.divf %41, %44 : vector<10x10xf32>
    %cst_21 = arith.constant dense<0.000000e+00> : vector<10x16xf32>
    %46 = tpu.matmul %45, %31, %cst_21 {dimension_numbers = #tpu.dot_dimension_numbers<[1], [0], [0], [1], [0, 0, 1, 1], [], []>} : vector<10x10xf32>, vector<10x16xf32>, vector<10x16xf32> -> vector<10x16xf32>
    %47 = vector.extract_strided_slice %28 {offsets = [0, 16], sizes = [10, 16], strides = [1, 1]} : vector<10x192xf32> to vector<10x16xf32>
    %48 = vector.extract_strided_slice %28 {offsets = [0, 80], sizes = [10, 16], strides = [1, 1]} : vector<10x192xf32> to vector<10x16xf32>
    %49 = vector.extract_strided_slice %28 {offsets = [0, 144], sizes = [10, 16], strides = [1, 1]} : vector<10x192xf32> to vector<10x16xf32>
    %50 = tpu.transpose %48, [1, 0] : vector<10x16xf32> -> vector<16x10xf32>
    %cst_22 = arith.constant dense<0.000000e+00> : vector<10x10xf32>
    %51 = tpu.matmul %47, %50, %cst_22 {dimension_numbers = #tpu.dot_dimension_numbers<[1], [0], [0], [1], [0, 0, 1, 1], [], []>} : vector<10x16xf32>, vector<16x10xf32>, vector<10x10xf32> -> vector<10x10xf32>
    %cst_23 = arith.constant 2.500000e-01 : f32
    %52 = vector.broadcast %cst_23 : f32 to vector<10x10xf32>
    %53 = arith.mulf %51, %52 : vector<10x10xf32>
    %54 = arith.addf %53, %0 : vector<10x10xf32>
    %cst_24 = arith.constant dense<0xFF800000> : vector<10xf32>
    %55 = vector.multi_reduction <maximumf>, %54, %cst_24 [1] : vector<10x10xf32> to vector<10xf32>
    %56 = vector.shape_cast %55 : vector<10xf32> to vector<10x1xf32>
    %57 = vector.broadcast %56 : vector<10x1xf32> to vector<10x10xf32>
    %58 = arith.subf %54, %57 : vector<10x10xf32>
    %59 = math.exp %58 : vector<10x10xf32>
    %cst_25 = arith.constant dense<0.000000e+00> : vector<10xf32>
    %60 = vector.multi_reduction <add>, %59, %cst_25 [1] : vector<10x10xf32> to vector<10xf32>
    %61 = vector.shape_cast %60 : vector<10xf32> to vector<10x1xf32>
    %62 = vector.broadcast %61 : vector<10x1xf32> to vector<10x10xf32>
    %63 = arith.divf %59, %62 : vector<10x10xf32>
    %cst_26 = arith.constant dense<0.000000e+00> : vector<10x16xf32>
    %64 = tpu.matmul %63, %49, %cst_26 {dimension_numbers = #tpu.dot_dimension_numbers<[1], [0], [0], [1], [0, 0, 1, 1], [], []>} : vector<10x10xf32>, vector<10x16xf32>, vector<10x16xf32> -> vector<10x16xf32>
    %65 = vector.extract_strided_slice %28 {offsets = [0, 32], sizes = [10, 16], strides = [1, 1]} : vector<10x192xf32> to vector<10x16xf32>
    %66 = vector.extract_strided_slice %28 {offsets = [0, 96], sizes = [10, 16], strides = [1, 1]} : vector<10x192xf32> to vector<10x16xf32>
    %67 = vector.extract_strided_slice %28 {offsets = [0, 160], sizes = [10, 16], strides = [1, 1]} : vector<10x192xf32> to vector<10x16xf32>
    %68 = tpu.transpose %66, [1, 0] : vector<10x16xf32> -> vector<16x10xf32>
    %cst_27 = arith.constant dense<0.000000e+00> : vector<10x10xf32>
    %69 = tpu.matmul %65, %68, %cst_27 {dimension_numbers = #tpu.dot_dimension_numbers<[1], [0], [0], [1], [0, 0, 1, 1], [], []>} : vector<10x16xf32>, vector<16x10xf32>, vector<10x10xf32> -> vector<10x10xf32>
    %cst_28 = arith.constant 2.500000e-01 : f32
    %70 = vector.broadcast %cst_28 : f32 to vector<10x10xf32>
    %71 = arith.mulf %69, %70 : vector<10x10xf32>
    %72 = arith.addf %71, %0 : vector<10x10xf32>
    %cst_29 = arith.constant dense<0xFF800000> : vector<10xf32>
    %73 = vector.multi_reduction <maximumf>, %72, %cst_29 [1] : vector<10x10xf32> to vector<10xf32>
    %74 = vector.shape_cast %73 : vector<10xf32> to vector<10x1xf32>
    %75 = vector.broadcast %74 : vector<10x1xf32> to vector<10x10xf32>
    %76 = arith.subf %72, %75 : vector<10x10xf32>
    %77 = math.exp %76 : vector<10x10xf32>
    %cst_30 = arith.constant dense<0.000000e+00> : vector<10xf32>
    %78 = vector.multi_reduction <add>, %77, %cst_30 [1] : vector<10x10xf32> to vector<10xf32>
    %79 = vector.shape_cast %78 : vector<10xf32> to vector<10x1xf32>
    %80 = vector.broadcast %79 : vector<10x1xf32> to vector<10x10xf32>
    %81 = arith.divf %77, %80 : vector<10x10xf32>
    %cst_31 = arith.constant dense<0.000000e+00> : vector<10x16xf32>
    %82 = tpu.matmul %81, %67, %cst_31 {dimension_numbers = #tpu.dot_dimension_numbers<[1], [0], [0], [1], [0, 0, 1, 1], [], []>} : vector<10x10xf32>, vector<10x16xf32>, vector<10x16xf32> -> vector<10x16xf32>
    %83 = vector.extract_strided_slice %28 {offsets = [0, 48], sizes = [10, 16], strides = [1, 1]} : vector<10x192xf32> to vector<10x16xf32>
    %84 = vector.extract_strided_slice %28 {offsets = [0, 112], sizes = [10, 16], strides = [1, 1]} : vector<10x192xf32> to vector<10x16xf32>
    %85 = vector.extract_strided_slice %28 {offsets = [0, 176], sizes = [10, 16], strides = [1, 1]} : vector<10x192xf32> to vector<10x16xf32>
    %86 = tpu.transpose %84, [1, 0] : vector<10x16xf32> -> vector<16x10xf32>
    %cst_32 = arith.constant dense<0.000000e+00> : vector<10x10xf32>
    %87 = tpu.matmul %83, %86, %cst_32 {dimension_numbers = #tpu.dot_dimension_numbers<[1], [0], [0], [1], [0, 0, 1, 1], [], []>} : vector<10x16xf32>, vector<16x10xf32>, vector<10x10xf32> -> vector<10x10xf32>
    %cst_33 = arith.constant 2.500000e-01 : f32
    %88 = vector.broadcast %cst_33 : f32 to vector<10x10xf32>
    %89 = arith.mulf %87, %88 : vector<10x10xf32>
    %90 = arith.addf %89, %0 : vector<10x10xf32>
    %cst_34 = arith.constant dense<0xFF800000> : vector<10xf32>
    %91 = vector.multi_reduction <maximumf>, %90, %cst_34 [1] : vector<10x10xf32> to vector<10xf32>
    %92 = vector.shape_cast %91 : vector<10xf32> to vector<10x1xf32>
    %93 = vector.broadcast %92 : vector<10x1xf32> to vector<10x10xf32>
    %94 = arith.subf %90, %93 : vector<10x10xf32>
    %95 = math.exp %94 : vector<10x10xf32>
    %cst_35 = arith.constant dense<0.000000e+00> : vector<10xf32>
    %96 = vector.multi_reduction <add>, %95, %cst_35 [1] : vector<10x10xf32> to vector<10xf32>
    %97 = vector.shape_cast %96 : vector<10xf32> to vector<10x1xf32>
    %98 = vector.broadcast %97 : vector<10x1xf32> to vector<10x10xf32>
    %99 = arith.divf %95, %98 : vector<10x10xf32>
    %cst_36 = arith.constant dense<0.000000e+00> : vector<10x16xf32>
    %100 = tpu.matmul %99, %85, %cst_36 {dimension_numbers = #tpu.dot_dimension_numbers<[1], [0], [0], [1], [0, 0, 1, 1], [], []>} : vector<10x10xf32>, vector<10x16xf32>, vector<10x16xf32> -> vector<10x16xf32>
    %101 = tpu.concatenate %46, %64, %82, %100 in 1 : vector<10x16xf32>, vector<10x16xf32>, vector<10x16xf32>, vector<10x16xf32> -> vector<10x64xf32>
    %102 = arith.truncf %101 : vector<10x64xf32> to vector<10x64xbf16>
    %c0_37 = arith.constant 0 : index
    %c0_38 = arith.constant 0 : index
    %103 = vector.load %arg7[%c0_37, %c0_38] : memref<64x64xbf16, #tpu.memory_space<vmem>>, vector<64x64xbf16>
    %cst_39 = arith.constant dense<0.000000e+00> : vector<10x64xf32>
    %104 = tpu.matmul %102, %103, %cst_39 {dimension_numbers = #tpu.dot_dimension_numbers<[1], [0], [0], [1], [0, 0, 1, 1], [], []>} : vector<10x64xbf16>, vector<64x64xbf16>, vector<10x64xf32> -> vector<10x64xf32>
    %c0_40 = arith.constant 0 : index
    %c0_41 = arith.constant 0 : index
    %105 = vector.load %arg8[%c0_40, %c0_41] : memref<1x64xf32, #tpu.memory_space<vmem>>, vector<1x64xf32>
    %106 = vector.broadcast %105 : vector<1x64xf32> to vector<10x64xf32>
    %107 = arith.addf %104, %106 : vector<10x64xf32>
    %108 = arith.addf %6, %107 : vector<10x64xf32>
    %cst_42 = arith.constant dense<0.000000e+00> : vector<10xf32>
    %109 = vector.multi_reduction <add>, %108, %cst_42 [1] : vector<10x64xf32> to vector<10xf32>
    %110 = vector.shape_cast %109 : vector<10xf32> to vector<10x1xf32>
    %cst_43 = arith.constant 6.400000e+01 : f32
    %111 = vector.broadcast %cst_43 : f32 to vector<10x1xf32>
    %112 = arith.divf %110, %111 : vector<10x1xf32>
    %113 = vector.broadcast %112 : vector<10x1xf32> to vector<10x64xf32>
    %114 = arith.subf %108, %113 : vector<10x64xf32>
    %115 = arith.mulf %114, %114 : vector<10x64xf32>
    %cst_44 = arith.constant dense<0.000000e+00> : vector<10xf32>
    %116 = vector.multi_reduction <add>, %115, %cst_44 [1] : vector<10x64xf32> to vector<10xf32>
    %117 = vector.shape_cast %116 : vector<10xf32> to vector<10x1xf32>
    %cst_45 = arith.constant 6.400000e+01 : f32
    %118 = vector.broadcast %cst_45 : f32 to vector<10x1xf32>
    %119 = arith.divf %117, %118 : vector<10x1xf32>
    %cst_46 = arith.constant 9.99999997E-7 : f32
    %120 = vector.broadcast %cst_46 : f32 to vector<10x1xf32>
    %121 = arith.addf %119, %120 : vector<10x1xf32>
    %122 = math.rsqrt %121 : vector<10x1xf32>
    %123 = vector.broadcast %122 : vector<10x1xf32> to vector<10x64xf32>
    %124 = arith.mulf %114, %123 : vector<10x64xf32>
    %125 = arith.truncf %124 : vector<10x64xf32> to vector<10x64xbf16>
    %c0_47 = arith.constant 0 : index
    %c0_48 = arith.constant 0 : index
    %126 = vector.load %arg9[%c0_47, %c0_48] : memref<64x256xbf16, #tpu.memory_space<vmem>>, vector<64x256xbf16>
    %cst_49 = arith.constant dense<0.000000e+00> : vector<10x256xf32>
    %127 = tpu.matmul %125, %126, %cst_49 {dimension_numbers = #tpu.dot_dimension_numbers<[1], [0], [0], [1], [0, 0, 1, 1], [], []>} : vector<10x64xbf16>, vector<64x256xbf16>, vector<10x256xf32> -> vector<10x256xf32>
    %c0_50 = arith.constant 0 : index
    %c0_51 = arith.constant 0 : index
    %128 = vector.load %arg10[%c0_50, %c0_51] : memref<1x256xf32, #tpu.memory_space<vmem>>, vector<1x256xf32>
    %129 = vector.broadcast %128 : vector<1x256xf32> to vector<10x256xf32>
    %130 = arith.addf %127, %129 : vector<10x256xf32>
    %cst_52 = arith.constant 5.000000e-01 : f32
    %131 = vector.broadcast %cst_52 : f32 to vector<10x256xf32>
    %132 = arith.mulf %131, %130 : vector<10x256xf32>
    %cst_53 = arith.constant 0.707106769 : f32
    %133 = vector.broadcast %cst_53 : f32 to vector<10x256xf32>
    %134 = arith.mulf %130, %133 : vector<10x256xf32>
    %135 = math.erf %134 : vector<10x256xf32>
    %cst_54 = arith.constant 1.000000e+00 : f32
    %136 = vector.broadcast %cst_54 : f32 to vector<10x256xf32>
    %137 = arith.addf %136, %135 : vector<10x256xf32>
    %138 = arith.mulf %132, %137 : vector<10x256xf32>
    %139 = arith.truncf %138 : vector<10x256xf32> to vector<10x256xbf16>
    %c0_55 = arith.constant 0 : index
    %c0_56 = arith.constant 0 : index
    %140 = vector.load %arg11[%c0_55, %c0_56] : memref<256x64xbf16, #tpu.memory_space<vmem>>, vector<256x64xbf16>
    %cst_57 = arith.constant dense<0.000000e+00> : vector<10x64xf32>
    %141 = tpu.matmul %139, %140, %cst_57 {dimension_numbers = #tpu.dot_dimension_numbers<[1], [0], [0], [1], [0, 0, 1, 1], [], []>} : vector<10x256xbf16>, vector<256x64xbf16>, vector<10x64xf32> -> vector<10x64xf32>
    %c0_58 = arith.constant 0 : index
    %c0_59 = arith.constant 0 : index
    %142 = vector.load %arg12[%c0_58, %c0_59] : memref<1x64xf32, #tpu.memory_space<vmem>>, vector<1x64xf32>
    %143 = vector.broadcast %142 : vector<1x64xf32> to vector<10x64xf32>
    %144 = arith.addf %141, %143 : vector<10x64xf32>
    %145 = arith.addf %108, %144 : vector<10x64xf32>
    %cst_60 = arith.constant dense<0.000000e+00> : vector<10xf32>
    %146 = vector.multi_reduction <add>, %145, %cst_60 [1] : vector<10x64xf32> to vector<10xf32>
    %147 = vector.shape_cast %146 : vector<10xf32> to vector<10x1xf32>
    %cst_61 = arith.constant 6.400000e+01 : f32
    %148 = vector.broadcast %cst_61 : f32 to vector<10x1xf32>
    %149 = arith.divf %147, %148 : vector<10x1xf32>
    %150 = vector.broadcast %149 : vector<10x1xf32> to vector<10x64xf32>
    %151 = arith.subf %145, %150 : vector<10x64xf32>
    %152 = arith.mulf %151, %151 : vector<10x64xf32>
    %cst_62 = arith.constant dense<0.000000e+00> : vector<10xf32>
    %153 = vector.multi_reduction <add>, %152, %cst_62 [1] : vector<10x64xf32> to vector<10xf32>
    %154 = vector.shape_cast %153 : vector<10xf32> to vector<10x1xf32>
    %cst_63 = arith.constant 6.400000e+01 : f32
    %155 = vector.broadcast %cst_63 : f32 to vector<10x1xf32>
    %156 = arith.divf %154, %155 : vector<10x1xf32>
    %cst_64 = arith.constant 9.99999997E-7 : f32
    %157 = vector.broadcast %cst_64 : f32 to vector<10x1xf32>
    %158 = arith.addf %156, %157 : vector<10x1xf32>
    %159 = math.rsqrt %158 : vector<10x1xf32>
    %160 = vector.broadcast %159 : vector<10x1xf32> to vector<10x64xf32>
    %161 = arith.mulf %151, %160 : vector<10x64xf32>
    %162 = arith.truncf %161 : vector<10x64xf32> to vector<10x64xbf16>
    %c0_65 = arith.constant 0 : index
    %c0_66 = arith.constant 0 : index
    %163 = vector.load %arg13[%c0_65, %c0_66] : memref<64x192xbf16, #tpu.memory_space<vmem>>, vector<64x192xbf16>
    %cst_67 = arith.constant dense<0.000000e+00> : vector<10x192xf32>
    %164 = tpu.matmul %162, %163, %cst_67 {dimension_numbers = #tpu.dot_dimension_numbers<[1], [0], [0], [1], [0, 0, 1, 1], [], []>} : vector<10x64xbf16>, vector<64x192xbf16>, vector<10x192xf32> -> vector<10x192xf32>
    %c0_68 = arith.constant 0 : index
    %c0_69 = arith.constant 0 : index
    %165 = vector.load %arg14[%c0_68, %c0_69] : memref<1x192xf32, #tpu.memory_space<vmem>>, vector<1x192xf32>
    %166 = vector.broadcast %165 : vector<1x192xf32> to vector<10x192xf32>
    %167 = arith.addf %164, %166 : vector<10x192xf32>
    %168 = vector.extract_strided_slice %167 {offsets = [0, 0], sizes = [10, 16], strides = [1, 1]} : vector<10x192xf32> to vector<10x16xf32>
    %169 = vector.extract_strided_slice %167 {offsets = [0, 64], sizes = [10, 16], strides = [1, 1]} : vector<10x192xf32> to vector<10x16xf32>
    %170 = vector.extract_strided_slice %167 {offsets = [0, 128], sizes = [10, 16], strides = [1, 1]} : vector<10x192xf32> to vector<10x16xf32>
    %171 = tpu.transpose %169, [1, 0] : vector<10x16xf32> -> vector<16x10xf32>
    %cst_70 = arith.constant dense<0.000000e+00> : vector<10x10xf32>
    %172 = tpu.matmul %168, %171, %cst_70 {dimension_numbers = #tpu.dot_dimension_numbers<[1], [0], [0], [1], [0, 0, 1, 1], [], []>} : vector<10x16xf32>, vector<16x10xf32>, vector<10x10xf32> -> vector<10x10xf32>
    %cst_71 = arith.constant 2.500000e-01 : f32
    %173 = vector.broadcast %cst_71 : f32 to vector<10x10xf32>
    %174 = arith.mulf %172, %173 : vector<10x10xf32>
    %175 = arith.addf %174, %0 : vector<10x10xf32>
    %cst_72 = arith.constant dense<0xFF800000> : vector<10xf32>
    %176 = vector.multi_reduction <maximumf>, %175, %cst_72 [1] : vector<10x10xf32> to vector<10xf32>
    %177 = vector.shape_cast %176 : vector<10xf32> to vector<10x1xf32>
    %178 = vector.broadcast %177 : vector<10x1xf32> to vector<10x10xf32>
    %179 = arith.subf %175, %178 : vector<10x10xf32>
    %180 = math.exp %179 : vector<10x10xf32>
    %cst_73 = arith.constant dense<0.000000e+00> : vector<10xf32>
    %181 = vector.multi_reduction <add>, %180, %cst_73 [1] : vector<10x10xf32> to vector<10xf32>
    %182 = vector.shape_cast %181 : vector<10xf32> to vector<10x1xf32>
    %183 = vector.broadcast %182 : vector<10x1xf32> to vector<10x10xf32>
    %184 = arith.divf %180, %183 : vector<10x10xf32>
    %cst_74 = arith.constant dense<0.000000e+00> : vector<10x16xf32>
    %185 = tpu.matmul %184, %170, %cst_74 {dimension_numbers = #tpu.dot_dimension_numbers<[1], [0], [0], [1], [0, 0, 1, 1], [], []>} : vector<10x10xf32>, vector<10x16xf32>, vector<10x16xf32> -> vector<10x16xf32>
    %186 = vector.extract_strided_slice %167 {offsets = [0, 16], sizes = [10, 16], strides = [1, 1]} : vector<10x192xf32> to vector<10x16xf32>
    %187 = vector.extract_strided_slice %167 {offsets = [0, 80], sizes = [10, 16], strides = [1, 1]} : vector<10x192xf32> to vector<10x16xf32>
    %188 = vector.extract_strided_slice %167 {offsets = [0, 144], sizes = [10, 16], strides = [1, 1]} : vector<10x192xf32> to vector<10x16xf32>
    %189 = tpu.transpose %187, [1, 0] : vector<10x16xf32> -> vector<16x10xf32>
    %cst_75 = arith.constant dense<0.000000e+00> : vector<10x10xf32>
    %190 = tpu.matmul %186, %189, %cst_75 {dimension_numbers = #tpu.dot_dimension_numbers<[1], [0], [0], [1], [0, 0, 1, 1], [], []>} : vector<10x16xf32>, vector<16x10xf32>, vector<10x10xf32> -> vector<10x10xf32>
    %cst_76 = arith.constant 2.500000e-01 : f32
    %191 = vector.broadcast %cst_76 : f32 to vector<10x10xf32>
    %192 = arith.mulf %190, %191 : vector<10x10xf32>
    %193 = arith.addf %192, %0 : vector<10x10xf32>
    %cst_77 = arith.constant dense<0xFF800000> : vector<10xf32>
    %194 = vector.multi_reduction <maximumf>, %193, %cst_77 [1] : vector<10x10xf32> to vector<10xf32>
    %195 = vector.shape_cast %194 : vector<10xf32> to vector<10x1xf32>
    %196 = vector.broadcast %195 : vector<10x1xf32> to vector<10x10xf32>
    %197 = arith.subf %193, %196 : vector<10x10xf32>
    %198 = math.exp %197 : vector<10x10xf32>
    %cst_78 = arith.constant dense<0.000000e+00> : vector<10xf32>
    %199 = vector.multi_reduction <add>, %198, %cst_78 [1] : vector<10x10xf32> to vector<10xf32>
    %200 = vector.shape_cast %199 : vector<10xf32> to vector<10x1xf32>
    %201 = vector.broadcast %200 : vector<10x1xf32> to vector<10x10xf32>
    %202 = arith.divf %198, %201 : vector<10x10xf32>
    %cst_79 = arith.constant dense<0.000000e+00> : vector<10x16xf32>
    %203 = tpu.matmul %202, %188, %cst_79 {dimension_numbers = #tpu.dot_dimension_numbers<[1], [0], [0], [1], [0, 0, 1, 1], [], []>} : vector<10x10xf32>, vector<10x16xf32>, vector<10x16xf32> -> vector<10x16xf32>
    %204 = vector.extract_strided_slice %167 {offsets = [0, 32], sizes = [10, 16], strides = [1, 1]} : vector<10x192xf32> to vector<10x16xf32>
    %205 = vector.extract_strided_slice %167 {offsets = [0, 96], sizes = [10, 16], strides = [1, 1]} : vector<10x192xf32> to vector<10x16xf32>
    %206 = vector.extract_strided_slice %167 {offsets = [0, 160], sizes = [10, 16], strides = [1, 1]} : vector<10x192xf32> to vector<10x16xf32>
    %207 = tpu.transpose %205, [1, 0] : vector<10x16xf32> -> vector<16x10xf32>
    %cst_80 = arith.constant dense<0.000000e+00> : vector<10x10xf32>
    %208 = tpu.matmul %204, %207, %cst_80 {dimension_numbers = #tpu.dot_dimension_numbers<[1], [0], [0], [1], [0, 0, 1, 1], [], []>} : vector<10x16xf32>, vector<16x10xf32>, vector<10x10xf32> -> vector<10x10xf32>
    %cst_81 = arith.constant 2.500000e-01 : f32
    %209 = vector.broadcast %cst_81 : f32 to vector<10x10xf32>
    %210 = arith.mulf %208, %209 : vector<10x10xf32>
    %211 = arith.addf %210, %0 : vector<10x10xf32>
    %cst_82 = arith.constant dense<0xFF800000> : vector<10xf32>
    %212 = vector.multi_reduction <maximumf>, %211, %cst_82 [1] : vector<10x10xf32> to vector<10xf32>
    %213 = vector.shape_cast %212 : vector<10xf32> to vector<10x1xf32>
    %214 = vector.broadcast %213 : vector<10x1xf32> to vector<10x10xf32>
    %215 = arith.subf %211, %214 : vector<10x10xf32>
    %216 = math.exp %215 : vector<10x10xf32>
    %cst_83 = arith.constant dense<0.000000e+00> : vector<10xf32>
    %217 = vector.multi_reduction <add>, %216, %cst_83 [1] : vector<10x10xf32> to vector<10xf32>
    %218 = vector.shape_cast %217 : vector<10xf32> to vector<10x1xf32>
    %219 = vector.broadcast %218 : vector<10x1xf32> to vector<10x10xf32>
    %220 = arith.divf %216, %219 : vector<10x10xf32>
    %cst_84 = arith.constant dense<0.000000e+00> : vector<10x16xf32>
    %221 = tpu.matmul %220, %206, %cst_84 {dimension_numbers = #tpu.dot_dimension_numbers<[1], [0], [0], [1], [0, 0, 1, 1], [], []>} : vector<10x10xf32>, vector<10x16xf32>, vector<10x16xf32> -> vector<10x16xf32>
    %222 = vector.extract_strided_slice %167 {offsets = [0, 48], sizes = [10, 16], strides = [1, 1]} : vector<10x192xf32> to vector<10x16xf32>
    %223 = vector.extract_strided_slice %167 {offsets = [0, 112], sizes = [10, 16], strides = [1, 1]} : vector<10x192xf32> to vector<10x16xf32>
    %224 = vector.extract_strided_slice %167 {offsets = [0, 176], sizes = [10, 16], strides = [1, 1]} : vector<10x192xf32> to vector<10x16xf32>
    %225 = tpu.transpose %223, [1, 0] : vector<10x16xf32> -> vector<16x10xf32>
    %cst_85 = arith.constant dense<0.000000e+00> : vector<10x10xf32>
    %226 = tpu.matmul %222, %225, %cst_85 {dimension_numbers = #tpu.dot_dimension_numbers<[1], [0], [0], [1], [0, 0, 1, 1], [], []>} : vector<10x16xf32>, vector<16x10xf32>, vector<10x10xf32> -> vector<10x10xf32>
    %cst_86 = arith.constant 2.500000e-01 : f32
    %227 = vector.broadcast %cst_86 : f32 to vector<10x10xf32>
    %228 = arith.mulf %226, %227 : vector<10x10xf32>
    %229 = arith.addf %228, %0 : vector<10x10xf32>
    %cst_87 = arith.constant dense<0xFF800000> : vector<10xf32>
    %230 = vector.multi_reduction <maximumf>, %229, %cst_87 [1] : vector<10x10xf32> to vector<10xf32>
    %231 = vector.shape_cast %230 : vector<10xf32> to vector<10x1xf32>
    %232 = vector.broadcast %231 : vector<10x1xf32> to vector<10x10xf32>
    %233 = arith.subf %229, %232 : vector<10x10xf32>
    %234 = math.exp %233 : vector<10x10xf32>
    %cst_88 = arith.constant dense<0.000000e+00> : vector<10xf32>
    %235 = vector.multi_reduction <add>, %234, %cst_88 [1] : vector<10x10xf32> to vector<10xf32>
    %236 = vector.shape_cast %235 : vector<10xf32> to vector<10x1xf32>
    %237 = vector.broadcast %236 : vector<10x1xf32> to vector<10x10xf32>
    %238 = arith.divf %234, %237 : vector<10x10xf32>
    %cst_89 = arith.constant dense<0.000000e+00> : vector<10x16xf32>
    %239 = tpu.matmul %238, %224, %cst_89 {dimension_numbers = #tpu.dot_dimension_numbers<[1], [0], [0], [1], [0, 0, 1, 1], [], []>} : vector<10x10xf32>, vector<10x16xf32>, vector<10x16xf32> -> vector<10x16xf32>
    %240 = tpu.concatenate %185, %203, %221, %239 in 1 : vector<10x16xf32>, vector<10x16xf32>, vector<10x16xf32>, vector<10x16xf32> -> vector<10x64xf32>
    %241 = arith.truncf %240 : vector<10x64xf32> to vector<10x64xbf16>
    %c0_90 = arith.constant 0 : index
    %c0_91 = arith.constant 0 : index
    %242 = vector.load %arg15[%c0_90, %c0_91] : memref<64x64xbf16, #tpu.memory_space<vmem>>, vector<64x64xbf16>
    %cst_92 = arith.constant dense<0.000000e+00> : vector<10x64xf32>
    %243 = tpu.matmul %241, %242, %cst_92 {dimension_numbers = #tpu.dot_dimension_numbers<[1], [0], [0], [1], [0, 0, 1, 1], [], []>} : vector<10x64xbf16>, vector<64x64xbf16>, vector<10x64xf32> -> vector<10x64xf32>
    %c0_93 = arith.constant 0 : index
    %c0_94 = arith.constant 0 : index
    %244 = vector.load %arg16[%c0_93, %c0_94] : memref<1x64xf32, #tpu.memory_space<vmem>>, vector<1x64xf32>
    %245 = vector.broadcast %244 : vector<1x64xf32> to vector<10x64xf32>
    %246 = arith.addf %243, %245 : vector<10x64xf32>
    %247 = arith.addf %145, %246 : vector<10x64xf32>
    %cst_95 = arith.constant dense<0.000000e+00> : vector<10xf32>
    %248 = vector.multi_reduction <add>, %247, %cst_95 [1] : vector<10x64xf32> to vector<10xf32>
    %249 = vector.shape_cast %248 : vector<10xf32> to vector<10x1xf32>
    %cst_96 = arith.constant 6.400000e+01 : f32
    %250 = vector.broadcast %cst_96 : f32 to vector<10x1xf32>
    %251 = arith.divf %249, %250 : vector<10x1xf32>
    %252 = vector.broadcast %251 : vector<10x1xf32> to vector<10x64xf32>
    %253 = arith.subf %247, %252 : vector<10x64xf32>
    %254 = arith.mulf %253, %253 : vector<10x64xf32>
    %cst_97 = arith.constant dense<0.000000e+00> : vector<10xf32>
    %255 = vector.multi_reduction <add>, %254, %cst_97 [1] : vector<10x64xf32> to vector<10xf32>
    %256 = vector.shape_cast %255 : vector<10xf32> to vector<10x1xf32>
    %cst_98 = arith.constant 6.400000e+01 : f32
    %257 = vector.broadcast %cst_98 : f32 to vector<10x1xf32>
    %258 = arith.divf %256, %257 : vector<10x1xf32>
    %cst_99 = arith.constant 9.99999997E-7 : f32
    %259 = vector.broadcast %cst_99 : f32 to vector<10x1xf32>
    %260 = arith.addf %258, %259 : vector<10x1xf32>
    %261 = math.rsqrt %260 : vector<10x1xf32>
    %262 = vector.broadcast %261 : vector<10x1xf32> to vector<10x64xf32>
    %263 = arith.mulf %253, %262 : vector<10x64xf32>
    %264 = arith.truncf %263 : vector<10x64xf32> to vector<10x64xbf16>
    %c0_100 = arith.constant 0 : index
    %c0_101 = arith.constant 0 : index
    %265 = vector.load %arg17[%c0_100, %c0_101] : memref<64x256xbf16, #tpu.memory_space<vmem>>, vector<64x256xbf16>
    %cst_102 = arith.constant dense<0.000000e+00> : vector<10x256xf32>
    %266 = tpu.matmul %264, %265, %cst_102 {dimension_numbers = #tpu.dot_dimension_numbers<[1], [0], [0], [1], [0, 0, 1, 1], [], []>} : vector<10x64xbf16>, vector<64x256xbf16>, vector<10x256xf32> -> vector<10x256xf32>
    %c0_103 = arith.constant 0 : index
    %c0_104 = arith.constant 0 : index
    %267 = vector.load %arg18[%c0_103, %c0_104] : memref<1x256xf32, #tpu.memory_space<vmem>>, vector<1x256xf32>
    %268 = vector.broadcast %267 : vector<1x256xf32> to vector<10x256xf32>
    %269 = arith.addf %266, %268 : vector<10x256xf32>
    %cst_105 = arith.constant 5.000000e-01 : f32
    %270 = vector.broadcast %cst_105 : f32 to vector<10x256xf32>
    %271 = arith.mulf %270, %269 : vector<10x256xf32>
    %cst_106 = arith.constant 0.707106769 : f32
    %272 = vector.broadcast %cst_106 : f32 to vector<10x256xf32>
    %273 = arith.mulf %269, %272 : vector<10x256xf32>
    %274 = math.erf %273 : vector<10x256xf32>
    %cst_107 = arith.constant 1.000000e+00 : f32
    %275 = vector.broadcast %cst_107 : f32 to vector<10x256xf32>
    %276 = arith.addf %275, %274 : vector<10x256xf32>
    %277 = arith.mulf %271, %276 : vector<10x256xf32>
    %278 = arith.truncf %277 : vector<10x256xf32> to vector<10x256xbf16>
    %c0_108 = arith.constant 0 : index
    %c0_109 = arith.constant 0 : index
    %279 = vector.load %arg19[%c0_108, %c0_109] : memref<256x64xbf16, #tpu.memory_space<vmem>>, vector<256x64xbf16>
    %cst_110 = arith.constant dense<0.000000e+00> : vector<10x64xf32>
    %280 = tpu.matmul %278, %279, %cst_110 {dimension_numbers = #tpu.dot_dimension_numbers<[1], [0], [0], [1], [0, 0, 1, 1], [], []>} : vector<10x256xbf16>, vector<256x64xbf16>, vector<10x64xf32> -> vector<10x64xf32>
    %c0_111 = arith.constant 0 : index
    %c0_112 = arith.constant 0 : index
    %281 = vector.load %arg20[%c0_111, %c0_112] : memref<1x64xf32, #tpu.memory_space<vmem>>, vector<1x64xf32>
    %282 = vector.broadcast %281 : vector<1x64xf32> to vector<10x64xf32>
    %283 = arith.addf %280, %282 : vector<10x64xf32>
    %284 = arith.addf %247, %283 : vector<10x64xf32>
    %cst_113 = arith.constant dense<0.000000e+00> : vector<10xf32>
    %285 = vector.multi_reduction <add>, %284, %cst_113 [1] : vector<10x64xf32> to vector<10xf32>
    %286 = vector.shape_cast %285 : vector<10xf32> to vector<10x1xf32>
    %cst_114 = arith.constant 6.400000e+01 : f32
    %287 = vector.broadcast %cst_114 : f32 to vector<10x1xf32>
    %288 = arith.divf %286, %287 : vector<10x1xf32>
    %289 = vector.broadcast %288 : vector<10x1xf32> to vector<10x64xf32>
    %290 = arith.subf %284, %289 : vector<10x64xf32>
    %291 = arith.mulf %290, %290 : vector<10x64xf32>
    %cst_115 = arith.constant dense<0.000000e+00> : vector<10xf32>
    %292 = vector.multi_reduction <add>, %291, %cst_115 [1] : vector<10x64xf32> to vector<10xf32>
    %293 = vector.shape_cast %292 : vector<10xf32> to vector<10x1xf32>
    %cst_116 = arith.constant 6.400000e+01 : f32
    %294 = vector.broadcast %cst_116 : f32 to vector<10x1xf32>
    %295 = arith.divf %293, %294 : vector<10x1xf32>
    %cst_117 = arith.constant 9.99999997E-7 : f32
    %296 = vector.broadcast %cst_117 : f32 to vector<10x1xf32>
    %297 = arith.addf %295, %296 : vector<10x1xf32>
    %298 = math.rsqrt %297 : vector<10x1xf32>
    %299 = vector.broadcast %298 : vector<10x1xf32> to vector<10x64xf32>
    %300 = arith.mulf %290, %299 : vector<10x64xf32>
    %301 = arith.truncf %300 : vector<10x64xf32> to vector<10x64xbf16>
    %c0_118 = arith.constant 0 : index
    %c0_119 = arith.constant 0 : index
    %302 = vector.load %arg21[%c0_118, %c0_119] : memref<64x128xbf16, #tpu.memory_space<vmem>>, vector<64x128xbf16>
    %cst_120 = arith.constant dense<0.000000e+00> : vector<10x128xf32>
    %303 = tpu.matmul %301, %302, %cst_120 {dimension_numbers = #tpu.dot_dimension_numbers<[1], [0], [0], [1], [0, 0, 1, 1], [], []>} : vector<10x64xbf16>, vector<64x128xbf16>, vector<10x128xf32> -> vector<10x128xf32>
    %c0_121 = arith.constant 0 : index
    %c0_122 = arith.constant 0 : index
    %304 = vector.load %arg22[%c0_121, %c0_122] : memref<10x128xf32, #tpu.memory_space<vmem>>, vector<10x128xf32>
    %305 = arith.addf %303, %304 : vector<10x128xf32>
    %cst_123 = arith.constant dense<0.000000e+00> : vector<10xf32>
    %306 = vector.multi_reduction <add>, %305, %cst_123 [1] : vector<10x128xf32> to vector<10xf32>
    %307 = vector.shape_cast %306 : vector<10xf32> to vector<10x1xf32>
    %cst_124 = arith.constant 1.280000e+02 : f32
    %308 = vector.broadcast %cst_124 : f32 to vector<10x1xf32>
    %309 = arith.divf %307, %308 : vector<10x1xf32>
    %310 = vector.broadcast %309 : vector<10x1xf32> to vector<10x128xf32>
    %311 = arith.subf %305, %310 : vector<10x128xf32>
    %312 = arith.mulf %311, %311 : vector<10x128xf32>
    %cst_125 = arith.constant dense<0.000000e+00> : vector<10xf32>
    %313 = vector.multi_reduction <add>, %312, %cst_125 [1] : vector<10x128xf32> to vector<10xf32>
    %314 = vector.shape_cast %313 : vector<10xf32> to vector<10x1xf32>
    %cst_126 = arith.constant 1.280000e+02 : f32
    %315 = vector.broadcast %cst_126 : f32 to vector<10x1xf32>
    %316 = arith.divf %314, %315 : vector<10x1xf32>
    %cst_127 = arith.constant 9.99999997E-7 : f32
    %317 = vector.broadcast %cst_127 : f32 to vector<10x1xf32>
    %318 = arith.addf %316, %317 : vector<10x1xf32>
    %319 = math.rsqrt %318 : vector<10x1xf32>
    %320 = vector.broadcast %319 : vector<10x1xf32> to vector<10x128xf32>
    %321 = arith.mulf %311, %320 : vector<10x128xf32>
    %322 = arith.truncf %321 : vector<10x128xf32> to vector<10x128xbf16>
    %c0_128 = arith.constant 0 : index
    %c0_129 = arith.constant 0 : index
    %323 = vector.load %arg23[%c0_128, %c0_129] : memref<128x384xbf16, #tpu.memory_space<vmem>>, vector<128x384xbf16>
    %cst_130 = arith.constant dense<0.000000e+00> : vector<10x384xf32>
    %324 = tpu.matmul %322, %323, %cst_130 {dimension_numbers = #tpu.dot_dimension_numbers<[1], [0], [0], [1], [0, 0, 1, 1], [], []>} : vector<10x128xbf16>, vector<128x384xbf16>, vector<10x384xf32> -> vector<10x384xf32>
    %c0_131 = arith.constant 0 : index
    %c0_132 = arith.constant 0 : index
    %325 = vector.load %arg24[%c0_131, %c0_132] : memref<1x384xf32, #tpu.memory_space<vmem>>, vector<1x384xf32>
    %326 = vector.broadcast %325 : vector<1x384xf32> to vector<10x384xf32>
    %327 = arith.addf %324, %326 : vector<10x384xf32>
    %328 = vector.extract_strided_slice %327 {offsets = [0, 0], sizes = [10, 32], strides = [1, 1]} : vector<10x384xf32> to vector<10x32xf32>
    %329 = vector.extract_strided_slice %327 {offsets = [0, 128], sizes = [10, 32], strides = [1, 1]} : vector<10x384xf32> to vector<10x32xf32>
    %330 = vector.extract_strided_slice %327 {offsets = [0, 256], sizes = [10, 32], strides = [1, 1]} : vector<10x384xf32> to vector<10x32xf32>
    %331 = tpu.transpose %329, [1, 0] : vector<10x32xf32> -> vector<32x10xf32>
    %cst_133 = arith.constant dense<0.000000e+00> : vector<10x10xf32>
    %332 = tpu.matmul %328, %331, %cst_133 {dimension_numbers = #tpu.dot_dimension_numbers<[1], [0], [0], [1], [0, 0, 1, 1], [], []>} : vector<10x32xf32>, vector<32x10xf32>, vector<10x10xf32> -> vector<10x10xf32>
    %cst_134 = arith.constant 0.176776692 : f32
    %333 = vector.broadcast %cst_134 : f32 to vector<10x10xf32>
    %334 = arith.mulf %332, %333 : vector<10x10xf32>
    %335 = arith.addf %334, %0 : vector<10x10xf32>
    %cst_135 = arith.constant dense<0xFF800000> : vector<10xf32>
    %336 = vector.multi_reduction <maximumf>, %335, %cst_135 [1] : vector<10x10xf32> to vector<10xf32>
    %337 = vector.shape_cast %336 : vector<10xf32> to vector<10x1xf32>
    %338 = vector.broadcast %337 : vector<10x1xf32> to vector<10x10xf32>
    %339 = arith.subf %335, %338 : vector<10x10xf32>
    %340 = math.exp %339 : vector<10x10xf32>
    %cst_136 = arith.constant dense<0.000000e+00> : vector<10xf32>
    %341 = vector.multi_reduction <add>, %340, %cst_136 [1] : vector<10x10xf32> to vector<10xf32>
    %342 = vector.shape_cast %341 : vector<10xf32> to vector<10x1xf32>
    %343 = vector.broadcast %342 : vector<10x1xf32> to vector<10x10xf32>
    %344 = arith.divf %340, %343 : vector<10x10xf32>
    %cst_137 = arith.constant dense<0.000000e+00> : vector<10x32xf32>
    %345 = tpu.matmul %344, %330, %cst_137 {dimension_numbers = #tpu.dot_dimension_numbers<[1], [0], [0], [1], [0, 0, 1, 1], [], []>} : vector<10x10xf32>, vector<10x32xf32>, vector<10x32xf32> -> vector<10x32xf32>
    %346 = vector.extract_strided_slice %327 {offsets = [0, 32], sizes = [10, 32], strides = [1, 1]} : vector<10x384xf32> to vector<10x32xf32>
    %347 = vector.extract_strided_slice %327 {offsets = [0, 160], sizes = [10, 32], strides = [1, 1]} : vector<10x384xf32> to vector<10x32xf32>
    %348 = vector.extract_strided_slice %327 {offsets = [0, 288], sizes = [10, 32], strides = [1, 1]} : vector<10x384xf32> to vector<10x32xf32>
    %349 = tpu.transpose %347, [1, 0] : vector<10x32xf32> -> vector<32x10xf32>
    %cst_138 = arith.constant dense<0.000000e+00> : vector<10x10xf32>
    %350 = tpu.matmul %346, %349, %cst_138 {dimension_numbers = #tpu.dot_dimension_numbers<[1], [0], [0], [1], [0, 0, 1, 1], [], []>} : vector<10x32xf32>, vector<32x10xf32>, vector<10x10xf32> -> vector<10x10xf32>
    %cst_139 = arith.constant 0.176776692 : f32
    %351 = vector.broadcast %cst_139 : f32 to vector<10x10xf32>
    %352 = arith.mulf %350, %351 : vector<10x10xf32>
    %353 = arith.addf %352, %0 : vector<10x10xf32>
    %cst_140 = arith.constant dense<0xFF800000> : vector<10xf32>
    %354 = vector.multi_reduction <maximumf>, %353, %cst_140 [1] : vector<10x10xf32> to vector<10xf32>
    %355 = vector.shape_cast %354 : vector<10xf32> to vector<10x1xf32>
    %356 = vector.broadcast %355 : vector<10x1xf32> to vector<10x10xf32>
    %357 = arith.subf %353, %356 : vector<10x10xf32>
    %358 = math.exp %357 : vector<10x10xf32>
    %cst_141 = arith.constant dense<0.000000e+00> : vector<10xf32>
    %359 = vector.multi_reduction <add>, %358, %cst_141 [1] : vector<10x10xf32> to vector<10xf32>
    %360 = vector.shape_cast %359 : vector<10xf32> to vector<10x1xf32>
    %361 = vector.broadcast %360 : vector<10x1xf32> to vector<10x10xf32>
    %362 = arith.divf %358, %361 : vector<10x10xf32>
    %cst_142 = arith.constant dense<0.000000e+00> : vector<10x32xf32>
    %363 = tpu.matmul %362, %348, %cst_142 {dimension_numbers = #tpu.dot_dimension_numbers<[1], [0], [0], [1], [0, 0, 1, 1], [], []>} : vector<10x10xf32>, vector<10x32xf32>, vector<10x32xf32> -> vector<10x32xf32>
    %364 = vector.extract_strided_slice %327 {offsets = [0, 64], sizes = [10, 32], strides = [1, 1]} : vector<10x384xf32> to vector<10x32xf32>
    %365 = vector.extract_strided_slice %327 {offsets = [0, 192], sizes = [10, 32], strides = [1, 1]} : vector<10x384xf32> to vector<10x32xf32>
    %366 = vector.extract_strided_slice %327 {offsets = [0, 320], sizes = [10, 32], strides = [1, 1]} : vector<10x384xf32> to vector<10x32xf32>
    %367 = tpu.transpose %365, [1, 0] : vector<10x32xf32> -> vector<32x10xf32>
    %cst_143 = arith.constant dense<0.000000e+00> : vector<10x10xf32>
    %368 = tpu.matmul %364, %367, %cst_143 {dimension_numbers = #tpu.dot_dimension_numbers<[1], [0], [0], [1], [0, 0, 1, 1], [], []>} : vector<10x32xf32>, vector<32x10xf32>, vector<10x10xf32> -> vector<10x10xf32>
    %cst_144 = arith.constant 0.176776692 : f32
    %369 = vector.broadcast %cst_144 : f32 to vector<10x10xf32>
    %370 = arith.mulf %368, %369 : vector<10x10xf32>
    %371 = arith.addf %370, %0 : vector<10x10xf32>
    %cst_145 = arith.constant dense<0xFF800000> : vector<10xf32>
    %372 = vector.multi_reduction <maximumf>, %371, %cst_145 [1] : vector<10x10xf32> to vector<10xf32>
    %373 = vector.shape_cast %372 : vector<10xf32> to vector<10x1xf32>
    %374 = vector.broadcast %373 : vector<10x1xf32> to vector<10x10xf32>
    %375 = arith.subf %371, %374 : vector<10x10xf32>
    %376 = math.exp %375 : vector<10x10xf32>
    %cst_146 = arith.constant dense<0.000000e+00> : vector<10xf32>
    %377 = vector.multi_reduction <add>, %376, %cst_146 [1] : vector<10x10xf32> to vector<10xf32>
    %378 = vector.shape_cast %377 : vector<10xf32> to vector<10x1xf32>
    %379 = vector.broadcast %378 : vector<10x1xf32> to vector<10x10xf32>
    %380 = arith.divf %376, %379 : vector<10x10xf32>
    %cst_147 = arith.constant dense<0.000000e+00> : vector<10x32xf32>
    %381 = tpu.matmul %380, %366, %cst_147 {dimension_numbers = #tpu.dot_dimension_numbers<[1], [0], [0], [1], [0, 0, 1, 1], [], []>} : vector<10x10xf32>, vector<10x32xf32>, vector<10x32xf32> -> vector<10x32xf32>
    %382 = vector.extract_strided_slice %327 {offsets = [0, 96], sizes = [10, 32], strides = [1, 1]} : vector<10x384xf32> to vector<10x32xf32>
    %383 = vector.extract_strided_slice %327 {offsets = [0, 224], sizes = [10, 32], strides = [1, 1]} : vector<10x384xf32> to vector<10x32xf32>
    %384 = vector.extract_strided_slice %327 {offsets = [0, 352], sizes = [10, 32], strides = [1, 1]} : vector<10x384xf32> to vector<10x32xf32>
    %385 = tpu.transpose %383, [1, 0] : vector<10x32xf32> -> vector<32x10xf32>
    %cst_148 = arith.constant dense<0.000000e+00> : vector<10x10xf32>
    %386 = tpu.matmul %382, %385, %cst_148 {dimension_numbers = #tpu.dot_dimension_numbers<[1], [0], [0], [1], [0, 0, 1, 1], [], []>} : vector<10x32xf32>, vector<32x10xf32>, vector<10x10xf32> -> vector<10x10xf32>
    %cst_149 = arith.constant 0.176776692 : f32
    %387 = vector.broadcast %cst_149 : f32 to vector<10x10xf32>
    %388 = arith.mulf %386, %387 : vector<10x10xf32>
    %389 = arith.addf %388, %0 : vector<10x10xf32>
    %cst_150 = arith.constant dense<0xFF800000> : vector<10xf32>
    %390 = vector.multi_reduction <maximumf>, %389, %cst_150 [1] : vector<10x10xf32> to vector<10xf32>
    %391 = vector.shape_cast %390 : vector<10xf32> to vector<10x1xf32>
    %392 = vector.broadcast %391 : vector<10x1xf32> to vector<10x10xf32>
    %393 = arith.subf %389, %392 : vector<10x10xf32>
    %394 = math.exp %393 : vector<10x10xf32>
    %cst_151 = arith.constant dense<0.000000e+00> : vector<10xf32>
    %395 = vector.multi_reduction <add>, %394, %cst_151 [1] : vector<10x10xf32> to vector<10xf32>
    %396 = vector.shape_cast %395 : vector<10xf32> to vector<10x1xf32>
    %397 = vector.broadcast %396 : vector<10x1xf32> to vector<10x10xf32>
    %398 = arith.divf %394, %397 : vector<10x10xf32>
    %cst_152 = arith.constant dense<0.000000e+00> : vector<10x32xf32>
    %399 = tpu.matmul %398, %384, %cst_152 {dimension_numbers = #tpu.dot_dimension_numbers<[1], [0], [0], [1], [0, 0, 1, 1], [], []>} : vector<10x10xf32>, vector<10x32xf32>, vector<10x32xf32> -> vector<10x32xf32>
    %400 = tpu.concatenate %345, %363, %381, %399 in 1 : vector<10x32xf32>, vector<10x32xf32>, vector<10x32xf32>, vector<10x32xf32> -> vector<10x128xf32>
    %401 = arith.truncf %400 : vector<10x128xf32> to vector<10x128xbf16>
    %c0_153 = arith.constant 0 : index
    %c0_154 = arith.constant 0 : index
    %402 = vector.load %arg25[%c0_153, %c0_154] : memref<128x128xbf16, #tpu.memory_space<vmem>>, vector<128x128xbf16>
    %cst_155 = arith.constant dense<0.000000e+00> : vector<10x128xf32>
    %403 = tpu.matmul %401, %402, %cst_155 {dimension_numbers = #tpu.dot_dimension_numbers<[1], [0], [0], [1], [0, 0, 1, 1], [], []>} : vector<10x128xbf16>, vector<128x128xbf16>, vector<10x128xf32> -> vector<10x128xf32>
    %c0_156 = arith.constant 0 : index
    %c0_157 = arith.constant 0 : index
    %404 = vector.load %arg26[%c0_156, %c0_157] : memref<1x128xf32, #tpu.memory_space<vmem>>, vector<1x128xf32>
    %405 = vector.broadcast %404 : vector<1x128xf32> to vector<10x128xf32>
    %406 = arith.addf %403, %405 : vector<10x128xf32>
    %407 = arith.addf %305, %406 : vector<10x128xf32>
    %cst_158 = arith.constant dense<0.000000e+00> : vector<10xf32>
    %408 = vector.multi_reduction <add>, %407, %cst_158 [1] : vector<10x128xf32> to vector<10xf32>
    %409 = vector.shape_cast %408 : vector<10xf32> to vector<10x1xf32>
    %cst_159 = arith.constant 1.280000e+02 : f32
    %410 = vector.broadcast %cst_159 : f32 to vector<10x1xf32>
    %411 = arith.divf %409, %410 : vector<10x1xf32>
    %412 = vector.broadcast %411 : vector<10x1xf32> to vector<10x128xf32>
    %413 = arith.subf %407, %412 : vector<10x128xf32>
    %414 = arith.mulf %413, %413 : vector<10x128xf32>
    %cst_160 = arith.constant dense<0.000000e+00> : vector<10xf32>
    %415 = vector.multi_reduction <add>, %414, %cst_160 [1] : vector<10x128xf32> to vector<10xf32>
    %416 = vector.shape_cast %415 : vector<10xf32> to vector<10x1xf32>
    %cst_161 = arith.constant 1.280000e+02 : f32
    %417 = vector.broadcast %cst_161 : f32 to vector<10x1xf32>
    %418 = arith.divf %416, %417 : vector<10x1xf32>
    %cst_162 = arith.constant 9.99999997E-7 : f32
    %419 = vector.broadcast %cst_162 : f32 to vector<10x1xf32>
    %420 = arith.addf %418, %419 : vector<10x1xf32>
    %421 = math.rsqrt %420 : vector<10x1xf32>
    %422 = vector.broadcast %421 : vector<10x1xf32> to vector<10x128xf32>
    %423 = arith.mulf %413, %422 : vector<10x128xf32>
    %424 = arith.truncf %423 : vector<10x128xf32> to vector<10x128xbf16>
    %c0_163 = arith.constant 0 : index
    %c0_164 = arith.constant 0 : index
    %425 = vector.load %arg27[%c0_163, %c0_164] : memref<128x512xbf16, #tpu.memory_space<vmem>>, vector<128x512xbf16>
    %cst_165 = arith.constant dense<0.000000e+00> : vector<10x512xf32>
    %426 = tpu.matmul %424, %425, %cst_165 {dimension_numbers = #tpu.dot_dimension_numbers<[1], [0], [0], [1], [0, 0, 1, 1], [], []>} : vector<10x128xbf16>, vector<128x512xbf16>, vector<10x512xf32> -> vector<10x512xf32>
    %c0_166 = arith.constant 0 : index
    %c0_167 = arith.constant 0 : index
    %427 = vector.load %arg28[%c0_166, %c0_167] : memref<1x512xf32, #tpu.memory_space<vmem>>, vector<1x512xf32>
    %428 = vector.broadcast %427 : vector<1x512xf32> to vector<10x512xf32>
    %429 = arith.addf %426, %428 : vector<10x512xf32>
    %cst_168 = arith.constant 5.000000e-01 : f32
    %430 = vector.broadcast %cst_168 : f32 to vector<10x512xf32>
    %431 = arith.mulf %430, %429 : vector<10x512xf32>
    %cst_169 = arith.constant 0.707106769 : f32
    %432 = vector.broadcast %cst_169 : f32 to vector<10x512xf32>
    %433 = arith.mulf %429, %432 : vector<10x512xf32>
    %434 = math.erf %433 : vector<10x512xf32>
    %cst_170 = arith.constant 1.000000e+00 : f32
    %435 = vector.broadcast %cst_170 : f32 to vector<10x512xf32>
    %436 = arith.addf %435, %434 : vector<10x512xf32>
    %437 = arith.mulf %431, %436 : vector<10x512xf32>
    %438 = arith.truncf %437 : vector<10x512xf32> to vector<10x512xbf16>
    %c0_171 = arith.constant 0 : index
    %c0_172 = arith.constant 0 : index
    %439 = vector.load %arg29[%c0_171, %c0_172] : memref<512x128xbf16, #tpu.memory_space<vmem>>, vector<512x128xbf16>
    %cst_173 = arith.constant dense<0.000000e+00> : vector<10x128xf32>
    %440 = tpu.matmul %438, %439, %cst_173 {dimension_numbers = #tpu.dot_dimension_numbers<[1], [0], [0], [1], [0, 0, 1, 1], [], []>} : vector<10x512xbf16>, vector<512x128xbf16>, vector<10x128xf32> -> vector<10x128xf32>
    %c0_174 = arith.constant 0 : index
    %c0_175 = arith.constant 0 : index
    %441 = vector.load %arg30[%c0_174, %c0_175] : memref<1x128xf32, #tpu.memory_space<vmem>>, vector<1x128xf32>
    %442 = vector.broadcast %441 : vector<1x128xf32> to vector<10x128xf32>
    %443 = arith.addf %440, %442 : vector<10x128xf32>
    %444 = arith.addf %407, %443 : vector<10x128xf32>
    %cst_176 = arith.constant dense<0.000000e+00> : vector<10xf32>
    %445 = vector.multi_reduction <add>, %444, %cst_176 [1] : vector<10x128xf32> to vector<10xf32>
    %446 = vector.shape_cast %445 : vector<10xf32> to vector<10x1xf32>
    %cst_177 = arith.constant 1.280000e+02 : f32
    %447 = vector.broadcast %cst_177 : f32 to vector<10x1xf32>
    %448 = arith.divf %446, %447 : vector<10x1xf32>
    %449 = vector.broadcast %448 : vector<10x1xf32> to vector<10x128xf32>
    %450 = arith.subf %444, %449 : vector<10x128xf32>
    %451 = arith.mulf %450, %450 : vector<10x128xf32>
    %cst_178 = arith.constant dense<0.000000e+00> : vector<10xf32>
    %452 = vector.multi_reduction <add>, %451, %cst_178 [1] : vector<10x128xf32> to vector<10xf32>
    %453 = vector.shape_cast %452 : vector<10xf32> to vector<10x1xf32>
    %cst_179 = arith.constant 1.280000e+02 : f32
    %454 = vector.broadcast %cst_179 : f32 to vector<10x1xf32>
    %455 = arith.divf %453, %454 : vector<10x1xf32>
    %cst_180 = arith.constant 9.99999997E-7 : f32
    %456 = vector.broadcast %cst_180 : f32 to vector<10x1xf32>
    %457 = arith.addf %455, %456 : vector<10x1xf32>
    %458 = math.rsqrt %457 : vector<10x1xf32>
    %459 = vector.broadcast %458 : vector<10x1xf32> to vector<10x128xf32>
    %460 = arith.mulf %450, %459 : vector<10x128xf32>
    %461 = arith.truncf %460 : vector<10x128xf32> to vector<10x128xbf16>
    %c0_181 = arith.constant 0 : index
    %c0_182 = arith.constant 0 : index
    %462 = vector.load %arg31[%c0_181, %c0_182] : memref<128x384xbf16, #tpu.memory_space<vmem>>, vector<128x384xbf16>
    %cst_183 = arith.constant dense<0.000000e+00> : vector<10x384xf32>
    %463 = tpu.matmul %461, %462, %cst_183 {dimension_numbers = #tpu.dot_dimension_numbers<[1], [0], [0], [1], [0, 0, 1, 1], [], []>} : vector<10x128xbf16>, vector<128x384xbf16>, vector<10x384xf32> -> vector<10x384xf32>
    %c0_184 = arith.constant 0 : index
    %c0_185 = arith.constant 0 : index
    %464 = vector.load %arg32[%c0_184, %c0_185] : memref<1x384xf32, #tpu.memory_space<vmem>>, vector<1x384xf32>
    %465 = vector.broadcast %464 : vector<1x384xf32> to vector<10x384xf32>
    %466 = arith.addf %463, %465 : vector<10x384xf32>
    %467 = vector.extract_strided_slice %466 {offsets = [0, 0], sizes = [10, 32], strides = [1, 1]} : vector<10x384xf32> to vector<10x32xf32>
    %468 = vector.extract_strided_slice %466 {offsets = [0, 128], sizes = [10, 32], strides = [1, 1]} : vector<10x384xf32> to vector<10x32xf32>
    %469 = vector.extract_strided_slice %466 {offsets = [0, 256], sizes = [10, 32], strides = [1, 1]} : vector<10x384xf32> to vector<10x32xf32>
    %470 = tpu.transpose %468, [1, 0] : vector<10x32xf32> -> vector<32x10xf32>
    %cst_186 = arith.constant dense<0.000000e+00> : vector<10x10xf32>
    %471 = tpu.matmul %467, %470, %cst_186 {dimension_numbers = #tpu.dot_dimension_numbers<[1], [0], [0], [1], [0, 0, 1, 1], [], []>} : vector<10x32xf32>, vector<32x10xf32>, vector<10x10xf32> -> vector<10x10xf32>
    %cst_187 = arith.constant 0.176776692 : f32
    %472 = vector.broadcast %cst_187 : f32 to vector<10x10xf32>
    %473 = arith.mulf %471, %472 : vector<10x10xf32>
    %474 = arith.addf %473, %0 : vector<10x10xf32>
    %cst_188 = arith.constant dense<0xFF800000> : vector<10xf32>
    %475 = vector.multi_reduction <maximumf>, %474, %cst_188 [1] : vector<10x10xf32> to vector<10xf32>
    %476 = vector.shape_cast %475 : vector<10xf32> to vector<10x1xf32>
    %477 = vector.broadcast %476 : vector<10x1xf32> to vector<10x10xf32>
    %478 = arith.subf %474, %477 : vector<10x10xf32>
    %479 = math.exp %478 : vector<10x10xf32>
    %cst_189 = arith.constant dense<0.000000e+00> : vector<10xf32>
    %480 = vector.multi_reduction <add>, %479, %cst_189 [1] : vector<10x10xf32> to vector<10xf32>
    %481 = vector.shape_cast %480 : vector<10xf32> to vector<10x1xf32>
    %482 = vector.broadcast %481 : vector<10x1xf32> to vector<10x10xf32>
    %483 = arith.divf %479, %482 : vector<10x10xf32>
    %cst_190 = arith.constant dense<0.000000e+00> : vector<10x32xf32>
    %484 = tpu.matmul %483, %469, %cst_190 {dimension_numbers = #tpu.dot_dimension_numbers<[1], [0], [0], [1], [0, 0, 1, 1], [], []>} : vector<10x10xf32>, vector<10x32xf32>, vector<10x32xf32> -> vector<10x32xf32>
    %485 = vector.extract_strided_slice %466 {offsets = [0, 32], sizes = [10, 32], strides = [1, 1]} : vector<10x384xf32> to vector<10x32xf32>
    %486 = vector.extract_strided_slice %466 {offsets = [0, 160], sizes = [10, 32], strides = [1, 1]} : vector<10x384xf32> to vector<10x32xf32>
    %487 = vector.extract_strided_slice %466 {offsets = [0, 288], sizes = [10, 32], strides = [1, 1]} : vector<10x384xf32> to vector<10x32xf32>
    %488 = tpu.transpose %486, [1, 0] : vector<10x32xf32> -> vector<32x10xf32>
    %cst_191 = arith.constant dense<0.000000e+00> : vector<10x10xf32>
    %489 = tpu.matmul %485, %488, %cst_191 {dimension_numbers = #tpu.dot_dimension_numbers<[1], [0], [0], [1], [0, 0, 1, 1], [], []>} : vector<10x32xf32>, vector<32x10xf32>, vector<10x10xf32> -> vector<10x10xf32>
    %cst_192 = arith.constant 0.176776692 : f32
    %490 = vector.broadcast %cst_192 : f32 to vector<10x10xf32>
    %491 = arith.mulf %489, %490 : vector<10x10xf32>
    %492 = arith.addf %491, %0 : vector<10x10xf32>
    %cst_193 = arith.constant dense<0xFF800000> : vector<10xf32>
    %493 = vector.multi_reduction <maximumf>, %492, %cst_193 [1] : vector<10x10xf32> to vector<10xf32>
    %494 = vector.shape_cast %493 : vector<10xf32> to vector<10x1xf32>
    %495 = vector.broadcast %494 : vector<10x1xf32> to vector<10x10xf32>
    %496 = arith.subf %492, %495 : vector<10x10xf32>
    %497 = math.exp %496 : vector<10x10xf32>
    %cst_194 = arith.constant dense<0.000000e+00> : vector<10xf32>
    %498 = vector.multi_reduction <add>, %497, %cst_194 [1] : vector<10x10xf32> to vector<10xf32>
    %499 = vector.shape_cast %498 : vector<10xf32> to vector<10x1xf32>
    %500 = vector.broadcast %499 : vector<10x1xf32> to vector<10x10xf32>
    %501 = arith.divf %497, %500 : vector<10x10xf32>
    %cst_195 = arith.constant dense<0.000000e+00> : vector<10x32xf32>
    %502 = tpu.matmul %501, %487, %cst_195 {dimension_numbers = #tpu.dot_dimension_numbers<[1], [0], [0], [1], [0, 0, 1, 1], [], []>} : vector<10x10xf32>, vector<10x32xf32>, vector<10x32xf32> -> vector<10x32xf32>
    %503 = vector.extract_strided_slice %466 {offsets = [0, 64], sizes = [10, 32], strides = [1, 1]} : vector<10x384xf32> to vector<10x32xf32>
    %504 = vector.extract_strided_slice %466 {offsets = [0, 192], sizes = [10, 32], strides = [1, 1]} : vector<10x384xf32> to vector<10x32xf32>
    %505 = vector.extract_strided_slice %466 {offsets = [0, 320], sizes = [10, 32], strides = [1, 1]} : vector<10x384xf32> to vector<10x32xf32>
    %506 = tpu.transpose %504, [1, 0] : vector<10x32xf32> -> vector<32x10xf32>
    %cst_196 = arith.constant dense<0.000000e+00> : vector<10x10xf32>
    %507 = tpu.matmul %503, %506, %cst_196 {dimension_numbers = #tpu.dot_dimension_numbers<[1], [0], [0], [1], [0, 0, 1, 1], [], []>} : vector<10x32xf32>, vector<32x10xf32>, vector<10x10xf32> -> vector<10x10xf32>
    %cst_197 = arith.constant 0.176776692 : f32
    %508 = vector.broadcast %cst_197 : f32 to vector<10x10xf32>
    %509 = arith.mulf %507, %508 : vector<10x10xf32>
    %510 = arith.addf %509, %0 : vector<10x10xf32>
    %cst_198 = arith.constant dense<0xFF800000> : vector<10xf32>
    %511 = vector.multi_reduction <maximumf>, %510, %cst_198 [1] : vector<10x10xf32> to vector<10xf32>
    %512 = vector.shape_cast %511 : vector<10xf32> to vector<10x1xf32>
    %513 = vector.broadcast %512 : vector<10x1xf32> to vector<10x10xf32>
    %514 = arith.subf %510, %513 : vector<10x10xf32>
    %515 = math.exp %514 : vector<10x10xf32>
    %cst_199 = arith.constant dense<0.000000e+00> : vector<10xf32>
    %516 = vector.multi_reduction <add>, %515, %cst_199 [1] : vector<10x10xf32> to vector<10xf32>
    %517 = vector.shape_cast %516 : vector<10xf32> to vector<10x1xf32>
    %518 = vector.broadcast %517 : vector<10x1xf32> to vector<10x10xf32>
    %519 = arith.divf %515, %518 : vector<10x10xf32>
    %cst_200 = arith.constant dense<0.000000e+00> : vector<10x32xf32>
    %520 = tpu.matmul %519, %505, %cst_200 {dimension_numbers = #tpu.dot_dimension_numbers<[1], [0], [0], [1], [0, 0, 1, 1], [], []>} : vector<10x10xf32>, vector<10x32xf32>, vector<10x32xf32> -> vector<10x32xf32>
    %521 = vector.extract_strided_slice %466 {offsets = [0, 96], sizes = [10, 32], strides = [1, 1]} : vector<10x384xf32> to vector<10x32xf32>
    %522 = vector.extract_strided_slice %466 {offsets = [0, 224], sizes = [10, 32], strides = [1, 1]} : vector<10x384xf32> to vector<10x32xf32>
    %523 = vector.extract_strided_slice %466 {offsets = [0, 352], sizes = [10, 32], strides = [1, 1]} : vector<10x384xf32> to vector<10x32xf32>
    %524 = tpu.transpose %522, [1, 0] : vector<10x32xf32> -> vector<32x10xf32>
    %cst_201 = arith.constant dense<0.000000e+00> : vector<10x10xf32>
    %525 = tpu.matmul %521, %524, %cst_201 {dimension_numbers = #tpu.dot_dimension_numbers<[1], [0], [0], [1], [0, 0, 1, 1], [], []>} : vector<10x32xf32>, vector<32x10xf32>, vector<10x10xf32> -> vector<10x10xf32>
    %cst_202 = arith.constant 0.176776692 : f32
    %526 = vector.broadcast %cst_202 : f32 to vector<10x10xf32>
    %527 = arith.mulf %525, %526 : vector<10x10xf32>
    %528 = arith.addf %527, %0 : vector<10x10xf32>
    %cst_203 = arith.constant dense<0xFF800000> : vector<10xf32>
    %529 = vector.multi_reduction <maximumf>, %528, %cst_203 [1] : vector<10x10xf32> to vector<10xf32>
    %530 = vector.shape_cast %529 : vector<10xf32> to vector<10x1xf32>
    %531 = vector.broadcast %530 : vector<10x1xf32> to vector<10x10xf32>
    %532 = arith.subf %528, %531 : vector<10x10xf32>
    %533 = math.exp %532 : vector<10x10xf32>
    %cst_204 = arith.constant dense<0.000000e+00> : vector<10xf32>
    %534 = vector.multi_reduction <add>, %533, %cst_204 [1] : vector<10x10xf32> to vector<10xf32>
    %535 = vector.shape_cast %534 : vector<10xf32> to vector<10x1xf32>
    %536 = vector.broadcast %535 : vector<10x1xf32> to vector<10x10xf32>
    %537 = arith.divf %533, %536 : vector<10x10xf32>
    %cst_205 = arith.constant dense<0.000000e+00> : vector<10x32xf32>
    %538 = tpu.matmul %537, %523, %cst_205 {dimension_numbers = #tpu.dot_dimension_numbers<[1], [0], [0], [1], [0, 0, 1, 1], [], []>} : vector<10x10xf32>, vector<10x32xf32>, vector<10x32xf32> -> vector<10x32xf32>
    %539 = tpu.concatenate %484, %502, %520, %538 in 1 : vector<10x32xf32>, vector<10x32xf32>, vector<10x32xf32>, vector<10x32xf32> -> vector<10x128xf32>
    %540 = arith.truncf %539 : vector<10x128xf32> to vector<10x128xbf16>
    %c0_206 = arith.constant 0 : index
    %c0_207 = arith.constant 0 : index
    %541 = vector.load %arg33[%c0_206, %c0_207] : memref<128x128xbf16, #tpu.memory_space<vmem>>, vector<128x128xbf16>
    %cst_208 = arith.constant dense<0.000000e+00> : vector<10x128xf32>
    %542 = tpu.matmul %540, %541, %cst_208 {dimension_numbers = #tpu.dot_dimension_numbers<[1], [0], [0], [1], [0, 0, 1, 1], [], []>} : vector<10x128xbf16>, vector<128x128xbf16>, vector<10x128xf32> -> vector<10x128xf32>
    %c0_209 = arith.constant 0 : index
    %c0_210 = arith.constant 0 : index
    %543 = vector.load %arg34[%c0_209, %c0_210] : memref<1x128xf32, #tpu.memory_space<vmem>>, vector<1x128xf32>
    %544 = vector.broadcast %543 : vector<1x128xf32> to vector<10x128xf32>
    %545 = arith.addf %542, %544 : vector<10x128xf32>
    %546 = arith.addf %444, %545 : vector<10x128xf32>
    %cst_211 = arith.constant dense<0.000000e+00> : vector<10xf32>
    %547 = vector.multi_reduction <add>, %546, %cst_211 [1] : vector<10x128xf32> to vector<10xf32>
    %548 = vector.shape_cast %547 : vector<10xf32> to vector<10x1xf32>
    %cst_212 = arith.constant 1.280000e+02 : f32
    %549 = vector.broadcast %cst_212 : f32 to vector<10x1xf32>
    %550 = arith.divf %548, %549 : vector<10x1xf32>
    %551 = vector.broadcast %550 : vector<10x1xf32> to vector<10x128xf32>
    %552 = arith.subf %546, %551 : vector<10x128xf32>
    %553 = arith.mulf %552, %552 : vector<10x128xf32>
    %cst_213 = arith.constant dense<0.000000e+00> : vector<10xf32>
    %554 = vector.multi_reduction <add>, %553, %cst_213 [1] : vector<10x128xf32> to vector<10xf32>
    %555 = vector.shape_cast %554 : vector<10xf32> to vector<10x1xf32>
    %cst_214 = arith.constant 1.280000e+02 : f32
    %556 = vector.broadcast %cst_214 : f32 to vector<10x1xf32>
    %557 = arith.divf %555, %556 : vector<10x1xf32>
    %cst_215 = arith.constant 9.99999997E-7 : f32
    %558 = vector.broadcast %cst_215 : f32 to vector<10x1xf32>
    %559 = arith.addf %557, %558 : vector<10x1xf32>
    %560 = math.rsqrt %559 : vector<10x1xf32>
    %561 = vector.broadcast %560 : vector<10x1xf32> to vector<10x128xf32>
    %562 = arith.mulf %552, %561 : vector<10x128xf32>
    %563 = arith.truncf %562 : vector<10x128xf32> to vector<10x128xbf16>
    %c0_216 = arith.constant 0 : index
    %c0_217 = arith.constant 0 : index
    %564 = vector.load %arg35[%c0_216, %c0_217] : memref<128x512xbf16, #tpu.memory_space<vmem>>, vector<128x512xbf16>
    %cst_218 = arith.constant dense<0.000000e+00> : vector<10x512xf32>
    %565 = tpu.matmul %563, %564, %cst_218 {dimension_numbers = #tpu.dot_dimension_numbers<[1], [0], [0], [1], [0, 0, 1, 1], [], []>} : vector<10x128xbf16>, vector<128x512xbf16>, vector<10x512xf32> -> vector<10x512xf32>
    %c0_219 = arith.constant 0 : index
    %c0_220 = arith.constant 0 : index
    %566 = vector.load %arg36[%c0_219, %c0_220] : memref<1x512xf32, #tpu.memory_space<vmem>>, vector<1x512xf32>
    %567 = vector.broadcast %566 : vector<1x512xf32> to vector<10x512xf32>
    %568 = arith.addf %565, %567 : vector<10x512xf32>
    %cst_221 = arith.constant 5.000000e-01 : f32
    %569 = vector.broadcast %cst_221 : f32 to vector<10x512xf32>
    %570 = arith.mulf %569, %568 : vector<10x512xf32>
    %cst_222 = arith.constant 0.707106769 : f32
    %571 = vector.broadcast %cst_222 : f32 to vector<10x512xf32>
    %572 = arith.mulf %568, %571 : vector<10x512xf32>
    %573 = math.erf %572 : vector<10x512xf32>
    %cst_223 = arith.constant 1.000000e+00 : f32
    %574 = vector.broadcast %cst_223 : f32 to vector<10x512xf32>
    %575 = arith.addf %574, %573 : vector<10x512xf32>
    %576 = arith.mulf %570, %575 : vector<10x512xf32>
    %577 = arith.truncf %576 : vector<10x512xf32> to vector<10x512xbf16>
    %c0_224 = arith.constant 0 : index
    %c0_225 = arith.constant 0 : index
    %578 = vector.load %arg37[%c0_224, %c0_225] : memref<512x128xbf16, #tpu.memory_space<vmem>>, vector<512x128xbf16>
    %cst_226 = arith.constant dense<0.000000e+00> : vector<10x128xf32>
    %579 = tpu.matmul %577, %578, %cst_226 {dimension_numbers = #tpu.dot_dimension_numbers<[1], [0], [0], [1], [0, 0, 1, 1], [], []>} : vector<10x512xbf16>, vector<512x128xbf16>, vector<10x128xf32> -> vector<10x128xf32>
    %c0_227 = arith.constant 0 : index
    %c0_228 = arith.constant 0 : index
    %580 = vector.load %arg38[%c0_227, %c0_228] : memref<1x128xf32, #tpu.memory_space<vmem>>, vector<1x128xf32>
    %581 = vector.broadcast %580 : vector<1x128xf32> to vector<10x128xf32>
    %582 = arith.addf %579, %581 : vector<10x128xf32>
    %583 = arith.addf %546, %582 : vector<10x128xf32>
    %cst_229 = arith.constant dense<0.000000e+00> : vector<10xf32>
    %584 = vector.multi_reduction <add>, %583, %cst_229 [1] : vector<10x128xf32> to vector<10xf32>
    %585 = vector.shape_cast %584 : vector<10xf32> to vector<10x1xf32>
    %cst_230 = arith.constant 1.280000e+02 : f32
    %586 = vector.broadcast %cst_230 : f32 to vector<10x1xf32>
    %587 = arith.divf %585, %586 : vector<10x1xf32>
    %588 = vector.broadcast %587 : vector<10x1xf32> to vector<10x128xf32>
    %589 = arith.subf %583, %588 : vector<10x128xf32>
    %590 = arith.mulf %589, %589 : vector<10x128xf32>
    %cst_231 = arith.constant dense<0.000000e+00> : vector<10xf32>
    %591 = vector.multi_reduction <add>, %590, %cst_231 [1] : vector<10x128xf32> to vector<10xf32>
    %592 = vector.shape_cast %591 : vector<10xf32> to vector<10x1xf32>
    %cst_232 = arith.constant 1.280000e+02 : f32
    %593 = vector.broadcast %cst_232 : f32 to vector<10x1xf32>
    %594 = arith.divf %592, %593 : vector<10x1xf32>
    %cst_233 = arith.constant 9.99999997E-7 : f32
    %595 = vector.broadcast %cst_233 : f32 to vector<10x1xf32>
    %596 = arith.addf %594, %595 : vector<10x1xf32>
    %597 = math.rsqrt %596 : vector<10x1xf32>
    %598 = vector.broadcast %597 : vector<10x1xf32> to vector<10x128xf32>
    %599 = arith.mulf %589, %598 : vector<10x128xf32>
    %600 = arith.truncf %599 : vector<10x128xf32> to vector<10x128xbf16>
    %c0_234 = arith.constant 0 : index
    %c0_235 = arith.constant 0 : index
    %601 = vector.load %arg39[%c0_234, %c0_235] : memref<128x512xbf16, #tpu.memory_space<vmem>>, vector<128x512xbf16>
    %cst_236 = arith.constant dense<0.000000e+00> : vector<10x512xf32>
    %602 = tpu.matmul %600, %601, %cst_236 {dimension_numbers = #tpu.dot_dimension_numbers<[1], [0], [0], [1], [0, 0, 1, 1], [], []>} : vector<10x128xbf16>, vector<128x512xbf16>, vector<10x512xf32> -> vector<10x512xf32>
    %c0_237 = arith.constant 0 : index
    %c0_238 = arith.constant 0 : index
    %603 = vector.load %arg40[%c0_237, %c0_238] : memref<1x512xf32, #tpu.memory_space<vmem>>, vector<1x512xf32>
    %604 = vector.broadcast %603 : vector<1x512xf32> to vector<10x512xf32>
    %605 = arith.addf %602, %604 : vector<10x512xf32>
    %c0_239 = arith.constant 0 : index
    %c0_240 = arith.constant 0 : index
    %606 = vector.load %arg41[%c0_239, %c0_240] : memref<10x512xf32, #tpu.memory_space<vmem>>, vector<10x512xf32>
    tpu.vector_store %arg41[%c0_239, %c0_240], %605 {strides = array<i32>} : memref<10x512xf32, #tpu.memory_space<vmem>>, vector<10x512xf32>,
    return
  }
  func.func @transform_0(%arg0: i32) -> (i32, i32) {
    %c0_i32 = arith.constant 0 : i32
    %c0_i32_0 = arith.constant 0 : i32
    %c0_i32_1 = arith.constant 0 : i32
    return %c0_i32, %c0_i32_0 : i32, i32
  }
  func.func @transform_1(%arg0: i32) -> (i32, i32) {
    %c0_i32 = arith.constant 0 : i32
    %c0_i32_0 = arith.constant 0 : i32
    %c0_i32_1 = arith.constant 0 : i32
    return %c0_i32, %c0_i32_0 : i32, i32
  }
  func.func @transform_2(%arg0: i32) -> (i32, i32) {
    %c0_i32 = arith.constant 0 : i32
    %c0_i32_0 = arith.constant 0 : i32
    %c0_i32_1 = arith.constant 0 : i32
    return %c0_i32, %c0_i32_0 : i32, i32
  }
  func.func @transform_3(%arg0: i32) -> (i32, i32) {
    %c0_i32 = arith.constant 0 : i32
    %c0_i32_0 = arith.constant 0 : i32
    %c0_i32_1 = arith.constant 0 : i32
    return %c0_i32, %c0_i32_0 : i32, i32
  }
  func.func @transform_4(%arg0: i32) -> (i32, i32) {
    %c0_i32 = arith.constant 0 : i32
    %c0_i32_0 = arith.constant 0 : i32
    %c0_i32_1 = arith.constant 0 : i32
    return %c0_i32, %c0_i32_0 : i32, i32
  }
  func.func @transform_5(%arg0: i32) -> (i32, i32) {
    %c0_i32 = arith.constant 0 : i32
    %c0_i32_0 = arith.constant 0 : i32
    %c0_i32_1 = arith.constant 0 : i32
    return %c0_i32, %c0_i32_0 : i32, i32
  }
  func.func @transform_6(%arg0: i32) -> (i32, i32) {
    %c0_i32 = arith.constant 0 : i32
    %c0_i32_0 = arith.constant 0 : i32
    %c0_i32_1 = arith.constant 0 : i32
    return %c0_i32, %c0_i32_0 : i32, i32
  }
  func.func @transform_7(%arg0: i32) -> (i32, i32) {
    %c0_i32 = arith.constant 0 : i32
    %c0_i32_0 = arith.constant 0 : i32
    %c0_i32_1 = arith.constant 0 : i32
    return %c0_i32, %c0_i32_0 : i32, i32
  }
  func.func @transform_8(%arg0: i32) -> (i32, i32) {
    %c0_i32 = arith.constant 0 : i32
    %c0_i32_0 = arith.constant 0 : i32
    %c0_i32_1 = arith.constant 0 : i32
    return %c0_i32, %c0_i32_0 : i32, i32
  }
  func.func @transform_9(%arg0: i32) -> (i32, i32) {
    %c0_i32 = arith.constant 0 : i32
    %c0_i32_0 = arith.constant 0 : i32
    %c0_i32_1 = arith.constant 0 : i32
    return %c0_i32, %c0_i32_0 : i32, i32
  }
  func.func @transform_10(%arg0: i32) -> (i32, i32) {
    %c0_i32 = arith.constant 0 : i32
    %c0_i32_0 = arith.constant 0 : i32
    %c0_i32_1 = arith.constant 0 : i32
    return %c0_i32, %c0_i32_0 : i32, i32
  }
  func.func @transform_11(%arg0: i32) -> (i32, i32) {
    %c0_i32 = arith.constant 0 : i32
    %c0_i32_0 = arith.constant 0 : i32
    %c0_i32_1 = arith.constant 0 : i32
    return %c0_i32, %c0_i32_0 : i32, i32
  }
  func.func @transform_12(%arg0: i32) -> (i32, i32) {
    %c0_i32 = arith.constant 0 : i32
    %c0_i32_0 = arith.constant 0 : i32
    %c0_i32_1 = arith.constant 0 : i32
    return %c0_i32, %c0_i32_0 : i32, i32
  }
  func.func @transform_13(%arg0: i32) -> (i32, i32) {
    %c0_i32 = arith.constant 0 : i32
    %c0_i32_0 = arith.constant 0 : i32
    %c0_i32_1 = arith.constant 0 : i32
    return %c0_i32, %c0_i32_0 : i32, i32
  }
  func.func @transform_14(%arg0: i32) -> (i32, i32) {
    %c0_i32 = arith.constant 0 : i32
    %c0_i32_0 = arith.constant 0 : i32
    %c0_i32_1 = arith.constant 0 : i32
    return %c0_i32, %c0_i32_0 : i32, i32
  }
  func.func @transform_15(%arg0: i32) -> (i32, i32) {
    %c0_i32 = arith.constant 0 : i32
    %c0_i32_0 = arith.constant 0 : i32
    %c0_i32_1 = arith.constant 0 : i32
    return %c0_i32, %c0_i32_0 : i32, i32
  }
  func.func @transform_16(%arg0: i32) -> (i32, i32) {
    %c0_i32 = arith.constant 0 : i32
    %c0_i32_0 = arith.constant 0 : i32
    %c0_i32_1 = arith.constant 0 : i32
    return %c0_i32, %c0_i32_0 : i32, i32
  }
  func.func @transform_17(%arg0: i32) -> (i32, i32) {
    %c0_i32 = arith.constant 0 : i32
    %c0_i32_0 = arith.constant 0 : i32
    %c0_i32_1 = arith.constant 0 : i32
    return %c0_i32, %c0_i32_0 : i32, i32
  }
  func.func @transform_18(%arg0: i32) -> (i32, i32) {
    %c0_i32 = arith.constant 0 : i32
    %c0_i32_0 = arith.constant 0 : i32
    %c0_i32_1 = arith.constant 0 : i32
    return %c0_i32, %c0_i32_0 : i32, i32
  }
  func.func @transform_19(%arg0: i32) -> (i32, i32) {
    %c0_i32 = arith.constant 0 : i32
    %c0_i32_0 = arith.constant 0 : i32
    %c0_i32_1 = arith.constant 0 : i32
    return %c0_i32, %c0_i32_0 : i32, i32
  }
  func.func @transform_20(%arg0: i32) -> (i32, i32) {
    %c0_i32 = arith.constant 0 : i32
    %c0_i32_0 = arith.constant 0 : i32
    %c0_i32_1 = arith.constant 0 : i32
    return %c0_i32, %c0_i32_0 : i32, i32
  }
  func.func @transform_21(%arg0: i32) -> (i32, i32) {
    %c0_i32 = arith.constant 0 : i32
    %c0_i32_0 = arith.constant 0 : i32
    %c0_i32_1 = arith.constant 0 : i32
    return %c0_i32, %c0_i32_0 : i32, i32
  }
  func.func @transform_22(%arg0: i32) -> (i32, i32) {
    %c0_i32 = arith.constant 0 : i32
    %c0_i32_0 = arith.constant 0 : i32
    %c0_i32_1 = arith.constant 0 : i32
    return %c0_i32, %c0_i32_0 : i32, i32
  }
  func.func @transform_23(%arg0: i32) -> (i32, i32) {
    %c0_i32 = arith.constant 0 : i32
    %c0_i32_0 = arith.constant 0 : i32
    %c0_i32_1 = arith.constant 0 : i32
    return %c0_i32, %c0_i32_0 : i32, i32
  }
  func.func @transform_24(%arg0: i32) -> (i32, i32) {
    %c0_i32 = arith.constant 0 : i32
    %c0_i32_0 = arith.constant 0 : i32
    %c0_i32_1 = arith.constant 0 : i32
    return %c0_i32, %c0_i32_0 : i32, i32
  }
  func.func @transform_25(%arg0: i32) -> (i32, i32) {
    %c0_i32 = arith.constant 0 : i32
    %c0_i32_0 = arith.constant 0 : i32
    %c0_i32_1 = arith.constant 0 : i32
    return %c0_i32, %c0_i32_0 : i32, i32
  }
  func.func @transform_26(%arg0: i32) -> (i32, i32) {
    %c0_i32 = arith.constant 0 : i32
    %c0_i32_0 = arith.constant 0 : i32
    %c0_i32_1 = arith.constant 0 : i32
    return %c0_i32, %c0_i32_0 : i32, i32
  }
  func.func @transform_27(%arg0: i32) -> (i32, i32) {
    %c0_i32 = arith.constant 0 : i32
    %c0_i32_0 = arith.constant 0 : i32
    %c0_i32_1 = arith.constant 0 : i32
    return %c0_i32, %c0_i32_0 : i32, i32
  }
  func.func @transform_28(%arg0: i32) -> (i32, i32) {
    %c0_i32 = arith.constant 0 : i32
    %c0_i32_0 = arith.constant 0 : i32
    %c0_i32_1 = arith.constant 0 : i32
    return %c0_i32, %c0_i32_0 : i32, i32
  }
  func.func @transform_29(%arg0: i32) -> (i32, i32) {
    %c0_i32 = arith.constant 0 : i32
    %c0_i32_0 = arith.constant 0 : i32
    %c0_i32_1 = arith.constant 0 : i32
    return %c0_i32, %c0_i32_0 : i32, i32
  }
  func.func @transform_30(%arg0: i32) -> (i32, i32) {
    %c0_i32 = arith.constant 0 : i32
    %c0_i32_0 = arith.constant 0 : i32
    %c0_i32_1 = arith.constant 0 : i32
    return %c0_i32, %c0_i32_0 : i32, i32
  }
  func.func @transform_31(%arg0: i32) -> (i32, i32) {
    %c0_i32 = arith.constant 0 : i32
    %c0_i32_0 = arith.constant 0 : i32
    %c0_i32_1 = arith.constant 0 : i32
    return %c0_i32, %c0_i32_0 : i32, i32
  }
  func.func @transform_32(%arg0: i32) -> (i32, i32) {
    %c0_i32 = arith.constant 0 : i32
    %c0_i32_0 = arith.constant 0 : i32
    %c0_i32_1 = arith.constant 0 : i32
    return %c0_i32, %c0_i32_0 : i32, i32
  }
  func.func @transform_33(%arg0: i32) -> (i32, i32) {
    %c0_i32 = arith.constant 0 : i32
    %c0_i32_0 = arith.constant 0 : i32
    %c0_i32_1 = arith.constant 0 : i32
    return %c0_i32, %c0_i32_0 : i32, i32
  }
  func.func @transform_34(%arg0: i32) -> (i32, i32) {
    %c0_i32 = arith.constant 0 : i32
    %c0_i32_0 = arith.constant 0 : i32
    %c0_i32_1 = arith.constant 0 : i32
    return %c0_i32, %c0_i32_0 : i32, i32
  }
  func.func @transform_35(%arg0: i32) -> (i32, i32) {
    %c0_i32 = arith.constant 0 : i32
    %c0_i32_0 = arith.constant 0 : i32
    %c0_i32_1 = arith.constant 0 : i32
    return %c0_i32, %c0_i32_0 : i32, i32
  }
  func.func @transform_36(%arg0: i32) -> (i32, i32) {
    %c0_i32 = arith.constant 0 : i32
    %c0_i32_0 = arith.constant 0 : i32
    %c0_i32_1 = arith.constant 0 : i32
    return %c0_i32, %c0_i32_0 : i32, i32
  }
  func.func @transform_37(%arg0: i32) -> (i32, i32) {
    %c0_i32 = arith.constant 0 : i32
    %c0_i32_0 = arith.constant 0 : i32
    %c0_i32_1 = arith.constant 0 : i32
    return %c0_i32, %c0_i32_0 : i32, i32
  }
  func.func @transform_38(%arg0: i32) -> (i32, i32) {
    %c0_i32 = arith.constant 0 : i32
    %c0_i32_0 = arith.constant 0 : i32
    %c0_i32_1 = arith.constant 0 : i32
    return %c0_i32, %c0_i32_0 : i32, i32
  }
  func.func @transform_39(%arg0: i32) -> (i32, i32) {
    %c0_i32 = arith.constant 0 : i32
    %c0_i32_0 = arith.constant 0 : i32
    %c0_i32_1 = arith.constant 0 : i32
    return %c0_i32, %c0_i32_0 : i32, i32
  }
  func.func @transform_40(%arg0: i32) -> (i32, i32) {
    %c0_i32 = arith.constant 0 : i32
    %c0_i32_0 = arith.constant 0 : i32
    %c0_i32_1 = arith.constant 0 : i32
    return %c0_i32, %c0_i32_0 : i32, i32
  }
}

</mosaic_0001>

<llo_original>
// kernel: _lambda_.1
$region0: #{_lambda_.1}
  #allocation0 [shape = 'u32[]', space=smem, size = 0x4, offset = 0x4, fixed_abs, tag = 'smem constant byte address 0x4 - core index']
  #allocation1 [shape = 'u32[144,128]{1,0:T(1,128)}', space=vmem, size = 0x12000, scoped, tag = 'internal scratch']
  %s0 = inlined_call_operand.smem [shape: u32[41], index: -1, kind: input, shape index: {}]
  %s1 = sld [smem:[%s0]]
  %s2 = scalar_lea.smem %s0, 1
  %s3 = sld [smem:[%s2]]
  %s4 = scalar_lea.smem %s0, 2
  %s5 = sld [smem:[%s4]]
  %s6 = scalar_lea.smem %s0, 3
  %s7 = sld [smem:[%s6]]
  %s8 = scalar_lea.smem %s0, 4
  %s9 = sld [smem:[%s8]]
  %s10 = scalar_lea.smem %s0, 5
  %s11 = sld [smem:[%s10]]
  %s12 = scalar_lea.smem %s0, 6
  %s13 = sld [smem:[%s12]]
  %s14 = scalar_lea.smem %s0, 7
  %s15 = sld [smem:[%s14]]
  %s16 = scalar_lea.smem %s0, 8
  %s17 = sld [smem:[%s16]]
  %s18 = scalar_lea.smem %s0, 9
  %s19 = sld [smem:[%s18]]
  %s20 = scalar_lea.smem %s0, 10
  %s21 = sld [smem:[%s20]]
  %s22 = scalar_lea.smem %s0, 11
  %s23 = sld [smem:[%s22]]
  %s24 = scalar_lea.smem %s0, 12
  %s25 = sld [smem:[%s24]]
  %s26 = scalar_lea.smem %s0, 13
  %s27 = sld [smem:[%s26]]
  %s28 = scalar_lea.smem %s0, 14
  %s29 = sld [smem:[%s28]]
  %s30 = scalar_lea.smem %s0, 15
  %s31 = sld [smem:[%s30]]
  %s32 = scalar_lea.smem %s0, 16
  %s33 = sld [smem:[%s32]]
  %s34 = scalar_lea.smem %s0, 17
  %s35 = sld [smem:[%s34]]
  %s36 = scalar_lea.smem %s0, 18
  %s37 = sld [smem:[%s36]]
  %s38 = scalar_lea.smem %s0, 19
  %s39 = sld [smem:[%s38]]
  %s40 = scalar_lea.smem %s0, 20
  %s41 = sld [smem:[%s40]]
  %s42 = scalar_lea.smem %s0, 21
  %s43 = sld [smem:[%s42]]
  %s44 = scalar_lea.smem %s0, 22
  %s45 = sld [smem:[%s44]]
  %s46 = scalar_lea.smem %s0, 23
  %s47 = sld [smem:[%s46]]
  %s48 = scalar_lea.smem %s0, 24
  %s49 = sld [smem:[%s48]]
  %s50 = scalar_lea.smem %s0, 25
  %s51 = sld [smem:[%s50]]
  %s52 = scalar_lea.smem %s0, 26
  %s53 = sld [smem:[%s52]]
  %s54 = scalar_lea.smem %s0, 27
  %s55 = sld [smem:[%s54]]
  %s56 = scalar_lea.smem %s0, 28
  %s57 = sld [smem:[%s56]]
  %s58 = scalar_lea.smem %s0, 29
  %s59 = sld [smem:[%s58]]
  %s60 = scalar_lea.smem %s0, 30
  %s61 = sld [smem:[%s60]]
  %s62 = scalar_lea.smem %s0, 31
  %s63 = sld [smem:[%s62]]
  %s64 = scalar_lea.smem %s0, 32
  %s65 = sld [smem:[%s64]]
  %s66 = scalar_lea.smem %s0, 33
  %s67 = sld [smem:[%s66]]
  %s68 = scalar_lea.smem %s0, 34
  %s69 = sld [smem:[%s68]]
  %s70 = scalar_lea.smem %s0, 35
  %s71 = sld [smem:[%s70]]
  %s72 = scalar_lea.smem %s0, 36
  %s73 = sld [smem:[%s72]]
  %s74 = scalar_lea.smem %s0, 37
  %s75 = sld [smem:[%s74]]
  %s76 = scalar_lea.smem %s0, 38
  %s77 = sld [smem:[%s76]]
  %s78 = scalar_lea.smem %s0, 39
  %s79 = sld [smem:[%s78]]
  %s80 = scalar_lea.smem %s0, 40
  %s81 = sld [smem:[%s80]]
  %s82 = sld [smem:[#allocation0]]
  $region170: #{_lambda_.1} parent=0
    _
  %s84 = ssub.s32 1, %s82
  %s85 = scalar_select 0, %s84, %s82
  // Predicated region
  $region2: #{_lambda_.1} parent=0 // pred_check
    _
  $region3: #{_lambda_.1} parent=0 // pred_check_branch
    %87 = sbr.rel (0) target = $region5
  $region4: #{_lambda_.1} parent=0 // pred_region
    _
  $region5: #{_lambda_.1} parent=0 // pred_fallthru
    _
  // Predicated region
  $region6: #{_lambda_.1} parent=0 // pred_check
    _
  $region7: #{_lambda_.1} parent=0 // pred_check_branch
    %89 = sbr.rel (0) target = $region9
  $region8: #{_lambda_.1} parent=0 // pred_region
    _
  $region9: #{_lambda_.1} parent=0 // pred_fallthru
    _
  // Predicated region
  $region10: #{_lambda_.1} parent=0 // pred_check
    _
  $region11: #{_lambda_.1} parent=0 // pred_check_branch
    %91 = sbr.rel (0) target = $region13
  $region12: #{_lambda_.1} parent=0 // pred_region
    _
  $region13: #{_lambda_.1} parent=0 // pred_fallthru
    _
  // Predicated region
  $region14: #{_lambda_.1} parent=0 // pred_check
    _
  $region15: #{_lambda_.1} parent=0 // pred_check_branch
    %93 = sbr.rel (0) target = $region17
  $region16: #{_lambda_.1} parent=0 // pred_region
    _
  $region17: #{_lambda_.1} parent=0 // pred_fallthru
    _
  // Predicated region
  $region18: #{_lambda_.1} parent=0 // pred_check
    _
  $region19: #{_lambda_.1} parent=0 // pred_check_branch
    %95 = sbr.rel (0) target = $region21
  $region20: #{_lambda_.1} parent=0 // pred_region
    _
  $region21: #{_lambda_.1} parent=0 // pred_fallthru
    _
  // Predicated region
  $region22: #{_lambda_.1} parent=0 // pred_check
    _
  $region23: #{_lambda_.1} parent=0 // pred_check_branch
    %97 = sbr.rel (0) target = $region25
  $region24: #{_lambda_.1} parent=0 // pred_region
    _
  $region25: #{_lambda_.1} parent=0 // pred_fallthru
    _
  // Predicated region
  $region26: #{_lambda_.1} parent=0 // pred_check
    _
  $region27: #{_lambda_.1} parent=0 // pred_check_branch
    %99 = sbr.rel (0) target = $region29
  $region28: #{_lambda_.1} parent=0 // pred_region
    _
  $region29: #{_lambda_.1} parent=0 // pred_fallthru
    _
  // Predicated region
  $region30: #{_lambda_.1} parent=0 // pred_check
    _
  $region31: #{_lambda_.1} parent=0 // pred_check_branch
    %101 = sbr.rel (0) target = $region33
  $region32: #{_lambda_.1} parent=0 // pred_region
    _
  $region33: #{_lambda_.1} parent=0 // pred_fallthru
    _
  // Predicated region
  $region34: #{_lambda_.1} parent=0 // pred_check
    _
  $region35: #{_lambda_.1} parent=0 // pred_check_branch
    %103 = sbr.rel (0) target = $region37
  $region36: #{_lambda_.1} parent=0 // pred_region
    _
  $region37: #{_lambda_.1} parent=0 // pred_fallthru
    _
  // Predicated region
  $region38: #{_lambda_.1} parent=0 // pred_check
    _
  $region39: #{_lambda_.1} parent=0 // pred_check_branch
    %105 = sbr.rel (0) target = $region41
  $region40: #{_lambda_.1} parent=0 // pred_region
    _
  $region41: #{_lambda_.1} parent=0 // pred_fallthru
    _
  // Predicated region
  $region42: #{_lambda_.1} parent=0 // pred_check
    _
  $region43: #{_lambda_.1} parent=0 // pred_check_branch
    %107 = sbr.rel (0) target = $region45
  $region44: #{_lambda_.1} parent=0 // pred_region
    _
  $region45: #{_lambda_.1} parent=0 // pred_fallthru
    _
  // Predicated region
  $region46: #{_lambda_.1} parent=0 // pred_check
    _
  $region47: #{_lambda_.1} parent=0 // pred_check_branch
    %109 = sbr.rel (0) target = $region49
  $region48: #{_lambda_.1} parent=0 // pred_region
    _
  $region49: #{_lambda_.1} parent=0 // pred_fallthru
    _
  // Predicated region
  $region50: #{_lambda_.1} parent=0 // pred_check
    _
  $region51: #{_lambda_.1} parent=0 // pred_check_branch
    %111 = sbr.rel (0) target = $region53
  $region52: #{_lambda_.1} parent=0 // pred_region
    _
  $region53: #{_lambda_.1} parent=0 // pred_fallthru
    _
  // Predicated region
  $region54: #{_lambda_.1} parent=0 // pred_check
    _
  $region55: #{_lambda_.1} parent=0 // pred_check_branch
    %113 = sbr.rel (0) target = $region57
  $region56: #{_lambda_.1} parent=0 // pred_region
    _
  $region57: #{_lambda_.1} parent=0 // pred_fallthru
    _
  // Predicated region
  $region58: #{_lambda_.1} parent=0 // pred_check
    _
  $region59: #{_lambda_.1} parent=0 // pred_check_branch
    %115 = sbr.rel (0) target = $region61
  $region60: #{_lambda_.1} parent=0 // pred_region
    _
  $region61: #{_lambda_.1} parent=0 // pred_fallthru
    _
  // Predicated region
  $region62: #{_lambda_.1} parent=0 // pred_check
    _
  $region63: #{_lambda_.1} parent=0 // pred_check_branch
    %117 = sbr.rel (0) target = $region65
  $region64: #{_lambda_.1} parent=0 // pred_region
    _
  $region65: #{_lambda_.1} parent=0 // pred_fallthru
    _
  // Predicated region
  $region66: #{_lambda_.1} parent=0 // pred_check
    _
  $region67: #{_lambda_.1} parent=0 // pred_check_branch
    %119 = sbr.rel (0) target = $region69
  $region68: #{_lambda_.1} parent=0 // pred_region
    _
  $region69: #{_lambda_.1} parent=0 // pred_fallthru
    _
  // Predicated region
  $region70: #{_lambda_.1} parent=0 // pred_check
    _
  $region71: #{_lambda_.1} parent=0 // pred_check_branch
    %121 = sbr.rel (0) target = $region73
  $region72: #{_lambda_.1} parent=0 // pred_region
    _
  $region73: #{_lambda_.1} parent=0 // pred_fallthru
    _
  // Predicated region
  $region74: #{_lambda_.1} parent=0 // pred_check
    _
  $region75: #{_lambda_.1} parent=0 // pred_check_branch
    %123 = sbr.rel (0) target = $region77
  $region76: #{_lambda_.1} parent=0 // pred_region
    _
  $region77: #{_lambda_.1} parent=0 // pred_fallthru
    _
  // Predicated region
  $region78: #{_lambda_.1} parent=0 // pred_check
    _
  $region79: #{_lambda_.1} parent=0 // pred_check_branch
    %125 = sbr.rel (0) target = $region81
  $region80: #{_lambda_.1} parent=0 // pred_region
    _
  $region81: #{_lambda_.1} parent=0 // pred_fallthru
    _
  // Predicated region
  $region82: #{_lambda_.1} parent=0 // pred_check
    _
  $region83: #{_lambda_.1} parent=0 // pred_check_branch
    %127 = sbr.rel (0) target = $region85
  $region84: #{_lambda_.1} parent=0 // pred_region
    _
  $region85: #{_lambda_.1} parent=0 // pred_fallthru
    _
  // Predicated region
  $region86: #{_lambda_.1} parent=0 // pred_check
    _
  $region87: #{_lambda_.1} parent=0 // pred_check_branch
    %129 = sbr.rel (0) target = $region89
  $region88: #{_lambda_.1} parent=0 // pred_region
    _
  $region89: #{_lambda_.1} parent=0 // pred_fallthru
    _
  // Predicated region
  $region90: #{_lambda_.1} parent=0 // pred_check
    _
  $region91: #{_lambda_.1} parent=0 // pred_check_branch
    %131 = sbr.rel (0) target = $region93
  $region92: #{_lambda_.1} parent=0 // pred_region
    _
  $region93: #{_lambda_.1} parent=0 // pred_fallthru
    _
  // Predicated region
  $region94: #{_lambda_.1} parent=0 // pred_check
    _
  $region95: #{_lambda_.1} parent=0 // pred_check_branch
    %133 = sbr.rel (0) target = $region97
  $region96: #{_lambda_.1} parent=0 // pred_region
    _
  $region97: #{_lambda_.1} parent=0 // pred_fallthru
    _
  // Predicated region
  $region98: #{_lambda_.1} parent=0 // pred_check
    _
  $region99: #{_lambda_.1} parent=0 // pred_check_branch
    %135 = sbr.rel (0) target = $region101
  $region100: #{_lambda_.1} parent=0 // pred_region
    _
  $region101: #{_lambda_.1} parent=0 // pred_fallthru
    _
  // Predicated region
  $region102: #{_lambda_.1} parent=0 // pred_check
    _
  $region103: #{_lambda_.1} parent=0 // pred_check_branch
    %137 = sbr.rel (0) target = $region105
  $region104: #{_lambda_.1} parent=0 // pred_region
    _
  $region105: #{_lambda_.1} parent=0 // pred_fallthru
    _
  // Predicated region
  $region106: #{_lambda_.1} parent=0 // pred_check
    _
  $region107: #{_lambda_.1} parent=0 // pred_check_branch
    %139 = sbr.rel (0) target = $region109
  $region108: #{_lambda_.1} parent=0 // pred_region
    _
  $region109: #{_lambda_.1} parent=0 // pred_fallthru
    _
  // Predicated region
  $region110: #{_lambda_.1} parent=0 // pred_check
    _
  $region111: #{_lambda_.1} parent=0 // pred_check_branch
    %141 = sbr.rel (0) target = $region113
  $region112: #{_lambda_.1} parent=0 // pred_region
    _
  $region113: #{_lambda_.1} parent=0 // pred_fallthru
    _
  // Predicated region
  $region114: #{_lambda_.1} parent=0 // pred_check
    _
  $region115: #{_lambda_.1} parent=0 // pred_check_branch
    %143 = sbr.rel (0) target = $region117
  $region116: #{_lambda_.1} parent=0 // pred_region
    _
  $region117: #{_lambda_.1} parent=0 // pred_fallthru
    _
  // Predicated region
  $region118: #{_lambda_.1} parent=0 // pred_check
    _
  $region119: #{_lambda_.1} parent=0 // pred_check_branch
    %145 = sbr.rel (0) target = $region121
  $region120: #{_lambda_.1} parent=0 // pred_region
    _
  $region121: #{_lambda_.1} parent=0 // pred_fallthru
    _
  // Predicated region
  $region122: #{_lambda_.1} parent=0 // pred_check
    _
  $region123: #{_lambda_.1} parent=0 // pred_check_branch
    %147 = sbr.rel (0) target = $region125
  $region124: #{_lambda_.1} parent=0 // pred_region
    _
  $region125: #{_lambda_.1} parent=0 // pred_fallthru
    _
  // Predicated region
  $region126: #{_lambda_.1} parent=0 // pred_check
    _
  $region127: #{_lambda_.1} parent=0 // pred_check_branch
    %149 = sbr.rel (0) target = $region129
  $region128: #{_lambda_.1} parent=0 // pred_region
    _
  $region129: #{_lambda_.1} parent=0 // pred_fallthru
    _
  // Predicated region
  $region130: #{_lambda_.1} parent=0 // pred_check
    _
  $region131: #{_lambda_.1} parent=0 // pred_check_branch
    %151 = sbr.rel (0) target = $region133
  $region132: #{_lambda_.1} parent=0 // pred_region
    _
  $region133: #{_lambda_.1} parent=0 // pred_fallthru
    _
  // Predicated region
  $region134: #{_lambda_.1} parent=0 // pred_check
    _
  $region135: #{_lambda_.1} parent=0 // pred_check_branch
    %153 = sbr.rel (0) target = $region137
  $region136: #{_lambda_.1} parent=0 // pred_region
    _
  $region137: #{_lambda_.1} parent=0 // pred_fallthru
    _
  // Predicated region
  $region138: #{_lambda_.1} parent=0 // pred_check
    _
  $region139: #{_lambda_.1} parent=0 // pred_check_branch
    %155 = sbr.rel (0) target = $region141
  $region140: #{_lambda_.1} parent=0 // pred_region
    _
  $region141: #{_lambda_.1} parent=0 // pred_fallthru
    _
  // Predicated region
  $region142: #{_lambda_.1} parent=0 // pred_check
    _
  $region143: #{_lambda_.1} parent=0 // pred_check_branch
    %157 = sbr.rel (0) target = $region145
  $region144: #{_lambda_.1} parent=0 // pred_region
    _
  $region145: #{_lambda_.1} parent=0 // pred_fallthru
    _
  // Predicated region
  $region146: #{_lambda_.1} parent=0 // pred_check
    _
  $region147: #{_lambda_.1} parent=0 // pred_check_branch
    %159 = sbr.rel (0) target = $region149
  $region148: #{_lambda_.1} parent=0 // pred_region
    _
  $region149: #{_lambda_.1} parent=0 // pred_fallthru
    _
  // Predicated region
  $region150: #{_lambda_.1} parent=0 // pred_check
    _
  $region151: #{_lambda_.1} parent=0 // pred_check_branch
    %161 = sbr.rel (0) target = $region153
  $region152: #{_lambda_.1} parent=0 // pred_region
    _
  $region153: #{_lambda_.1} parent=0 // pred_fallthru
    _
  // Predicated region
  $region154: #{_lambda_.1} parent=0 // pred_check
    _
  $region155: #{_lambda_.1} parent=0 // pred_check_branch
    %163 = sbr.rel (0) target = $region157
  $region156: #{_lambda_.1} parent=0 // pred_region
    _
  $region157: #{_lambda_.1} parent=0 // pred_fallthru
    _
  // Predicated region
  $region158: #{_lambda_.1} parent=0 // pred_check
    _
  $region159: #{_lambda_.1} parent=0 // pred_check_branch
    %165 = sbr.rel (0) target = $region161
  $region160: #{_lambda_.1} parent=0 // pred_region
    _
  $region161: #{_lambda_.1} parent=0 // pred_fallthru
    _
  %v167 = vld [vmem:[%s3] sm:$0xff]
  %v168 = vld [vmem:[%s3 + $0x8] sm:$0x3]
  %v169 = vld [vmem:[%s1] sm:$0xff]
  %v170 = vld [vmem:[%s1 + $0x8] sm:$0xff]
  %v171 = vld [vmem:[%s1 + $0x10] sm:$0xff]
  %v172 = vld [vmem:[%s1 + $0x18] sm:$0xff]
  %v173 = vld [vmem:[%s1 + $0x20] sm:$0xff]
  %v174 = vld [vmem:[%s1 + $0x28] sm:$0xff]
  %v175 = vld [vmem:[%s1 + $0x30] sm:$0x3]
  %v176 = vld [vmem:[%s1 + $0x38] sm:$0x3]
  %v177 = vld [vmem:[%s1 + $0x40] sm:$0x3]
  %v178 = vld [vmem:[%s1 + $0x48] sm:$0x3]
  %v179 = vld [vmem:[%s1 + $0x50] sm:$0x3]
  %v180 = vld [vmem:[%s1 + $0x58] sm:$0x3]
  %v181 = vpack.c.bf16 %v175, %v169
  %v182 = vpack.c.bf16 %v176, %v170
  %v183 = vpack.c.bf16 %v177, %v171
  %v184 = vpack.c.bf16 %v178, %v172
  %v185 = vpack.c.bf16 %v179, %v173
  %v186 = vpack.c.bf16 %v180, %v174
  %v187 = vld [vmem:[%s5] sm:$0xf]
  %v188 = vld [vmem:[%s5 + $0x4] sm:$0xf]
  %v189 = vld [vmem:[%s5 + $0x8] sm:$0xf]
  %v190 = vld [vmem:[%s5 + $0xc] sm:$0xf]
  %v191 = vld [vmem:[%s5 + $0x10] sm:$0xf]
  %v192 = vld [vmem:[%s5 + $0x14] sm:$0xf]
  %v193 = vld [vmem:[%s5 + $0x18] sm:$0xf]
  %v194 = vld [vmem:[%s5 + $0x1c] sm:$0xf]
  %v195 = vld [vmem:[%s5 + $0x20] sm:$0xf]
  %v196 = vld [vmem:[%s5 + $0x24] sm:$0xf]
  %v197 = vld [vmem:[%s5 + $0x28] sm:$0xf]
  %v198 = vld [vmem:[%s5 + $0x2c] sm:$0xf]
  %v199 = vld [vmem:[%s5 + $0x30] sm:$0xf]
  %v200 = vld [vmem:[%s5 + $0x34] sm:$0xf]
  %v201 = vld [vmem:[%s5 + $0x38] sm:$0xf]
  %v202 = vld [vmem:[%s5 + $0x3c] sm:$0xf]
  %v203 = vld [vmem:[%s5 + $0x40] sm:$0xf]
  %v204 = vld [vmem:[%s5 + $0x44] sm:$0xf]
  %v205 = vld [vmem:[%s5 + $0x48] sm:$0xf]
  %v206 = vld [vmem:[%s5 + $0x4c] sm:$0xf]
  %v207 = vld [vmem:[%s5 + $0x50] sm:$0xf]
  %v208 = vld [vmem:[%s5 + $0x54] sm:$0xf]
  %v209 = vld [vmem:[%s5 + $0x58] sm:$0xf]
  %v210 = vld [vmem:[%s5 + $0x5c] sm:$0xf]
  %v211 = vld [vmem:[%s5 + $0x60] sm:$0xf]
  %v212 = vld [vmem:[%s5 + $0x64] sm:$0xf]
  %v213 = vld [vmem:[%s5 + $0x68] sm:$0xf]
  %v214 = vld [vmem:[%s5 + $0x6c] sm:$0xf]
  %v215 = vld [vmem:[%s5 + $0x70] sm:$0xf]
  %v216 = vld [vmem:[%s5 + $0x74] sm:$0xf]
  %v217 = vld [vmem:[%s5 + $0x78] sm:$0xf]
  %v218 = vld [vmem:[%s5 + $0x7c] sm:$0xf]
  %v219 = vld [vmem:[%s5 + $0x80] sm:$0xf]
  %v220 = vld [vmem:[%s5 + $0x84] sm:$0xf]
  %v221 = vld [vmem:[%s5 + $0x88] sm:$0xf]
  %v222 = vld [vmem:[%s5 + $0x8c] sm:$0xf]
  %v223 = vld [vmem:[%s5 + $0x90] sm:$0xf]
  %v224 = vld [vmem:[%s5 + $0x94] sm:$0xf]
  %v225 = vld [vmem:[%s5 + $0x98] sm:$0xf]
  %v226 = vld [vmem:[%s5 + $0x9c] sm:$0xf]
  %v227 = vld [vmem:[%s5 + $0xa0] sm:$0xf]
  %v228 = vld [vmem:[%s5 + $0xa4] sm:$0xf]
  %v229 = vld [vmem:[%s5 + $0xa8] sm:$0xf]
  %v230 = vld [vmem:[%s5 + $0xac] sm:$0xf]
  %v231 = vld [vmem:[%s5 + $0xb0] sm:$0xf]
  %v232 = vld [vmem:[%s5 + $0xb4] sm:$0xf]
  %v233 = vld [vmem:[%s5 + $0xb8] sm:$0xf]
  %v234 = vld [vmem:[%s5 + $0xbc] sm:$0xf]
  %v235 = vld [vmem:[%s5 + $0xc0] sm:$0xf]
  %v236 = vld [vmem:[%s5 + $0xc4] sm:$0xf]
  %v237 = vld [vmem:[%s5 + $0xc8] sm:$0xf]
  %v238 = vld [vmem:[%s5 + $0xcc] sm:$0xf]
  %v239 = vld [vmem:[%s5 + $0xd0] sm:$0xf]
  %v240 = vld [vmem:[%s5 + $0xd4] sm:$0xf]
  %v241 = vld [vmem:[%s5 + $0xd8] sm:$0xf]
  %v242 = vld [vmem:[%s5 + $0xdc] sm:$0xf]
  %v243 = vld [vmem:[%s5 + $0xe0] sm:$0xf]
  %v244 = vld [vmem:[%s5 + $0xe4] sm:$0xf]
  %v245 = vld [vmem:[%s5 + $0xe8] sm:$0xf]
  %v246 = vld [vmem:[%s5 + $0xec] sm:$0xf]
  %v247 = vld [vmem:[%s5 + $0xf0] sm:$0xf]
  %v248 = vld [vmem:[%s5 + $0xf4] sm:$0xf]
  %v249 = vld [vmem:[%s5 + $0xf8] sm:$0xf]
  %v250 = vld [vmem:[%s5 + $0xfc] sm:$0xf]
  %v251 = vld [vmem:[%s5 + $0x100] sm:$0xf]
  %v252 = vld [vmem:[%s5 + $0x104] sm:$0xf]
  %v253 = vld [vmem:[%s5 + $0x108] sm:$0xf]
  %v254 = vld [vmem:[%s5 + $0x10c] sm:$0xf]
  %v255 = vld [vmem:[%s5 + $0x110] sm:$0xf]
  %v256 = vld [vmem:[%s5 + $0x114] sm:$0xf]
  %v257 = vld [vmem:[%s5 + $0x118] sm:$0xf]
  %v258 = vld [vmem:[%s5 + $0x11c] sm:$0xf]
  %v259 = vld [vmem:[%s5 + $0x120] sm:$0xf]
  %v260 = vld [vmem:[%s5 + $0x124] sm:$0xf]
  %v261 = vld [vmem:[%s5 + $0x128] sm:$0xf]
  %v262 = vld [vmem:[%s5 + $0x12c] sm:$0xf]
  %v263 = vld [vmem:[%s5 + $0x130] sm:$0xf]
  %v264 = vld [vmem:[%s5 + $0x134] sm:$0xf]
  %v265 = vld [vmem:[%s5 + $0x138] sm:$0xf]
  %v266 = vld [vmem:[%s5 + $0x13c] sm:$0xf]
  %v267 = vld [vmem:[%s5 + $0x140] sm:$0xf]
  %v268 = vld [vmem:[%s5 + $0x144] sm:$0xf]
  %v269 = vld [vmem:[%s5 + $0x148] sm:$0xf]
  %v270 = vld [vmem:[%s5 + $0x14c] sm:$0xf]
  %v271 = vld [vmem:[%s5 + $0x150] sm:$0xf]
  %v272 = vld [vmem:[%s5 + $0x154] sm:$0xf]
  %v273 = vld [vmem:[%s5 + $0x158] sm:$0xf]
  %v274 = vld [vmem:[%s5 + $0x15c] sm:$0xf]
  %v275 = vld [vmem:[%s5 + $0x160] sm:$0xf]
  %v276 = vld [vmem:[%s5 + $0x164] sm:$0xf]
  %v277 = vld [vmem:[%s5 + $0x168] sm:$0xf]
  %v278 = vld [vmem:[%s5 + $0x16c] sm:$0xf]
  %v279 = vld [vmem:[%s5 + $0x170] sm:$0xf]
  %v280 = vld [vmem:[%s5 + $0x174] sm:$0xf]
  %v281 = vld [vmem:[%s5 + $0x178] sm:$0xf]
  %v282 = vld [vmem:[%s5 + $0x17c] sm:$0xf]
  %v283 = vld [vmem:[%s7] sm:$0xff]
  %v284 = vld [vmem:[%s7 + $0x8] sm:$0x3]
  %v381 = vunpack.c.l.b16 %v187
  %v382 = vunpack.c.l.b16 %v188
  %v383 = vunpack.c.l.b16 %v189
  %v384 = vunpack.c.l.b16 %v190
  %v385 = vunpack.c.l.b16 %v191
  %v386 = vunpack.c.l.b16 %v192
  %v387 = vunpack.c.l.b16 %v193
  %v388 = vunpack.c.l.b16 %v194
  %v389 = vunpack.c.l.b16 %v195
  %v390 = vunpack.c.l.b16 %v196
  %v391 = vunpack.c.l.b16 %v197
  %v392 = vunpack.c.l.b16 %v198
  %v393 = vunpack.c.l.b16 %v199
  %v394 = vunpack.c.l.b16 %v200
  %v395 = vunpack.c.l.b16 %v201
  %v396 = vunpack.c.l.b16 %v202
  %v397 = vunpack.c.l.b16 %v203
  %v398 = vunpack.c.l.b16 %v204
  %v399 = vunpack.c.l.b16 %v205
  %v400 = vunpack.c.l.b16 %v206
  %v401 = vunpack.c.l.b16 %v207
  %v402 = vunpack.c.l.b16 %v208
  %v403 = vunpack.c.l.b16 %v209
  %v404 = vunpack.c.l.b16 %v210
  %v405 = vunpack.c.l.b16 %v211
  %v406 = vunpack.c.l.b16 %v212
  %v407 = vunpack.c.l.b16 %v213
  %v408 = vunpack.c.l.b16 %v214
  %v409 = vunpack.c.l.b16 %v215
  %v410 = vunpack.c.l.b16 %v216
  %v411 = vunpack.c.l.b16 %v217
  %v412 = vunpack.c.l.b16 %v218
  %v413 = vunpack.c.l.b16 %v219
  %v414 = vunpack.c.l.b16 %v220
  %v415 = vunpack.c.l.b16 %v221
  %v416 = vunpack.c.l.b16 %v222
  %v417 = vunpack.c.l.b16 %v223
  %v418 = vunpack.c.l.b16 %v224
  %v419 = vunpack.c.l.b16 %v225
  %v420 = vunpack.c.l.b16 %v226
  %v421 = vunpack.c.l.b16 %v227
  %v422 = vunpack.c.l.b16 %v228
  %v423 = vunpack.c.l.b16 %v229
  %v424 = vunpack.c.l.b16 %v230
  %v425 = vunpack.c.l.b16 %v231
  %v426 = vunpack.c.l.b16 %v232
  %v427 = vunpack.c.l.b16 %v233
  %v428 = vunpack.c.l.b16 %v234
  %v429 = vunpack.c.l.b16 %v235
  %v430 = vunpack.c.l.b16 %v236
  %v431 = vunpack.c.l.b16 %v237
  %v432 = vunpack.c.l.b16 %v238
  %v433 = vunpack.c.l.b16 %v239
  %v434 = vunpack.c.l.b16 %v240
  %v435 = vunpack.c.l.b16 %v241
  %v436 = vunpack.c.l.b16 %v242
  %v437 = vunpack.c.l.b16 %v243
  %v438 = vunpack.c.l.b16 %v244
  %v439 = vunpack.c.l.b16 %v245
  %v440 = vunpack.c.l.b16 %v246
  %v441 = vunpack.c.l.b16 %v247
  %v442 = vunpack.c.l.b16 %v248
  %v443 = vunpack.c.l.b16 %v249
  %v444 = vunpack.c.l.b16 %v250
  %v445 = vunpack.c.l.b16 %v251
  %v446 = vunpack.c.l.b16 %v252
  %v447 = vunpack.c.l.b16 %v253
  %v448 = vunpack.c.l.b16 %v254
  %v449 = vunpack.c.l.b16 %v255
  %v450 = vunpack.c.l.b16 %v256
  %v451 = vunpack.c.l.b16 %v257
  %v452 = vunpack.c.l.b16 %v258
  %v453 = vunpack.c.l.b16 %v259
  %v454 = vunpack.c.l.b16 %v260
  %v455 = vunpack.c.l.b16 %v261
  %v456 = vunpack.c.l.b16 %v262
  %v457 = vunpack.c.l.b16 %v263
  %v458 = vunpack.c.l.b16 %v264
  %v459 = vunpack.c.l.b16 %v265
  %v460 = vunpack.c.l.b16 %v266
  %v461 = vunpack.c.l.b16 %v267
  %v462 = vunpack.c.l.b16 %v268
  %v463 = vunpack.c.l.b16 %v269
  %v464 = vunpack.c.l.b16 %v270
  %v465 = vunpack.c.l.b16 %v271
  %v466 = vunpack.c.l.b16 %v272
  %v467 = vunpack.c.l.b16 %v273
  %v468 = vunpack.c.l.b16 %v274
  %v469 = vunpack.c.l.b16 %v275
  %v470 = vunpack.c.l.b16 %v276
  %v471 = vunpack.c.l.b16 %v277
  %v472 = vunpack.c.l.b16 %v278
  %v473 = vunpack.c.l.b16 %v279
  %v474 = vunpack.c.l.b16 %v280
  %v475 = vunpack.c.l.b16 %v281
  %v476 = vunpack.c.l.b16 %v282
  %v477 = vpack.c.b16 %v382, %v381
  %v478 = vpack.c.b16 %v384, %v383
  %v479 = vpack.c.b16 %v386, %v385
  %v480 = vpack.c.b16 %v388, %v387
  %v481 = vpack.c.b16 %v390, %v389
  %v482 = vpack.c.b16 %v392, %v391
  %v483 = vpack.c.b16 %v394, %v393
  %v484 = vpack.c.b16 %v396, %v395
  %v485 = vpack.c.b16 %v398, %v397
  %v486 = vpack.c.b16 %v400, %v399
  %v487 = vpack.c.b16 %v402, %v401
  %v488 = vpack.c.b16 %v404, %v403
  %v489 = vpack.c.b16 %v406, %v405
  %v490 = vpack.c.b16 %v408, %v407
  %v491 = vpack.c.b16 %v410, %v409
  %v492 = vpack.c.b16 %v412, %v411
  %v493 = vpack.c.b16 %v414, %v413
  %v494 = vpack.c.b16 %v416, %v415
  %v495 = vpack.c.b16 %v418, %v417
  %v496 = vpack.c.b16 %v420, %v419
  %v497 = vpack.c.b16 %v422, %v421
  %v498 = vpack.c.b16 %v424, %v423
  %v499 = vpack.c.b16 %v426, %v425
  %v500 = vpack.c.b16 %v428, %v427
  %v501 = vpack.c.b16 %v430, %v429
  %v502 = vpack.c.b16 %v432, %v431
  %v503 = vpack.c.b16 %v434, %v433
  %v504 = vpack.c.b16 %v436, %v435
  %v505 = vpack.c.b16 %v438, %v437
  %v506 = vpack.c.b16 %v440, %v439
  %v507 = vpack.c.b16 %v442, %v441
  %v508 = vpack.c.b16 %v444, %v443
  %v509 = vpack.c.b16 %v446, %v445
  %v510 = vpack.c.b16 %v448, %v447
  %v511 = vpack.c.b16 %v450, %v449
  %v512 = vpack.c.b16 %v452, %v451
  %v513 = vpack.c.b16 %v454, %v453
  %v514 = vpack.c.b16 %v456, %v455
  %v515 = vpack.c.b16 %v458, %v457
  %v516 = vpack.c.b16 %v460, %v459
  %v517 = vpack.c.b16 %v462, %v461
  %v518 = vpack.c.b16 %v464, %v463
  %v519 = vpack.c.b16 %v466, %v465
  %v520 = vpack.c.b16 %v468, %v467
  %v521 = vpack.c.b16 %v470, %v469
  %v522 = vpack.c.b16 %v472, %v471
  %v523 = vpack.c.b16 %v474, %v473
  %v524 = vpack.c.b16 %v476, %v475
  %573 = vmatprep.subr.bf16.mxu0 0
  %574 = vmatpush1.bf16.msra.mxu0 %v477
  %575 = vmatprep.subr.bf16.mxu0 0
  %576 = vmatpush1.bf16.msra.mxu0 %v478
  %577 = vmatprep.subr.bf16.mxu0 0
  %578 = vmatpush1.bf16.msra.mxu0 %v479
  %579 = vmatprep.subr.bf16.mxu0 0
  %580 = vmatpush1.bf16.msra.mxu0 %v480
  %581 = vmatprep.subr.bf16.mxu0 0
  %582 = vmatpush1.bf16.msra.mxu0 %v481
  %583 = vmatprep.subr.bf16.mxu0 0
  %584 = vmatpush1.bf16.msra.mxu0 %v482
  %585 = vmatprep.subr.bf16.mxu0 0
  %586 = vmatpush1.bf16.msra.mxu0 %v483
  %587 = vmatprep.subr.bf16.mxu0 0
  %588 = vmatpush1.bf16.msra.mxu0 %v484
  %589 = vmatprep.subr.bf16.mxu0 0
  %590 = vmatpush1.bf16.msra.mxu0 %v485
  %591 = vmatprep.subr.bf16.mxu0 0
  %592 = vmatpush1.bf16.msra.mxu0 %v486
  %593 = vmatprep.subr.bf16.mxu0 0
  %594 = vmatpush1.bf16.msra.mxu0 %v487
  %595 = vmatprep.subr.bf16.mxu0 0
  %596 = vmatpush1.bf16.msra.mxu0 %v488
  %597 = vmatprep.subr.bf16.mxu0 0
  %598 = vmatpush1.bf16.msra.mxu0 %v489
  %599 = vmatprep.subr.bf16.mxu0 0
  %600 = vmatpush1.bf16.msra.mxu0 %v490
  %601 = vmatprep.subr.bf16.mxu0 0
  %602 = vmatpush1.bf16.msra.mxu0 %v491
  %603 = vmatprep.subr.bf16.mxu0 0
  %604 = vmatpush1.bf16.msra.mxu0 %v492
  %605 = vmatprep.mubr.bf16.mxu0 %v182
  %606 = vmatmul.mubr.bf16.gmra.mrb[0].mxu0 %v181
  %v607 = vpop.f32.mrb[0].mxu0
  %v608 = vadd.f32 %v283, %v607
  %v609 = vpop.f32.mrb[0].mxu0
  %v610 = vpop.f32.mrb[0].mxu0
  %v611 = vadd.f32 %v284, %v610
  %v612 = vpop.f32.mrb[0].mxu0
  %613 = vdwg.mxu0
  %614 = vmatprep.subr.bf16.mxu0 0
  %615 = vmatpush1.bf16.msra.mxu0 %v493
  %616 = vmatprep.subr.bf16.mxu0 0
  %617 = vmatpush1.bf16.msra.mxu0 %v494
  %618 = vmatprep.subr.bf16.mxu0 0
  %619 = vmatpush1.bf16.msra.mxu0 %v495
  %620 = vmatprep.subr.bf16.mxu0 0
  %621 = vmatpush1.bf16.msra.mxu0 %v496
  %622 = vmatprep.subr.bf16.mxu0 0
  %623 = vmatpush1.bf16.msra.mxu0 %v497
  %624 = vmatprep.subr.bf16.mxu0 0
  %625 = vmatpush1.bf16.msra.mxu0 %v498
  %626 = vmatprep.subr.bf16.mxu0 0
  %627 = vmatpush1.bf16.msra.mxu0 %v499
  %628 = vmatprep.subr.bf16.mxu0 0
  %629 = vmatpush1.bf16.msra.mxu0 %v500
  %630 = vmatprep.subr.bf16.mxu0 0
  %631 = vmatpush1.bf16.msra.mxu0 %v501
  %632 = vmatprep.subr.bf16.mxu0 0
  %633 = vmatpush1.bf16.msra.mxu0 %v502
  %634 = vmatprep.subr.bf16.mxu0 0
  %635 = vmatpush1.bf16.msra.mxu0 %v503
  %636 = vmatprep.subr.bf16.mxu0 0
  %637 = vmatpush1.bf16.msra.mxu0 %v504
  %638 = vmatprep.subr.bf16.mxu0 0
  %639 = vmatpush1.bf16.msra.mxu0 %v505
  %640 = vmatprep.subr.bf16.mxu0 0
  %641 = vmatpush1.bf16.msra.mxu0 %v506
  %642 = vmatprep.subr.bf16.mxu0 0
  %643 = vmatpush1.bf16.msra.mxu0 %v507
  %644 = vmatprep.subr.bf16.mxu0 0
  %645 = vmatpush1.bf16.msra.mxu0 %v508
  %646 = vmatprep.mubr.bf16.mxu0 %v184
  %647 = vmatmul.mubr.bf16.gmra.mrb[0].mxu0 %v183
  %v648 = vpop.f32.mrb[0].mxu0
  %v649 = vadd.f32 %v608, %v648
  %v650 = vpop.f32.mrb[0].mxu0
  %v651 = vpop.f32.mrb[0].mxu0
  %v652 = vadd.f32 %v611, %v651
  %v653 = vpop.f32.mrb[0].mxu0
  %654 = vdwg.mxu0
  %655 = vmatprep.subr.bf16.mxu0 0
  %656 = vmatpush1.bf16.msra.mxu0 %v509
  %657 = vmatprep.subr.bf16.mxu0 0
  %658 = vmatpush1.bf16.msra.mxu0 %v510
  %659 = vmatprep.subr.bf16.mxu0 0
  %660 = vmatpush1.bf16.msra.mxu0 %v511
  %661 = vmatprep.subr.bf16.mxu0 0
  %662 = vmatpush1.bf16.msra.mxu0 %v512
  %663 = vmatprep.subr.bf16.mxu0 0
  %664 = vmatpush1.bf16.msra.mxu0 %v513
  %665 = vmatprep.subr.bf16.mxu0 0
  %666 = vmatpush1.bf16.msra.mxu0 %v514
  %667 = vmatprep.subr.bf16.mxu0 0
  %668 = vmatpush1.bf16.msra.mxu0 %v515
  %669 = vmatprep.subr.bf16.mxu0 0
  %670 = vmatpush1.bf16.msra.mxu0 %v516
  %671 = vmatprep.subr.bf16.mxu0 0
  %672 = vmatpush1.bf16.msra.mxu0 %v517
  %673 = vmatprep.subr.bf16.mxu0 0
  %674 = vmatpush1.bf16.msra.mxu0 %v518
  %675 = vmatprep.subr.bf16.mxu0 0
  %676 = vmatpush1.bf16.msra.mxu0 %v519
  %677 = vmatprep.subr.bf16.mxu0 0
  %678 = vmatpush1.bf16.msra.mxu0 %v520
  %679 = vmatprep.subr.bf16.mxu0 0
  %680 = vmatpush1.bf16.msra.mxu0 %v521
  %681 = vmatprep.subr.bf16.mxu0 0
  %682 = vmatpush1.bf16.msra.mxu0 %v522
  %683 = vmatprep.subr.bf16.mxu0 0
  %684 = vmatpush1.bf16.msra.mxu0 %v523
  %685 = vmatprep.subr.bf16.mxu0 0
  %686 = vmatpush1.bf16.msra.mxu0 %v524
  %687 = vmatprep.mubr.bf16.mxu0 %v186
  %688 = vmatmul.mubr.bf16.gmra.mrb[0].mxu0 %v185
  %v689 = vpop.f32.mrb[0].mxu0
  %v690 = vadd.f32 %v649, %v689
  %v691 = vpop.f32.mrb[0].mxu0
  %v692 = vpop.f32.mrb[0].mxu0
  %v693 = vadd.f32 %v652, %v692
  %v694 = vpop.f32.mrb[0].mxu0
  %695 = vdwg.mxu0
  %vm696 = vcmask 523264
  %v697 = vsel %vm696, %v690, 0.0
  %698 = vadd.xlane.f32.xlu0 %v697
  %v699 = vpop.xlane.xlu0 %698
  %vm700 = vcmask 517120
  %v701 = vsel %vm700, %v693, 0.0
  %702 = vadd.xlane.f32.xlu0 %v701
  %v703 = vpop.xlane.xlu0 %702
  %v704 = vrcp.pop 64.0
  %v705 = vmul.f32 %v699, %v704
  %v706 = vmul.f32 %v703, %v704
  %v707 = vsub.f32 %v690, %v705
  %v708 = vsub.f32 %v693, %v706
  %v709 = vmul.f32 %v707, %v707
  %v710 = vmul.f32 %v708, %v708
  %v711 = vsel %vm696, %v709, 0.0
  %712 = vadd.xlane.f32.xlu0 %v711
  %v713 = vpop.xlane.xlu0 %712
  %v714 = vsel %vm700, %v710, 0.0
  %715 = vadd.xlane.f32.xlu0 %v714
  %v716 = vpop.xlane.xlu0 %715
  %v717 = vmul.f32 %v713, %v704
  %v718 = vmul.f32 %v716, %v704
  %v719 = vadd.f32 %v717, 1e-06
  %v720 = vadd.f32 %v718, 1e-06
  %v721 = vrsqrt.pop %v719
  %v722 = vrsqrt.pop %v720
  %v723 = vmul.f32 %v707, %v721
  %v724 = vmul.f32 %v708, %v722
  %v725 = vpack.c.bf16 %v724, %v723
  %v726 = vld [vmem:[%s9] sm:$0xff]
  %v727 = vld [vmem:[%s9 + $0x8] sm:$0xff]
  %v728 = vld [vmem:[%s9 + $0x10] sm:$0xff]
  %v729 = vld [vmem:[%s9 + $0x18] sm:$0xff]
  %v730 = vld [vmem:[%s9 + $0x20] sm:$0xff]
  %v731 = vld [vmem:[%s9 + $0x28] sm:$0xff]
  %v732 = vld [vmem:[%s9 + $0x30] sm:$0xff]
  %v733 = vld [vmem:[%s9 + $0x38] sm:$0xff]
  %v734 = vld [vmem:[%s11] sm:$0x3]
  %v736 = vlaneseq
  %v737 = vshrl.u32 %v736, 7
  %v738 = vsub.s32 0, %v737
  %v739 = vrot.slane %v734, %v738
  %v740 = vlaneseq
  %v741 = vshrl.u32 %v740, 7
  %v742 = vsub.s32 1, %v741
  %v743 = vrot.slane %v734, %v742
  %v754 = vunpack.c.l.b16 %v726
  %v755 = vunpack.c.h.b16 %v726
  %v756 = vunpack.c.l.b16 %v727
  %v757 = vunpack.c.h.b16 %v727
  %v758 = vunpack.c.l.b16 %v728
  %v759 = vunpack.c.h.b16 %v728
  %v760 = vunpack.c.l.b16 %v729
  %v761 = vunpack.c.h.b16 %v729
  %v762 = vunpack.c.l.b16 %v730
  %v763 = vunpack.c.h.b16 %v730
  %v764 = vunpack.c.l.b16 %v731
  %v765 = vunpack.c.h.b16 %v731
  %v766 = vunpack.c.l.b16 %v732
  %v767 = vunpack.c.h.b16 %v732
  %v768 = vunpack.c.l.b16 %v733
  %v769 = vunpack.c.h.b16 %v733
  %v770 = vpack.c.b16 %v756, %v754
  %v771 = vpack.c.b16 %v757, %v755
  %v772 = vpack.c.b16 %v760, %v758
  %v773 = vpack.c.b16 %v761, %v759
  %v774 = vpack.c.b16 %v764, %v762
  %v775 = vpack.c.b16 %v765, %v763
  %v776 = vpack.c.b16 %v768, %v766
  %v777 = vpack.c.b16 %v769, %v767
  %v787 = vsel %vm696, %v725, 0
  %789 = vmatprep.subr.bf16.mxu0 %v771
  %790 = vmatpush1.bf16.msra.mxu0 %v770
  %791 = vmatprep.subr.bf16.mxu0 %v773
  %792 = vmatpush1.bf16.msra.mxu0 %v772
  %793 = vmatprep.subr.bf16.mxu0 %v775
  %794 = vmatpush1.bf16.msra.mxu0 %v774
  %795 = vmatprep.subr.bf16.mxu0 %v777
  %796 = vmatpush1.bf16.msra.mxu0 %v776
  %797 = vmatprep.subr.bf16.mxu0 0
  %798 = vmatpush1.bf16.msra.mxu0 0
  %799 = vmatprep.subr.bf16.mxu0 0
  %800 = vmatpush1.bf16.msra.mxu0 0
  %801 = vmatprep.subr.bf16.mxu0 0
  %802 = vmatpush1.bf16.msra.mxu0 0
  %803 = vmatprep.subr.bf16.mxu0 0
  %804 = vmatpush1.bf16.msra.mxu0 0
  %805 = vmatprep.subr.bf16.mxu0 0
  %806 = vmatpush1.bf16.msra.mxu0 0
  %807 = vmatprep.subr.bf16.mxu0 0
  %808 = vmatpush1.bf16.msra.mxu0 0
  %809 = vmatprep.subr.bf16.mxu0 0
  %810 = vmatpush1.bf16.msra.mxu0 0
  %811 = vmatprep.subr.bf16.mxu0 0
  %812 = vmatpush1.bf16.msra.mxu0 0
  %813 = vmatprep.subr.bf16.mxu0 0
  %814 = vmatpush1.bf16.msra.mxu0 0
  %815 = vmatprep.subr.bf16.mxu0 0
  %816 = vmatpush1.bf16.msra.mxu0 0
  %817 = vmatprep.subr.bf16.mxu0 0
  %818 = vmatpush1.bf16.msra.mxu0 0
  %819 = vmatprep.subr.bf16.mxu0 0
  %820 = vmatpush1.bf16.msra.mxu0 0
  %821 = vmatprep.mubr.bf16.mxu0 0
  %822 = vmatmul.mubr.bf16.gmra.mrb[0].mxu0 %v787
  %v823 = vpop.f32.mrb[0].mxu0
  %v824 = vadd.f32 %v739, %v823
  %v825 = vpop.f32.mrb[0].mxu0
  %v826 = vadd.f32 %v743, %v825
  %v827 = vpop.f32.mrb[0].mxu0
  %v828 = vadd.f32 %v739, %v827
  %v829 = vpop.f32.mrb[0].mxu0
  %v830 = vadd.f32 %v743, %v829
  %831 = vdwg.mxu0
  %834 = vrot.lane.b32.xlu0 %v824, 64
  %v835 = vpop.permute.xlu0 %834
  %836 = vrot.lane.b32.xlu0 %v828, 64
  %v837 = vpop.permute.xlu0 %836
  %vm838 = vcmask 130048
  %v839 = vsel %vm838, %v824, 0
  %v841 = vsel %vm838, %v828, 0
  %v843 = vsel %vm838, %v835, 0
  %v845 = vsel %vm838, %v837, 0
  %847 = vmatprep.subr.mxu0 0.0
  %848 = vmatpush1.xpose.msra.mxu0 %v843
  %849 = vmatprep.subr.mxu0 0.0
  %850 = vmatpush1.xpose.msra.mxu0 %v845
  %851 = vmatprep.subr.mxu0 0.0
  %852 = vmatpush1.xpose.msra.mxu0 0.0
  %853 = vmatprep.subr.mxu0 0.0
  %854 = vmatpush1.xpose.msra.mxu0 0.0
  %855 = vmatprep.subr.mxu0 0.0
  %856 = vmatpush1.xpose.msra.mxu0 0.0
  %857 = vmatprep.subr.mxu0 0.0
  %858 = vmatpush1.xpose.msra.mxu0 0.0
  %859 = vmatprep.subr.mxu0 0.0
  %860 = vmatpush1.xpose.msra.mxu0 0.0
  %861 = vmatprep.subr.mxu0 0.0
  %862 = vmatpush1.xpose.msra.mxu0 0.0
  %863 = vmatprep.subr.mxu0 0.0
  %864 = vmatpush1.xpose.msra.mxu0 0.0
  %865 = vmatprep.subr.mxu0 0.0
  %866 = vmatpush1.xpose.msra.mxu0 0.0
  %867 = vmatprep.subr.mxu0 0.0
  %868 = vmatpush1.xpose.msra.mxu0 0.0
  %869 = vmatprep.subr.mxu0 0.0
  %870 = vmatpush1.xpose.msra.mxu0 0.0
  %871 = vmatprep.subr.mxu0 0.0
  %872 = vmatpush1.xpose.msra.mxu0 0.0
  %873 = vmatprep.subr.mxu0 0.0
  %874 = vmatpush1.xpose.msra.mxu0 0.0
  %875 = vmatprep.subr.mxu0 0.0
  %876 = vmatpush1.xpose.msra.mxu0 0.0
  %877 = vmatprep.subr.mxu0 0.0
  %878 = vmatpush1.xpose.msra.mxu0 0.0
  %879 = vmatprep.subr.mxu0 0.0
  %880 = vmatpush1.xpose.msra.mxu0 0.0
  %881 = vmatprep.subr.mxu0 0.0
  %882 = vmatpush1.xpose.msra.mxu0 0.0
  %883 = vmatprep.subr.mxu0 0.0
  %884 = vmatpush1.xpose.msra.mxu0 0.0
  %885 = vmatprep.subr.mxu0 0.0
  %886 = vmatpush1.xpose.msra.mxu0 0.0
  %887 = vmatprep.subr.mxu0 0.0
  %888 = vmatpush1.xpose.msra.mxu0 0.0
  %889 = vmatprep.subr.mxu0 0.0
  %890 = vmatpush1.xpose.msra.mxu0 0.0
  %891 = vmatprep.subr.mxu0 0.0
  %892 = vmatpush1.xpose.msra.mxu0 0.0
  %893 = vmatprep.subr.mxu0 0.0
  %894 = vmatpush1.xpose.msra.mxu0 0.0
  %895 = vmatprep.subr.mxu0 0.0
  %896 = vmatpush1.xpose.msra.mxu0 0.0
  %897 = vmatprep.subr.mxu0 0.0
  %898 = vmatpush1.xpose.msra.mxu0 0.0
  %899 = vmatprep.subr.mxu0 0.0
  %900 = vmatpush1.xpose.msra.mxu0 0.0
  %901 = vmatprep.subr.mxu0 0.0
  %902 = vmatpush1.xpose.msra.mxu0 0.0
  %903 = vmatprep.subr.mxu0 0.0
  %904 = vmatpush1.xpose.msra.mxu0 0.0
  %905 = vmatprep.subr.mxu0 0.0
  %906 = vmatpush1.xpose.msra.mxu0 0.0
  %907 = vmatprep.subr.mxu0 0.0
  %908 = vmatpush1.xpose.msra.mxu0 0.0
  %909 = vmatprep.subr.mxu0 0.0
  %910 = vmatpush1.xpose.msra.mxu0 0.0
  %911 = vmatprep.mubr.f32.mxu0 0.0
  %912 = vmatmul.mubr.f32.gmra.mrb[0].mxu0 %v839
  %v913 = vpop.f32.mrb[0].mxu0
  %v914 = vadd.f32 0.0, %v913
  %v915 = vpop.f32.mrb[0].mxu0
  %916 = vmatprep.mubr.f32.mxu0 0.0
  %917 = vmatmul.mubr.f32.gmra.mrb[0].mxu0 %v841
  %v918 = vpop.f32.mrb[0].mxu0
  %v919 = vadd.f32 0.0, %v918
  %v920 = vpop.f32.mrb[0].mxu0
  %921 = vdwg.mxu0
  %v922 = vmul.f32 %v914, 0.25
  %v923 = vmul.f32 %v919, 0.25
  %v924 = vadd.f32 %v922, %v167
  %v925 = vadd.f32 %v923, %v168
  %vm926 = vcmask 80896
  %v927 = vsel %vm926, %v924, -inf
  %928 = vmax.xlane.f32.xlu0 %v927
  %v929 = vpop.xlane.xlu0 %928
  %vm930 = vcmask 74752
  %v931 = vsel %vm930, %v925, -inf
  %932 = vmax.xlane.f32.xlu0 %v931
  %v933 = vpop.xlane.xlu0 %932
  %v934 = vsub.f32 %v924, %v929
  %v935 = vsub.f32 %v925, %v933
  %v936 = vmul.f32 %v934, 1.442695
  %v937 = vpow.pop %v936
  %v938 = vmul.f32 %v935, 1.442695
  %v939 = vpow.pop %v938
  %v940 = vsel %vm926, %v937, 0.0
  %941 = vadd.xlane.f32.xlu0 %v940
  %v942 = vpop.xlane.xlu0 %941
  %v943 = vsel %vm930, %v939, 0.0
  %944 = vadd.xlane.f32.xlu0 %v943
  %v945 = vpop.xlane.xlu0 %944
  %v946 = vrcp.pop %v942
  %v947 = vmul.f32 %v937, %v946
  %v948 = vrcp.pop %v945
  %v949 = vmul.f32 %v939, %v948
  %v951 = vsel %vm926, %v947, 0
  %v954 = vsel %vm926, %v949, 0
  %vm956 = vcmask 1041408
  %v958 = vsel %vm956, %v830, 0
  %960 = vmatprep.subr.mxu0 0.0
  %961 = vmatpush1.msra.mxu0 %v826
  %962 = vmatprep.subr.mxu0 0.0
  %963 = vmatpush1.msra.mxu0 %v958
  %964 = vmatprep.subr.mxu0 0.0
  %965 = vmatpush1.msra.mxu0 0.0
  %966 = vmatprep.subr.mxu0 0.0
  %967 = vmatpush1.msra.mxu0 0.0
  %968 = vmatprep.subr.mxu0 0.0
  %969 = vmatpush1.msra.mxu0 0.0
  %970 = vmatprep.subr.mxu0 0.0
  %971 = vmatpush1.msra.mxu0 0.0
  %972 = vmatprep.subr.mxu0 0.0
  %973 = vmatpush1.msra.mxu0 0.0
  %974 = vmatprep.subr.mxu0 0.0
  %975 = vmatpush1.msra.mxu0 0.0
  %976 = vmatprep.subr.mxu0 0.0
  %977 = vmatpush1.msra.mxu0 0.0
  %978 = vmatprep.subr.mxu0 0.0
  %979 = vmatpush1.msra.mxu0 0.0
  %980 = vmatprep.subr.mxu0 0.0
  %981 = vmatpush1.msra.mxu0 0.0
  %982 = vmatprep.subr.mxu0 0.0
  %983 = vmatpush1.msra.mxu0 0.0
  %984 = vmatprep.subr.mxu0 0.0
  %985 = vmatpush1.msra.mxu0 0.0
  %986 = vmatprep.subr.mxu0 0.0
  %987 = vmatpush1.msra.mxu0 0.0
  %988 = vmatprep.subr.mxu0 0.0
  %989 = vmatpush1.msra.mxu0 0.0
  %990 = vmatprep.subr.mxu0 0.0
  %991 = vmatpush1.msra.mxu0 0.0
  %992 = vmatprep.subr.mxu0 0.0
  %993 = vmatpush1.msra.mxu0 0.0
  %994 = vmatprep.subr.mxu0 0.0
  %995 = vmatpush1.msra.mxu0 0.0
  %996 = vmatprep.subr.mxu0 0.0
  %997 = vmatpush1.msra.mxu0 0.0
  %998 = vmatprep.subr.mxu0 0.0
  %999 = vmatpush1.msra.mxu0 0.0
  %1000 = vmatprep.subr.mxu0 0.0
  %1001 = vmatpush1.msra.mxu0 0.0
  %1002 = vmatprep.subr.mxu0 0.0
  %1003 = vmatpush1.msra.mxu0 0.0
  %1004 = vmatprep.subr.mxu0 0.0
  %1005 = vmatpush1.msra.mxu0 0.0
  %1006 = vmatprep.subr.mxu0 0.0
  %1007 = vmatpush1.msra.mxu0 0.0
  %1008 = vmatprep.subr.mxu0 0.0
  %1009 = vmatpush1.msra.mxu0 0.0
  %1010 = vmatprep.subr.mxu0 0.0
  %1011 = vmatpush1.msra.mxu0 0.0
  %1012 = vmatprep.subr.mxu0 0.0
  %1013 = vmatpush1.msra.mxu0 0.0
  %1014 = vmatprep.subr.mxu0 0.0
  %1015 = vmatpush1.msra.mxu0 0.0
  %1016 = vmatprep.subr.mxu0 0.0
  %1017 = vmatpush1.msra.mxu0 0.0
  %1018 = vmatprep.subr.mxu0 0.0
  %1019 = vmatpush1.msra.mxu0 0.0
  %1020 = vmatprep.subr.mxu0 0.0
  %1021 = vmatpush1.msra.mxu0 0.0
  %1022 = vmatprep.subr.mxu0 0.0
  %1023 = vmatpush1.msra.mxu0 0.0
  %1024 = vmatprep.mubr.f32.mxu0 0.0
  %1025 = vmatmul.mubr.f32.gmra.mrb[0].mxu0 %v951
  %v1026 = vpop.f32.mrb[0].mxu0
  %v1027 = vadd.f32 0.0, %v1026
  %v1028 = vpop.f32.mrb[0].mxu0
  %1029 = vmatprep.mubr.f32.mxu0 0.0
  %1030 = vmatmul.mubr.f32.gmra.mrb[0].mxu0 %v954
  %v1031 = vpop.f32.mrb[0].mxu0
  %v1032 = vadd.f32 0.0, %v1031
  %v1033 = vpop.f32.mrb[0].mxu0
  %1034 = vdwg.mxu0
  %1035 = vrot.lane.b32.xlu0 %v824, 112
  %v1036 = vpop.permute.xlu0 %1035
  %1037 = vrot.lane.b32.xlu0 %v828, 112
  %v1038 = vpop.permute.xlu0 %1037
  %1039 = vrot.lane.b32.xlu0 %v824, 48
  %v1040 = vpop.permute.xlu0 %1039
  %1041 = vrot.lane.b32.xlu0 %v828, 48
  %v1042 = vpop.permute.xlu0 %1041
  %v1043 = vsel %vm838, %v1036, 0
  %v1045 = vsel %vm838, %v1038, 0
  %v1047 = vsel %vm838, %v1040, 0
  %v1049 = vsel %vm838, %v1042, 0
  %1051 = vmatprep.subr.mxu0 0.0
  %1052 = vmatpush1.xpose.msra.mxu0 %v1047
  %1053 = vmatprep.subr.mxu0 0.0
  %1054 = vmatpush1.xpose.msra.mxu0 %v1049
  %1055 = vmatprep.subr.mxu0 0.0
  %1056 = vmatpush1.xpose.msra.mxu0 0.0
  %1057 = vmatprep.subr.mxu0 0.0
  %1058 = vmatpush1.xpose.msra.mxu0 0.0
  %1059 = vmatprep.subr.mxu0 0.0
  %1060 = vmatpush1.xpose.msra.mxu0 0.0
  %1061 = vmatprep.subr.mxu0 0.0
  %1062 = vmatpush1.xpose.msra.mxu0 0.0
  %1063 = vmatprep.subr.mxu0 0.0
  %1064 = vmatpush1.xpose.msra.mxu0 0.0
  %1065 = vmatprep.subr.mxu0 0.0
  %1066 = vmatpush1.xpose.msra.mxu0 0.0
  %1067 = vmatprep.subr.mxu0 0.0
  %1068 = vmatpush1.xpose.msra.mxu0 0.0
  %1069 = vmatprep.subr.mxu0 0.0
  %1070 = vmatpush1.xpose.msra.mxu0 0.0
  %1071 = vmatprep.subr.mxu0 0.0
  %1072 = vmatpush1.xpose.msra.mxu0 0.0
  %1073 = vmatprep.subr.mxu0 0.0
  %1074 = vmatpush1.xpose.msra.mxu0 0.0
  %1075 = vmatprep.subr.mxu0 0.0
  %1076 = vmatpush1.xpose.msra.mxu0 0.0
  %1077 = vmatprep.subr.mxu0 0.0
  %1078 = vmatpush1.xpose.msra.mxu0 0.0
  %1079 = vmatprep.subr.mxu0 0.0
  %1080 = vmatpush1.xpose.msra.mxu0 0.0
  %1081 = vmatprep.subr.mxu0 0.0
  %1082 = vmatpush1.xpose.msra.mxu0 0.0
  %1083 = vmatprep.subr.mxu0 0.0
  %1084 = vmatpush1.xpose.msra.mxu0 0.0
  %1085 = vmatprep.subr.mxu0 0.0
  %1086 = vmatpush1.xpose.msra.mxu0 0.0
  %1087 = vmatprep.subr.mxu0 0.0
  %1088 = vmatpush1.xpose.msra.mxu0 0.0
  %1089 = vmatprep.subr.mxu0 0.0
  %1090 = vmatpush1.xpose.msra.mxu0 0.0
  %1091 = vmatprep.subr.mxu0 0.0
  %1092 = vmatpush1.xpose.msra.mxu0 0.0
  %1093 = vmatprep.subr.mxu0 0.0
  %1094 = vmatpush1.xpose.msra.mxu0 0.0
  %1095 = vmatprep.subr.mxu0 0.0
  %1096 = vmatpush1.xpose.msra.mxu0 0.0
  %1097 = vmatprep.subr.mxu0 0.0
  %1098 = vmatpush1.xpose.msra.mxu0 0.0
  %1099 = vmatprep.subr.mxu0 0.0
  %1100 = vmatpush1.xpose.msra.mxu0 0.0
  %1101 = vmatprep.subr.mxu0 0.0
  %1102 = vmatpush1.xpose.msra.mxu0 0.0
  %1103 = vmatprep.subr.mxu0 0.0
  %1104 = vmatpush1.xpose.msra.mxu0 0.0
  %1105 = vmatprep.subr.mxu0 0.0
  %1106 = vmatpush1.xpose.msra.mxu0 0.0
  %1107 = vmatprep.subr.mxu0 0.0
  %1108 = vmatpush1.xpose.msra.mxu0 0.0
  %1109 = vmatprep.subr.mxu0 0.0
  %1110 = vmatpush1.xpose.msra.mxu0 0.0
  %1111 = vmatprep.subr.mxu0 0.0
  %1112 = vmatpush1.xpose.msra.mxu0 0.0
  %1113 = vmatprep.subr.mxu0 0.0
  %1114 = vmatpush1.xpose.msra.mxu0 0.0
  %1115 = vmatprep.mubr.f32.mxu0 0.0
  %1116 = vmatmul.mubr.f32.gmra.mrb[0].mxu0 %v1043
  %v1117 = vpop.f32.mrb[0].mxu0
  %v1118 = vadd.f32 0.0, %v1117
  %v1119 = vpop.f32.mrb[0].mxu0
  %1120 = vmatprep.mubr.f32.mxu0 0.0
  %1121 = vmatmul.mubr.f32.gmra.mrb[0].mxu0 %v1045
  %v1122 = vpop.f32.mrb[0].mxu0
  %v1123 = vadd.f32 0.0, %v1122
  %v1124 = vpop.f32.mrb[0].mxu0
  %1125 = vdwg.mxu0
  %v1126 = vmul.f32 %v1118, 0.25
  %v1127 = vmul.f32 %v1123, 0.25
  %v1128 = vadd.f32 %v1126, %v167
  %v1129 = vadd.f32 %v1127, %v168
  %v1130 = vsel %vm926, %v1128, -inf
  %1131 = vmax.xlane.f32.xlu0 %v1130
  %v1132 = vpop.xlane.xlu0 %1131
  %v1133 = vsel %vm930, %v1129, -inf
  %1134 = vmax.xlane.f32.xlu0 %v1133
  %v1135 = vpop.xlane.xlu0 %1134
  %v1136 = vsub.f32 %v1128, %v1132
  %v1137 = vsub.f32 %v1129, %v1135
  %v1138 = vmul.f32 %v1136, 1.442695
  %v1139 = vpow.pop %v1138
  %v1140 = vmul.f32 %v1137, 1.442695
  %v1141 = vpow.pop %v1140
  %v1142 = vsel %vm926, %v1139, 0.0
  %1143 = vadd.xlane.f32.xlu0 %v1142
  %v1144 = vpop.xlane.xlu0 %1143
  %v1145 = vsel %vm930, %v1141, 0.0
  %1146 = vadd.xlane.f32.xlu0 %v1145
  %v1147 = vpop.xlane.xlu0 %1146
  %v1148 = vrcp.pop %v1144
  %v1149 = vmul.f32 %v1139, %v1148
  %v1150 = vrcp.pop %v1147
  %v1151 = vmul.f32 %v1141, %v1150
  %1153 = vrot.lane.b32.xlu0 %v826, 112
  %v1154 = vpop.permute.xlu0 %1153
  %1155 = vrot.lane.b32.xlu0 %v830, 112
  %v1156 = vpop.permute.xlu0 %1155
  %v1159 = vsel %vm926, %v1149, 0
  %v1162 = vsel %vm926, %v1151, 0
  %v1164 = vsel %vm956, %v1156, 0
  %1166 = vmatprep.subr.mxu0 0.0
  %1167 = vmatpush1.msra.mxu0 %v1154
  %1168 = vmatprep.subr.mxu0 0.0
  %1169 = vmatpush1.msra.mxu0 %v1164
  %1170 = vmatprep.subr.mxu0 0.0
  %1171 = vmatpush1.msra.mxu0 0.0
  %1172 = vmatprep.subr.mxu0 0.0
  %1173 = vmatpush1.msra.mxu0 0.0
  %1174 = vmatprep.subr.mxu0 0.0
  %1175 = vmatpush1.msra.mxu0 0.0
  %1176 = vmatprep.subr.mxu0 0.0
  %1177 = vmatpush1.msra.mxu0 0.0
  %1178 = vmatprep.subr.mxu0 0.0
  %1179 = vmatpush1.msra.mxu0 0.0
  %1180 = vmatprep.subr.mxu0 0.0
  %1181 = vmatpush1.msra.mxu0 0.0
  %1182 = vmatprep.subr.mxu0 0.0
  %1183 = vmatpush1.msra.mxu0 0.0
  %1184 = vmatprep.subr.mxu0 0.0
  %1185 = vmatpush1.msra.mxu0 0.0
  %1186 = vmatprep.subr.mxu0 0.0
  %1187 = vmatpush1.msra.mxu0 0.0
  %1188 = vmatprep.subr.mxu0 0.0
  %1189 = vmatpush1.msra.mxu0 0.0
  %1190 = vmatprep.subr.mxu0 0.0
  %1191 = vmatpush1.msra.mxu0 0.0
  %1192 = vmatprep.subr.mxu0 0.0
  %1193 = vmatpush1.msra.mxu0 0.0
  %1194 = vmatprep.subr.mxu0 0.0
  %1195 = vmatpush1.msra.mxu0 0.0
  %1196 = vmatprep.subr.mxu0 0.0
  %1197 = vmatpush1.msra.mxu0 0.0
  %1198 = vmatprep.subr.mxu0 0.0
  %1199 = vmatpush1.msra.mxu0 0.0
  %1200 = vmatprep.subr.mxu0 0.0
  %1201 = vmatpush1.msra.mxu0 0.0
  %1202 = vmatprep.subr.mxu0 0.0
  %1203 = vmatpush1.msra.mxu0 0.0
  %1204 = vmatprep.subr.mxu0 0.0
  %1205 = vmatpush1.msra.mxu0 0.0
  %1206 = vmatprep.subr.mxu0 0.0
  %1207 = vmatpush1.msra.mxu0 0.0
  %1208 = vmatprep.subr.mxu0 0.0
  %1209 = vmatpush1.msra.mxu0 0.0
  %1210 = vmatprep.subr.mxu0 0.0
  %1211 = vmatpush1.msra.mxu0 0.0
  %1212 = vmatprep.subr.mxu0 0.0
  %1213 = vmatpush1.msra.mxu0 0.0
  %1214 = vmatprep.subr.mxu0 0.0
  %1215 = vmatpush1.msra.mxu0 0.0
  %1216 = vmatprep.subr.mxu0 0.0
  %1217 = vmatpush1.msra.mxu0 0.0
  %1218 = vmatprep.subr.mxu0 0.0
  %1219 = vmatpush1.msra.mxu0 0.0
  %1220 = vmatprep.subr.mxu0 0.0
  %1221 = vmatpush1.msra.mxu0 0.0
  %1222 = vmatprep.subr.mxu0 0.0
  %1223 = vmatpush1.msra.mxu0 0.0
  %1224 = vmatprep.subr.mxu0 0.0
  %1225 = vmatpush1.msra.mxu0 0.0
  %1226 = vmatprep.subr.mxu0 0.0
  %1227 = vmatpush1.msra.mxu0 0.0
  %1228 = vmatprep.subr.mxu0 0.0
  %1229 = vmatpush1.msra.mxu0 0.0
  %1230 = vmatprep.mubr.f32.mxu0 0.0
  %1231 = vmatmul.mubr.f32.gmra.mrb[0].mxu0 %v1159
  %v1232 = vpop.f32.mrb[0].mxu0
  %v1233 = vadd.f32 0.0, %v1232
  %v1234 = vpop.f32.mrb[0].mxu0
  %1235 = vmatprep.mubr.f32.mxu0 0.0
  %1236 = vmatmul.mubr.f32.gmra.mrb[0].mxu0 %v1162
  %v1237 = vpop.f32.mrb[0].mxu0
  %v1238 = vadd.f32 0.0, %v1237
  %v1239 = vpop.f32.mrb[0].mxu0
  %1240 = vdwg.mxu0
  %1241 = vrot.lane.b32.xlu0 %v824, 96
  %v1242 = vpop.permute.xlu0 %1241
  %1243 = vrot.lane.b32.xlu0 %v828, 96
  %v1244 = vpop.permute.xlu0 %1243
  %1245 = vrot.lane.b32.xlu0 %v824, 32
  %v1246 = vpop.permute.xlu0 %1245
  %1247 = vrot.lane.b32.xlu0 %v828, 32
  %v1248 = vpop.permute.xlu0 %1247
  %v1249 = vsel %vm838, %v1242, 0
  %v1251 = vsel %vm838, %v1244, 0
  %v1253 = vsel %vm838, %v1246, 0
  %v1255 = vsel %vm838, %v1248, 0
  %1257 = vmatprep.subr.mxu0 0.0
  %1258 = vmatpush1.xpose.msra.mxu0 %v1253
  %1259 = vmatprep.subr.mxu0 0.0
  %1260 = vmatpush1.xpose.msra.mxu0 %v1255
  %1261 = vmatprep.subr.mxu0 0.0
  %1262 = vmatpush1.xpose.msra.mxu0 0.0
  %1263 = vmatprep.subr.mxu0 0.0
  %1264 = vmatpush1.xpose.msra.mxu0 0.0
  %1265 = vmatprep.subr.mxu0 0.0
  %1266 = vmatpush1.xpose.msra.mxu0 0.0
  %1267 = vmatprep.subr.mxu0 0.0
  %1268 = vmatpush1.xpose.msra.mxu0 0.0
  %1269 = vmatprep.subr.mxu0 0.0
  %1270 = vmatpush1.xpose.msra.mxu0 0.0
  %1271 = vmatprep.subr.mxu0 0.0
  %1272 = vmatpush1.xpose.msra.mxu0 0.0
  %1273 = vmatprep.subr.mxu0 0.0
  %1274 = vmatpush1.xpose.msra.mxu0 0.0
  %1275 = vmatprep.subr.mxu0 0.0
  %1276 = vmatpush1.xpose.msra.mxu0 0.0
  %1277 = vmatprep.subr.mxu0 0.0
  %1278 = vmatpush1.xpose.msra.mxu0 0.0
  %1279 = vmatprep.subr.mxu0 0.0
  %1280 = vmatpush1.xpose.msra.mxu0 0.0
  %1281 = vmatprep.subr.mxu0 0.0
  %1282 = vmatpush1.xpose.msra.mxu0 0.0
  %1283 = vmatprep.subr.mxu0 0.0
  %1284 = vmatpush1.xpose.msra.mxu0 0.0
  %1285 = vmatprep.subr.mxu0 0.0
  %1286 = vmatpush1.xpose.msra.mxu0 0.0
  %1287 = vmatprep.subr.mxu0 0.0
  %1288 = vmatpush1.xpose.msra.mxu0 0.0
  %1289 = vmatprep.subr.mxu0 0.0
  %1290 = vmatpush1.xpose.msra.mxu0 0.0
  %1291 = vmatprep.subr.mxu0 0.0
  %1292 = vmatpush1.xpose.msra.mxu0 0.0
  %1293 = vmatprep.subr.mxu0 0.0
  %1294 = vmatpush1.xpose.msra.mxu0 0.0
  %1295 = vmatprep.subr.mxu0 0.0
  %1296 = vmatpush1.xpose.msra.mxu0 0.0
  %1297 = vmatprep.subr.mxu0 0.0
  %1298 = vmatpush1.xpose.msra.mxu0 0.0
  %1299 = vmatprep.subr.mxu0 0.0
  %1300 = vmatpush1.xpose.msra.mxu0 0.0
  %1301 = vmatprep.subr.mxu0 0.0
  %1302 = vmatpush1.xpose.msra.mxu0 0.0
  %1303 = vmatprep.subr.mxu0 0.0
  %1304 = vmatpush1.xpose.msra.mxu0 0.0
  %1305 = vmatprep.subr.mxu0 0.0
  %1306 = vmatpush1.xpose.msra.mxu0 0.0
  %1307 = vmatprep.subr.mxu0 0.0
  %1308 = vmatpush1.xpose.msra.mxu0 0.0
  %1309 = vmatprep.subr.mxu0 0.0
  %1310 = vmatpush1.xpose.msra.mxu0 0.0
  %1311 = vmatprep.subr.mxu0 0.0
  %1312 = vmatpush1.xpose.msra.mxu0 0.0
  %1313 = vmatprep.subr.mxu0 0.0
  %1314 = vmatpush1.xpose.msra.mxu0 0.0
  %1315 = vmatprep.subr.mxu0 0.0
  %1316 = vmatpush1.xpose.msra.mxu0 0.0
  %1317 = vmatprep.subr.mxu0 0.0
  %1318 = vmatpush1.xpose.msra.mxu0 0.0
  %1319 = vmatprep.subr.mxu0 0.0
  %1320 = vmatpush1.xpose.msra.mxu0 0.0
  %1321 = vmatprep.mubr.f32.mxu0 0.0
  %1322 = vmatmul.mubr.f32.gmra.mrb[0].mxu0 %v1249
  %v1323 = vpop.f32.mrb[0].mxu0
  %v1324 = vadd.f32 0.0, %v1323
  %v1325 = vpop.f32.mrb[0].mxu0
  %1326 = vmatprep.mubr.f32.mxu0 0.0
  %1327 = vmatmul.mubr.f32.gmra.mrb[0].mxu0 %v1251
  %v1328 = vpop.f32.mrb[0].mxu0
  %v1329 = vadd.f32 0.0, %v1328
  %v1330 = vpop.f32.mrb[0].mxu0
  %1331 = vdwg.mxu0
  %v1332 = vmul.f32 %v1324, 0.25
  %v1333 = vmul.f32 %v1329, 0.25
  %v1334 = vadd.f32 %v1332, %v167
  %v1335 = vadd.f32 %v1333, %v168
  %v1336 = vsel %vm926, %v1334, -inf
  %1337 = vmax.xlane.f32.xlu0 %v1336
  %v1338 = vpop.xlane.xlu0 %1337
  %v1339 = vsel %vm930, %v1335, -inf
  %1340 = vmax.xlane.f32.xlu0 %v1339
  %v1341 = vpop.xlane.xlu0 %1340
  %v1342 = vsub.f32 %v1334, %v1338
  %v1343 = vsub.f32 %v1335, %v1341
  %v1344 = vmul.f32 %v1342, 1.442695
  %v1345 = vpow.pop %v1344
  %v1346 = vmul.f32 %v1343, 1.442695
  %v1347 = vpow.pop %v1346
  %v1348 = vsel %vm926, %v1345, 0.0
  %1349 = vadd.xlane.f32.xlu0 %v1348
  %v1350 = vpop.xlane.xlu0 %1349
  %v1351 = vsel %vm930, %v1347, 0.0
  %1352 = vadd.xlane.f32.xlu0 %v1351
  %v1353 = vpop.xlane.xlu0 %1352
  %v1354 = vrcp.pop %v1350
  %v1355 = vmul.f32 %v1345, %v1354
  %v1356 = vrcp.pop %v1353
  %v1357 = vmul.f32 %v1347, %v1356
  %1358 = vrot.lane.b32.xlu0 %v826, 96
  %v1359 = vpop.permute.xlu0 %1358
  %1360 = vrot.lane.b32.xlu0 %v830, 96
  %v1361 = vpop.permute.xlu0 %1360
  %v1364 = vsel %vm926, %v1355, 0
  %v1367 = vsel %vm926, %v1357, 0
  %v1369 = vsel %vm956, %v1361, 0
  %1371 = vmatprep.subr.mxu0 0.0
  %1372 = vmatpush1.msra.mxu0 %v1359
  %1373 = vmatprep.subr.mxu0 0.0
  %1374 = vmatpush1.msra.mxu0 %v1369
  %1375 = vmatprep.subr.mxu0 0.0
  %1376 = vmatpush1.msra.mxu0 0.0
  %1377 = vmatprep.subr.mxu0 0.0
  %1378 = vmatpush1.msra.mxu0 0.0
  %1379 = vmatprep.subr.mxu0 0.0
  %1380 = vmatpush1.msra.mxu0 0.0
  %1381 = vmatprep.subr.mxu0 0.0
  %1382 = vmatpush1.msra.mxu0 0.0
  %1383 = vmatprep.subr.mxu0 0.0
  %1384 = vmatpush1.msra.mxu0 0.0
  %1385 = vmatprep.subr.mxu0 0.0
  %1386 = vmatpush1.msra.mxu0 0.0
  %1387 = vmatprep.subr.mxu0 0.0
  %1388 = vmatpush1.msra.mxu0 0.0
  %1389 = vmatprep.subr.mxu0 0.0
  %1390 = vmatpush1.msra.mxu0 0.0
  %1391 = vmatprep.subr.mxu0 0.0
  %1392 = vmatpush1.msra.mxu0 0.0
  %1393 = vmatprep.subr.mxu0 0.0
  %1394 = vmatpush1.msra.mxu0 0.0
  %1395 = vmatprep.subr.mxu0 0.0
  %1396 = vmatpush1.msra.mxu0 0.0
  %1397 = vmatprep.subr.mxu0 0.0
  %1398 = vmatpush1.msra.mxu0 0.0
  %1399 = vmatprep.subr.mxu0 0.0
  %1400 = vmatpush1.msra.mxu0 0.0
  %1401 = vmatprep.subr.mxu0 0.0
  %1402 = vmatpush1.msra.mxu0 0.0
  %1403 = vmatprep.subr.mxu0 0.0
  %1404 = vmatpush1.msra.mxu0 0.0
  %1405 = vmatprep.subr.mxu0 0.0
  %1406 = vmatpush1.msra.mxu0 0.0
  %1407 = vmatprep.subr.mxu0 0.0
  %1408 = vmatpush1.msra.mxu0 0.0
  %1409 = vmatprep.subr.mxu0 0.0
  %1410 = vmatpush1.msra.mxu0 0.0
  %1411 = vmatprep.subr.mxu0 0.0
  %1412 = vmatpush1.msra.mxu0 0.0
  %1413 = vmatprep.subr.mxu0 0.0
  %1414 = vmatpush1.msra.mxu0 0.0
  %1415 = vmatprep.subr.mxu0 0.0
  %1416 = vmatpush1.msra.mxu0 0.0
  %1417 = vmatprep.subr.mxu0 0.0
  %1418 = vmatpush1.msra.mxu0 0.0
  %1419 = vmatprep.subr.mxu0 0.0
  %1420 = vmatpush1.msra.mxu0 0.0
  %1421 = vmatprep.subr.mxu0 0.0
  %1422 = vmatpush1.msra.mxu0 0.0
  %1423 = vmatprep.subr.mxu0 0.0
  %1424 = vmatpush1.msra.mxu0 0.0
  %1425 = vmatprep.subr.mxu0 0.0
  %1426 = vmatpush1.msra.mxu0 0.0
  %1427 = vmatprep.subr.mxu0 0.0
  %1428 = vmatpush1.msra.mxu0 0.0
  %1429 = vmatprep.subr.mxu0 0.0
  %1430 = vmatpush1.msra.mxu0 0.0
  %1431 = vmatprep.subr.mxu0 0.0
  %1432 = vmatpush1.msra.mxu0 0.0
  %1433 = vmatprep.subr.mxu0 0.0
  %1434 = vmatpush1.msra.mxu0 0.0
  %1435 = vmatprep.mubr.f32.mxu0 0.0
  %1436 = vmatmul.mubr.f32.gmra.mrb[0].mxu0 %v1364
  %v1437 = vpop.f32.mrb[0].mxu0
  %v1438 = vadd.f32 0.0, %v1437
  %v1439 = vpop.f32.mrb[0].mxu0
  %1440 = vmatprep.mubr.f32.mxu0 0.0
  %1441 = vmatmul.mubr.f32.gmra.mrb[0].mxu0 %v1367
  %v1442 = vpop.f32.mrb[0].mxu0
  %v1443 = vadd.f32 0.0, %v1442
  %v1444 = vpop.f32.mrb[0].mxu0
  %1445 = vdwg.mxu0
  %1446 = vrot.lane.b32.xlu0 %v824, 80
  %v1447 = vpop.permute.xlu0 %1446
  %1448 = vrot.lane.b32.xlu0 %v828, 80
  %v1449 = vpop.permute.xlu0 %1448
  %1450 = vrot.lane.b32.xlu0 %v824, 16
  %v1451 = vpop.permute.xlu0 %1450
  %1452 = vrot.lane.b32.xlu0 %v828, 16
  %v1453 = vpop.permute.xlu0 %1452
  %v1454 = vsel %vm838, %v1447, 0
  %v1456 = vsel %vm838, %v1449, 0
  %v1458 = vsel %vm838, %v1451, 0
  %v1460 = vsel %vm838, %v1453, 0
  %1462 = vmatprep.subr.mxu0 0.0
  %1463 = vmatpush1.xpose.msra.mxu0 %v1458
  %1464 = vmatprep.subr.mxu0 0.0
  %1465 = vmatpush1.xpose.msra.mxu0 %v1460
  %1466 = vmatprep.subr.mxu0 0.0
  %1467 = vmatpush1.xpose.msra.mxu0 0.0
  %1468 = vmatprep.subr.mxu0 0.0
  %1469 = vmatpush1.xpose.msra.mxu0 0.0
  %1470 = vmatprep.subr.mxu0 0.0
  %1471 = vmatpush1.xpose.msra.mxu0 0.0
  %1472 = vmatprep.subr.mxu0 0.0
  %1473 = vmatpush1.xpose.msra.mxu0 0.0
  %1474 = vmatprep.subr.mxu0 0.0
  %1475 = vmatpush1.xpose.msra.mxu0 0.0
  %1476 = vmatprep.subr.mxu0 0.0
  %1477 = vmatpush1.xpose.msra.mxu0 0.0
  %1478 = vmatprep.subr.mxu0 0.0
  %1479 = vmatpush1.xpose.msra.mxu0 0.0
  %1480 = vmatprep.subr.mxu0 0.0
  %1481 = vmatpush1.xpose.msra.mxu0 0.0
  %1482 = vmatprep.subr.mxu0 0.0
  %1483 = vmatpush1.xpose.msra.mxu0 0.0
  %1484 = vmatprep.subr.mxu0 0.0
  %1485 = vmatpush1.xpose.msra.mxu0 0.0
  %1486 = vmatprep.subr.mxu0 0.0
  %1487 = vmatpush1.xpose.msra.mxu0 0.0
  %1488 = vmatprep.subr.mxu0 0.0
  %1489 = vmatpush1.xpose.msra.mxu0 0.0
  %1490 = vmatprep.subr.mxu0 0.0
  %1491 = vmatpush1.xpose.msra.mxu0 0.0
  %1492 = vmatprep.subr.mxu0 0.0
  %1493 = vmatpush1.xpose.msra.mxu0 0.0
  %1494 = vmatprep.subr.mxu0 0.0
  %1495 = vmatpush1.xpose.msra.mxu0 0.0
  %1496 = vmatprep.subr.mxu0 0.0
  %1497 = vmatpush1.xpose.msra.mxu0 0.0
  %1498 = vmatprep.subr.mxu0 0.0
  %1499 = vmatpush1.xpose.msra.mxu0 0.0
  %1500 = vmatprep.subr.mxu0 0.0
  %1501 = vmatpush1.xpose.msra.mxu0 0.0
  %1502 = vmatprep.subr.mxu0 0.0
  %1503 = vmatpush1.xpose.msra.mxu0 0.0
  %1504 = vmatprep.subr.mxu0 0.0
  %1505 = vmatpush1.xpose.msra.mxu0 0.0
  %1506 = vmatprep.subr.mxu0 0.0
  %1507 = vmatpush1.xpose.msra.mxu0 0.0
  %1508 = vmatprep.subr.mxu0 0.0
  %1509 = vmatpush1.xpose.msra.mxu0 0.0
  %1510 = vmatprep.subr.mxu0 0.0
  %1511 = vmatpush1.xpose.msra.mxu0 0.0
  %1512 = vmatprep.subr.mxu0 0.0
  %1513 = vmatpush1.xpose.msra.mxu0 0.0
  %1514 = vmatprep.subr.mxu0 0.0
  %1515 = vmatpush1.xpose.msra.mxu0 0.0
  %1516 = vmatprep.subr.mxu0 0.0
  %1517 = vmatpush1.xpose.msra.mxu0 0.0
  %1518 = vmatprep.subr.mxu0 0.0
  %1519 = vmatpush1.xpose.msra.mxu0 0.0
  %1520 = vmatprep.subr.mxu0 0.0
  %1521 = vmatpush1.xpose.msra.mxu0 0.0
  %1522 = vmatprep.subr.mxu0 0.0
  %1523 = vmatpush1.xpose.msra.mxu0 0.0
  %1524 = vmatprep.subr.mxu0 0.0
  %1525 = vmatpush1.xpose.msra.mxu0 0.0
  %1526 = vmatprep.mubr.f32.mxu0 0.0
  %1527 = vmatmul.mubr.f32.gmra.mrb[0].mxu0 %v1454
  %v1528 = vpop.f32.mrb[0].mxu0
  %v1529 = vadd.f32 0.0, %v1528
  %v1530 = vpop.f32.mrb[0].mxu0
  %1531 = vmatprep.mubr.f32.mxu0 0.0
  %1532 = vmatmul.mubr.f32.gmra.mrb[0].mxu0 %v1456
  %v1533 = vpop.f32.mrb[0].mxu0
  %v1534 = vadd.f32 0.0, %v1533
  %v1535 = vpop.f32.mrb[0].mxu0
  %1536 = vdwg.mxu0
  %v1537 = vmul.f32 %v1529, 0.25
  %v1538 = vmul.f32 %v1534, 0.25
  %v1539 = vadd.f32 %v1537, %v167
  %v1540 = vadd.f32 %v1538, %v168
  %v1541 = vsel %vm926, %v1539, -inf
  %1542 = vmax.xlane.f32.xlu0 %v1541
  %v1543 = vpop.xlane.xlu0 %1542
  %v1544 = vsel %vm930, %v1540, -inf
  %1545 = vmax.xlane.f32.xlu0 %v1544
  %v1546 = vpop.xlane.xlu0 %1545
  %v1547 = vsub.f32 %v1539, %v1543
  %v1548 = vsub.f32 %v1540, %v1546
  %v1549 = vmul.f32 %v1547, 1.442695
  %v1550 = vpow.pop %v1549
  %v1551 = vmul.f32 %v1548, 1.442695
  %v1552 = vpow.pop %v1551
  %v1553 = vsel %vm926, %v1550, 0.0
  %1554 = vadd.xlane.f32.xlu0 %v1553
  %v1555 = vpop.xlane.xlu0 %1554
  %v1556 = vsel %vm930, %v1552, 0.0
  %1557 = vadd.xlane.f32.xlu0 %v1556
  %v1558 = vpop.xlane.xlu0 %1557
  %v1559 = vrcp.pop %v1555
  %v1560 = vmul.f32 %v1550, %v1559
  %v1561 = vrcp.pop %v1558
  %v1562 = vmul.f32 %v1552, %v1561
  %1563 = vrot.lane.b32.xlu0 %v826, 80
  %v1564 = vpop.permute.xlu0 %1563
  %1565 = vrot.lane.b32.xlu0 %v830, 80
  %v1566 = vpop.permute.xlu0 %1565
  %v1569 = vsel %vm926, %v1560, 0
  %v1572 = vsel %vm926, %v1562, 0
  %v1574 = vsel %vm956, %v1566, 0
  %1576 = vmatprep.subr.mxu0 0.0
  %1577 = vmatpush1.msra.mxu0 %v1564
  %1578 = vmatprep.subr.mxu0 0.0
  %1579 = vmatpush1.msra.mxu0 %v1574
  %1580 = vmatprep.subr.mxu0 0.0
  %1581 = vmatpush1.msra.mxu0 0.0
  %1582 = vmatprep.subr.mxu0 0.0
  %1583 = vmatpush1.msra.mxu0 0.0
  %1584 = vmatprep.subr.mxu0 0.0
  %1585 = vmatpush1.msra.mxu0 0.0
  %1586 = vmatprep.subr.mxu0 0.0
  %1587 = vmatpush1.msra.mxu0 0.0
  %1588 = vmatprep.subr.mxu0 0.0
  %1589 = vmatpush1.msra.mxu0 0.0
  %1590 = vmatprep.subr.mxu0 0.0
  %1591 = vmatpush1.msra.mxu0 0.0
  %1592 = vmatprep.subr.mxu0 0.0
  %1593 = vmatpush1.msra.mxu0 0.0
  %1594 = vmatprep.subr.mxu0 0.0
  %1595 = vmatpush1.msra.mxu0 0.0
  %1596 = vmatprep.subr.mxu0 0.0
  %1597 = vmatpush1.msra.mxu0 0.0
  %1598 = vmatprep.subr.mxu0 0.0
  %1599 = vmatpush1.msra.mxu0 0.0
  %1600 = vmatprep.subr.mxu0 0.0
  %1601 = vmatpush1.msra.mxu0 0.0
  %1602 = vmatprep.subr.mxu0 0.0
  %1603 = vmatpush1.msra.mxu0 0.0
  %1604 = vmatprep.subr.mxu0 0.0
  %1605 = vmatpush1.msra.mxu0 0.0
  %1606 = vmatprep.subr.mxu0 0.0
  %1607 = vmatpush1.msra.mxu0 0.0
  %1608 = vmatprep.subr.mxu0 0.0
  %1609 = vmatpush1.msra.mxu0 0.0
  %1610 = vmatprep.subr.mxu0 0.0
  %1611 = vmatpush1.msra.mxu0 0.0
  %1612 = vmatprep.subr.mxu0 0.0
  %1613 = vmatpush1.msra.mxu0 0.0
  %1614 = vmatprep.subr.mxu0 0.0
  %1615 = vmatpush1.msra.mxu0 0.0
  %1616 = vmatprep.subr.mxu0 0.0
  %1617 = vmatpush1.msra.mxu0 0.0
  %1618 = vmatprep.subr.mxu0 0.0
  %1619 = vmatpush1.msra.mxu0 0.0
  %1620 = vmatprep.subr.mxu0 0.0
  %1621 = vmatpush1.msra.mxu0 0.0
  %1622 = vmatprep.subr.mxu0 0.0
  %1623 = vmatpush1.msra.mxu0 0.0
  %1624 = vmatprep.subr.mxu0 0.0
  %1625 = vmatpush1.msra.mxu0 0.0
  %1626 = vmatprep.subr.mxu0 0.0
  %1627 = vmatpush1.msra.mxu0 0.0
  %1628 = vmatprep.subr.mxu0 0.0
  %1629 = vmatpush1.msra.mxu0 0.0
  %1630 = vmatprep.subr.mxu0 0.0
  %1631 = vmatpush1.msra.mxu0 0.0
  %1632 = vmatprep.subr.mxu0 0.0
  %1633 = vmatpush1.msra.mxu0 0.0
  %1634 = vmatprep.subr.mxu0 0.0
  %1635 = vmatpush1.msra.mxu0 0.0
  %1636 = vmatprep.subr.mxu0 0.0
  %1637 = vmatpush1.msra.mxu0 0.0
  %1638 = vmatprep.subr.mxu0 0.0
  %1639 = vmatpush1.msra.mxu0 0.0
  %1640 = vmatprep.mubr.f32.mxu0 0.0
  %1641 = vmatmul.mubr.f32.gmra.mrb[0].mxu0 %v1569
  %v1642 = vpop.f32.mrb[0].mxu0
  %v1643 = vadd.f32 0.0, %v1642
  %v1644 = vpop.f32.mrb[0].mxu0
  %1645 = vmatprep.mubr.f32.mxu0 0.0
  %1646 = vmatmul.mubr.f32.gmra.mrb[0].mxu0 %v1572
  %v1647 = vpop.f32.mrb[0].mxu0
  %v1648 = vadd.f32 0.0, %v1647
  %v1649 = vpop.f32.mrb[0].mxu0
  %1650 = vdwg.mxu0
  %1653 = vrot.lane.b32.xlu0 %v1233, 16
  %v1654 = vpop.permute.xlu0 %1653
  %1655 = vrot.lane.b32.xlu0 %v1238, 16
  %v1656 = vpop.permute.xlu0 %1655
  %1661 = vrot.lane.b32.xlu0 %v1438, 32
  %v1662 = vpop.permute.xlu0 %1661
  %1663 = vrot.lane.b32.xlu0 %v1443, 32
  %v1664 = vpop.permute.xlu0 %1663
  %1669 = vrot.lane.b32.xlu0 %v1643, 48
  %v1670 = vpop.permute.xlu0 %1669
  %1671 = vrot.lane.b32.xlu0 %v1648, 48
  %v1672 = vpop.permute.xlu0 %1671
  %v1675 = vsel %vm838, %v1027, %v1654
  %v1676 = vsel %vm838, %v1032, %v1656
  %vm1677 = vcmask 261120
  %v1678 = vsel %vm1677, %v1675, %v1662
  %v1679 = vsel %vm1677, %v1676, %v1664
  %vm1680 = vcmask 392192
  %v1681 = vsel %vm1680, %v1678, %v1670
  %v1682 = vsel %vm1680, %v1679, %v1672
  %v1683 = vpack.c.bf16 %v1682, %v1681
  %v1684 = vld [vmem:[%s13] sm:$0xf]
  %v1685 = vld [vmem:[%s13 + $0x4] sm:$0xf]
  %v1686 = vld [vmem:[%s13 + $0x8] sm:$0xf]
  %v1687 = vld [vmem:[%s13 + $0xc] sm:$0xf]
  %v1688 = vld [vmem:[%s13 + $0x10] sm:$0xf]
  %v1689 = vld [vmem:[%s13 + $0x14] sm:$0xf]
  %v1690 = vld [vmem:[%s13 + $0x18] sm:$0xf]
  %v1691 = vld [vmem:[%s13 + $0x1c] sm:$0xf]
  %v1692 = vld [vmem:[%s15] sm:$0x1]
  %v1694 = vlaneseq
  %v1695 = vshrl.u32 %v1694, 7
  %v1696 = vsub.s32 0, %v1695
  %v1697 = vrot.slane %v1692, %v1696
  %v1707 = vunpack.c.l.b16 %v1684
  %v1708 = vunpack.c.l.b16 %v1685
  %v1709 = vunpack.c.l.b16 %v1686
  %v1710 = vunpack.c.l.b16 %v1687
  %v1711 = vunpack.c.l.b16 %v1688
  %v1712 = vunpack.c.l.b16 %v1689
  %v1713 = vunpack.c.l.b16 %v1690
  %v1714 = vunpack.c.l.b16 %v1691
  %v1715 = vpack.c.b16 %v1708, %v1707
  %v1716 = vpack.c.b16 %v1710, %v1709
  %v1717 = vpack.c.b16 %v1712, %v1711
  %v1718 = vpack.c.b16 %v1714, %v1713
  %v1724 = vsel %vm696, %v1683, 0
  %1726 = vmatprep.subr.bf16.mxu0 0
  %1727 = vmatpush1.bf16.msra.mxu0 %v1715
  %1728 = vmatprep.subr.bf16.mxu0 0
  %1729 = vmatpush1.bf16.msra.mxu0 %v1716
  %1730 = vmatprep.subr.bf16.mxu0 0
  %1731 = vmatpush1.bf16.msra.mxu0 %v1717
  %1732 = vmatprep.subr.bf16.mxu0 0
  %1733 = vmatpush1.bf16.msra.mxu0 %v1718
  %1734 = vmatprep.subr.bf16.mxu0 0
  %1735 = vmatpush1.bf16.msra.mxu0 0
  %1736 = vmatprep.subr.bf16.mxu0 0
  %1737 = vmatpush1.bf16.msra.mxu0 0
  %1738 = vmatprep.subr.bf16.mxu0 0
  %1739 = vmatpush1.bf16.msra.mxu0 0
  %1740 = vmatprep.subr.bf16.mxu0 0
  %1741 = vmatpush1.bf16.msra.mxu0 0
  %1742 = vmatprep.subr.bf16.mxu0 0
  %1743 = vmatpush1.bf16.msra.mxu0 0
  %1744 = vmatprep.subr.bf16.mxu0 0
  %1745 = vmatpush1.bf16.msra.mxu0 0
  %1746 = vmatprep.subr.bf16.mxu0 0
  %1747 = vmatpush1.bf16.msra.mxu0 0
  %1748 = vmatprep.subr.bf16.mxu0 0
  %1749 = vmatpush1.bf16.msra.mxu0 0
  %1750 = vmatprep.subr.bf16.mxu0 0
  %1751 = vmatpush1.bf16.msra.mxu0 0
  %1752 = vmatprep.subr.bf16.mxu0 0
  %1753 = vmatpush1.bf16.msra.mxu0 0
  %1754 = vmatprep.subr.bf16.mxu0 0
  %1755 = vmatpush1.bf16.msra.mxu0 0
  %1756 = vmatprep.subr.bf16.mxu0 0
  %1757 = vmatpush1.bf16.msra.mxu0 0
  %1758 = vmatprep.mubr.bf16.mxu0 0
  %1759 = vmatmul.mubr.bf16.gmra.mrb[0].mxu0 %v1724
  %v1760 = vpop.f32.mrb[0].mxu0
  %v1761 = vadd.f32 %v1697, %v1760
  %v1762 = vpop.f32.mrb[0].mxu0
  %v1763 = vpop.f32.mrb[0].mxu0
  %v1764 = vadd.f32 %v1697, %v1763
  %v1765 = vpop.f32.mrb[0].mxu0
  %1766 = vdwg.mxu0
  %v1767 = vadd.f32 %v690, %v1761
  %v1768 = vadd.f32 %v693, %v1764
  %v1769 = vsel %vm696, %v1767, 0.0
  %1770 = vadd.xlane.f32.xlu0 %v1769
  %v1771 = vpop.xlane.xlu0 %1770
  %v1772 = vsel %vm700, %v1768, 0.0
  %1773 = vadd.xlane.f32.xlu0 %v1772
  %v1774 = vpop.xlane.xlu0 %1773
  %v1775 = vmul.f32 %v1771, %v704
  %v1776 = vmul.f32 %v1774, %v704
  %v1777 = vsub.f32 %v1767, %v1775
  %v1778 = vsub.f32 %v1768, %v1776
  %v1779 = vmul.f32 %v1777, %v1777
  %v1780 = vmul.f32 %v1778, %v1778
  %v1781 = vsel %vm696, %v1779, 0.0
  %1782 = vadd.xlane.f32.xlu0 %v1781
  %v1783 = vpop.xlane.xlu0 %1782
  %v1784 = vsel %vm700, %v1780, 0.0
  %1785 = vadd.xlane.f32.xlu0 %v1784
  %v1786 = vpop.xlane.xlu0 %1785
  %v1787 = vmul.f32 %v1783, %v704
  %v1788 = vmul.f32 %v1786, %v704
  %v1789 = vadd.f32 %v1787, 1e-06
  %v1790 = vadd.f32 %v1788, 1e-06
  %v1791 = vrsqrt.pop %v1789
  %v1792 = vrsqrt.pop %v1790
  %v1793 = vmul.f32 %v1777, %v1791
  %v1794 = vmul.f32 %v1778, %v1792
  %v1795 = vpack.c.bf16 %v1794, %v1793
  %v1796 = vld [vmem:[%s17] sm:$0xff]
  %v1797 = vld [vmem:[%s17 + $0x8] sm:$0xff]
  %v1798 = vld [vmem:[%s17 + $0x10] sm:$0xff]
  %v1799 = vld [vmem:[%s17 + $0x18] sm:$0xff]
  %v1800 = vld [vmem:[%s17 + $0x20] sm:$0xff]
  %v1801 = vld [vmem:[%s17 + $0x28] sm:$0xff]
  %v1802 = vld [vmem:[%s17 + $0x30] sm:$0xff]
  %v1803 = vld [vmem:[%s17 + $0x38] sm:$0xff]
  %v1804 = vld [vmem:[%s19] sm:$0x3]
  %v1806 = vlaneseq
  %v1807 = vshrl.u32 %v1806, 7
  %v1808 = vsub.s32 0, %v1807
  %v1809 = vrot.slane %v1804, %v1808
  %v1810 = vlaneseq
  %v1811 = vshrl.u32 %v1810, 7
  %v1812 = vsub.s32 1, %v1811
  %v1813 = vrot.slane %v1804, %v1812
  %v1824 = vunpack.c.l.b16 %v1796
  %v1825 = vunpack.c.h.b16 %v1796
  %v1826 = vunpack.c.l.b16 %v1797
  %v1827 = vunpack.c.h.b16 %v1797
  %v1828 = vunpack.c.l.b16 %v1798
  %v1829 = vunpack.c.h.b16 %v1798
  %v1830 = vunpack.c.l.b16 %v1799
  %v1831 = vunpack.c.h.b16 %v1799
  %v1832 = vunpack.c.l.b16 %v1800
  %v1833 = vunpack.c.h.b16 %v1800
  %v1834 = vunpack.c.l.b16 %v1801
  %v1835 = vunpack.c.h.b16 %v1801
  %v1836 = vunpack.c.l.b16 %v1802
  %v1837 = vunpack.c.h.b16 %v1802
  %v1838 = vunpack.c.l.b16 %v1803
  %v1839 = vunpack.c.h.b16 %v1803
  %v1840 = vpack.c.b16 %v1826, %v1824
  %v1841 = vpack.c.b16 %v1827, %v1825
  %v1842 = vpack.c.b16 %v1830, %v1828
  %v1843 = vpack.c.b16 %v1831, %v1829
  %v1844 = vpack.c.b16 %v1834, %v1832
  %v1845 = vpack.c.b16 %v1835, %v1833
  %v1846 = vpack.c.b16 %v1838, %v1836
  %v1847 = vpack.c.b16 %v1839, %v1837
  %v1857 = vsel %vm696, %v1795, 0
  %1859 = vmatprep.subr.bf16.mxu0 %v1841
  %1860 = vmatpush1.bf16.msra.mxu0 %v1840
  %1861 = vmatprep.subr.bf16.mxu0 %v1843
  %1862 = vmatpush1.bf16.msra.mxu0 %v1842
  %1863 = vmatprep.subr.bf16.mxu0 %v1845
  %1864 = vmatpush1.bf16.msra.mxu0 %v1844
  %1865 = vmatprep.subr.bf16.mxu0 %v1847
  %1866 = vmatpush1.bf16.msra.mxu0 %v1846
  %1867 = vmatprep.subr.bf16.mxu0 0
  %1868 = vmatpush1.bf16.msra.mxu0 0
  %1869 = vmatprep.subr.bf16.mxu0 0
  %1870 = vmatpush1.bf16.msra.mxu0 0
  %1871 = vmatprep.subr.bf16.mxu0 0
  %1872 = vmatpush1.bf16.msra.mxu0 0
  %1873 = vmatprep.subr.bf16.mxu0 0
  %1874 = vmatpush1.bf16.msra.mxu0 0
  %1875 = vmatprep.subr.bf16.mxu0 0
  %1876 = vmatpush1.bf16.msra.mxu0 0
  %1877 = vmatprep.subr.bf16.mxu0 0
  %1878 = vmatpush1.bf16.msra.mxu0 0
  %1879 = vmatprep.subr.bf16.mxu0 0
  %1880 = vmatpush1.bf16.msra.mxu0 0
  %1881 = vmatprep.subr.bf16.mxu0 0
  %1882 = vmatpush1.bf16.msra.mxu0 0
  %1883 = vmatprep.subr.bf16.mxu0 0
  %1884 = vmatpush1.bf16.msra.mxu0 0
  %1885 = vmatprep.subr.bf16.mxu0 0
  %1886 = vmatpush1.bf16.msra.mxu0 0
  %1887 = vmatprep.subr.bf16.mxu0 0
  %1888 = vmatpush1.bf16.msra.mxu0 0
  %1889 = vmatprep.subr.bf16.mxu0 0
  %1890 = vmatpush1.bf16.msra.mxu0 0
  %1891 = vmatprep.mubr.bf16.mxu0 0
  %1892 = vmatmul.mubr.bf16.gmra.mrb[0].mxu0 %v1857
  %v1893 = vpop.f32.mrb[0].mxu0
  %v1894 = vadd.f32 %v1809, %v1893
  %v1895 = vpop.f32.mrb[0].mxu0
  %v1896 = vadd.f32 %v1813, %v1895
  %v1897 = vpop.f32.mrb[0].mxu0
  %v1898 = vadd.f32 %v1809, %v1897
  %v1899 = vpop.f32.mrb[0].mxu0
  %v1900 = vadd.f32 %v1813, %v1899
  %1901 = vdwg.mxu0
  %v1902 = vmul.f32 %v1894, 0.5
  %v1903 = vmul.f32 %v1896, 0.5
  %v1904 = vmul.f32 %v1898, 0.5
  %v1905 = vmul.f32 %v1900, 0.5
  %v1906 = vmul.f32 %v1894, 0.70710677
  %v1907 = vmul.f32 %v1896, 0.70710677
  %v1908 = vmul.f32 %v1898, 0.70710677
  %v1909 = vmul.f32 %v1900, 0.70710677
  %v1910 = verf.f32.pop %v1906
  %v1911 = verf.f32.pop %v1907
  %v1912 = verf.f32.pop %v1908
  %v1913 = verf.f32.pop %v1909
  %v1914 = vadd.f32 %v1910, 1.0
  %v1915 = vadd.f32 %v1911, 1.0
  %v1916 = vadd.f32 %v1912, 1.0
  %v1917 = vadd.f32 %v1913, 1.0
  %v1918 = vmul.f32 %v1902, %v1914
  %v1919 = vmul.f32 %v1903, %v1915
  %v1920 = vmul.f32 %v1904, %v1916
  %v1921 = vmul.f32 %v1905, %v1917
  %v1922 = vpack.c.bf16 %v1920, %v1918
  %v1923 = vpack.c.bf16 %v1921, %v1919
  %v1924 = vld [vmem:[%s21] sm:$0xf]
  %v1925 = vld [vmem:[%s21 + $0x4] sm:$0xf]
  %v1926 = vld [vmem:[%s21 + $0x8] sm:$0xf]
  %v1927 = vld [vmem:[%s21 + $0xc] sm:$0xf]
  %v1928 = vld [vmem:[%s21 + $0x10] sm:$0xf]
  %v1929 = vld [vmem:[%s21 + $0x14] sm:$0xf]
  %v1930 = vld [vmem:[%s21 + $0x18] sm:$0xf]
  %v1931 = vld [vmem:[%s21 + $0x1c] sm:$0xf]
  %v1932 = vld [vmem:[%s21 + $0x20] sm:$0xf]
  %v1933 = vld [vmem:[%s21 + $0x24] sm:$0xf]
  %v1934 = vld [vmem:[%s21 + $0x28] sm:$0xf]
  %v1935 = vld [vmem:[%s21 + $0x2c] sm:$0xf]
  %v1936 = vld [vmem:[%s21 + $0x30] sm:$0xf]
  %v1937 = vld [vmem:[%s21 + $0x34] sm:$0xf]
  %v1938 = vld [vmem:[%s21 + $0x38] sm:$0xf]
  %v1939 = vld [vmem:[%s21 + $0x3c] sm:$0xf]
  %v1940 = vld [vmem:[%s21 + $0x40] sm:$0xf]
  %v1941 = vld [vmem:[%s21 + $0x44] sm:$0xf]
  %v1942 = vld [vmem:[%s21 + $0x48] sm:$0xf]
  %v1943 = vld [vmem:[%s21 + $0x4c] sm:$0xf]
  %v1944 = vld [vmem:[%s21 + $0x50] sm:$0xf]
  %v1945 = vld [vmem:[%s21 + $0x54] sm:$0xf]
  %v1946 = vld [vmem:[%s21 + $0x58] sm:$0xf]
  %v1947 = vld [vmem:[%s21 + $0x5c] sm:$0xf]
  %v1948 = vld [vmem:[%s21 + $0x60] sm:$0xf]
  %v1949 = vld [vmem:[%s21 + $0x64] sm:$0xf]
  %v1950 = vld [vmem:[%s21 + $0x68] sm:$0xf]
  %v1951 = vld [vmem:[%s21 + $0x6c] sm:$0xf]
  %v1952 = vld [vmem:[%s21 + $0x70] sm:$0xf]
  %v1953 = vld [vmem:[%s21 + $0x74] sm:$0xf]
  %v1954 = vld [vmem:[%s21 + $0x78] sm:$0xf]
  %v1955 = vld [vmem:[%s21 + $0x7c] sm:$0xf]
  %v1956 = vld [vmem:[%s23] sm:$0x1]
  %v1958 = vlaneseq
  %v1959 = vshrl.u32 %v1958, 7
  %v1960 = vsub.s32 0, %v1959
  %v1961 = vrot.slane %v1956, %v1960
  %v1995 = vunpack.c.l.b16 %v1924
  %v1996 = vunpack.c.l.b16 %v1925
  %v1997 = vunpack.c.l.b16 %v1926
  %v1998 = vunpack.c.l.b16 %v1927
  %v1999 = vunpack.c.l.b16 %v1928
  %v2000 = vunpack.c.l.b16 %v1929
  %v2001 = vunpack.c.l.b16 %v1930
  %v2002 = vunpack.c.l.b16 %v1931
  %v2003 = vunpack.c.l.b16 %v1932
  %v2004 = vunpack.c.l.b16 %v1933
  %v2005 = vunpack.c.l.b16 %v1934
  %v2006 = vunpack.c.l.b16 %v1935
  %v2007 = vunpack.c.l.b16 %v1936
  %v2008 = vunpack.c.l.b16 %v1937
  %v2009 = vunpack.c.l.b16 %v1938
  %v2010 = vunpack.c.l.b16 %v1939
  %v2011 = vunpack.c.l.b16 %v1940
  %v2012 = vunpack.c.l.b16 %v1941
  %v2013 = vunpack.c.l.b16 %v1942
  %v2014 = vunpack.c.l.b16 %v1943
  %v2015 = vunpack.c.l.b16 %v1944
  %v2016 = vunpack.c.l.b16 %v1945
  %v2017 = vunpack.c.l.b16 %v1946
  %v2018 = vunpack.c.l.b16 %v1947
  %v2019 = vunpack.c.l.b16 %v1948
  %v2020 = vunpack.c.l.b16 %v1949
  %v2021 = vunpack.c.l.b16 %v1950
  %v2022 = vunpack.c.l.b16 %v1951
  %v2023 = vunpack.c.l.b16 %v1952
  %v2024 = vunpack.c.l.b16 %v1953
  %v2025 = vunpack.c.l.b16 %v1954
  %v2026 = vunpack.c.l.b16 %v1955
  %v2027 = vpack.c.b16 %v1996, %v1995
  %v2028 = vpack.c.b16 %v1998, %v1997
  %v2029 = vpack.c.b16 %v2000, %v1999
  %v2030 = vpack.c.b16 %v2002, %v2001
  %v2031 = vpack.c.b16 %v2004, %v2003
  %v2032 = vpack.c.b16 %v2006, %v2005
  %v2033 = vpack.c.b16 %v2008, %v2007
  %v2034 = vpack.c.b16 %v2010, %v2009
  %v2035 = vpack.c.b16 %v2012, %v2011
  %v2036 = vpack.c.b16 %v2014, %v2013
  %v2037 = vpack.c.b16 %v2016, %v2015
  %v2038 = vpack.c.b16 %v2018, %v2017
  %v2039 = vpack.c.b16 %v2020, %v2019
  %v2040 = vpack.c.b16 %v2022, %v2021
  %v2041 = vpack.c.b16 %v2024, %v2023
  %v2042 = vpack.c.b16 %v2026, %v2025
  %2059 = vmatprep.subr.bf16.mxu0 0
  %2060 = vmatpush1.bf16.msra.mxu0 %v2027
  %2061 = vmatprep.subr.bf16.mxu0 0
  %2062 = vmatpush1.bf16.msra.mxu0 %v2028
  %2063 = vmatprep.subr.bf16.mxu0 0
  %2064 = vmatpush1.bf16.msra.mxu0 %v2029
  %2065 = vmatprep.subr.bf16.mxu0 0
  %2066 = vmatpush1.bf16.msra.mxu0 %v2030
  %2067 = vmatprep.subr.bf16.mxu0 0
  %2068 = vmatpush1.bf16.msra.mxu0 %v2031
  %2069 = vmatprep.subr.bf16.mxu0 0
  %2070 = vmatpush1.bf16.msra.mxu0 %v2032
  %2071 = vmatprep.subr.bf16.mxu0 0
  %2072 = vmatpush1.bf16.msra.mxu0 %v2033
  %2073 = vmatprep.subr.bf16.mxu0 0
  %2074 = vmatpush1.bf16.msra.mxu0 %v2034
  %2075 = vmatprep.subr.bf16.mxu0 0
  %2076 = vmatpush1.bf16.msra.mxu0 %v2035
  %2077 = vmatprep.subr.bf16.mxu0 0
  %2078 = vmatpush1.bf16.msra.mxu0 %v2036
  %2079 = vmatprep.subr.bf16.mxu0 0
  %2080 = vmatpush1.bf16.msra.mxu0 %v2037
  %2081 = vmatprep.subr.bf16.mxu0 0
  %2082 = vmatpush1.bf16.msra.mxu0 %v2038
  %2083 = vmatprep.subr.bf16.mxu0 0
  %2084 = vmatpush1.bf16.msra.mxu0 %v2039
  %2085 = vmatprep.subr.bf16.mxu0 0
  %2086 = vmatpush1.bf16.msra.mxu0 %v2040
  %2087 = vmatprep.subr.bf16.mxu0 0
  %2088 = vmatpush1.bf16.msra.mxu0 %v2041
  %2089 = vmatprep.subr.bf16.mxu0 0
  %2090 = vmatpush1.bf16.msra.mxu0 %v2042
  %2091 = vmatprep.mubr.bf16.mxu0 %v1923
  %2092 = vmatmul.mubr.bf16.gmra.mrb[0].mxu0 %v1922
  %v2093 = vpop.f32.mrb[0].mxu0
  %v2094 = vadd.f32 %v1961, %v2093
  %v2095 = vpop.f32.mrb[0].mxu0
  %v2096 = vpop.f32.mrb[0].mxu0
  %v2097 = vadd.f32 %v1961, %v2096
  %v2098 = vpop.f32.mrb[0].mxu0
  %2099 = vdwg.mxu0
  %v2100 = vadd.f32 %v1767, %v2094
  %v2101 = vadd.f32 %v1768, %v2097
  %v2102 = vsel %vm696, %v2100, 0.0
  %2103 = vadd.xlane.f32.xlu0 %v2102
  %v2104 = vpop.xlane.xlu0 %2103
  %v2105 = vsel %vm700, %v2101, 0.0
  %2106 = vadd.xlane.f32.xlu0 %v2105
  %v2107 = vpop.xlane.xlu0 %2106
  %v2108 = vmul.f32 %v2104, %v704
  %v2109 = vmul.f32 %v2107, %v704
  %v2110 = vsub.f32 %v2100, %v2108
  %v2111 = vsub.f32 %v2101, %v2109
  %v2112 = vmul.f32 %v2110, %v2110
  %v2113 = vmul.f32 %v2111, %v2111
  %v2114 = vsel %vm696, %v2112, 0.0
  %2115 = vadd.xlane.f32.xlu0 %v2114
  %v2116 = vpop.xlane.xlu0 %2115
  %v2117 = vsel %vm700, %v2113, 0.0
  %2118 = vadd.xlane.f32.xlu0 %v2117
  %v2119 = vpop.xlane.xlu0 %2118
  %v2120 = vmul.f32 %v2116, %v704
  %v2121 = vmul.f32 %v2119, %v704
  %v2122 = vadd.f32 %v2120, 1e-06
  %v2123 = vadd.f32 %v2121, 1e-06
  %v2124 = vrsqrt.pop %v2122
  %v2125 = vrsqrt.pop %v2123
  %v2126 = vmul.f32 %v2110, %v2124
  %v2127 = vmul.f32 %v2111, %v2125
  %v2128 = vpack.c.bf16 %v2127, %v2126
  %v2129 = vld [vmem:[%s25] sm:$0xff]
  %v2130 = vld [vmem:[%s25 + $0x8] sm:$0xff]
  %v2131 = vld [vmem:[%s25 + $0x10] sm:$0xff]
  %v2132 = vld [vmem:[%s25 + $0x18] sm:$0xff]
  %v2133 = vld [vmem:[%s25 + $0x20] sm:$0xff]
  %v2134 = vld [vmem:[%s25 + $0x28] sm:$0xff]
  %v2135 = vld [vmem:[%s25 + $0x30] sm:$0xff]
  %v2136 = vld [vmem:[%s25 + $0x38] sm:$0xff]
  %v2137 = vld [vmem:[%s27] sm:$0x3]
  %v2139 = vlaneseq
  %v2140 = vshrl.u32 %v2139, 7
  %v2141 = vsub.s32 0, %v2140
  %v2142 = vrot.slane %v2137, %v2141
  %v2143 = vlaneseq
  %v2144 = vshrl.u32 %v2143, 7
  %v2145 = vsub.s32 1, %v2144
  %v2146 = vrot.slane %v2137, %v2145
  %v2157 = vunpack.c.l.b16 %v2129
  %v2158 = vunpack.c.h.b16 %v2129
  %v2159 = vunpack.c.l.b16 %v2130
  %v2160 = vunpack.c.h.b16 %v2130
  %v2161 = vunpack.c.l.b16 %v2131
  %v2162 = vunpack.c.h.b16 %v2131
  %v2163 = vunpack.c.l.b16 %v2132
  %v2164 = vunpack.c.h.b16 %v2132
  %v2165 = vunpack.c.l.b16 %v2133
  %v2166 = vunpack.c.h.b16 %v2133
  %v2167 = vunpack.c.l.b16 %v2134
  %v2168 = vunpack.c.h.b16 %v2134
  %v2169 = vunpack.c.l.b16 %v2135
  %v2170 = vunpack.c.h.b16 %v2135
  %v2171 = vunpack.c.l.b16 %v2136
  %v2172 = vunpack.c.h.b16 %v2136
  %v2173 = vpack.c.b16 %v2159, %v2157
  %v2174 = vpack.c.b16 %v2160, %v2158
  %v2175 = vpack.c.b16 %v2163, %v2161
  %v2176 = vpack.c.b16 %v2164, %v2162
  %v2177 = vpack.c.b16 %v2167, %v2165
  %v2178 = vpack.c.b16 %v2168, %v2166
  %v2179 = vpack.c.b16 %v2171, %v2169
  %v2180 = vpack.c.b16 %v2172, %v2170
  %v2190 = vsel %vm696, %v2128, 0
  %2192 = vmatprep.subr.bf16.mxu0 %v2174
  %2193 = vmatpush1.bf16.msra.mxu0 %v2173
  %2194 = vmatprep.subr.bf16.mxu0 %v2176
  %2195 = vmatpush1.bf16.msra.mxu0 %v2175
  %2196 = vmatprep.subr.bf16.mxu0 %v2178
  %2197 = vmatpush1.bf16.msra.mxu0 %v2177
  %2198 = vmatprep.subr.bf16.mxu0 %v2180
  %2199 = vmatpush1.bf16.msra.mxu0 %v2179
  %2200 = vmatprep.subr.bf16.mxu0 0
  %2201 = vmatpush1.bf16.msra.mxu0 0
  %2202 = vmatprep.subr.bf16.mxu0 0
  %2203 = vmatpush1.bf16.msra.mxu0 0
  %2204 = vmatprep.subr.bf16.mxu0 0
  %2205 = vmatpush1.bf16.msra.mxu0 0
  %2206 = vmatprep.subr.bf16.mxu0 0
  %2207 = vmatpush1.bf16.msra.mxu0 0
  %2208 = vmatprep.subr.bf16.mxu0 0
  %2209 = vmatpush1.bf16.msra.mxu0 0
  %2210 = vmatprep.subr.bf16.mxu0 0
  %2211 = vmatpush1.bf16.msra.mxu0 0
  %2212 = vmatprep.subr.bf16.mxu0 0
  %2213 = vmatpush1.bf16.msra.mxu0 0
  %2214 = vmatprep.subr.bf16.mxu0 0
  %2215 = vmatpush1.bf16.msra.mxu0 0
  %2216 = vmatprep.subr.bf16.mxu0 0
  %2217 = vmatpush1.bf16.msra.mxu0 0
  %2218 = vmatprep.subr.bf16.mxu0 0
  %2219 = vmatpush1.bf16.msra.mxu0 0
  %2220 = vmatprep.subr.bf16.mxu0 0
  %2221 = vmatpush1.bf16.msra.mxu0 0
  %2222 = vmatprep.subr.bf16.mxu0 0
  %2223 = vmatpush1.bf16.msra.mxu0 0
  %2224 = vmatprep.mubr.bf16.mxu0 0
  %2225 = vmatmul.mubr.bf16.gmra.mrb[0].mxu0 %v2190
  %v2226 = vpop.f32.mrb[0].mxu0
  %v2227 = vadd.f32 %v2142, %v2226
  %v2228 = vpop.f32.mrb[0].mxu0
  %v2229 = vadd.f32 %v2146, %v2228
  %v2230 = vpop.f32.mrb[0].mxu0
  %v2231 = vadd.f32 %v2142, %v2230
  %v2232 = vpop.f32.mrb[0].mxu0
  %v2233 = vadd.f32 %v2146, %v2232
  %2234 = vdwg.mxu0
  %2237 = vrot.lane.b32.xlu0 %v2227, 64
  %v2238 = vpop.permute.xlu0 %2237
  %2239 = vrot.lane.b32.xlu0 %v2231, 64
  %v2240 = vpop.permute.xlu0 %2239
  %v2241 = vsel %vm838, %v2227, 0
  %v2243 = vsel %vm838, %v2231, 0
  %v2245 = vsel %vm838, %v2238, 0
  %v2247 = vsel %vm838, %v2240, 0
  %2249 = vmatprep.subr.mxu0 0.0
  %2250 = vmatpush1.xpose.msra.mxu0 %v2245
  %2251 = vmatprep.subr.mxu0 0.0
  %2252 = vmatpush1.xpose.msra.mxu0 %v2247
  %2253 = vmatprep.subr.mxu0 0.0
  %2254 = vmatpush1.xpose.msra.mxu0 0.0
  %2255 = vmatprep.subr.mxu0 0.0
  %2256 = vmatpush1.xpose.msra.mxu0 0.0
  %2257 = vmatprep.subr.mxu0 0.0
  %2258 = vmatpush1.xpose.msra.mxu0 0.0
  %2259 = vmatprep.subr.mxu0 0.0
  %2260 = vmatpush1.xpose.msra.mxu0 0.0
  %2261 = vmatprep.subr.mxu0 0.0
  %2262 = vmatpush1.xpose.msra.mxu0 0.0
  %2263 = vmatprep.subr.mxu0 0.0
  %2264 = vmatpush1.xpose.msra.mxu0 0.0
  %2265 = vmatprep.subr.mxu0 0.0
  %2266 = vmatpush1.xpose.msra.mxu0 0.0
  %2267 = vmatprep.subr.mxu0 0.0
  %2268 = vmatpush1.xpose.msra.mxu0 0.0
  %2269 = vmatprep.subr.mxu0 0.0
  %2270 = vmatpush1.xpose.msra.mxu0 0.0
  %2271 = vmatprep.subr.mxu0 0.0
  %2272 = vmatpush1.xpose.msra.mxu0 0.0
  %2273 = vmatprep.subr.mxu0 0.0
  %2274 = vmatpush1.xpose.msra.mxu0 0.0
  %2275 = vmatprep.subr.mxu0 0.0
  %2276 = vmatpush1.xpose.msra.mxu0 0.0
  %2277 = vmatprep.subr.mxu0 0.0
  %2278 = vmatpush1.xpose.msra.mxu0 0.0
  %2279 = vmatprep.subr.mxu0 0.0
  %2280 = vmatpush1.xpose.msra.mxu0 0.0
  %2281 = vmatprep.subr.mxu0 0.0
  %2282 = vmatpush1.xpose.msra.mxu0 0.0
  %2283 = vmatprep.subr.mxu0 0.0
  %2284 = vmatpush1.xpose.msra.mxu0 0.0
  %2285 = vmatprep.subr.mxu0 0.0
  %2286 = vmatpush1.xpose.msra.mxu0 0.0
  %2287 = vmatprep.subr.mxu0 0.0
  %2288 = vmatpush1.xpose.msra.mxu0 0.0
  %2289 = vmatprep.subr.mxu0 0.0
  %2290 = vmatpush1.xpose.msra.mxu0 0.0
  %2291 = vmatprep.subr.mxu0 0.0
  %2292 = vmatpush1.xpose.msra.mxu0 0.0
  %2293 = vmatprep.subr.mxu0 0.0
  %2294 = vmatpush1.xpose.msra.mxu0 0.0
  %2295 = vmatprep.subr.mxu0 0.0
  %2296 = vmatpush1.xpose.msra.mxu0 0.0
  %2297 = vmatprep.subr.mxu0 0.0
  %2298 = vmatpush1.xpose.msra.mxu0 0.0
  %2299 = vmatprep.subr.mxu0 0.0
  %2300 = vmatpush1.xpose.msra.mxu0 0.0
  %2301 = vmatprep.subr.mxu0 0.0
  %2302 = vmatpush1.xpose.msra.mxu0 0.0
  %2303 = vmatprep.subr.mxu0 0.0
  %2304 = vmatpush1.xpose.msra.mxu0 0.0
  %2305 = vmatprep.subr.mxu0 0.0
  %2306 = vmatpush1.xpose.msra.mxu0 0.0
  %2307 = vmatprep.subr.mxu0 0.0
  %2308 = vmatpush1.xpose.msra.mxu0 0.0
  %2309 = vmatprep.subr.mxu0 0.0
  %2310 = vmatpush1.xpose.msra.mxu0 0.0
  %2311 = vmatprep.subr.mxu0 0.0
  %2312 = vmatpush1.xpose.msra.mxu0 0.0
  %2313 = vmatprep.mubr.f32.mxu0 0.0
  %2314 = vmatmul.mubr.f32.gmra.mrb[0].mxu0 %v2241
  %v2315 = vpop.f32.mrb[0].mxu0
  %v2316 = vadd.f32 0.0, %v2315
  %v2317 = vpop.f32.mrb[0].mxu0
  %2318 = vmatprep.mubr.f32.mxu0 0.0
  %2319 = vmatmul.mubr.f32.gmra.mrb[0].mxu0 %v2243
  %v2320 = vpop.f32.mrb[0].mxu0
  %v2321 = vadd.f32 0.0, %v2320
  %v2322 = vpop.f32.mrb[0].mxu0
  %2323 = vdwg.mxu0
  %v2324 = vmul.f32 %v2316, 0.25
  %v2325 = vmul.f32 %v2321, 0.25
  %v2326 = vadd.f32 %v2324, %v167
  %v2327 = vadd.f32 %v2325, %v168
  %v2328 = vsel %vm926, %v2326, -inf
  %2329 = vmax.xlane.f32.xlu0 %v2328
  %v2330 = vpop.xlane.xlu0 %2329
  %v2331 = vsel %vm930, %v2327, -inf
  %2332 = vmax.xlane.f32.xlu0 %v2331
  %v2333 = vpop.xlane.xlu0 %2332
  %v2334 = vsub.f32 %v2326, %v2330
  %v2335 = vsub.f32 %v2327, %v2333
  %v2336 = vmul.f32 %v2334, 1.442695
  %v2337 = vpow.pop %v2336
  %v2338 = vmul.f32 %v2335, 1.442695
  %v2339 = vpow.pop %v2338
  %v2340 = vsel %vm926, %v2337, 0.0
  %2341 = vadd.xlane.f32.xlu0 %v2340
  %v2342 = vpop.xlane.xlu0 %2341
  %v2343 = vsel %vm930, %v2339, 0.0
  %2344 = vadd.xlane.f32.xlu0 %v2343
  %v2345 = vpop.xlane.xlu0 %2344
  %v2346 = vrcp.pop %v2342
  %v2347 = vmul.f32 %v2337, %v2346
  %v2348 = vrcp.pop %v2345
  %v2349 = vmul.f32 %v2339, %v2348
  %v2351 = vsel %vm926, %v2347, 0
  %v2354 = vsel %vm926, %v2349, 0
  %v2357 = vsel %vm956, %v2233, 0
  %2359 = vmatprep.subr.mxu0 0.0
  %2360 = vmatpush1.msra.mxu0 %v2229
  %2361 = vmatprep.subr.mxu0 0.0
  %2362 = vmatpush1.msra.mxu0 %v2357
  %2363 = vmatprep.subr.mxu0 0.0
  %2364 = vmatpush1.msra.mxu0 0.0
  %2365 = vmatprep.subr.mxu0 0.0
  %2366 = vmatpush1.msra.mxu0 0.0
  %2367 = vmatprep.subr.mxu0 0.0
  %2368 = vmatpush1.msra.mxu0 0.0
  %2369 = vmatprep.subr.mxu0 0.0
  %2370 = vmatpush1.msra.mxu0 0.0
  %2371 = vmatprep.subr.mxu0 0.0
  %2372 = vmatpush1.msra.mxu0 0.0
  %2373 = vmatprep.subr.mxu0 0.0
  %2374 = vmatpush1.msra.mxu0 0.0
  %2375 = vmatprep.subr.mxu0 0.0
  %2376 = vmatpush1.msra.mxu0 0.0
  %2377 = vmatprep.subr.mxu0 0.0
  %2378 = vmatpush1.msra.mxu0 0.0
  %2379 = vmatprep.subr.mxu0 0.0
  %2380 = vmatpush1.msra.mxu0 0.0
  %2381 = vmatprep.subr.mxu0 0.0
  %2382 = vmatpush1.msra.mxu0 0.0
  %2383 = vmatprep.subr.mxu0 0.0
  %2384 = vmatpush1.msra.mxu0 0.0
  %2385 = vmatprep.subr.mxu0 0.0
  %2386 = vmatpush1.msra.mxu0 0.0
  %2387 = vmatprep.subr.mxu0 0.0
  %2388 = vmatpush1.msra.mxu0 0.0
  %2389 = vmatprep.subr.mxu0 0.0
  %2390 = vmatpush1.msra.mxu0 0.0
  %2391 = vmatprep.subr.mxu0 0.0
  %2392 = vmatpush1.msra.mxu0 0.0
  %2393 = vmatprep.subr.mxu0 0.0
  %2394 = vmatpush1.msra.mxu0 0.0
  %2395 = vmatprep.subr.mxu0 0.0
  %2396 = vmatpush1.msra.mxu0 0.0
  %2397 = vmatprep.subr.mxu0 0.0
  %2398 = vmatpush1.msra.mxu0 0.0
  %2399 = vmatprep.subr.mxu0 0.0
  %2400 = vmatpush1.msra.mxu0 0.0
  %2401 = vmatprep.subr.mxu0 0.0
  %2402 = vmatpush1.msra.mxu0 0.0
  %2403 = vmatprep.subr.mxu0 0.0
  %2404 = vmatpush1.msra.mxu0 0.0
  %2405 = vmatprep.subr.mxu0 0.0
  %2406 = vmatpush1.msra.mxu0 0.0
  %2407 = vmatprep.subr.mxu0 0.0
  %2408 = vmatpush1.msra.mxu0 0.0
  %2409 = vmatprep.subr.mxu0 0.0
  %2410 = vmatpush1.msra.mxu0 0.0
  %2411 = vmatprep.subr.mxu0 0.0
  %2412 = vmatpush1.msra.mxu0 0.0
  %2413 = vmatprep.subr.mxu0 0.0
  %2414 = vmatpush1.msra.mxu0 0.0
  %2415 = vmatprep.subr.mxu0 0.0
  %2416 = vmatpush1.msra.mxu0 0.0
  %2417 = vmatprep.subr.mxu0 0.0
  %2418 = vmatpush1.msra.mxu0 0.0
  %2419 = vmatprep.subr.mxu0 0.0
  %2420 = vmatpush1.msra.mxu0 0.0
  %2421 = vmatprep.subr.mxu0 0.0
  %2422 = vmatpush1.msra.mxu0 0.0
  %2423 = vmatprep.mubr.f32.mxu0 0.0
  %2424 = vmatmul.mubr.f32.gmra.mrb[0].mxu0 %v2351
  %v2425 = vpop.f32.mrb[0].mxu0
  %v2426 = vadd.f32 0.0, %v2425
  %v2427 = vpop.f32.mrb[0].mxu0
  %2428 = vmatprep.mubr.f32.mxu0 0.0
  %2429 = vmatmul.mubr.f32.gmra.mrb[0].mxu0 %v2354
  %v2430 = vpop.f32.mrb[0].mxu0
  %v2431 = vadd.f32 0.0, %v2430
  %v2432 = vpop.f32.mrb[0].mxu0
  %2433 = vdwg.mxu0
  %2434 = vrot.lane.b32.xlu0 %v2227, 112
  %v2435 = vpop.permute.xlu0 %2434
  %2436 = vrot.lane.b32.xlu0 %v2231, 112
  %v2437 = vpop.permute.xlu0 %2436
  %2438 = vrot.lane.b32.xlu0 %v2227, 48
  %v2439 = vpop.permute.xlu0 %2438
  %2440 = vrot.lane.b32.xlu0 %v2231, 48
  %v2441 = vpop.permute.xlu0 %2440
  %v2442 = vsel %vm838, %v2435, 0
  %v2444 = vsel %vm838, %v2437, 0
  %v2446 = vsel %vm838, %v2439, 0
  %v2448 = vsel %vm838, %v2441, 0
  %2450 = vmatprep.subr.mxu0 0.0
  %2451 = vmatpush1.xpose.msra.mxu0 %v2446
  %2452 = vmatprep.subr.mxu0 0.0
  %2453 = vmatpush1.xpose.msra.mxu0 %v2448
  %2454 = vmatprep.subr.mxu0 0.0
  %2455 = vmatpush1.xpose.msra.mxu0 0.0
  %2456 = vmatprep.subr.mxu0 0.0
  %2457 = vmatpush1.xpose.msra.mxu0 0.0
  %2458 = vmatprep.subr.mxu0 0.0
  %2459 = vmatpush1.xpose.msra.mxu0 0.0
  %2460 = vmatprep.subr.mxu0 0.0
  %2461 = vmatpush1.xpose.msra.mxu0 0.0
  %2462 = vmatprep.subr.mxu0 0.0
  %2463 = vmatpush1.xpose.msra.mxu0 0.0
  %2464 = vmatprep.subr.mxu0 0.0
  %2465 = vmatpush1.xpose.msra.mxu0 0.0
  %2466 = vmatprep.subr.mxu0 0.0
  %2467 = vmatpush1.xpose.msra.mxu0 0.0
  %2468 = vmatprep.subr.mxu0 0.0
  %2469 = vmatpush1.xpose.msra.mxu0 0.0
  %2470 = vmatprep.subr.mxu0 0.0
  %2471 = vmatpush1.xpose.msra.mxu0 0.0
  %2472 = vmatprep.subr.mxu0 0.0
  %2473 = vmatpush1.xpose.msra.mxu0 0.0
  %2474 = vmatprep.subr.mxu0 0.0
  %2475 = vmatpush1.xpose.msra.mxu0 0.0
  %2476 = vmatprep.subr.mxu0 0.0
  %2477 = vmatpush1.xpose.msra.mxu0 0.0
  %2478 = vmatprep.subr.mxu0 0.0
  %2479 = vmatpush1.xpose.msra.mxu0 0.0
  %2480 = vmatprep.subr.mxu0 0.0
  %2481 = vmatpush1.xpose.msra.mxu0 0.0
  %2482 = vmatprep.subr.mxu0 0.0
  %2483 = vmatpush1.xpose.msra.mxu0 0.0
  %2484 = vmatprep.subr.mxu0 0.0
  %2485 = vmatpush1.xpose.msra.mxu0 0.0
  %2486 = vmatprep.subr.mxu0 0.0
  %2487 = vmatpush1.xpose.msra.mxu0 0.0
  %2488 = vmatprep.subr.mxu0 0.0
  %2489 = vmatpush1.xpose.msra.mxu0 0.0
  %2490 = vmatprep.subr.mxu0 0.0
  %2491 = vmatpush1.xpose.msra.mxu0 0.0
  %2492 = vmatprep.subr.mxu0 0.0
  %2493 = vmatpush1.xpose.msra.mxu0 0.0
  %2494 = vmatprep.subr.mxu0 0.0
  %2495 = vmatpush1.xpose.msra.mxu0 0.0
  %2496 = vmatprep.subr.mxu0 0.0
  %2497 = vmatpush1.xpose.msra.mxu0 0.0
  %2498 = vmatprep.subr.mxu0 0.0
  %2499 = vmatpush1.xpose.msra.mxu0 0.0
  %2500 = vmatprep.subr.mxu0 0.0
  %2501 = vmatpush1.xpose.msra.mxu0 0.0
  %2502 = vmatprep.subr.mxu0 0.0
  %2503 = vmatpush1.xpose.msra.mxu0 0.0
  %2504 = vmatprep.subr.mxu0 0.0
  %2505 = vmatpush1.xpose.msra.mxu0 0.0
  %2506 = vmatprep.subr.mxu0 0.0
  %2507 = vmatpush1.xpose.msra.mxu0 0.0
  %2508 = vmatprep.subr.mxu0 0.0
  %2509 = vmatpush1.xpose.msra.mxu0 0.0
  %2510 = vmatprep.subr.mxu0 0.0
  %2511 = vmatpush1.xpose.msra.mxu0 0.0
  %2512 = vmatprep.subr.mxu0 0.0
  %2513 = vmatpush1.xpose.msra.mxu0 0.0
  %2514 = vmatprep.mubr.f32.mxu0 0.0
  %2515 = vmatmul.mubr.f32.gmra.mrb[0].mxu0 %v2442
  %v2516 = vpop.f32.mrb[0].mxu0
  %v2517 = vadd.f32 0.0, %v2516
  %v2518 = vpop.f32.mrb[0].mxu0
  %2519 = vmatprep.mubr.f32.mxu0 0.0
  %2520 = vmatmul.mubr.f32.gmra.mrb[0].mxu0 %v2444
  %v2521 = vpop.f32.mrb[0].mxu0
  %v2522 = vadd.f32 0.0, %v2521
  %v2523 = vpop.f32.mrb[0].mxu0
  %2524 = vdwg.mxu0
  %v2525 = vmul.f32 %v2517, 0.25
  %v2526 = vmul.f32 %v2522, 0.25
  %v2527 = vadd.f32 %v2525, %v167
  %v2528 = vadd.f32 %v2526, %v168
  %v2529 = vsel %vm926, %v2527, -inf
  %2530 = vmax.xlane.f32.xlu0 %v2529
  %v2531 = vpop.xlane.xlu0 %2530
  %v2532 = vsel %vm930, %v2528, -inf
  %2533 = vmax.xlane.f32.xlu0 %v2532
  %v2534 = vpop.xlane.xlu0 %2533
  %v2535 = vsub.f32 %v2527, %v2531
  %v2536 = vsub.f32 %v2528, %v2534
  %v2537 = vmul.f32 %v2535, 1.442695
  %v2538 = vpow.pop %v2537
  %v2539 = vmul.f32 %v2536, 1.442695
  %v2540 = vpow.pop %v2539
  %v2541 = vsel %vm926, %v2538, 0.0
  %2542 = vadd.xlane.f32.xlu0 %v2541
  %v2543 = vpop.xlane.xlu0 %2542
  %v2544 = vsel %vm930, %v2540, 0.0
  %2545 = vadd.xlane.f32.xlu0 %v2544
  %v2546 = vpop.xlane.xlu0 %2545
  %v2547 = vrcp.pop %v2543
  %v2548 = vmul.f32 %v2538, %v2547
  %v2549 = vrcp.pop %v2546
  %v2550 = vmul.f32 %v2540, %v2549
  %2552 = vrot.lane.b32.xlu0 %v2229, 112
  %v2553 = vpop.permute.xlu0 %2552
  %2554 = vrot.lane.b32.xlu0 %v2233, 112
  %v2555 = vpop.permute.xlu0 %2554
  %v2558 = vsel %vm926, %v2548, 0
  %v2561 = vsel %vm926, %v2550, 0
  %v2563 = vsel %vm956, %v2555, 0
  %2565 = vmatprep.subr.mxu0 0.0
  %2566 = vmatpush1.msra.mxu0 %v2553
  %2567 = vmatprep.subr.mxu0 0.0
  %2568 = vmatpush1.msra.mxu0 %v2563
  %2569 = vmatprep.subr.mxu0 0.0
  %2570 = vmatpush1.msra.mxu0 0.0
  %2571 = vmatprep.subr.mxu0 0.0
  %2572 = vmatpush1.msra.mxu0 0.0
  %2573 = vmatprep.subr.mxu0 0.0
  %2574 = vmatpush1.msra.mxu0 0.0
  %2575 = vmatprep.subr.mxu0 0.0
  %2576 = vmatpush1.msra.mxu0 0.0
  %2577 = vmatprep.subr.mxu0 0.0
  %2578 = vmatpush1.msra.mxu0 0.0
  %2579 = vmatprep.subr.mxu0 0.0
  %2580 = vmatpush1.msra.mxu0 0.0
  %2581 = vmatprep.subr.mxu0 0.0
  %2582 = vmatpush1.msra.mxu0 0.0
  %2583 = vmatprep.subr.mxu0 0.0
  %2584 = vmatpush1.msra.mxu0 0.0
  %2585 = vmatprep.subr.mxu0 0.0
  %2586 = vmatpush1.msra.mxu0 0.0
  %2587 = vmatprep.subr.mxu0 0.0
  %2588 = vmatpush1.msra.mxu0 0.0
  %2589 = vmatprep.subr.mxu0 0.0
  %2590 = vmatpush1.msra.mxu0 0.0
  %2591 = vmatprep.subr.mxu0 0.0
  %2592 = vmatpush1.msra.mxu0 0.0
  %2593 = vmatprep.subr.mxu0 0.0
  %2594 = vmatpush1.msra.mxu0 0.0
  %2595 = vmatprep.subr.mxu0 0.0
  %2596 = vmatpush1.msra.mxu0 0.0
  %2597 = vmatprep.subr.mxu0 0.0
  %2598 = vmatpush1.msra.mxu0 0.0
  %2599 = vmatprep.subr.mxu0 0.0
  %2600 = vmatpush1.msra.mxu0 0.0
  %2601 = vmatprep.subr.mxu0 0.0
  %2602 = vmatpush1.msra.mxu0 0.0
  %2603 = vmatprep.subr.mxu0 0.0
  %2604 = vmatpush1.msra.mxu0 0.0
  %2605 = vmatprep.subr.mxu0 0.0
  %2606 = vmatpush1.msra.mxu0 0.0
  %2607 = vmatprep.subr.mxu0 0.0
  %2608 = vmatpush1.msra.mxu0 0.0
  %2609 = vmatprep.subr.mxu0 0.0
  %2610 = vmatpush1.msra.mxu0 0.0
  %2611 = vmatprep.subr.mxu0 0.0
  %2612 = vmatpush1.msra.mxu0 0.0
  %2613 = vmatprep.subr.mxu0 0.0
  %2614 = vmatpush1.msra.mxu0 0.0
  %2615 = vmatprep.subr.mxu0 0.0
  %2616 = vmatpush1.msra.mxu0 0.0
  %2617 = vmatprep.subr.mxu0 0.0
  %2618 = vmatpush1.msra.mxu0 0.0
  %2619 = vmatprep.subr.mxu0 0.0
  %2620 = vmatpush1.msra.mxu0 0.0
  %2621 = vmatprep.subr.mxu0 0.0
  %2622 = vmatpush1.msra.mxu0 0.0
  %2623 = vmatprep.subr.mxu0 0.0
  %2624 = vmatpush1.msra.mxu0 0.0
  %2625 = vmatprep.subr.mxu0 0.0
  %2626 = vmatpush1.msra.mxu0 0.0
  %2627 = vmatprep.subr.mxu0 0.0
  %2628 = vmatpush1.msra.mxu0 0.0
  %2629 = vmatprep.mubr.f32.mxu0 0.0
  %2630 = vmatmul.mubr.f32.gmra.mrb[0].mxu0 %v2558
  %v2631 = vpop.f32.mrb[0].mxu0
  %v2632 = vadd.f32 0.0, %v2631
  %v2633 = vpop.f32.mrb[0].mxu0
  %2634 = vmatprep.mubr.f32.mxu0 0.0
  %2635 = vmatmul.mubr.f32.gmra.mrb[0].mxu0 %v2561
  %v2636 = vpop.f32.mrb[0].mxu0
  %v2637 = vadd.f32 0.0, %v2636
  %v2638 = vpop.f32.mrb[0].mxu0
  %2639 = vdwg.mxu0
  %2640 = vrot.lane.b32.xlu0 %v2227, 96
  %v2641 = vpop.permute.xlu0 %2640
  %2642 = vrot.lane.b32.xlu0 %v2231, 96
  %v2643 = vpop.permute.xlu0 %2642
  %2644 = vrot.lane.b32.xlu0 %v2227, 32
  %v2645 = vpop.permute.xlu0 %2644
  %2646 = vrot.lane.b32.xlu0 %v2231, 32
  %v2647 = vpop.permute.xlu0 %2646
  %v2648 = vsel %vm838, %v2641, 0
  %v2650 = vsel %vm838, %v2643, 0
  %v2652 = vsel %vm838, %v2645, 0
  %v2654 = vsel %vm838, %v2647, 0
  %2656 = vmatprep.subr.mxu0 0.0
  %2657 = vmatpush1.xpose.msra.mxu0 %v2652
  %2658 = vmatprep.subr.mxu0 0.0
  %2659 = vmatpush1.xpose.msra.mxu0 %v2654
  %2660 = vmatprep.subr.mxu0 0.0
  %2661 = vmatpush1.xpose.msra.mxu0 0.0
  %2662 = vmatprep.subr.mxu0 0.0
  %2663 = vmatpush1.xpose.msra.mxu0 0.0
  %2664 = vmatprep.subr.mxu0 0.0
  %2665 = vmatpush1.xpose.msra.mxu0 0.0
  %2666 = vmatprep.subr.mxu0 0.0
  %2667 = vmatpush1.xpose.msra.mxu0 0.0
  %2668 = vmatprep.subr.mxu0 0.0
  %2669 = vmatpush1.xpose.msra.mxu0 0.0
  %2670 = vmatprep.subr.mxu0 0.0
  %2671 = vmatpush1.xpose.msra.mxu0 0.0
  %2672 = vmatprep.subr.mxu0 0.0
  %2673 = vmatpush1.xpose.msra.mxu0 0.0
  %2674 = vmatprep.subr.mxu0 0.0
  %2675 = vmatpush1.xpose.msra.mxu0 0.0
  %2676 = vmatprep.subr.mxu0 0.0
  %2677 = vmatpush1.xpose.msra.mxu0 0.0
  %2678 = vmatprep.subr.mxu0 0.0
  %2679 = vmatpush1.xpose.msra.mxu0 0.0
  %2680 = vmatprep.subr.mxu0 0.0
  %2681 = vmatpush1.xpose.msra.mxu0 0.0
  %2682 = vmatprep.subr.mxu0 0.0
  %2683 = vmatpush1.xpose.msra.mxu0 0.0
  %2684 = vmatprep.subr.mxu0 0.0
  %2685 = vmatpush1.xpose.msra.mxu0 0.0
  %2686 = vmatprep.subr.mxu0 0.0
  %2687 = vmatpush1.xpose.msra.mxu0 0.0
  %2688 = vmatprep.subr.mxu0 0.0
  %2689 = vmatpush1.xpose.msra.mxu0 0.0
  %2690 = vmatprep.subr.mxu0 0.0
  %2691 = vmatpush1.xpose.msra.mxu0 0.0
  %2692 = vmatprep.subr.mxu0 0.0
  %2693 = vmatpush1.xpose.msra.mxu0 0.0
  %2694 = vmatprep.subr.mxu0 0.0
  %2695 = vmatpush1.xpose.msra.mxu0 0.0
  %2696 = vmatprep.subr.mxu0 0.0
  %2697 = vmatpush1.xpose.msra.mxu0 0.0
  %2698 = vmatprep.subr.mxu0 0.0
  %2699 = vmatpush1.xpose.msra.mxu0 0.0
  %2700 = vmatprep.subr.mxu0 0.0
  %2701 = vmatpush1.xpose.msra.mxu0 0.0
  %2702 = vmatprep.subr.mxu0 0.0
  %2703 = vmatpush1.xpose.msra.mxu0 0.0
  %2704 = vmatprep.subr.mxu0 0.0
  %2705 = vmatpush1.xpose.msra.mxu0 0.0
  %2706 = vmatprep.subr.mxu0 0.0
  %2707 = vmatpush1.xpose.msra.mxu0 0.0
  %2708 = vmatprep.subr.mxu0 0.0
  %2709 = vmatpush1.xpose.msra.mxu0 0.0
  %2710 = vmatprep.subr.mxu0 0.0
  %2711 = vmatpush1.xpose.msra.mxu0 0.0
  %2712 = vmatprep.subr.mxu0 0.0
  %2713 = vmatpush1.xpose.msra.mxu0 0.0
  %2714 = vmatprep.subr.mxu0 0.0
  %2715 = vmatpush1.xpose.msra.mxu0 0.0
  %2716 = vmatprep.subr.mxu0 0.0
  %2717 = vmatpush1.xpose.msra.mxu0 0.0
  %2718 = vmatprep.subr.mxu0 0.0
  %2719 = vmatpush1.xpose.msra.mxu0 0.0
  %2720 = vmatprep.mubr.f32.mxu0 0.0
  %2721 = vmatmul.mubr.f32.gmra.mrb[0].mxu0 %v2648
  %v2722 = vpop.f32.mrb[0].mxu0
  %v2723 = vadd.f32 0.0, %v2722
  %v2724 = vpop.f32.mrb[0].mxu0
  %2725 = vmatprep.mubr.f32.mxu0 0.0
  %2726 = vmatmul.mubr.f32.gmra.mrb[0].mxu0 %v2650
  %v2727 = vpop.f32.mrb[0].mxu0
  %v2728 = vadd.f32 0.0, %v2727
  %v2729 = vpop.f32.mrb[0].mxu0
  %2730 = vdwg.mxu0
  %v2731 = vmul.f32 %v2723, 0.25
  %v2732 = vmul.f32 %v2728, 0.25
  %v2733 = vadd.f32 %v2731, %v167
  %v2734 = vadd.f32 %v2732, %v168
  %v2735 = vsel %vm926, %v2733, -inf
  %2736 = vmax.xlane.f32.xlu0 %v2735
  %v2737 = vpop.xlane.xlu0 %2736
  %v2738 = vsel %vm930, %v2734, -inf
  %2739 = vmax.xlane.f32.xlu0 %v2738
  %v2740 = vpop.xlane.xlu0 %2739
  %v2741 = vsub.f32 %v2733, %v2737
  %v2742 = vsub.f32 %v2734, %v2740
  %v2743 = vmul.f32 %v2741, 1.442695
  %v2744 = vpow.pop %v2743
  %v2745 = vmul.f32 %v2742, 1.442695
  %v2746 = vpow.pop %v2745
  %v2747 = vsel %vm926, %v2744, 0.0
  %2748 = vadd.xlane.f32.xlu0 %v2747
  %v2749 = vpop.xlane.xlu0 %2748
  %v2750 = vsel %vm930, %v2746, 0.0
  %2751 = vadd.xlane.f32.xlu0 %v2750
  %v2752 = vpop.xlane.xlu0 %2751
  %v2753 = vrcp.pop %v2749
  %v2754 = vmul.f32 %v2744, %v2753
  %v2755 = vrcp.pop %v2752
  %v2756 = vmul.f32 %v2746, %v2755
  %2757 = vrot.lane.b32.xlu0 %v2229, 96
  %v2758 = vpop.permute.xlu0 %2757
  %2759 = vrot.lane.b32.xlu0 %v2233, 96
  %v2760 = vpop.permute.xlu0 %2759
  %v2763 = vsel %vm926, %v2754, 0
  %v2766 = vsel %vm926, %v2756, 0
  %v2768 = vsel %vm956, %v2760, 0
  %2770 = vmatprep.subr.mxu0 0.0
  %2771 = vmatpush1.msra.mxu0 %v2758
  %2772 = vmatprep.subr.mxu0 0.0
  %2773 = vmatpush1.msra.mxu0 %v2768
  %2774 = vmatprep.subr.mxu0 0.0
  %2775 = vmatpush1.msra.mxu0 0.0
  %2776 = vmatprep.subr.mxu0 0.0
  %2777 = vmatpush1.msra.mxu0 0.0
  %2778 = vmatprep.subr.mxu0 0.0
  %2779 = vmatpush1.msra.mxu0 0.0
  %2780 = vmatprep.subr.mxu0 0.0
  %2781 = vmatpush1.msra.mxu0 0.0
  %2782 = vmatprep.subr.mxu0 0.0
  %2783 = vmatpush1.msra.mxu0 0.0
  %2784 = vmatprep.subr.mxu0 0.0
  %2785 = vmatpush1.msra.mxu0 0.0
  %2786 = vmatprep.subr.mxu0 0.0
  %2787 = vmatpush1.msra.mxu0 0.0
  %2788 = vmatprep.subr.mxu0 0.0
  %2789 = vmatpush1.msra.mxu0 0.0
  %2790 = vmatprep.subr.mxu0 0.0
  %2791 = vmatpush1.msra.mxu0 0.0
  %2792 = vmatprep.subr.mxu0 0.0
  %2793 = vmatpush1.msra.mxu0 0.0
  %2794 = vmatprep.subr.mxu0 0.0
  %2795 = vmatpush1.msra.mxu0 0.0
  %2796 = vmatprep.subr.mxu0 0.0
  %2797 = vmatpush1.msra.mxu0 0.0
  %2798 = vmatprep.subr.mxu0 0.0
  %2799 = vmatpush1.msra.mxu0 0.0
  %2800 = vmatprep.subr.mxu0 0.0
  %2801 = vmatpush1.msra.mxu0 0.0
  %2802 = vmatprep.subr.mxu0 0.0
  %2803 = vmatpush1.msra.mxu0 0.0
  %2804 = vmatprep.subr.mxu0 0.0
  %2805 = vmatpush1.msra.mxu0 0.0
  %2806 = vmatprep.subr.mxu0 0.0
  %2807 = vmatpush1.msra.mxu0 0.0
  %2808 = vmatprep.subr.mxu0 0.0
  %2809 = vmatpush1.msra.mxu0 0.0
  %2810 = vmatprep.subr.mxu0 0.0
  %2811 = vmatpush1.msra.mxu0 0.0
  %2812 = vmatprep.subr.mxu0 0.0
  %2813 = vmatpush1.msra.mxu0 0.0
  %2814 = vmatprep.subr.mxu0 0.0
  %2815 = vmatpush1.msra.mxu0 0.0
  %2816 = vmatprep.subr.mxu0 0.0
  %2817 = vmatpush1.msra.mxu0 0.0
  %2818 = vmatprep.subr.mxu0 0.0
  %2819 = vmatpush1.msra.mxu0 0.0
  %2820 = vmatprep.subr.mxu0 0.0
  %2821 = vmatpush1.msra.mxu0 0.0
  %2822 = vmatprep.subr.mxu0 0.0
  %2823 = vmatpush1.msra.mxu0 0.0
  %2824 = vmatprep.subr.mxu0 0.0
  %2825 = vmatpush1.msra.mxu0 0.0
  %2826 = vmatprep.subr.mxu0 0.0
  %2827 = vmatpush1.msra.mxu0 0.0
  %2828 = vmatprep.subr.mxu0 0.0
  %2829 = vmatpush1.msra.mxu0 0.0
  %2830 = vmatprep.subr.mxu0 0.0
  %2831 = vmatpush1.msra.mxu0 0.0
  %2832 = vmatprep.subr.mxu0 0.0
  %2833 = vmatpush1.msra.mxu0 0.0
  %2834 = vmatprep.mubr.f32.mxu0 0.0
  %2835 = vmatmul.mubr.f32.gmra.mrb[0].mxu0 %v2763
  %v2836 = vpop.f32.mrb[0].mxu0
  %v2837 = vadd.f32 0.0, %v2836
  %v2838 = vpop.f32.mrb[0].mxu0
  %2839 = vmatprep.mubr.f32.mxu0 0.0
  %2840 = vmatmul.mubr.f32.gmra.mrb[0].mxu0 %v2766
  %v2841 = vpop.f32.mrb[0].mxu0
  %v2842 = vadd.f32 0.0, %v2841
  %v2843 = vpop.f32.mrb[0].mxu0
  %2844 = vdwg.mxu0
  %2845 = vrot.lane.b32.xlu0 %v2227, 80
  %v2846 = vpop.permute.xlu0 %2845
  %2847 = vrot.lane.b32.xlu0 %v2231, 80
  %v2848 = vpop.permute.xlu0 %2847
  %2849 = vrot.lane.b32.xlu0 %v2227, 16
  %v2850 = vpop.permute.xlu0 %2849
  %2851 = vrot.lane.b32.xlu0 %v2231, 16
  %v2852 = vpop.permute.xlu0 %2851
  %v2853 = vsel %vm838, %v2846, 0
  %v2855 = vsel %vm838, %v2848, 0
  %v2857 = vsel %vm838, %v2850, 0
  %v2859 = vsel %vm838, %v2852, 0
  %2861 = vmatprep.subr.mxu0 0.0
  %2862 = vmatpush1.xpose.msra.mxu0 %v2857
  %2863 = vmatprep.subr.mxu0 0.0
  %2864 = vmatpush1.xpose.msra.mxu0 %v2859
  %2865 = vmatprep.subr.mxu0 0.0
  %2866 = vmatpush1.xpose.msra.mxu0 0.0
  %2867 = vmatprep.subr.mxu0 0.0
  %2868 = vmatpush1.xpose.msra.mxu0 0.0
  %2869 = vmatprep.subr.mxu0 0.0
  %2870 = vmatpush1.xpose.msra.mxu0 0.0
  %2871 = vmatprep.subr.mxu0 0.0
  %2872 = vmatpush1.xpose.msra.mxu0 0.0
  %2873 = vmatprep.subr.mxu0 0.0
  %2874 = vmatpush1.xpose.msra.mxu0 0.0
  %2875 = vmatprep.subr.mxu0 0.0
  %2876 = vmatpush1.xpose.msra.mxu0 0.0
  %2877 = vmatprep.subr.mxu0 0.0
  %2878 = vmatpush1.xpose.msra.mxu0 0.0
  %2879 = vmatprep.subr.mxu0 0.0
  %2880 = vmatpush1.xpose.msra.mxu0 0.0
  %2881 = vmatprep.subr.mxu0 0.0
  %2882 = vmatpush1.xpose.msra.mxu0 0.0
  %2883 = vmatprep.subr.mxu0 0.0
  %2884 = vmatpush1.xpose.msra.mxu0 0.0
  %2885 = vmatprep.subr.mxu0 0.0
  %2886 = vmatpush1.xpose.msra.mxu0 0.0
  %2887 = vmatprep.subr.mxu0 0.0
  %2888 = vmatpush1.xpose.msra.mxu0 0.0
  %2889 = vmatprep.subr.mxu0 0.0
  %2890 = vmatpush1.xpose.msra.mxu0 0.0
  %2891 = vmatprep.subr.mxu0 0.0
  %2892 = vmatpush1.xpose.msra.mxu0 0.0
  %2893 = vmatprep.subr.mxu0 0.0
  %2894 = vmatpush1.xpose.msra.mxu0 0.0
  %2895 = vmatprep.subr.mxu0 0.0
  %2896 = vmatpush1.xpose.msra.mxu0 0.0
  %2897 = vmatprep.subr.mxu0 0.0
  %2898 = vmatpush1.xpose.msra.mxu0 0.0
  %2899 = vmatprep.subr.mxu0 0.0
  %2900 = vmatpush1.xpose.msra.mxu0 0.0
  %2901 = vmatprep.subr.mxu0 0.0
  %2902 = vmatpush1.xpose.msra.mxu0 0.0
  %2903 = vmatprep.subr.mxu0 0.0
  %2904 = vmatpush1.xpose.msra.mxu0 0.0
  %2905 = vmatprep.subr.mxu0 0.0
  %2906 = vmatpush1.xpose.msra.mxu0 0.0
  %2907 = vmatprep.subr.mxu0 0.0
  %2908 = vmatpush1.xpose.msra.mxu0 0.0
  %2909 = vmatprep.subr.mxu0 0.0
  %2910 = vmatpush1.xpose.msra.mxu0 0.0
  %2911 = vmatprep.subr.mxu0 0.0
  %2912 = vmatpush1.xpose.msra.mxu0 0.0
  %2913 = vmatprep.subr.mxu0 0.0
  %2914 = vmatpush1.xpose.msra.mxu0 0.0
  %2915 = vmatprep.subr.mxu0 0.0
  %2916 = vmatpush1.xpose.msra.mxu0 0.0
  %2917 = vmatprep.subr.mxu0 0.0
  %2918 = vmatpush1.xpose.msra.mxu0 0.0
  %2919 = vmatprep.subr.mxu0 0.0
  %2920 = vmatpush1.xpose.msra.mxu0 0.0
  %2921 = vmatprep.subr.mxu0 0.0
  %2922 = vmatpush1.xpose.msra.mxu0 0.0
  %2923 = vmatprep.subr.mxu0 0.0
  %2924 = vmatpush1.xpose.msra.mxu0 0.0
  %2925 = vmatprep.mubr.f32.mxu0 0.0
  %2926 = vmatmul.mubr.f32.gmra.mrb[0].mxu0 %v2853
  %v2927 = vpop.f32.mrb[0].mxu0
  %v2928 = vadd.f32 0.0, %v2927
  %v2929 = vpop.f32.mrb[0].mxu0
  %2930 = vmatprep.mubr.f32.mxu0 0.0
  %2931 = vmatmul.mubr.f32.gmra.mrb[0].mxu0 %v2855
  %v2932 = vpop.f32.mrb[0].mxu0
  %v2933 = vadd.f32 0.0, %v2932
  %v2934 = vpop.f32.mrb[0].mxu0
  %2935 = vdwg.mxu0
  %v2936 = vmul.f32 %v2928, 0.25
  %v2937 = vmul.f32 %v2933, 0.25
  %v2938 = vadd.f32 %v2936, %v167
  %v2939 = vadd.f32 %v2937, %v168
  %v2940 = vsel %vm926, %v2938, -inf
  %2941 = vmax.xlane.f32.xlu0 %v2940
  %v2942 = vpop.xlane.xlu0 %2941
  %v2943 = vsel %vm930, %v2939, -inf
  %2944 = vmax.xlane.f32.xlu0 %v2943
  %v2945 = vpop.xlane.xlu0 %2944
  %v2946 = vsub.f32 %v2938, %v2942
  %v2947 = vsub.f32 %v2939, %v2945
  %v2948 = vmul.f32 %v2946, 1.442695
  %v2949 = vpow.pop %v2948
  %v2950 = vmul.f32 %v2947, 1.442695
  %v2951 = vpow.pop %v2950
  %v2952 = vsel %vm926, %v2949, 0.0
  %2953 = vadd.xlane.f32.xlu0 %v2952
  %v2954 = vpop.xlane.xlu0 %2953
  %v2955 = vsel %vm930, %v2951, 0.0
  %2956 = vadd.xlane.f32.xlu0 %v2955
  %v2957 = vpop.xlane.xlu0 %2956
  %v2958 = vrcp.pop %v2954
  %v2959 = vmul.f32 %v2949, %v2958
  %v2960 = vrcp.pop %v2957
  %v2961 = vmul.f32 %v2951, %v2960
  %2962 = vrot.lane.b32.xlu0 %v2229, 80
  %v2963 = vpop.permute.xlu0 %2962
  %2964 = vrot.lane.b32.xlu0 %v2233, 80
  %v2965 = vpop.permute.xlu0 %2964
  %v2968 = vsel %vm926, %v2959, 0
  %v2971 = vsel %vm926, %v2961, 0
  %v2973 = vsel %vm956, %v2965, 0
  %2975 = vmatprep.subr.mxu0 0.0
  %2976 = vmatpush1.msra.mxu0 %v2963
  %2977 = vmatprep.subr.mxu0 0.0
  %2978 = vmatpush1.msra.mxu0 %v2973
  %2979 = vmatprep.subr.mxu0 0.0
  %2980 = vmatpush1.msra.mxu0 0.0
  %2981 = vmatprep.subr.mxu0 0.0
  %2982 = vmatpush1.msra.mxu0 0.0
  %2983 = vmatprep.subr.mxu0 0.0
  %2984 = vmatpush1.msra.mxu0 0.0
  %2985 = vmatprep.subr.mxu0 0.0
  %2986 = vmatpush1.msra.mxu0 0.0
  %2987 = vmatprep.subr.mxu0 0.0
  %2988 = vmatpush1.msra.mxu0 0.0
  %2989 = vmatprep.subr.mxu0 0.0
  %2990 = vmatpush1.msra.mxu0 0.0
  %2991 = vmatprep.subr.mxu0 0.0
  %2992 = vmatpush1.msra.mxu0 0.0
  %2993 = vmatprep.subr.mxu0 0.0
  %2994 = vmatpush1.msra.mxu0 0.0
  %2995 = vmatprep.subr.mxu0 0.0
  %2996 = vmatpush1.msra.mxu0 0.0
  %2997 = vmatprep.subr.mxu0 0.0
  %2998 = vmatpush1.msra.mxu0 0.0
  %2999 = vmatprep.subr.mxu0 0.0
  %3000 = vmatpush1.msra.mxu0 0.0
  %3001 = vmatprep.subr.mxu0 0.0
  %3002 = vmatpush1.msra.mxu0 0.0
  %3003 = vmatprep.subr.mxu0 0.0
  %3004 = vmatpush1.msra.mxu0 0.0
  %3005 = vmatprep.subr.mxu0 0.0
  %3006 = vmatpush1.msra.mxu0 0.0
  %3007 = vmatprep.subr.mxu0 0.0
  %3008 = vmatpush1.msra.mxu0 0.0
  %3009 = vmatprep.subr.mxu0 0.0
  %3010 = vmatpush1.msra.mxu0 0.0
  %3011 = vmatprep.subr.mxu0 0.0
  %3012 = vmatpush1.msra.mxu0 0.0
  %3013 = vmatprep.subr.mxu0 0.0
  %3014 = vmatpush1.msra.mxu0 0.0
  %3015 = vmatprep.subr.mxu0 0.0
  %3016 = vmatpush1.msra.mxu0 0.0
  %3017 = vmatprep.subr.mxu0 0.0
  %3018 = vmatpush1.msra.mxu0 0.0
  %3019 = vmatprep.subr.mxu0 0.0
  %3020 = vmatpush1.msra.mxu0 0.0
  %3021 = vmatprep.subr.mxu0 0.0
  %3022 = vmatpush1.msra.mxu0 0.0
  %3023 = vmatprep.subr.mxu0 0.0
  %3024 = vmatpush1.msra.mxu0 0.0
  %3025 = vmatprep.subr.mxu0 0.0
  %3026 = vmatpush1.msra.mxu0 0.0
  %3027 = vmatprep.subr.mxu0 0.0
  %3028 = vmatpush1.msra.mxu0 0.0
  %3029 = vmatprep.subr.mxu0 0.0
  %3030 = vmatpush1.msra.mxu0 0.0
  %3031 = vmatprep.subr.mxu0 0.0
  %3032 = vmatpush1.msra.mxu0 0.0
  %3033 = vmatprep.subr.mxu0 0.0
  %3034 = vmatpush1.msra.mxu0 0.0
  %3035 = vmatprep.subr.mxu0 0.0
  %3036 = vmatpush1.msra.mxu0 0.0
  %3037 = vmatprep.subr.mxu0 0.0
  %3038 = vmatpush1.msra.mxu0 0.0
  %3039 = vmatprep.mubr.f32.mxu0 0.0
  %3040 = vmatmul.mubr.f32.gmra.mrb[0].mxu0 %v2968
  %v3041 = vpop.f32.mrb[0].mxu0
  %v3042 = vadd.f32 0.0, %v3041
  %v3043 = vpop.f32.mrb[0].mxu0
  %3044 = vmatprep.mubr.f32.mxu0 0.0
  %3045 = vmatmul.mubr.f32.gmra.mrb[0].mxu0 %v2971
  %v3046 = vpop.f32.mrb[0].mxu0
  %v3047 = vadd.f32 0.0, %v3046
  %v3048 = vpop.f32.mrb[0].mxu0
  %3049 = vdwg.mxu0
  %3052 = vrot.lane.b32.xlu0 %v2632, 16
  %v3053 = vpop.permute.xlu0 %3052
  %3054 = vrot.lane.b32.xlu0 %v2637, 16
  %v3055 = vpop.permute.xlu0 %3054
  %3060 = vrot.lane.b32.xlu0 %v2837, 32
  %v3061 = vpop.permute.xlu0 %3060
  %3062 = vrot.lane.b32.xlu0 %v2842, 32
  %v3063 = vpop.permute.xlu0 %3062
  %3068 = vrot.lane.b32.xlu0 %v3042, 48
  %v3069 = vpop.permute.xlu0 %3068
  %3070 = vrot.lane.b32.xlu0 %v3047, 48
  %v3071 = vpop.permute.xlu0 %3070
  %v3074 = vsel %vm838, %v2426, %v3053
  %v3075 = vsel %vm838, %v2431, %v3055
  %v3076 = vsel %vm1677, %v3074, %v3061
  %v3077 = vsel %vm1677, %v3075, %v3063
  %v3078 = vsel %vm1680, %v3076, %v3069
  %v3079 = vsel %vm1680, %v3077, %v3071
  %v3080 = vpack.c.bf16 %v3079, %v3078
  %v3081 = vld [vmem:[%s29] sm:$0xf]
  %v3082 = vld [vmem:[%s29 + $0x4] sm:$0xf]
  %v3083 = vld [vmem:[%s29 + $0x8] sm:$0xf]
  %v3084 = vld [vmem:[%s29 + $0xc] sm:$0xf]
  %v3085 = vld [vmem:[%s29 + $0x10] sm:$0xf]
  %v3086 = vld [vmem:[%s29 + $0x14] sm:$0xf]
  %v3087 = vld [vmem:[%s29 + $0x18] sm:$0xf]
  %v3088 = vld [vmem:[%s29 + $0x1c] sm:$0xf]
  %v3089 = vld [vmem:[%s31] sm:$0x1]
  %v3091 = vlaneseq
  %v3092 = vshrl.u32 %v3091, 7
  %v3093 = vsub.s32 0, %v3092
  %v3094 = vrot.slane %v3089, %v3093
  %v3104 = vunpack.c.l.b16 %v3081
  %v3105 = vunpack.c.l.b16 %v3082
  %v3106 = vunpack.c.l.b16 %v3083
  %v3107 = vunpack.c.l.b16 %v3084
  %v3108 = vunpack.c.l.b16 %v3085
  %v3109 = vunpack.c.l.b16 %v3086
  %v3110 = vunpack.c.l.b16 %v3087
  %v3111 = vunpack.c.l.b16 %v3088
  %v3112 = vpack.c.b16 %v3105, %v3104
  %v3113 = vpack.c.b16 %v3107, %v3106
  %v3114 = vpack.c.b16 %v3109, %v3108
  %v3115 = vpack.c.b16 %v3111, %v3110
  %v3121 = vsel %vm696, %v3080, 0
  %3123 = vmatprep.subr.bf16.mxu0 0
  %3124 = vmatpush1.bf16.msra.mxu0 %v3112
  %3125 = vmatprep.subr.bf16.mxu0 0
  %3126 = vmatpush1.bf16.msra.mxu0 %v3113
  %3127 = vmatprep.subr.bf16.mxu0 0
  %3128 = vmatpush1.bf16.msra.mxu0 %v3114
  %3129 = vmatprep.subr.bf16.mxu0 0
  %3130 = vmatpush1.bf16.msra.mxu0 %v3115
  %3131 = vmatprep.subr.bf16.mxu0 0
  %3132 = vmatpush1.bf16.msra.mxu0 0
  %3133 = vmatprep.subr.bf16.mxu0 0
  %3134 = vmatpush1.bf16.msra.mxu0 0
  %3135 = vmatprep.subr.bf16.mxu0 0
  %3136 = vmatpush1.bf16.msra.mxu0 0
  %3137 = vmatprep.subr.bf16.mxu0 0
  %3138 = vmatpush1.bf16.msra.mxu0 0
  %3139 = vmatprep.subr.bf16.mxu0 0
  %3140 = vmatpush1.bf16.msra.mxu0 0
  %3141 = vmatprep.subr.bf16.mxu0 0
  %3142 = vmatpush1.bf16.msra.mxu0 0
  %3143 = vmatprep.subr.bf16.mxu0 0
  %3144 = vmatpush1.bf16.msra.mxu0 0
  %3145 = vmatprep.subr.bf16.mxu0 0
  %3146 = vmatpush1.bf16.msra.mxu0 0
  %3147 = vmatprep.subr.bf16.mxu0 0
  %3148 = vmatpush1.bf16.msra.mxu0 0
  %3149 = vmatprep.subr.bf16.mxu0 0
  %3150 = vmatpush1.bf16.msra.mxu0 0
  %3151 = vmatprep.subr.bf16.mxu0 0
  %3152 = vmatpush1.bf16.msra.mxu0 0
  %3153 = vmatprep.subr.bf16.mxu0 0
  %3154 = vmatpush1.bf16.msra.mxu0 0
  %3155 = vmatprep.mubr.bf16.mxu0 0
  %3156 = vmatmul.mubr.bf16.gmra.mrb[0].mxu0 %v3121
  %v3157 = vpop.f32.mrb[0].mxu0
  %v3158 = vadd.f32 %v3094, %v3157
  %v3159 = vpop.f32.mrb[0].mxu0
  %v3160 = vpop.f32.mrb[0].mxu0
  %v3161 = vadd.f32 %v3094, %v3160
  %v3162 = vpop.f32.mrb[0].mxu0
  %3163 = vdwg.mxu0
  %v3164 = vadd.f32 %v2100, %v3158
  %v3165 = vadd.f32 %v2101, %v3161
  %v3166 = vsel %vm696, %v3164, 0.0
  %3167 = vadd.xlane.f32.xlu0 %v3166
  %v3168 = vpop.xlane.xlu0 %3167
  %v3169 = vsel %vm700, %v3165, 0.0
  %3170 = vadd.xlane.f32.xlu0 %v3169
  %v3171 = vpop.xlane.xlu0 %3170
  %v3172 = vmul.f32 %v3168, %v704
  %v3173 = vmul.f32 %v3171, %v704
  %v3174 = vsub.f32 %v3164, %v3172
  %v3175 = vsub.f32 %v3165, %v3173
  %v3176 = vmul.f32 %v3174, %v3174
  %v3177 = vmul.f32 %v3175, %v3175
  %v3178 = vsel %vm696, %v3176, 0.0
  %3179 = vadd.xlane.f32.xlu0 %v3178
  %v3180 = vpop.xlane.xlu0 %3179
  %v3181 = vsel %vm700, %v3177, 0.0
  %3182 = vadd.xlane.f32.xlu0 %v3181
  %v3183 = vpop.xlane.xlu0 %3182
  %v3184 = vmul.f32 %v3180, %v704
  %v3185 = vmul.f32 %v3183, %v704
  %v3186 = vadd.f32 %v3184, 1e-06
  %v3187 = vadd.f32 %v3185, 1e-06
  %v3188 = vrsqrt.pop %v3186
  %v3189 = vrsqrt.pop %v3187
  %v3190 = vmul.f32 %v3174, %v3188
  %v3191 = vmul.f32 %v3175, %v3189
  %v3192 = vpack.c.bf16 %v3191, %v3190
  %v3193 = vld [vmem:[%s33] sm:$0xff]
  %v3194 = vld [vmem:[%s33 + $0x8] sm:$0xff]
  %v3195 = vld [vmem:[%s33 + $0x10] sm:$0xff]
  %v3196 = vld [vmem:[%s33 + $0x18] sm:$0xff]
  %v3197 = vld [vmem:[%s33 + $0x20] sm:$0xff]
  %v3198 = vld [vmem:[%s33 + $0x28] sm:$0xff]
  %v3199 = vld [vmem:[%s33 + $0x30] sm:$0xff]
  %v3200 = vld [vmem:[%s33 + $0x38] sm:$0xff]
  %v3201 = vld [vmem:[%s35] sm:$0x3]
  %v3203 = vlaneseq
  %v3204 = vshrl.u32 %v3203, 7
  %v3205 = vsub.s32 0, %v3204
  %v3206 = vrot.slane %v3201, %v3205
  %v3207 = vlaneseq
  %v3208 = vshrl.u32 %v3207, 7
  %v3209 = vsub.s32 1, %v3208
  %v3210 = vrot.slane %v3201, %v3209
  %v3221 = vunpack.c.l.b16 %v3193
  %v3222 = vunpack.c.h.b16 %v3193
  %v3223 = vunpack.c.l.b16 %v3194
  %v3224 = vunpack.c.h.b16 %v3194
  %v3225 = vunpack.c.l.b16 %v3195
  %v3226 = vunpack.c.h.b16 %v3195
  %v3227 = vunpack.c.l.b16 %v3196
  %v3228 = vunpack.c.h.b16 %v3196
  %v3229 = vunpack.c.l.b16 %v3197
  %v3230 = vunpack.c.h.b16 %v3197
  %v3231 = vunpack.c.l.b16 %v3198
  %v3232 = vunpack.c.h.b16 %v3198
  %v3233 = vunpack.c.l.b16 %v3199
  %v3234 = vunpack.c.h.b16 %v3199
  %v3235 = vunpack.c.l.b16 %v3200
  %v3236 = vunpack.c.h.b16 %v3200
  %v3237 = vpack.c.b16 %v3223, %v3221
  %v3238 = vpack.c.b16 %v3224, %v3222
  %v3239 = vpack.c.b16 %v3227, %v3225
  %v3240 = vpack.c.b16 %v3228, %v3226
  %v3241 = vpack.c.b16 %v3231, %v3229
  %v3242 = vpack.c.b16 %v3232, %v3230
  %v3243 = vpack.c.b16 %v3235, %v3233
  %v3244 = vpack.c.b16 %v3236, %v3234
  %v3254 = vsel %vm696, %v3192, 0
  %3256 = vmatprep.subr.bf16.mxu0 %v3238
  %3257 = vmatpush1.bf16.msra.mxu0 %v3237
  %3258 = vmatprep.subr.bf16.mxu0 %v3240
  %3259 = vmatpush1.bf16.msra.mxu0 %v3239
  %3260 = vmatprep.subr.bf16.mxu0 %v3242
  %3261 = vmatpush1.bf16.msra.mxu0 %v3241
  %3262 = vmatprep.subr.bf16.mxu0 %v3244
  %3263 = vmatpush1.bf16.msra.mxu0 %v3243
  %3264 = vmatprep.subr.bf16.mxu0 0
  %3265 = vmatpush1.bf16.msra.mxu0 0
  %3266 = vmatprep.subr.bf16.mxu0 0
  %3267 = vmatpush1.bf16.msra.mxu0 0
  %3268 = vmatprep.subr.bf16.mxu0 0
  %3269 = vmatpush1.bf16.msra.mxu0 0
  %3270 = vmatprep.subr.bf16.mxu0 0
  %3271 = vmatpush1.bf16.msra.mxu0 0
  %3272 = vmatprep.subr.bf16.mxu0 0
  %3273 = vmatpush1.bf16.msra.mxu0 0
  %3274 = vmatprep.subr.bf16.mxu0 0
  %3275 = vmatpush1.bf16.msra.mxu0 0
  %3276 = vmatprep.subr.bf16.mxu0 0
  %3277 = vmatpush1.bf16.msra.mxu0 0
  %3278 = vmatprep.subr.bf16.mxu0 0
  %3279 = vmatpush1.bf16.msra.mxu0 0
  %3280 = vmatprep.subr.bf16.mxu0 0
  %3281 = vmatpush1.bf16.msra.mxu0 0
  %3282 = vmatprep.subr.bf16.mxu0 0
  %3283 = vmatpush1.bf16.msra.mxu0 0
  %3284 = vmatprep.subr.bf16.mxu0 0
  %3285 = vmatpush1.bf16.msra.mxu0 0
  %3286 = vmatprep.subr.bf16.mxu0 0
  %3287 = vmatpush1.bf16.msra.mxu0 0
  %3288 = vmatprep.mubr.bf16.mxu0 0
  %3289 = vmatmul.mubr.bf16.gmra.mrb[0].mxu0 %v3254
  %v3290 = vpop.f32.mrb[0].mxu0
  %v3291 = vadd.f32 %v3206, %v3290
  %v3292 = vpop.f32.mrb[0].mxu0
  %v3293 = vadd.f32 %v3210, %v3292
  %v3294 = vpop.f32.mrb[0].mxu0
  %v3295 = vadd.f32 %v3206, %v3294
  %v3296 = vpop.f32.mrb[0].mxu0
  %v3297 = vadd.f32 %v3210, %v3296
  %3298 = vdwg.mxu0
  %v3299 = vmul.f32 %v3291, 0.5
  %v3300 = vmul.f32 %v3293, 0.5
  %v3301 = vmul.f32 %v3295, 0.5
  %v3302 = vmul.f32 %v3297, 0.5
  %v3303 = vmul.f32 %v3291, 0.70710677
  %v3304 = vmul.f32 %v3293, 0.70710677
  %v3305 = vmul.f32 %v3295, 0.70710677
  %v3306 = vmul.f32 %v3297, 0.70710677
  %v3307 = verf.f32.pop %v3303
  %v3308 = verf.f32.pop %v3304
  %v3309 = verf.f32.pop %v3305
  %v3310 = verf.f32.pop %v3306
  %v3311 = vadd.f32 %v3307, 1.0
  %v3312 = vadd.f32 %v3308, 1.0
  %v3313 = vadd.f32 %v3309, 1.0
  %v3314 = vadd.f32 %v3310, 1.0
  %v3315 = vmul.f32 %v3299, %v3311
  %v3316 = vmul.f32 %v3300, %v3312
  %v3317 = vmul.f32 %v3301, %v3313
  %v3318 = vmul.f32 %v3302, %v3314
  %v3319 = vpack.c.bf16 %v3317, %v3315
  %v3320 = vpack.c.bf16 %v3318, %v3316
  %v3321 = vld [vmem:[%s37] sm:$0xf]
  %v3322 = vld [vmem:[%s37 + $0x4] sm:$0xf]
  %v3323 = vld [vmem:[%s37 + $0x8] sm:$0xf]
  %v3324 = vld [vmem:[%s37 + $0xc] sm:$0xf]
  %v3325 = vld [vmem:[%s37 + $0x10] sm:$0xf]
  %v3326 = vld [vmem:[%s37 + $0x14] sm:$0xf]
  %v3327 = vld [vmem:[%s37 + $0x18] sm:$0xf]
  %v3328 = vld [vmem:[%s37 + $0x1c] sm:$0xf]
  %v3329 = vld [vmem:[%s37 + $0x20] sm:$0xf]
  %v3330 = vld [vmem:[%s37 + $0x24] sm:$0xf]
  %v3331 = vld [vmem:[%s37 + $0x28] sm:$0xf]
  %v3332 = vld [vmem:[%s37 + $0x2c] sm:$0xf]
  %v3333 = vld [vmem:[%s37 + $0x30] sm:$0xf]
  %v3334 = vld [vmem:[%s37 + $0x34] sm:$0xf]
  %v3335 = vld [vmem:[%s37 + $0x38] sm:$0xf]
  %v3336 = vld [vmem:[%s37 + $0x3c] sm:$0xf]
  %v3337 = vld [vmem:[%s37 + $0x40] sm:$0xf]
  %v3338 = vld [vmem:[%s37 + $0x44] sm:$0xf]
  %v3339 = vld [vmem:[%s37 + $0x48] sm:$0xf]
  %v3340 = vld [vmem:[%s37 + $0x4c] sm:$0xf]
  %v3341 = vld [vmem:[%s37 + $0x50] sm:$0xf]
  %v3342 = vld [vmem:[%s37 + $0x54] sm:$0xf]
  %v3343 = vld [vmem:[%s37 + $0x58] sm:$0xf]
  %v3344 = vld [vmem:[%s37 + $0x5c] sm:$0xf]
  %v3345 = vld [vmem:[%s37 + $0x60] sm:$0xf]
  %v3346 = vld [vmem:[%s37 + $0x64] sm:$0xf]
  %v3347 = vld [vmem:[%s37 + $0x68] sm:$0xf]
  %v3348 = vld [vmem:[%s37 + $0x6c] sm:$0xf]
  %v3349 = vld [vmem:[%s37 + $0x70] sm:$0xf]
  %v3350 = vld [vmem:[%s37 + $0x74] sm:$0xf]
  %v3351 = vld [vmem:[%s37 + $0x78] sm:$0xf]
  %v3352 = vld [vmem:[%s37 + $0x7c] sm:$0xf]
  %v3353 = vld [vmem:[%s39] sm:$0x1]
  %v3355 = vlaneseq
  %v3356 = vshrl.u32 %v3355, 7
  %v3357 = vsub.s32 0, %v3356
  %v3358 = vrot.slane %v3353, %v3357
  %v3392 = vunpack.c.l.b16 %v3321
  %v3393 = vunpack.c.l.b16 %v3322
  %v3394 = vunpack.c.l.b16 %v3323
  %v3395 = vunpack.c.l.b16 %v3324
  %v3396 = vunpack.c.l.b16 %v3325
  %v3397 = vunpack.c.l.b16 %v3326
  %v3398 = vunpack.c.l.b16 %v3327
  %v3399 = vunpack.c.l.b16 %v3328
  %v3400 = vunpack.c.l.b16 %v3329
  %v3401 = vunpack.c.l.b16 %v3330
  %v3402 = vunpack.c.l.b16 %v3331
  %v3403 = vunpack.c.l.b16 %v3332
  %v3404 = vunpack.c.l.b16 %v3333
  %v3405 = vunpack.c.l.b16 %v3334
  %v3406 = vunpack.c.l.b16 %v3335
  %v3407 = vunpack.c.l.b16 %v3336
  %v3408 = vunpack.c.l.b16 %v3337
  %v3409 = vunpack.c.l.b16 %v3338
  %v3410 = vunpack.c.l.b16 %v3339
  %v3411 = vunpack.c.l.b16 %v3340
  %v3412 = vunpack.c.l.b16 %v3341
  %v3413 = vunpack.c.l.b16 %v3342
  %v3414 = vunpack.c.l.b16 %v3343
  %v3415 = vunpack.c.l.b16 %v3344
  %v3416 = vunpack.c.l.b16 %v3345
  %v3417 = vunpack.c.l.b16 %v3346
  %v3418 = vunpack.c.l.b16 %v3347
  %v3419 = vunpack.c.l.b16 %v3348
  %v3420 = vunpack.c.l.b16 %v3349
  %v3421 = vunpack.c.l.b16 %v3350
  %v3422 = vunpack.c.l.b16 %v3351
  %v3423 = vunpack.c.l.b16 %v3352
  %v3424 = vpack.c.b16 %v3393, %v3392
  %v3425 = vpack.c.b16 %v3395, %v3394
  %v3426 = vpack.c.b16 %v3397, %v3396
  %v3427 = vpack.c.b16 %v3399, %v3398
  %v3428 = vpack.c.b16 %v3401, %v3400
  %v3429 = vpack.c.b16 %v3403, %v3402
  %v3430 = vpack.c.b16 %v3405, %v3404
  %v3431 = vpack.c.b16 %v3407, %v3406
  %v3432 = vpack.c.b16 %v3409, %v3408
  %v3433 = vpack.c.b16 %v3411, %v3410
  %v3434 = vpack.c.b16 %v3413, %v3412
  %v3435 = vpack.c.b16 %v3415, %v3414
  %v3436 = vpack.c.b16 %v3417, %v3416
  %v3437 = vpack.c.b16 %v3419, %v3418
  %v3438 = vpack.c.b16 %v3421, %v3420
  %v3439 = vpack.c.b16 %v3423, %v3422
  %3456 = vmatprep.subr.bf16.mxu0 0
  %3457 = vmatpush1.bf16.msra.mxu0 %v3424
  %3458 = vmatprep.subr.bf16.mxu0 0
  %3459 = vmatpush1.bf16.msra.mxu0 %v3425
  %3460 = vmatprep.subr.bf16.mxu0 0
  %3461 = vmatpush1.bf16.msra.mxu0 %v3426
  %3462 = vmatprep.subr.bf16.mxu0 0
  %3463 = vmatpush1.bf16.msra.mxu0 %v3427
  %3464 = vmatprep.subr.bf16.mxu0 0
  %3465 = vmatpush1.bf16.msra.mxu0 %v3428
  %3466 = vmatprep.subr.bf16.mxu0 0
  %3467 = vmatpush1.bf16.msra.mxu0 %v3429
  %3468 = vmatprep.subr.bf16.mxu0 0
  %3469 = vmatpush1.bf16.msra.mxu0 %v3430
  %3470 = vmatprep.subr.bf16.mxu0 0
  %3471 = vmatpush1.bf16.msra.mxu0 %v3431
  %3472 = vmatprep.subr.bf16.mxu0 0
  %3473 = vmatpush1.bf16.msra.mxu0 %v3432
  %3474 = vmatprep.subr.bf16.mxu0 0
  %3475 = vmatpush1.bf16.msra.mxu0 %v3433
  %3476 = vmatprep.subr.bf16.mxu0 0
  %3477 = vmatpush1.bf16.msra.mxu0 %v3434
  %3478 = vmatprep.subr.bf16.mxu0 0
  %3479 = vmatpush1.bf16.msra.mxu0 %v3435
  %3480 = vmatprep.subr.bf16.mxu0 0
  %3481 = vmatpush1.bf16.msra.mxu0 %v3436
  %3482 = vmatprep.subr.bf16.mxu0 0
  %3483 = vmatpush1.bf16.msra.mxu0 %v3437
  %3484 = vmatprep.subr.bf16.mxu0 0
  %3485 = vmatpush1.bf16.msra.mxu0 %v3438
  %3486 = vmatprep.subr.bf16.mxu0 0
  %3487 = vmatpush1.bf16.msra.mxu0 %v3439
  %3488 = vmatprep.mubr.bf16.mxu0 %v3320
  %3489 = vmatmul.mubr.bf16.gmra.mrb[0].mxu0 %v3319
  %v3490 = vpop.f32.mrb[0].mxu0
  %v3491 = vadd.f32 %v3358, %v3490
  %v3492 = vpop.f32.mrb[0].mxu0
  %v3493 = vpop.f32.mrb[0].mxu0
  %v3494 = vadd.f32 %v3358, %v3493
  %v3495 = vpop.f32.mrb[0].mxu0
  %3496 = vdwg.mxu0
  %v3497 = vadd.f32 %v3164, %v3491
  %v3498 = vadd.f32 %v3165, %v3494
  %v3499 = vsel %vm696, %v3497, 0.0
  %3500 = vadd.xlane.f32.xlu0 %v3499
  %v3501 = vpop.xlane.xlu0 %3500
  %v3502 = vsel %vm700, %v3498, 0.0
  %3503 = vadd.xlane.f32.xlu0 %v3502
  %v3504 = vpop.xlane.xlu0 %3503
  %v3505 = vmul.f32 %v3501, %v704
  %v3506 = vmul.f32 %v3504, %v704
  %v3507 = vsub.f32 %v3497, %v3505
  %v3508 = vsub.f32 %v3498, %v3506
  %v3509 = vmul.f32 %v3507, %v3507
  %v3510 = vmul.f32 %v3508, %v3508
  %v3511 = vsel %vm696, %v3509, 0.0
  %3512 = vadd.xlane.f32.xlu0 %v3511
  %v3513 = vpop.xlane.xlu0 %3512
  %v3514 = vsel %vm700, %v3510, 0.0
  %3515 = vadd.xlane.f32.xlu0 %v3514
  %v3516 = vpop.xlane.xlu0 %3515
  %v3517 = vmul.f32 %v3513, %v704
  %v3518 = vmul.f32 %v3516, %v704
  %v3519 = vadd.f32 %v3517, 1e-06
  %v3520 = vadd.f32 %v3518, 1e-06
  %v3521 = vrsqrt.pop %v3519
  %v3522 = vrsqrt.pop %v3520
  %v3523 = vmul.f32 %v3507, %v3521
  %v3524 = vmul.f32 %v3508, %v3522
  %v3525 = vpack.c.bf16 %v3524, %v3523
  %v3526 = vld [vmem:[%s41] sm:$0xf]
  %v3527 = vld [vmem:[%s41 + $0x4] sm:$0xf]
  %v3528 = vld [vmem:[%s41 + $0x8] sm:$0xf]
  %v3529 = vld [vmem:[%s41 + $0xc] sm:$0xf]
  %v3530 = vld [vmem:[%s41 + $0x10] sm:$0xf]
  %v3531 = vld [vmem:[%s41 + $0x14] sm:$0xf]
  %v3532 = vld [vmem:[%s41 + $0x18] sm:$0xf]
  %v3533 = vld [vmem:[%s41 + $0x1c] sm:$0xf]
  %v3534 = vld [vmem:[%s43] sm:$0xff]
  %v3535 = vld [vmem:[%s43 + $0x8] sm:$0x3]
  %v3544 = vunpack.c.l.b16 %v3526
  %v3545 = vunpack.c.l.b16 %v3527
  %v3546 = vunpack.c.l.b16 %v3528
  %v3547 = vunpack.c.l.b16 %v3529
  %v3548 = vunpack.c.l.b16 %v3530
  %v3549 = vunpack.c.l.b16 %v3531
  %v3550 = vunpack.c.l.b16 %v3532
  %v3551 = vunpack.c.l.b16 %v3533
  %v3552 = vpack.c.b16 %v3545, %v3544
  %v3553 = vpack.c.b16 %v3547, %v3546
  %v3554 = vpack.c.b16 %v3549, %v3548
  %v3555 = vpack.c.b16 %v3551, %v3550
  %v3561 = vsel %vm696, %v3525, 0
  %3563 = vmatprep.subr.bf16.mxu0 0
  %3564 = vmatpush1.bf16.msra.mxu0 %v3552
  %3565 = vmatprep.subr.bf16.mxu0 0
  %3566 = vmatpush1.bf16.msra.mxu0 %v3553
  %3567 = vmatprep.subr.bf16.mxu0 0
  %3568 = vmatpush1.bf16.msra.mxu0 %v3554
  %3569 = vmatprep.subr.bf16.mxu0 0
  %3570 = vmatpush1.bf16.msra.mxu0 %v3555
  %3571 = vmatprep.subr.bf16.mxu0 0
  %3572 = vmatpush1.bf16.msra.mxu0 0
  %3573 = vmatprep.subr.bf16.mxu0 0
  %3574 = vmatpush1.bf16.msra.mxu0 0
  %3575 = vmatprep.subr.bf16.mxu0 0
  %3576 = vmatpush1.bf16.msra.mxu0 0
  %3577 = vmatprep.subr.bf16.mxu0 0
  %3578 = vmatpush1.bf16.msra.mxu0 0
  %3579 = vmatprep.subr.bf16.mxu0 0
  %3580 = vmatpush1.bf16.msra.mxu0 0
  %3581 = vmatprep.subr.bf16.mxu0 0
  %3582 = vmatpush1.bf16.msra.mxu0 0
  %3583 = vmatprep.subr.bf16.mxu0 0
  %3584 = vmatpush1.bf16.msra.mxu0 0
  %3585 = vmatprep.subr.bf16.mxu0 0
  %3586 = vmatpush1.bf16.msra.mxu0 0
  %3587 = vmatprep.subr.bf16.mxu0 0
  %3588 = vmatpush1.bf16.msra.mxu0 0
  %3589 = vmatprep.subr.bf16.mxu0 0
  %3590 = vmatpush1.bf16.msra.mxu0 0
  %3591 = vmatprep.subr.bf16.mxu0 0
  %3592 = vmatpush1.bf16.msra.mxu0 0
  %3593 = vmatprep.subr.bf16.mxu0 0
  %3594 = vmatpush1.bf16.msra.mxu0 0
  %3595 = vmatprep.mubr.bf16.mxu0 0
  %3596 = vmatmul.mubr.bf16.gmra.mrb[0].mxu0 %v3561
  %v3597 = vpop.f32.mrb[0].mxu0
  %v3598 = vadd.f32 %v3534, %v3597
  %v3599 = vpop.f32.mrb[0].mxu0
  %v3600 = vpop.f32.mrb[0].mxu0
  %v3601 = vadd.f32 %v3535, %v3600
  %v3602 = vpop.f32.mrb[0].mxu0
  %3603 = vdwg.mxu0
  %3604 = vadd.xlane.f32.xlu0 %v3598
  %v3605 = vpop.xlane.xlu0 %3604
  %v3606 = vsel %vm956, %v3601, 0.0
  %3607 = vadd.xlane.f32.xlu0 %v3606
  %v3608 = vpop.xlane.xlu0 %3607
  %v3609 = vrcp.pop 128.0
  %v3610 = vmul.f32 %v3605, %v3609
  %v3611 = vmul.f32 %v3608, %v3609
  %v3612 = vsub.f32 %v3598, %v3610
  %v3613 = vsub.f32 %v3601, %v3611
  %v3614 = vmul.f32 %v3612, %v3612
  %v3615 = vmul.f32 %v3613, %v3613
  %3616 = vadd.xlane.f32.xlu0 %v3614
  %v3617 = vpop.xlane.xlu0 %3616
  %v3618 = vsel %vm956, %v3615, 0.0
  %3619 = vadd.xlane.f32.xlu0 %v3618
  %v3620 = vpop.xlane.xlu0 %3619
  %v3621 = vmul.f32 %v3617, %v3609
  %v3622 = vmul.f32 %v3620, %v3609
  %v3623 = vadd.f32 %v3621, 1e-06
  %v3624 = vadd.f32 %v3622, 1e-06
  %v3625 = vrsqrt.pop %v3623
  %v3626 = vrsqrt.pop %v3624
  %v3627 = vmul.f32 %v3612, %v3625
  %v3628 = vmul.f32 %v3613, %v3626
  %v3629 = vpack.c.bf16 %v3628, %v3627
  %v3630 = vld [vmem:[%s45] sm:$0xff]
  %v3631 = vld [vmem:[%s45 + $0x8] sm:$0xf]
  %v3632 = vld [vmem:[%s45 + $0xc] sm:$0xff]
  %v3633 = vld [vmem:[%s45 + $0x14] sm:$0xf]
  %v3634 = vld [vmem:[%s45 + $0x18] sm:$0xff]
  %v3635 = vld [vmem:[%s45 + $0x20] sm:$0xf]
  %v3636 = vld [vmem:[%s45 + $0x24] sm:$0xff]
  %v3637 = vld [vmem:[%s45 + $0x2c] sm:$0xf]
  %v3638 = vld [vmem:[%s45 + $0x30] sm:$0xff]
  %v3639 = vld [vmem:[%s45 + $0x38] sm:$0xf]
  %v3640 = vld [vmem:[%s45 + $0x3c] sm:$0xff]
  %v3641 = vld [vmem:[%s45 + $0x44] sm:$0xf]
  %v3642 = vld [vmem:[%s45 + $0x48] sm:$0xff]
  %v3643 = vld [vmem:[%s45 + $0x50] sm:$0xf]
  %v3644 = vld [vmem:[%s45 + $0x54] sm:$0xff]
  %v3645 = vld [vmem:[%s45 + $0x5c] sm:$0xf]
  %v3646 = vld [vmem:[%s45 + $0x60] sm:$0xff]
  %v3647 = vld [vmem:[%s45 + $0x68] sm:$0xf]
  %v3648 = vld [vmem:[%s45 + $0x6c] sm:$0xff]
  %v3649 = vld [vmem:[%s45 + $0x74] sm:$0xf]
  %v3650 = vld [vmem:[%s45 + $0x78] sm:$0xff]
  %v3651 = vld [vmem:[%s45 + $0x80] sm:$0xf]
  %v3652 = vld [vmem:[%s45 + $0x84] sm:$0xff]
  %v3653 = vld [vmem:[%s45 + $0x8c] sm:$0xf]
  %v3654 = vld [vmem:[%s45 + $0x90] sm:$0xff]
  %v3655 = vld [vmem:[%s45 + $0x98] sm:$0xf]
  %v3656 = vld [vmem:[%s45 + $0x9c] sm:$0xff]
  %v3657 = vld [vmem:[%s45 + $0xa4] sm:$0xf]
  %v3658 = vld [vmem:[%s45 + $0xa8] sm:$0xff]
  %v3659 = vld [vmem:[%s45 + $0xb0] sm:$0xf]
  %v3660 = vld [vmem:[%s45 + $0xb4] sm:$0xff]
  %v3661 = vld [vmem:[%s45 + $0xbc] sm:$0xf]
  %v3662 = vld [vmem:[%s47] sm:$0x7]
  %v3664 = vlaneseq
  %v3665 = vshrl.u32 %v3664, 7
  %v3666 = vsub.s32 0, %v3665
  %v3667 = vrot.slane %v3662, %v3666
  %v3668 = vlaneseq
  %v3669 = vshrl.u32 %v3668, 7
  %v3670 = vsub.s32 1, %v3669
  %v3671 = vrot.slane %v3662, %v3670
  %v3672 = vlaneseq
  %v3673 = vshrl.u32 %v3672, 7
  %v3674 = vsub.s32 2, %v3673
  %v3675 = vrot.slane %v3662, %v3674
  %v3711 = vunpack.c.l.b16 %v3630
  %v3712 = vunpack.c.h.b16 %v3630
  %v3713 = vunpack.c.l.b16 %v3631
  %v3714 = vunpack.c.l.b16 %v3632
  %v3715 = vunpack.c.h.b16 %v3632
  %v3716 = vunpack.c.l.b16 %v3633
  %v3717 = vunpack.c.l.b16 %v3634
  %v3718 = vunpack.c.h.b16 %v3634
  %v3719 = vunpack.c.l.b16 %v3635
  %v3720 = vunpack.c.l.b16 %v3636
  %v3721 = vunpack.c.h.b16 %v3636
  %v3722 = vunpack.c.l.b16 %v3637
  %v3723 = vunpack.c.l.b16 %v3638
  %v3724 = vunpack.c.h.b16 %v3638
  %v3725 = vunpack.c.l.b16 %v3639
  %v3726 = vunpack.c.l.b16 %v3640
  %v3727 = vunpack.c.h.b16 %v3640
  %v3728 = vunpack.c.l.b16 %v3641
  %v3729 = vunpack.c.l.b16 %v3642
  %v3730 = vunpack.c.h.b16 %v3642
  %v3731 = vunpack.c.l.b16 %v3643
  %v3732 = vunpack.c.l.b16 %v3644
  %v3733 = vunpack.c.h.b16 %v3644
  %v3734 = vunpack.c.l.b16 %v3645
  %v3735 = vunpack.c.l.b16 %v3646
  %v3736 = vunpack.c.h.b16 %v3646
  %v3737 = vunpack.c.l.b16 %v3647
  %v3738 = vunpack.c.l.b16 %v3648
  %v3739 = vunpack.c.h.b16 %v3648
  %v3740 = vunpack.c.l.b16 %v3649
  %v3741 = vunpack.c.l.b16 %v3650
  %v3742 = vunpack.c.h.b16 %v3650
  %v3743 = vunpack.c.l.b16 %v3651
  %v3744 = vunpack.c.l.b16 %v3652
  %v3745 = vunpack.c.h.b16 %v3652
  %v3746 = vunpack.c.l.b16 %v3653
  %v3747 = vunpack.c.l.b16 %v3654
  %v3748 = vunpack.c.h.b16 %v3654
  %v3749 = vunpack.c.l.b16 %v3655
  %v3750 = vunpack.c.l.b16 %v3656
  %v3751 = vunpack.c.h.b16 %v3656
  %v3752 = vunpack.c.l.b16 %v3657
  %v3753 = vunpack.c.l.b16 %v3658
  %v3754 = vunpack.c.h.b16 %v3658
  %v3755 = vunpack.c.l.b16 %v3659
  %v3756 = vunpack.c.l.b16 %v3660
  %v3757 = vunpack.c.h.b16 %v3660
  %v3758 = vunpack.c.l.b16 %v3661
  %v3759 = vpack.c.b16 %v3714, %v3711
  %v3760 = vpack.c.b16 %v3715, %v3712
  %v3761 = vpack.c.b16 %v3716, %v3713
  %v3762 = vpack.c.b16 %v3720, %v3717
  %v3763 = vpack.c.b16 %v3721, %v3718
  %v3764 = vpack.c.b16 %v3722, %v3719
  %v3765 = vpack.c.b16 %v3726, %v3723
  %v3766 = vpack.c.b16 %v3727, %v3724
  %v3767 = vpack.c.b16 %v3728, %v3725
  %v3768 = vpack.c.b16 %v3732, %v3729
  %v3769 = vpack.c.b16 %v3733, %v3730
  %v3770 = vpack.c.b16 %v3734, %v3731
  %v3771 = vpack.c.b16 %v3738, %v3735
  %v3772 = vpack.c.b16 %v3739, %v3736
  %v3773 = vpack.c.b16 %v3740, %v3737
  %v3774 = vpack.c.b16 %v3744, %v3741
  %v3775 = vpack.c.b16 %v3745, %v3742
  %v3776 = vpack.c.b16 %v3746, %v3743
  %v3777 = vpack.c.b16 %v3750, %v3747
  %v3778 = vpack.c.b16 %v3751, %v3748
  %v3779 = vpack.c.b16 %v3752, %v3749
  %v3780 = vpack.c.b16 %v3756, %v3753
  %v3781 = vpack.c.b16 %v3757, %v3754
  %v3782 = vpack.c.b16 %v3758, %v3755
  %3807 = vmatprep.subr.bf16.mxu0 %v3760
  %3808 = vmatpush1.bf16.msra.mxu0 %v3759
  %3809 = vmatprep.subr.bf16.mxu0 %v3763
  %3810 = vmatpush1.bf16.msra.mxu0 %v3762
  %3811 = vmatprep.subr.bf16.mxu0 %v3766
  %3812 = vmatpush1.bf16.msra.mxu0 %v3765
  %3813 = vmatprep.subr.bf16.mxu0 %v3769
  %3814 = vmatpush1.bf16.msra.mxu0 %v3768
  %3815 = vmatprep.subr.bf16.mxu0 %v3772
  %3816 = vmatpush1.bf16.msra.mxu0 %v3771
  %3817 = vmatprep.subr.bf16.mxu0 %v3775
  %3818 = vmatpush1.bf16.msra.mxu0 %v3774
  %3819 = vmatprep.subr.bf16.mxu0 %v3778
  %3820 = vmatpush1.bf16.msra.mxu0 %v3777
  %3821 = vmatprep.subr.bf16.mxu0 %v3781
  %3822 = vmatpush1.bf16.msra.mxu0 %v3780
  %3823 = vmatprep.subr.bf16.mxu0 0
  %3824 = vmatpush1.bf16.msra.mxu0 0
  %3825 = vmatprep.subr.bf16.mxu0 0
  %3826 = vmatpush1.bf16.msra.mxu0 0
  %3827 = vmatprep.subr.bf16.mxu0 0
  %3828 = vmatpush1.bf16.msra.mxu0 0
  %3829 = vmatprep.subr.bf16.mxu0 0
  %3830 = vmatpush1.bf16.msra.mxu0 0
  %3831 = vmatprep.subr.bf16.mxu0 0
  %3832 = vmatpush1.bf16.msra.mxu0 0
  %3833 = vmatprep.subr.bf16.mxu0 0
  %3834 = vmatpush1.bf16.msra.mxu0 0
  %3835 = vmatprep.subr.bf16.mxu0 0
  %3836 = vmatpush1.bf16.msra.mxu0 0
  %3837 = vmatprep.subr.bf16.mxu0 0
  %3838 = vmatpush1.bf16.msra.mxu0 0
  %3839 = vmatprep.mubr.bf16.mxu0 0
  %3840 = vmatmul.mubr.bf16.gmra.mrb[0].mxu0 %v3629
  %v3841 = vpop.f32.mrb[0].mxu0
  %v3842 = vadd.f32 %v3667, %v3841
  %v3843 = vpop.f32.mrb[0].mxu0
  %v3844 = vadd.f32 %v3671, %v3843
  %v3845 = vpop.f32.mrb[0].mxu0
  %v3846 = vadd.f32 %v3667, %v3845
  %v3847 = vpop.f32.mrb[0].mxu0
  %v3848 = vadd.f32 %v3671, %v3847
  %3849 = vdwg.mxu0
  %3850 = vmatprep.subr.bf16.mxu0 0
  %3851 = vmatpush1.bf16.msra.mxu0 %v3761
  %3852 = vmatprep.subr.bf16.mxu0 0
  %3853 = vmatpush1.bf16.msra.mxu0 %v3764
  %3854 = vmatprep.subr.bf16.mxu0 0
  %3855 = vmatpush1.bf16.msra.mxu0 %v3767
  %3856 = vmatprep.subr.bf16.mxu0 0
  %3857 = vmatpush1.bf16.msra.mxu0 %v3770
  %3858 = vmatprep.subr.bf16.mxu0 0
  %3859 = vmatpush1.bf16.msra.mxu0 %v3773
  %3860 = vmatprep.subr.bf16.mxu0 0
  %3861 = vmatpush1.bf16.msra.mxu0 %v3776
  %3862 = vmatprep.subr.bf16.mxu0 0
  %3863 = vmatpush1.bf16.msra.mxu0 %v3779
  %3864 = vmatprep.subr.bf16.mxu0 0
  %3865 = vmatpush1.bf16.msra.mxu0 %v3782
  %3866 = vmatprep.subr.bf16.mxu0 0
  %3867 = vmatpush1.bf16.msra.mxu0 0
  %3868 = vmatprep.subr.bf16.mxu0 0
  %3869 = vmatpush1.bf16.msra.mxu0 0
  %3870 = vmatprep.subr.bf16.mxu0 0
  %3871 = vmatpush1.bf16.msra.mxu0 0
  %3872 = vmatprep.subr.bf16.mxu0 0
  %3873 = vmatpush1.bf16.msra.mxu0 0
  %3874 = vmatprep.subr.bf16.mxu0 0
  %3875 = vmatpush1.bf16.msra.mxu0 0
  %3876 = vmatprep.subr.bf16.mxu0 0
  %3877 = vmatpush1.bf16.msra.mxu0 0
  %3878 = vmatprep.subr.bf16.mxu0 0
  %3879 = vmatpush1.bf16.msra.mxu0 0
  %3880 = vmatprep.subr.bf16.mxu0 0
  %3881 = vmatpush1.bf16.msra.mxu0 0
  %3882 = vmatprep.mubr.bf16.mxu0 0
  %3883 = vmatmul.mubr.bf16.gmra.mrb[0].mxu0 %v3629
  %v3884 = vpop.f32.mrb[0].mxu0
  %v3885 = vadd.f32 %v3675, %v3884
  %v3886 = vpop.f32.mrb[0].mxu0
  %v3887 = vpop.f32.mrb[0].mxu0
  %v3888 = vadd.f32 %v3675, %v3887
  %v3889 = vpop.f32.mrb[0].mxu0
  %3890 = vdwg.mxu0
  %v3892 = vsel %vm1677, %v3842, 0
  %v3895 = vsel %vm1677, %v3846, 0
  %v3898 = vsel %vm1677, %v3844, 0
  %v3901 = vsel %vm1677, %v3848, 0
  %3903 = vmatprep.subr.mxu0 0.0
  %3904 = vmatpush1.xpose.msra.mxu0 %v3898
  %3905 = vmatprep.subr.mxu0 0.0
  %3906 = vmatpush1.xpose.msra.mxu0 %v3901
  %3907 = vmatprep.subr.mxu0 0.0
  %3908 = vmatpush1.xpose.msra.mxu0 0.0
  %3909 = vmatprep.subr.mxu0 0.0
  %3910 = vmatpush1.xpose.msra.mxu0 0.0
  %3911 = vmatprep.subr.mxu0 0.0
  %3912 = vmatpush1.xpose.msra.mxu0 0.0
  %3913 = vmatprep.subr.mxu0 0.0
  %3914 = vmatpush1.xpose.msra.mxu0 0.0
  %3915 = vmatprep.subr.mxu0 0.0
  %3916 = vmatpush1.xpose.msra.mxu0 0.0
  %3917 = vmatprep.subr.mxu0 0.0
  %3918 = vmatpush1.xpose.msra.mxu0 0.0
  %3919 = vmatprep.subr.mxu0 0.0
  %3920 = vmatpush1.xpose.msra.mxu0 0.0
  %3921 = vmatprep.subr.mxu0 0.0
  %3922 = vmatpush1.xpose.msra.mxu0 0.0
  %3923 = vmatprep.subr.mxu0 0.0
  %3924 = vmatpush1.xpose.msra.mxu0 0.0
  %3925 = vmatprep.subr.mxu0 0.0
  %3926 = vmatpush1.xpose.msra.mxu0 0.0
  %3927 = vmatprep.subr.mxu0 0.0
  %3928 = vmatpush1.xpose.msra.mxu0 0.0
  %3929 = vmatprep.subr.mxu0 0.0
  %3930 = vmatpush1.xpose.msra.mxu0 0.0
  %3931 = vmatprep.subr.mxu0 0.0
  %3932 = vmatpush1.xpose.msra.mxu0 0.0
  %3933 = vmatprep.subr.mxu0 0.0
  %3934 = vmatpush1.xpose.msra.mxu0 0.0
  %3935 = vmatprep.subr.mxu0 0.0
  %3936 = vmatpush1.xpose.msra.mxu0 0.0
  %3937 = vmatprep.subr.mxu0 0.0
  %3938 = vmatpush1.xpose.msra.mxu0 0.0
  %3939 = vmatprep.subr.mxu0 0.0
  %3940 = vmatpush1.xpose.msra.mxu0 0.0
  %3941 = vmatprep.subr.mxu0 0.0
  %3942 = vmatpush1.xpose.msra.mxu0 0.0
  %3943 = vmatprep.subr.mxu0 0.0
  %3944 = vmatpush1.xpose.msra.mxu0 0.0
  %3945 = vmatprep.subr.mxu0 0.0
  %3946 = vmatpush1.xpose.msra.mxu0 0.0
  %3947 = vmatprep.subr.mxu0 0.0
  %3948 = vmatpush1.xpose.msra.mxu0 0.0
  %3949 = vmatprep.subr.mxu0 0.0
  %3950 = vmatpush1.xpose.msra.mxu0 0.0
  %3951 = vmatprep.subr.mxu0 0.0
  %3952 = vmatpush1.xpose.msra.mxu0 0.0
  %3953 = vmatprep.subr.mxu0 0.0
  %3954 = vmatpush1.xpose.msra.mxu0 0.0
  %3955 = vmatprep.subr.mxu0 0.0
  %3956 = vmatpush1.xpose.msra.mxu0 0.0
  %3957 = vmatprep.subr.mxu0 0.0
  %3958 = vmatpush1.xpose.msra.mxu0 0.0
  %3959 = vmatprep.subr.mxu0 0.0
  %3960 = vmatpush1.xpose.msra.mxu0 0.0
  %3961 = vmatprep.subr.mxu0 0.0
  %3962 = vmatpush1.xpose.msra.mxu0 0.0
  %3963 = vmatprep.subr.mxu0 0.0
  %3964 = vmatpush1.xpose.msra.mxu0 0.0
  %3965 = vmatprep.subr.mxu0 0.0
  %3966 = vmatpush1.xpose.msra.mxu0 0.0
  %3967 = vmatprep.mubr.f32.mxu0 0.0
  %3968 = vmatmul.mubr.f32.gmra.mrb[0].mxu0 %v3892
  %v3969 = vpop.f32.mrb[0].mxu0
  %v3970 = vadd.f32 0.0, %v3969
  %v3971 = vpop.f32.mrb[0].mxu0
  %3972 = vmatprep.mubr.f32.mxu0 0.0
  %3973 = vmatmul.mubr.f32.gmra.mrb[0].mxu0 %v3895
  %v3974 = vpop.f32.mrb[0].mxu0
  %v3975 = vadd.f32 0.0, %v3974
  %v3976 = vpop.f32.mrb[0].mxu0
  %3977 = vdwg.mxu0
  %v3978 = vmul.f32 %v3970, 0.17677669
  %v3979 = vmul.f32 %v3975, 0.17677669
  %v3980 = vadd.f32 %v3978, %v167
  %v3981 = vadd.f32 %v3979, %v168
  %v3982 = vsel %vm926, %v3980, -inf
  %3983 = vmax.xlane.f32.xlu0 %v3982
  %v3984 = vpop.xlane.xlu0 %3983
  %v3985 = vsel %vm930, %v3981, -inf
  %3986 = vmax.xlane.f32.xlu0 %v3985
  %v3987 = vpop.xlane.xlu0 %3986
  %v3988 = vsub.f32 %v3980, %v3984
  %v3989 = vsub.f32 %v3981, %v3987
  %v3990 = vmul.f32 %v3988, 1.442695
  %v3991 = vpow.pop %v3990
  %v3992 = vmul.f32 %v3989, 1.442695
  %v3993 = vpow.pop %v3992
  %v3994 = vsel %vm926, %v3991, 0.0
  %3995 = vadd.xlane.f32.xlu0 %v3994
  %v3996 = vpop.xlane.xlu0 %3995
  %v3997 = vsel %vm930, %v3993, 0.0
  %3998 = vadd.xlane.f32.xlu0 %v3997
  %v3999 = vpop.xlane.xlu0 %3998
  %v4000 = vrcp.pop %v3996
  %v4001 = vmul.f32 %v3991, %v4000
  %v4002 = vrcp.pop %v3999
  %v4003 = vmul.f32 %v3993, %v4002
  %v4005 = vsel %vm926, %v4001, 0
  %v4008 = vsel %vm926, %v4003, 0
  %v4011 = vsel %vm956, %v3888, 0
  %4013 = vmatprep.subr.mxu0 0.0
  %4014 = vmatpush1.msra.mxu0 %v3885
  %4015 = vmatprep.subr.mxu0 0.0
  %4016 = vmatpush1.msra.mxu0 %v4011
  %4017 = vmatprep.subr.mxu0 0.0
  %4018 = vmatpush1.msra.mxu0 0.0
  %4019 = vmatprep.subr.mxu0 0.0
  %4020 = vmatpush1.msra.mxu0 0.0
  %4021 = vmatprep.subr.mxu0 0.0
  %4022 = vmatpush1.msra.mxu0 0.0
  %4023 = vmatprep.subr.mxu0 0.0
  %4024 = vmatpush1.msra.mxu0 0.0
  %4025 = vmatprep.subr.mxu0 0.0
  %4026 = vmatpush1.msra.mxu0 0.0
  %4027 = vmatprep.subr.mxu0 0.0
  %4028 = vmatpush1.msra.mxu0 0.0
  %4029 = vmatprep.subr.mxu0 0.0
  %4030 = vmatpush1.msra.mxu0 0.0
  %4031 = vmatprep.subr.mxu0 0.0
  %4032 = vmatpush1.msra.mxu0 0.0
  %4033 = vmatprep.subr.mxu0 0.0
  %4034 = vmatpush1.msra.mxu0 0.0
  %4035 = vmatprep.subr.mxu0 0.0
  %4036 = vmatpush1.msra.mxu0 0.0
  %4037 = vmatprep.subr.mxu0 0.0
  %4038 = vmatpush1.msra.mxu0 0.0
  %4039 = vmatprep.subr.mxu0 0.0
  %4040 = vmatpush1.msra.mxu0 0.0
  %4041 = vmatprep.subr.mxu0 0.0
  %4042 = vmatpush1.msra.mxu0 0.0
  %4043 = vmatprep.subr.mxu0 0.0
  %4044 = vmatpush1.msra.mxu0 0.0
  %4045 = vmatprep.subr.mxu0 0.0
  %4046 = vmatpush1.msra.mxu0 0.0
  %4047 = vmatprep.subr.mxu0 0.0
  %4048 = vmatpush1.msra.mxu0 0.0
  %4049 = vmatprep.subr.mxu0 0.0
  %4050 = vmatpush1.msra.mxu0 0.0
  %4051 = vmatprep.subr.mxu0 0.0
  %4052 = vmatpush1.msra.mxu0 0.0
  %4053 = vmatprep.subr.mxu0 0.0
  %4054 = vmatpush1.msra.mxu0 0.0
  %4055 = vmatprep.subr.mxu0 0.0
  %4056 = vmatpush1.msra.mxu0 0.0
  %4057 = vmatprep.subr.mxu0 0.0
  %4058 = vmatpush1.msra.mxu0 0.0
  %4059 = vmatprep.subr.mxu0 0.0
  %4060 = vmatpush1.msra.mxu0 0.0
  %4061 = vmatprep.subr.mxu0 0.0
  %4062 = vmatpush1.msra.mxu0 0.0
  %4063 = vmatprep.subr.mxu0 0.0
  %4064 = vmatpush1.msra.mxu0 0.0
  %4065 = vmatprep.subr.mxu0 0.0
  %4066 = vmatpush1.msra.mxu0 0.0
  %4067 = vmatprep.subr.mxu0 0.0
  %4068 = vmatpush1.msra.mxu0 0.0
  %4069 = vmatprep.subr.mxu0 0.0
  %4070 = vmatpush1.msra.mxu0 0.0
  %4071 = vmatprep.subr.mxu0 0.0
  %4072 = vmatpush1.msra.mxu0 0.0
  %4073 = vmatprep.subr.mxu0 0.0
  %4074 = vmatpush1.msra.mxu0 0.0
  %4075 = vmatprep.subr.mxu0 0.0
  %4076 = vmatpush1.msra.mxu0 0.0
  %4077 = vmatprep.mubr.f32.mxu0 0.0
  %4078 = vmatmul.mubr.f32.gmra.mrb[0].mxu0 %v4005
  %v4079 = vpop.f32.mrb[0].mxu0
  %v4080 = vadd.f32 0.0, %v4079
  %v4081 = vpop.f32.mrb[0].mxu0
  %4082 = vmatprep.mubr.f32.mxu0 0.0
  %4083 = vmatmul.mubr.f32.gmra.mrb[0].mxu0 %v4008
  %v4084 = vpop.f32.mrb[0].mxu0
  %v4085 = vadd.f32 0.0, %v4084
  %v4086 = vpop.f32.mrb[0].mxu0
  %4087 = vdwg.mxu0
  %4088 = vrot.lane.b32.xlu0 %v3842, 96
  %v4089 = vpop.permute.xlu0 %4088
  %4090 = vrot.lane.b32.xlu0 %v3846, 96
  %v4091 = vpop.permute.xlu0 %4090
  %4092 = vrot.lane.b32.xlu0 %v3844, 96
  %v4093 = vpop.permute.xlu0 %4092
  %4094 = vrot.lane.b32.xlu0 %v3848, 96
  %v4095 = vpop.permute.xlu0 %4094
  %v4096 = vsel %vm1677, %v4089, 0
  %v4098 = vsel %vm1677, %v4091, 0
  %v4100 = vsel %vm1677, %v4093, 0
  %v4102 = vsel %vm1677, %v4095, 0
  %4104 = vmatprep.subr.mxu0 0.0
  %4105 = vmatpush1.xpose.msra.mxu0 %v4100
  %4106 = vmatprep.subr.mxu0 0.0
  %4107 = vmatpush1.xpose.msra.mxu0 %v4102
  %4108 = vmatprep.subr.mxu0 0.0
  %4109 = vmatpush1.xpose.msra.mxu0 0.0
  %4110 = vmatprep.subr.mxu0 0.0
  %4111 = vmatpush1.xpose.msra.mxu0 0.0
  %4112 = vmatprep.subr.mxu0 0.0
  %4113 = vmatpush1.xpose.msra.mxu0 0.0
  %4114 = vmatprep.subr.mxu0 0.0
  %4115 = vmatpush1.xpose.msra.mxu0 0.0
  %4116 = vmatprep.subr.mxu0 0.0
  %4117 = vmatpush1.xpose.msra.mxu0 0.0
  %4118 = vmatprep.subr.mxu0 0.0
  %4119 = vmatpush1.xpose.msra.mxu0 0.0
  %4120 = vmatprep.subr.mxu0 0.0
  %4121 = vmatpush1.xpose.msra.mxu0 0.0
  %4122 = vmatprep.subr.mxu0 0.0
  %4123 = vmatpush1.xpose.msra.mxu0 0.0
  %4124 = vmatprep.subr.mxu0 0.0
  %4125 = vmatpush1.xpose.msra.mxu0 0.0
  %4126 = vmatprep.subr.mxu0 0.0
  %4127 = vmatpush1.xpose.msra.mxu0 0.0
  %4128 = vmatprep.subr.mxu0 0.0
  %4129 = vmatpush1.xpose.msra.mxu0 0.0
  %4130 = vmatprep.subr.mxu0 0.0
  %4131 = vmatpush1.xpose.msra.mxu0 0.0
  %4132 = vmatprep.subr.mxu0 0.0
  %4133 = vmatpush1.xpose.msra.mxu0 0.0
  %4134 = vmatprep.subr.mxu0 0.0
  %4135 = vmatpush1.xpose.msra.mxu0 0.0
  %4136 = vmatprep.subr.mxu0 0.0
  %4137 = vmatpush1.xpose.msra.mxu0 0.0
  %4138 = vmatprep.subr.mxu0 0.0
  %4139 = vmatpush1.xpose.msra.mxu0 0.0
  %4140 = vmatprep.subr.mxu0 0.0
  %4141 = vmatpush1.xpose.msra.mxu0 0.0
  %4142 = vmatprep.subr.mxu0 0.0
  %4143 = vmatpush1.xpose.msra.mxu0 0.0
  %4144 = vmatprep.subr.mxu0 0.0
  %4145 = vmatpush1.xpose.msra.mxu0 0.0
  %4146 = vmatprep.subr.mxu0 0.0
  %4147 = vmatpush1.xpose.msra.mxu0 0.0
  %4148 = vmatprep.subr.mxu0 0.0
  %4149 = vmatpush1.xpose.msra.mxu0 0.0
  %4150 = vmatprep.subr.mxu0 0.0
  %4151 = vmatpush1.xpose.msra.mxu0 0.0
  %4152 = vmatprep.subr.mxu0 0.0
  %4153 = vmatpush1.xpose.msra.mxu0 0.0
  %4154 = vmatprep.subr.mxu0 0.0
  %4155 = vmatpush1.xpose.msra.mxu0 0.0
  %4156 = vmatprep.subr.mxu0 0.0
  %4157 = vmatpush1.xpose.msra.mxu0 0.0
  %4158 = vmatprep.subr.mxu0 0.0
  %4159 = vmatpush1.xpose.msra.mxu0 0.0
  %4160 = vmatprep.subr.mxu0 0.0
  %4161 = vmatpush1.xpose.msra.mxu0 0.0
  %4162 = vmatprep.subr.mxu0 0.0
  %4163 = vmatpush1.xpose.msra.mxu0 0.0
  %4164 = vmatprep.subr.mxu0 0.0
  %4165 = vmatpush1.xpose.msra.mxu0 0.0
  %4166 = vmatprep.subr.mxu0 0.0
  %4167 = vmatpush1.xpose.msra.mxu0 0.0
  %4168 = vmatprep.mubr.f32.mxu0 0.0
  %4169 = vmatmul.mubr.f32.gmra.mrb[0].mxu0 %v4096
  %v4170 = vpop.f32.mrb[0].mxu0
  %v4171 = vadd.f32 0.0, %v4170
  %v4172 = vpop.f32.mrb[0].mxu0
  %4173 = vmatprep.mubr.f32.mxu0 0.0
  %4174 = vmatmul.mubr.f32.gmra.mrb[0].mxu0 %v4098
  %v4175 = vpop.f32.mrb[0].mxu0
  %v4176 = vadd.f32 0.0, %v4175
  %v4177 = vpop.f32.mrb[0].mxu0
  %4178 = vdwg.mxu0
  %v4179 = vmul.f32 %v4171, 0.17677669
  %v4180 = vmul.f32 %v4176, 0.17677669
  %v4181 = vadd.f32 %v4179, %v167
  %v4182 = vadd.f32 %v4180, %v168
  %v4183 = vsel %vm926, %v4181, -inf
  %4184 = vmax.xlane.f32.xlu0 %v4183
  %v4185 = vpop.xlane.xlu0 %4184
  %v4186 = vsel %vm930, %v4182, -inf
  %4187 = vmax.xlane.f32.xlu0 %v4186
  %v4188 = vpop.xlane.xlu0 %4187
  %v4189 = vsub.f32 %v4181, %v4185
  %v4190 = vsub.f32 %v4182, %v4188
  %v4191 = vmul.f32 %v4189, 1.442695
  %v4192 = vpow.pop %v4191
  %v4193 = vmul.f32 %v4190, 1.442695
  %v4194 = vpow.pop %v4193
  %v4195 = vsel %vm926, %v4192, 0.0
  %4196 = vadd.xlane.f32.xlu0 %v4195
  %v4197 = vpop.xlane.xlu0 %4196
  %v4198 = vsel %vm930, %v4194, 0.0
  %4199 = vadd.xlane.f32.xlu0 %v4198
  %v4200 = vpop.xlane.xlu0 %4199
  %v4201 = vrcp.pop %v4197
  %v4202 = vmul.f32 %v4192, %v4201
  %v4203 = vrcp.pop %v4200
  %v4204 = vmul.f32 %v4194, %v4203
  %4206 = vrot.lane.b32.xlu0 %v3885, 96
  %v4207 = vpop.permute.xlu0 %4206
  %4208 = vrot.lane.b32.xlu0 %v3888, 96
  %v4209 = vpop.permute.xlu0 %4208
  %v4212 = vsel %vm926, %v4202, 0
  %v4215 = vsel %vm926, %v4204, 0
  %v4217 = vsel %vm956, %v4209, 0
  %4219 = vmatprep.subr.mxu0 0.0
  %4220 = vmatpush1.msra.mxu0 %v4207
  %4221 = vmatprep.subr.mxu0 0.0
  %4222 = vmatpush1.msra.mxu0 %v4217
  %4223 = vmatprep.subr.mxu0 0.0
  %4224 = vmatpush1.msra.mxu0 0.0
  %4225 = vmatprep.subr.mxu0 0.0
  %4226 = vmatpush1.msra.mxu0 0.0
  %4227 = vmatprep.subr.mxu0 0.0
  %4228 = vmatpush1.msra.mxu0 0.0
  %4229 = vmatprep.subr.mxu0 0.0
  %4230 = vmatpush1.msra.mxu0 0.0
  %4231 = vmatprep.subr.mxu0 0.0
  %4232 = vmatpush1.msra.mxu0 0.0
  %4233 = vmatprep.subr.mxu0 0.0
  %4234 = vmatpush1.msra.mxu0 0.0
  %4235 = vmatprep.subr.mxu0 0.0
  %4236 = vmatpush1.msra.mxu0 0.0
  %4237 = vmatprep.subr.mxu0 0.0
  %4238 = vmatpush1.msra.mxu0 0.0
  %4239 = vmatprep.subr.mxu0 0.0
  %4240 = vmatpush1.msra.mxu0 0.0
  %4241 = vmatprep.subr.mxu0 0.0
  %4242 = vmatpush1.msra.mxu0 0.0
  %4243 = vmatprep.subr.mxu0 0.0
  %4244 = vmatpush1.msra.mxu0 0.0
  %4245 = vmatprep.subr.mxu0 0.0
  %4246 = vmatpush1.msra.mxu0 0.0
  %4247 = vmatprep.subr.mxu0 0.0
  %4248 = vmatpush1.msra.mxu0 0.0
  %4249 = vmatprep.subr.mxu0 0.0
  %4250 = vmatpush1.msra.mxu0 0.0
  %4251 = vmatprep.subr.mxu0 0.0
  %4252 = vmatpush1.msra.mxu0 0.0
  %4253 = vmatprep.subr.mxu0 0.0
  %4254 = vmatpush1.msra.mxu0 0.0
  %4255 = vmatprep.subr.mxu0 0.0
  %4256 = vmatpush1.msra.mxu0 0.0
  %4257 = vmatprep.subr.mxu0 0.0
  %4258 = vmatpush1.msra.mxu0 0.0
  %4259 = vmatprep.subr.mxu0 0.0
  %4260 = vmatpush1.msra.mxu0 0.0
  %4261 = vmatprep.subr.mxu0 0.0
  %4262 = vmatpush1.msra.mxu0 0.0
  %4263 = vmatprep.subr.mxu0 0.0
  %4264 = vmatpush1.msra.mxu0 0.0
  %4265 = vmatprep.subr.mxu0 0.0
  %4266 = vmatpush1.msra.mxu0 0.0
  %4267 = vmatprep.subr.mxu0 0.0
  %4268 = vmatpush1.msra.mxu0 0.0
  %4269 = vmatprep.subr.mxu0 0.0
  %4270 = vmatpush1.msra.mxu0 0.0
  %4271 = vmatprep.subr.mxu0 0.0
  %4272 = vmatpush1.msra.mxu0 0.0
  %4273 = vmatprep.subr.mxu0 0.0
  %4274 = vmatpush1.msra.mxu0 0.0
  %4275 = vmatprep.subr.mxu0 0.0
  %4276 = vmatpush1.msra.mxu0 0.0
  %4277 = vmatprep.subr.mxu0 0.0
  %4278 = vmatpush1.msra.mxu0 0.0
  %4279 = vmatprep.subr.mxu0 0.0
  %4280 = vmatpush1.msra.mxu0 0.0
  %4281 = vmatprep.subr.mxu0 0.0
  %4282 = vmatpush1.msra.mxu0 0.0
  %4283 = vmatprep.mubr.f32.mxu0 0.0
  %4284 = vmatmul.mubr.f32.gmra.mrb[0].mxu0 %v4212
  %v4285 = vpop.f32.mrb[0].mxu0
  %v4286 = vadd.f32 0.0, %v4285
  %v4287 = vpop.f32.mrb[0].mxu0
  %4288 = vmatprep.mubr.f32.mxu0 0.0
  %4289 = vmatmul.mubr.f32.gmra.mrb[0].mxu0 %v4215
  %v4290 = vpop.f32.mrb[0].mxu0
  %v4291 = vadd.f32 0.0, %v4290
  %v4292 = vpop.f32.mrb[0].mxu0
  %4293 = vdwg.mxu0
  %4294 = vrot.lane.b32.xlu0 %v3842, 64
  %v4295 = vpop.permute.xlu0 %4294
  %4296 = vrot.lane.b32.xlu0 %v3846, 64
  %v4297 = vpop.permute.xlu0 %4296
  %4298 = vrot.lane.b32.xlu0 %v3844, 64
  %v4299 = vpop.permute.xlu0 %4298
  %4300 = vrot.lane.b32.xlu0 %v3848, 64
  %v4301 = vpop.permute.xlu0 %4300
  %v4302 = vsel %vm1677, %v4295, 0
  %v4304 = vsel %vm1677, %v4297, 0
  %v4306 = vsel %vm1677, %v4299, 0
  %v4308 = vsel %vm1677, %v4301, 0
  %4310 = vmatprep.subr.mxu0 0.0
  %4311 = vmatpush1.xpose.msra.mxu0 %v4306
  %4312 = vmatprep.subr.mxu0 0.0
  %4313 = vmatpush1.xpose.msra.mxu0 %v4308
  %4314 = vmatprep.subr.mxu0 0.0
  %4315 = vmatpush1.xpose.msra.mxu0 0.0
  %4316 = vmatprep.subr.mxu0 0.0
  %4317 = vmatpush1.xpose.msra.mxu0 0.0
  %4318 = vmatprep.subr.mxu0 0.0
  %4319 = vmatpush1.xpose.msra.mxu0 0.0
  %4320 = vmatprep.subr.mxu0 0.0
  %4321 = vmatpush1.xpose.msra.mxu0 0.0
  %4322 = vmatprep.subr.mxu0 0.0
  %4323 = vmatpush1.xpose.msra.mxu0 0.0
  %4324 = vmatprep.subr.mxu0 0.0
  %4325 = vmatpush1.xpose.msra.mxu0 0.0
  %4326 = vmatprep.subr.mxu0 0.0
  %4327 = vmatpush1.xpose.msra.mxu0 0.0
  %4328 = vmatprep.subr.mxu0 0.0
  %4329 = vmatpush1.xpose.msra.mxu0 0.0
  %4330 = vmatprep.subr.mxu0 0.0
  %4331 = vmatpush1.xpose.msra.mxu0 0.0
  %4332 = vmatprep.subr.mxu0 0.0
  %4333 = vmatpush1.xpose.msra.mxu0 0.0
  %4334 = vmatprep.subr.mxu0 0.0
  %4335 = vmatpush1.xpose.msra.mxu0 0.0
  %4336 = vmatprep.subr.mxu0 0.0
  %4337 = vmatpush1.xpose.msra.mxu0 0.0
  %4338 = vmatprep.subr.mxu0 0.0
  %4339 = vmatpush1.xpose.msra.mxu0 0.0
  %4340 = vmatprep.subr.mxu0 0.0
  %4341 = vmatpush1.xpose.msra.mxu0 0.0
  %4342 = vmatprep.subr.mxu0 0.0
  %4343 = vmatpush1.xpose.msra.mxu0 0.0
  %4344 = vmatprep.subr.mxu0 0.0
  %4345 = vmatpush1.xpose.msra.mxu0 0.0
  %4346 = vmatprep.subr.mxu0 0.0
  %4347 = vmatpush1.xpose.msra.mxu0 0.0
  %4348 = vmatprep.subr.mxu0 0.0
  %4349 = vmatpush1.xpose.msra.mxu0 0.0
  %4350 = vmatprep.subr.mxu0 0.0
  %4351 = vmatpush1.xpose.msra.mxu0 0.0
  %4352 = vmatprep.subr.mxu0 0.0
  %4353 = vmatpush1.xpose.msra.mxu0 0.0
  %4354 = vmatprep.subr.mxu0 0.0
  %4355 = vmatpush1.xpose.msra.mxu0 0.0
  %4356 = vmatprep.subr.mxu0 0.0
  %4357 = vmatpush1.xpose.msra.mxu0 0.0
  %4358 = vmatprep.subr.mxu0 0.0
  %4359 = vmatpush1.xpose.msra.mxu0 0.0
  %4360 = vmatprep.subr.mxu0 0.0
  %4361 = vmatpush1.xpose.msra.mxu0 0.0
  %4362 = vmatprep.subr.mxu0 0.0
  %4363 = vmatpush1.xpose.msra.mxu0 0.0
  %4364 = vmatprep.subr.mxu0 0.0
  %4365 = vmatpush1.xpose.msra.mxu0 0.0
  %4366 = vmatprep.subr.mxu0 0.0
  %4367 = vmatpush1.xpose.msra.mxu0 0.0
  %4368 = vmatprep.subr.mxu0 0.0
  %4369 = vmatpush1.xpose.msra.mxu0 0.0
  %4370 = vmatprep.subr.mxu0 0.0
  %4371 = vmatpush1.xpose.msra.mxu0 0.0
  %4372 = vmatprep.subr.mxu0 0.0
  %4373 = vmatpush1.xpose.msra.mxu0 0.0
  %4374 = vmatprep.mubr.f32.mxu0 0.0
  %4375 = vmatmul.mubr.f32.gmra.mrb[0].mxu0 %v4302
  %v4376 = vpop.f32.mrb[0].mxu0
  %v4377 = vadd.f32 0.0, %v4376
  %v4378 = vpop.f32.mrb[0].mxu0
  %4379 = vmatprep.mubr.f32.mxu0 0.0
  %4380 = vmatmul.mubr.f32.gmra.mrb[0].mxu0 %v4304
  %v4381 = vpop.f32.mrb[0].mxu0
  %v4382 = vadd.f32 0.0, %v4381
  %v4383 = vpop.f32.mrb[0].mxu0
  %4384 = vdwg.mxu0
  %v4385 = vmul.f32 %v4377, 0.17677669
  %v4386 = vmul.f32 %v4382, 0.17677669
  %v4387 = vadd.f32 %v4385, %v167
  %v4388 = vadd.f32 %v4386, %v168
  %v4389 = vsel %vm926, %v4387, -inf
  %4390 = vmax.xlane.f32.xlu0 %v4389
  %v4391 = vpop.xlane.xlu0 %4390
  %v4392 = vsel %vm930, %v4388, -inf
  %4393 = vmax.xlane.f32.xlu0 %v4392
  %v4394 = vpop.xlane.xlu0 %4393
  %v4395 = vsub.f32 %v4387, %v4391
  %v4396 = vsub.f32 %v4388, %v4394
  %v4397 = vmul.f32 %v4395, 1.442695
  %v4398 = vpow.pop %v4397
  %v4399 = vmul.f32 %v4396, 1.442695
  %v4400 = vpow.pop %v4399
  %v4401 = vsel %vm926, %v4398, 0.0
  %4402 = vadd.xlane.f32.xlu0 %v4401
  %v4403 = vpop.xlane.xlu0 %4402
  %v4404 = vsel %vm930, %v4400, 0.0
  %4405 = vadd.xlane.f32.xlu0 %v4404
  %v4406 = vpop.xlane.xlu0 %4405
  %v4407 = vrcp.pop %v4403
  %v4408 = vmul.f32 %v4398, %v4407
  %v4409 = vrcp.pop %v4406
  %v4410 = vmul.f32 %v4400, %v4409
  %4411 = vrot.lane.b32.xlu0 %v3885, 64
  %v4412 = vpop.permute.xlu0 %4411
  %4413 = vrot.lane.b32.xlu0 %v3888, 64
  %v4414 = vpop.permute.xlu0 %4413
  %v4417 = vsel %vm926, %v4408, 0
  %v4420 = vsel %vm926, %v4410, 0
  %v4422 = vsel %vm956, %v4414, 0
  %4424 = vmatprep.subr.mxu0 0.0
  %4425 = vmatpush1.msra.mxu0 %v4412
  %4426 = vmatprep.subr.mxu0 0.0
  %4427 = vmatpush1.msra.mxu0 %v4422
  %4428 = vmatprep.subr.mxu0 0.0
  %4429 = vmatpush1.msra.mxu0 0.0
  %4430 = vmatprep.subr.mxu0 0.0
  %4431 = vmatpush1.msra.mxu0 0.0
  %4432 = vmatprep.subr.mxu0 0.0
  %4433 = vmatpush1.msra.mxu0 0.0
  %4434 = vmatprep.subr.mxu0 0.0
  %4435 = vmatpush1.msra.mxu0 0.0
  %4436 = vmatprep.subr.mxu0 0.0
  %4437 = vmatpush1.msra.mxu0 0.0
  %4438 = vmatprep.subr.mxu0 0.0
  %4439 = vmatpush1.msra.mxu0 0.0
  %4440 = vmatprep.subr.mxu0 0.0
  %4441 = vmatpush1.msra.mxu0 0.0
  %4442 = vmatprep.subr.mxu0 0.0
  %4443 = vmatpush1.msra.mxu0 0.0
  %4444 = vmatprep.subr.mxu0 0.0
  %4445 = vmatpush1.msra.mxu0 0.0
  %4446 = vmatprep.subr.mxu0 0.0
  %4447 = vmatpush1.msra.mxu0 0.0
  %4448 = vmatprep.subr.mxu0 0.0
  %4449 = vmatpush1.msra.mxu0 0.0
  %4450 = vmatprep.subr.mxu0 0.0
  %4451 = vmatpush1.msra.mxu0 0.0
  %4452 = vmatprep.subr.mxu0 0.0
  %4453 = vmatpush1.msra.mxu0 0.0
  %4454 = vmatprep.subr.mxu0 0.0
  %4455 = vmatpush1.msra.mxu0 0.0
  %4456 = vmatprep.subr.mxu0 0.0
  %4457 = vmatpush1.msra.mxu0 0.0
  %4458 = vmatprep.subr.mxu0 0.0
  %4459 = vmatpush1.msra.mxu0 0.0
  %4460 = vmatprep.subr.mxu0 0.0
  %4461 = vmatpush1.msra.mxu0 0.0
  %4462 = vmatprep.subr.mxu0 0.0
  %4463 = vmatpush1.msra.mxu0 0.0
  %4464 = vmatprep.subr.mxu0 0.0
  %4465 = vmatpush1.msra.mxu0 0.0
  %4466 = vmatprep.subr.mxu0 0.0
  %4467 = vmatpush1.msra.mxu0 0.0
  %4468 = vmatprep.subr.mxu0 0.0
  %4469 = vmatpush1.msra.mxu0 0.0
  %4470 = vmatprep.subr.mxu0 0.0
  %4471 = vmatpush1.msra.mxu0 0.0
  %4472 = vmatprep.subr.mxu0 0.0
  %4473 = vmatpush1.msra.mxu0 0.0
  %4474 = vmatprep.subr.mxu0 0.0
  %4475 = vmatpush1.msra.mxu0 0.0
  %4476 = vmatprep.subr.mxu0 0.0
  %4477 = vmatpush1.msra.mxu0 0.0
  %4478 = vmatprep.subr.mxu0 0.0
  %4479 = vmatpush1.msra.mxu0 0.0
  %4480 = vmatprep.subr.mxu0 0.0
  %4481 = vmatpush1.msra.mxu0 0.0
  %4482 = vmatprep.subr.mxu0 0.0
  %4483 = vmatpush1.msra.mxu0 0.0
  %4484 = vmatprep.subr.mxu0 0.0
  %4485 = vmatpush1.msra.mxu0 0.0
  %4486 = vmatprep.subr.mxu0 0.0
  %4487 = vmatpush1.msra.mxu0 0.0
  %4488 = vmatprep.mubr.f32.mxu0 0.0
  %4489 = vmatmul.mubr.f32.gmra.mrb[0].mxu0 %v4417
  %v4490 = vpop.f32.mrb[0].mxu0
  %v4491 = vadd.f32 0.0, %v4490
  %v4492 = vpop.f32.mrb[0].mxu0
  %4493 = vmatprep.mubr.f32.mxu0 0.0
  %4494 = vmatmul.mubr.f32.gmra.mrb[0].mxu0 %v4420
  %v4495 = vpop.f32.mrb[0].mxu0
  %v4496 = vadd.f32 0.0, %v4495
  %v4497 = vpop.f32.mrb[0].mxu0
  %4498 = vdwg.mxu0
  %4499 = vrot.lane.b32.xlu0 %v3842, 32
  %v4500 = vpop.permute.xlu0 %4499
  %4501 = vrot.lane.b32.xlu0 %v3846, 32
  %v4502 = vpop.permute.xlu0 %4501
  %4503 = vrot.lane.b32.xlu0 %v3844, 32
  %v4504 = vpop.permute.xlu0 %4503
  %4505 = vrot.lane.b32.xlu0 %v3848, 32
  %v4506 = vpop.permute.xlu0 %4505
  %v4507 = vsel %vm1677, %v4500, 0
  %v4509 = vsel %vm1677, %v4502, 0
  %v4511 = vsel %vm1677, %v4504, 0
  %v4513 = vsel %vm1677, %v4506, 0
  %4515 = vmatprep.subr.mxu0 0.0
  %4516 = vmatpush1.xpose.msra.mxu0 %v4511
  %4517 = vmatprep.subr.mxu0 0.0
  %4518 = vmatpush1.xpose.msra.mxu0 %v4513
  %4519 = vmatprep.subr.mxu0 0.0
  %4520 = vmatpush1.xpose.msra.mxu0 0.0
  %4521 = vmatprep.subr.mxu0 0.0
  %4522 = vmatpush1.xpose.msra.mxu0 0.0
  %4523 = vmatprep.subr.mxu0 0.0
  %4524 = vmatpush1.xpose.msra.mxu0 0.0
  %4525 = vmatprep.subr.mxu0 0.0
  %4526 = vmatpush1.xpose.msra.mxu0 0.0
  %4527 = vmatprep.subr.mxu0 0.0
  %4528 = vmatpush1.xpose.msra.mxu0 0.0
  %4529 = vmatprep.subr.mxu0 0.0
  %4530 = vmatpush1.xpose.msra.mxu0 0.0
  %4531 = vmatprep.subr.mxu0 0.0
  %4532 = vmatpush1.xpose.msra.mxu0 0.0
  %4533 = vmatprep.subr.mxu0 0.0
  %4534 = vmatpush1.xpose.msra.mxu0 0.0
  %4535 = vmatprep.subr.mxu0 0.0
  %4536 = vmatpush1.xpose.msra.mxu0 0.0
  %4537 = vmatprep.subr.mxu0 0.0
  %4538 = vmatpush1.xpose.msra.mxu0 0.0
  %4539 = vmatprep.subr.mxu0 0.0
  %4540 = vmatpush1.xpose.msra.mxu0 0.0
  %4541 = vmatprep.subr.mxu0 0.0
  %4542 = vmatpush1.xpose.msra.mxu0 0.0
  %4543 = vmatprep.subr.mxu0 0.0
  %4544 = vmatpush1.xpose.msra.mxu0 0.0
  %4545 = vmatprep.subr.mxu0 0.0
  %4546 = vmatpush1.xpose.msra.mxu0 0.0
  %4547 = vmatprep.subr.mxu0 0.0
  %4548 = vmatpush1.xpose.msra.mxu0 0.0
  %4549 = vmatprep.subr.mxu0 0.0
  %4550 = vmatpush1.xpose.msra.mxu0 0.0
  %4551 = vmatprep.subr.mxu0 0.0
  %4552 = vmatpush1.xpose.msra.mxu0 0.0
  %4553 = vmatprep.subr.mxu0 0.0
  %4554 = vmatpush1.xpose.msra.mxu0 0.0
  %4555 = vmatprep.subr.mxu0 0.0
  %4556 = vmatpush1.xpose.msra.mxu0 0.0
  %4557 = vmatprep.subr.mxu0 0.0
  %4558 = vmatpush1.xpose.msra.mxu0 0.0
  %4559 = vmatprep.subr.mxu0 0.0
  %4560 = vmatpush1.xpose.msra.mxu0 0.0
  %4561 = vmatprep.subr.mxu0 0.0
  %4562 = vmatpush1.xpose.msra.mxu0 0.0
  %4563 = vmatprep.subr.mxu0 0.0
  %4564 = vmatpush1.xpose.msra.mxu0 0.0
  %4565 = vmatprep.subr.mxu0 0.0
  %4566 = vmatpush1.xpose.msra.mxu0 0.0
  %4567 = vmatprep.subr.mxu0 0.0
  %4568 = vmatpush1.xpose.msra.mxu0 0.0
  %4569 = vmatprep.subr.mxu0 0.0
  %4570 = vmatpush1.xpose.msra.mxu0 0.0
  %4571 = vmatprep.subr.mxu0 0.0
  %4572 = vmatpush1.xpose.msra.mxu0 0.0
  %4573 = vmatprep.subr.mxu0 0.0
  %4574 = vmatpush1.xpose.msra.mxu0 0.0
  %4575 = vmatprep.subr.mxu0 0.0
  %4576 = vmatpush1.xpose.msra.mxu0 0.0
  %4577 = vmatprep.subr.mxu0 0.0
  %4578 = vmatpush1.xpose.msra.mxu0 0.0
  %4579 = vmatprep.mubr.f32.mxu0 0.0
  %4580 = vmatmul.mubr.f32.gmra.mrb[0].mxu0 %v4507
  %v4581 = vpop.f32.mrb[0].mxu0
  %v4582 = vadd.f32 0.0, %v4581
  %v4583 = vpop.f32.mrb[0].mxu0
  %4584 = vmatprep.mubr.f32.mxu0 0.0
  %4585 = vmatmul.mubr.f32.gmra.mrb[0].mxu0 %v4509
  %v4586 = vpop.f32.mrb[0].mxu0
  %v4587 = vadd.f32 0.0, %v4586
  %v4588 = vpop.f32.mrb[0].mxu0
  %4589 = vdwg.mxu0
  %v4590 = vmul.f32 %v4582, 0.17677669
  %v4591 = vmul.f32 %v4587, 0.17677669
  %v4592 = vadd.f32 %v4590, %v167
  %v4593 = vadd.f32 %v4591, %v168
  %v4594 = vsel %vm926, %v4592, -inf
  %4595 = vmax.xlane.f32.xlu0 %v4594
  %v4596 = vpop.xlane.xlu0 %4595
  %v4597 = vsel %vm930, %v4593, -inf
  %4598 = vmax.xlane.f32.xlu0 %v4597
  %v4599 = vpop.xlane.xlu0 %4598
  %v4600 = vsub.f32 %v4592, %v4596
  %v4601 = vsub.f32 %v4593, %v4599
  %v4602 = vmul.f32 %v4600, 1.442695
  %v4603 = vpow.pop %v4602
  %v4604 = vmul.f32 %v4601, 1.442695
  %v4605 = vpow.pop %v4604
  %v4606 = vsel %vm926, %v4603, 0.0
  %4607 = vadd.xlane.f32.xlu0 %v4606
  %v4608 = vpop.xlane.xlu0 %4607
  %v4609 = vsel %vm930, %v4605, 0.0
  %4610 = vadd.xlane.f32.xlu0 %v4609
  %v4611 = vpop.xlane.xlu0 %4610
  %v4612 = vrcp.pop %v4608
  %v4613 = vmul.f32 %v4603, %v4612
  %v4614 = vrcp.pop %v4611
  %v4615 = vmul.f32 %v4605, %v4614
  %4616 = vrot.lane.b32.xlu0 %v3885, 32
  %v4617 = vpop.permute.xlu0 %4616
  %4618 = vrot.lane.b32.xlu0 %v3888, 32
  %v4619 = vpop.permute.xlu0 %4618
  %v4622 = vsel %vm926, %v4613, 0
  %v4625 = vsel %vm926, %v4615, 0
  %v4627 = vsel %vm956, %v4619, 0
  %4629 = vmatprep.subr.mxu0 0.0
  %4630 = vmatpush1.msra.mxu0 %v4617
  %4631 = vmatprep.subr.mxu0 0.0
  %4632 = vmatpush1.msra.mxu0 %v4627
  %4633 = vmatprep.subr.mxu0 0.0
  %4634 = vmatpush1.msra.mxu0 0.0
  %4635 = vmatprep.subr.mxu0 0.0
  %4636 = vmatpush1.msra.mxu0 0.0
  %4637 = vmatprep.subr.mxu0 0.0
  %4638 = vmatpush1.msra.mxu0 0.0
  %4639 = vmatprep.subr.mxu0 0.0
  %4640 = vmatpush1.msra.mxu0 0.0
  %4641 = vmatprep.subr.mxu0 0.0
  %4642 = vmatpush1.msra.mxu0 0.0
  %4643 = vmatprep.subr.mxu0 0.0
  %4644 = vmatpush1.msra.mxu0 0.0
  %4645 = vmatprep.subr.mxu0 0.0
  %4646 = vmatpush1.msra.mxu0 0.0
  %4647 = vmatprep.subr.mxu0 0.0
  %4648 = vmatpush1.msra.mxu0 0.0
  %4649 = vmatprep.subr.mxu0 0.0
  %4650 = vmatpush1.msra.mxu0 0.0
  %4651 = vmatprep.subr.mxu0 0.0
  %4652 = vmatpush1.msra.mxu0 0.0
  %4653 = vmatprep.subr.mxu0 0.0
  %4654 = vmatpush1.msra.mxu0 0.0
  %4655 = vmatprep.subr.mxu0 0.0
  %4656 = vmatpush1.msra.mxu0 0.0
  %4657 = vmatprep.subr.mxu0 0.0
  %4658 = vmatpush1.msra.mxu0 0.0
  %4659 = vmatprep.subr.mxu0 0.0
  %4660 = vmatpush1.msra.mxu0 0.0
  %4661 = vmatprep.subr.mxu0 0.0
  %4662 = vmatpush1.msra.mxu0 0.0
  %4663 = vmatprep.subr.mxu0 0.0
  %4664 = vmatpush1.msra.mxu0 0.0
  %4665 = vmatprep.subr.mxu0 0.0
  %4666 = vmatpush1.msra.mxu0 0.0
  %4667 = vmatprep.subr.mxu0 0.0
  %4668 = vmatpush1.msra.mxu0 0.0
  %4669 = vmatprep.subr.mxu0 0.0
  %4670 = vmatpush1.msra.mxu0 0.0
  %4671 = vmatprep.subr.mxu0 0.0
  %4672 = vmatpush1.msra.mxu0 0.0
  %4673 = vmatprep.subr.mxu0 0.0
  %4674 = vmatpush1.msra.mxu0 0.0
  %4675 = vmatprep.subr.mxu0 0.0
  %4676 = vmatpush1.msra.mxu0 0.0
  %4677 = vmatprep.subr.mxu0 0.0
  %4678 = vmatpush1.msra.mxu0 0.0
  %4679 = vmatprep.subr.mxu0 0.0
  %4680 = vmatpush1.msra.mxu0 0.0
  %4681 = vmatprep.subr.mxu0 0.0
  %4682 = vmatpush1.msra.mxu0 0.0
  %4683 = vmatprep.subr.mxu0 0.0
  %4684 = vmatpush1.msra.mxu0 0.0
  %4685 = vmatprep.subr.mxu0 0.0
  %4686 = vmatpush1.msra.mxu0 0.0
  %4687 = vmatprep.subr.mxu0 0.0
  %4688 = vmatpush1.msra.mxu0 0.0
  %4689 = vmatprep.subr.mxu0 0.0
  %4690 = vmatpush1.msra.mxu0 0.0
  %4691 = vmatprep.subr.mxu0 0.0
  %4692 = vmatpush1.msra.mxu0 0.0
  %4693 = vmatprep.mubr.f32.mxu0 0.0
  %4694 = vmatmul.mubr.f32.gmra.mrb[0].mxu0 %v4622
  %v4695 = vpop.f32.mrb[0].mxu0
  %v4696 = vadd.f32 0.0, %v4695
  %v4697 = vpop.f32.mrb[0].mxu0
  %4698 = vmatprep.mubr.f32.mxu0 0.0
  %4699 = vmatmul.mubr.f32.gmra.mrb[0].mxu0 %v4625
  %v4700 = vpop.f32.mrb[0].mxu0
  %v4701 = vadd.f32 0.0, %v4700
  %v4702 = vpop.f32.mrb[0].mxu0
  %4703 = vdwg.mxu0
  %4706 = vrot.lane.b32.xlu0 %v4286, 32
  %v4707 = vpop.permute.xlu0 %4706
  %4708 = vrot.lane.b32.xlu0 %v4291, 32
  %v4709 = vpop.permute.xlu0 %4708
  %4714 = vrot.lane.b32.xlu0 %v4491, 64
  %v4715 = vpop.permute.xlu0 %4714
  %4716 = vrot.lane.b32.xlu0 %v4496, 64
  %v4717 = vpop.permute.xlu0 %4716
  %4722 = vrot.lane.b32.xlu0 %v4696, 96
  %v4723 = vpop.permute.xlu0 %4722
  %4724 = vrot.lane.b32.xlu0 %v4701, 96
  %v4725 = vpop.permute.xlu0 %4724
  %v4728 = vsel %vm1677, %v4080, %v4707
  %v4729 = vsel %vm1677, %v4085, %v4709
  %v4730 = vsel %vm696, %v4728, %v4715
  %v4731 = vsel %vm696, %v4729, %v4717
  %vm4732 = vcmask 785408
  %v4733 = vsel %vm4732, %v4730, %v4723
  %v4734 = vsel %vm4732, %v4731, %v4725
  %v4735 = vpack.c.bf16 %v4734, %v4733
  %v4736 = vld [vmem:[%s49] sm:$0xf]
  %v4737 = vld [vmem:[%s49 + $0x4] sm:$0xf]
  %v4738 = vld [vmem:[%s49 + $0x8] sm:$0xf]
  %v4739 = vld [vmem:[%s49 + $0xc] sm:$0xf]
  %v4740 = vld [vmem:[%s49 + $0x10] sm:$0xf]
  %v4741 = vld [vmem:[%s49 + $0x14] sm:$0xf]
  %v4742 = vld [vmem:[%s49 + $0x18] sm:$0xf]
  %v4743 = vld [vmem:[%s49 + $0x1c] sm:$0xf]
  %v4744 = vld [vmem:[%s49 + $0x20] sm:$0xf]
  %v4745 = vld [vmem:[%s49 + $0x24] sm:$0xf]
  %v4746 = vld [vmem:[%s49 + $0x28] sm:$0xf]
  %v4747 = vld [vmem:[%s49 + $0x2c] sm:$0xf]
  %v4748 = vld [vmem:[%s49 + $0x30] sm:$0xf]
  %v4749 = vld [vmem:[%s49 + $0x34] sm:$0xf]
  %v4750 = vld [vmem:[%s49 + $0x38] sm:$0xf]
  %v4751 = vld [vmem:[%s49 + $0x3c] sm:$0xf]
  %v4752 = vld [vmem:[%s51] sm:$0x1]
  %v4754 = vlaneseq
  %v4755 = vshrl.u32 %v4754, 7
  %v4756 = vsub.s32 0, %v4755
  %v4757 = vrot.slane %v4752, %v4756
  %v4775 = vunpack.c.l.b16 %v4736
  %v4776 = vunpack.c.l.b16 %v4737
  %v4777 = vunpack.c.l.b16 %v4738
  %v4778 = vunpack.c.l.b16 %v4739
  %v4779 = vunpack.c.l.b16 %v4740
  %v4780 = vunpack.c.l.b16 %v4741
  %v4781 = vunpack.c.l.b16 %v4742
  %v4782 = vunpack.c.l.b16 %v4743
  %v4783 = vunpack.c.l.b16 %v4744
  %v4784 = vunpack.c.l.b16 %v4745
  %v4785 = vunpack.c.l.b16 %v4746
  %v4786 = vunpack.c.l.b16 %v4747
  %v4787 = vunpack.c.l.b16 %v4748
  %v4788 = vunpack.c.l.b16 %v4749
  %v4789 = vunpack.c.l.b16 %v4750
  %v4790 = vunpack.c.l.b16 %v4751
  %v4791 = vpack.c.b16 %v4776, %v4775
  %v4792 = vpack.c.b16 %v4778, %v4777
  %v4793 = vpack.c.b16 %v4780, %v4779
  %v4794 = vpack.c.b16 %v4782, %v4781
  %v4795 = vpack.c.b16 %v4784, %v4783
  %v4796 = vpack.c.b16 %v4786, %v4785
  %v4797 = vpack.c.b16 %v4788, %v4787
  %v4798 = vpack.c.b16 %v4790, %v4789
  %4807 = vmatprep.subr.bf16.mxu0 0
  %4808 = vmatpush1.bf16.msra.mxu0 %v4791
  %4809 = vmatprep.subr.bf16.mxu0 0
  %4810 = vmatpush1.bf16.msra.mxu0 %v4792
  %4811 = vmatprep.subr.bf16.mxu0 0
  %4812 = vmatpush1.bf16.msra.mxu0 %v4793
  %4813 = vmatprep.subr.bf16.mxu0 0
  %4814 = vmatpush1.bf16.msra.mxu0 %v4794
  %4815 = vmatprep.subr.bf16.mxu0 0
  %4816 = vmatpush1.bf16.msra.mxu0 %v4795
  %4817 = vmatprep.subr.bf16.mxu0 0
  %4818 = vmatpush1.bf16.msra.mxu0 %v4796
  %4819 = vmatprep.subr.bf16.mxu0 0
  %4820 = vmatpush1.bf16.msra.mxu0 %v4797
  %4821 = vmatprep.subr.bf16.mxu0 0
  %4822 = vmatpush1.bf16.msra.mxu0 %v4798
  %4823 = vmatprep.subr.bf16.mxu0 0
  %4824 = vmatpush1.bf16.msra.mxu0 0
  %4825 = vmatprep.subr.bf16.mxu0 0
  %4826 = vmatpush1.bf16.msra.mxu0 0
  %4827 = vmatprep.subr.bf16.mxu0 0
  %4828 = vmatpush1.bf16.msra.mxu0 0
  %4829 = vmatprep.subr.bf16.mxu0 0
  %4830 = vmatpush1.bf16.msra.mxu0 0
  %4831 = vmatprep.subr.bf16.mxu0 0
  %4832 = vmatpush1.bf16.msra.mxu0 0
  %4833 = vmatprep.subr.bf16.mxu0 0
  %4834 = vmatpush1.bf16.msra.mxu0 0
  %4835 = vmatprep.subr.bf16.mxu0 0
  %4836 = vmatpush1.bf16.msra.mxu0 0
  %4837 = vmatprep.subr.bf16.mxu0 0
  %4838 = vmatpush1.bf16.msra.mxu0 0
  %4839 = vmatprep.mubr.bf16.mxu0 0
  %4840 = vmatmul.mubr.bf16.gmra.mrb[0].mxu0 %v4735
  %v4841 = vpop.f32.mrb[0].mxu0
  %v4842 = vadd.f32 %v4757, %v4841
  %v4843 = vpop.f32.mrb[0].mxu0
  %v4844 = vpop.f32.mrb[0].mxu0
  %v4845 = vadd.f32 %v4757, %v4844
  %v4846 = vpop.f32.mrb[0].mxu0
  %4847 = vdwg.mxu0
  %v4848 = vadd.f32 %v3598, %v4842
  %v4849 = vadd.f32 %v3601, %v4845
  %4850 = vadd.xlane.f32.xlu0 %v4848
  %v4851 = vpop.xlane.xlu0 %4850
  %v4852 = vsel %vm956, %v4849, 0.0
  %4853 = vadd.xlane.f32.xlu0 %v4852
  %v4854 = vpop.xlane.xlu0 %4853
  %v4855 = vmul.f32 %v4851, %v3609
  %v4856 = vmul.f32 %v4854, %v3609
  %v4857 = vsub.f32 %v4848, %v4855
  %v4858 = vsub.f32 %v4849, %v4856
  %v4859 = vmul.f32 %v4857, %v4857
  %v4860 = vmul.f32 %v4858, %v4858
  %4861 = vadd.xlane.f32.xlu0 %v4859
  %v4862 = vpop.xlane.xlu0 %4861
  %v4863 = vsel %vm956, %v4860, 0.0
  %4864 = vadd.xlane.f32.xlu0 %v4863
  %v4865 = vpop.xlane.xlu0 %4864
  %v4866 = vmul.f32 %v4862, %v3609
  %v4867 = vmul.f32 %v4865, %v3609
  %v4868 = vadd.f32 %v4866, 1e-06
  %v4869 = vadd.f32 %v4867, 1e-06
  %v4870 = vrsqrt.pop %v4868
  %v4871 = vrsqrt.pop %v4869
  %v4872 = vmul.f32 %v4857, %v4870
  %v4873 = vmul.f32 %v4858, %v4871
  %v4874 = vpack.c.bf16 %v4873, %v4872
  %v4875 = vld [vmem:[%s53] sm:$0xff]
  %v4876 = vld [vmem:[%s53 + $0x8] sm:$0xff]
  %v4877 = vld [vmem:[%s53 + $0x10] sm:$0xff]
  %v4878 = vld [vmem:[%s53 + $0x18] sm:$0xff]
  %v4879 = vld [vmem:[%s53 + $0x20] sm:$0xff]
  %v4880 = vld [vmem:[%s53 + $0x28] sm:$0xff]
  %v4881 = vld [vmem:[%s53 + $0x30] sm:$0xff]
  %v4882 = vld [vmem:[%s53 + $0x38] sm:$0xff]
  %v4883 = vld [vmem:[%s53 + $0x40] sm:$0xff]
  %v4884 = vld [vmem:[%s53 + $0x48] sm:$0xff]
  %v4885 = vld [vmem:[%s53 + $0x50] sm:$0xff]
  %v4886 = vld [vmem:[%s53 + $0x58] sm:$0xff]
  %v4887 = vld [vmem:[%s53 + $0x60] sm:$0xff]
  %v4888 = vld [vmem:[%s53 + $0x68] sm:$0xff]
  %v4889 = vld [vmem:[%s53 + $0x70] sm:$0xff]
  %v4890 = vld [vmem:[%s53 + $0x78] sm:$0xff]
  %v4891 = vld [vmem:[%s53 + $0x80] sm:$0xff]
  %v4892 = vld [vmem:[%s53 + $0x88] sm:$0xff]
  %v4893 = vld [vmem:[%s53 + $0x90] sm:$0xff]
  %v4894 = vld [vmem:[%s53 + $0x98] sm:$0xff]
  %v4895 = vld [vmem:[%s53 + $0xa0] sm:$0xff]
  %v4896 = vld [vmem:[%s53 + $0xa8] sm:$0xff]
  %v4897 = vld [vmem:[%s53 + $0xb0] sm:$0xff]
  %v4898 = vld [vmem:[%s53 + $0xb8] sm:$0xff]
  %v4899 = vld [vmem:[%s53 + $0xc0] sm:$0xff]
  %v4900 = vld [vmem:[%s53 + $0xc8] sm:$0xff]
  %v4901 = vld [vmem:[%s53 + $0xd0] sm:$0xff]
  %v4902 = vld [vmem:[%s53 + $0xd8] sm:$0xff]
  %v4903 = vld [vmem:[%s53 + $0xe0] sm:$0xff]
  %v4904 = vld [vmem:[%s53 + $0xe8] sm:$0xff]
  %v4905 = vld [vmem:[%s53 + $0xf0] sm:$0xff]
  %v4906 = vld [vmem:[%s53 + $0xf8] sm:$0xff]
  %v4907 = vld [vmem:[%s55] sm:$0xf]
  %v4909 = vlaneseq
  %v4910 = vshrl.u32 %v4909, 7
  %v4911 = vsub.s32 0, %v4910
  %v4912 = vrot.slane %v4907, %v4911
  %v4913 = vlaneseq
  %v4914 = vshrl.u32 %v4913, 7
  %v4915 = vsub.s32 1, %v4914
  %v4916 = vrot.slane %v4907, %v4915
  %v4917 = vlaneseq
  %v4918 = vshrl.u32 %v4917, 7
  %v4919 = vsub.s32 2, %v4918
  %v4920 = vrot.slane %v4907, %v4919
  %v4921 = vlaneseq
  %v4922 = vshrl.u32 %v4921, 7
  %v4923 = vsub.s32 3, %v4922
  %v4924 = vrot.slane %v4907, %v4923
  %v4961 = vunpack.c.l.b16 %v4875
  %v4962 = vunpack.c.h.b16 %v4875
  %v4963 = vunpack.c.l.b16 %v4876
  %v4964 = vunpack.c.h.b16 %v4876
  %v4965 = vunpack.c.l.b16 %v4877
  %v4966 = vunpack.c.h.b16 %v4877
  %v4967 = vunpack.c.l.b16 %v4878
  %v4968 = vunpack.c.h.b16 %v4878
  %v4969 = vunpack.c.l.b16 %v4879
  %v4970 = vunpack.c.h.b16 %v4879
  %v4971 = vunpack.c.l.b16 %v4880
  %v4972 = vunpack.c.h.b16 %v4880
  %v4973 = vunpack.c.l.b16 %v4881
  %v4974 = vunpack.c.h.b16 %v4881
  %v4975 = vunpack.c.l.b16 %v4882
  %v4976 = vunpack.c.h.b16 %v4882
  %v4977 = vunpack.c.l.b16 %v4883
  %v4978 = vunpack.c.h.b16 %v4883
  %v4979 = vunpack.c.l.b16 %v4884
  %v4980 = vunpack.c.h.b16 %v4884
  %v4981 = vunpack.c.l.b16 %v4885
  %v4982 = vunpack.c.h.b16 %v4885
  %v4983 = vunpack.c.l.b16 %v4886
  %v4984 = vunpack.c.h.b16 %v4886
  %v4985 = vunpack.c.l.b16 %v4887
  %v4986 = vunpack.c.h.b16 %v4887
  %v4987 = vunpack.c.l.b16 %v4888
  %v4988 = vunpack.c.h.b16 %v4888
  %v4989 = vunpack.c.l.b16 %v4889
  %v4990 = vunpack.c.h.b16 %v4889
  %v4991 = vunpack.c.l.b16 %v4890
  %v4992 = vunpack.c.h.b16 %v4890
  %v4993 = vunpack.c.l.b16 %v4891
  %v4994 = vunpack.c.h.b16 %v4891
  %v4995 = vunpack.c.l.b16 %v4892
  %v4996 = vunpack.c.h.b16 %v4892
  %v4997 = vunpack.c.l.b16 %v4893
  %v4998 = vunpack.c.h.b16 %v4893
  %v4999 = vunpack.c.l.b16 %v4894
  %v5000 = vunpack.c.h.b16 %v4894
  %v5001 = vunpack.c.l.b16 %v4895
  %v5002 = vunpack.c.h.b16 %v4895
  %v5003 = vunpack.c.l.b16 %v4896
  %v5004 = vunpack.c.h.b16 %v4896
  %v5005 = vunpack.c.l.b16 %v4897
  %v5006 = vunpack.c.h.b16 %v4897
  %v5007 = vunpack.c.l.b16 %v4898
  %v5008 = vunpack.c.h.b16 %v4898
  %v5009 = vunpack.c.l.b16 %v4899
  %v5010 = vunpack.c.h.b16 %v4899
  %v5011 = vunpack.c.l.b16 %v4900
  %v5012 = vunpack.c.h.b16 %v4900
  %v5013 = vunpack.c.l.b16 %v4901
  %v5014 = vunpack.c.h.b16 %v4901
  %v5015 = vunpack.c.l.b16 %v4902
  %v5016 = vunpack.c.h.b16 %v4902
  %v5017 = vunpack.c.l.b16 %v4903
  %v5018 = vunpack.c.h.b16 %v4903
  %v5019 = vunpack.c.l.b16 %v4904
  %v5020 = vunpack.c.h.b16 %v4904
  %v5021 = vunpack.c.l.b16 %v4905
  %v5022 = vunpack.c.h.b16 %v4905
  %v5023 = vunpack.c.l.b16 %v4906
  %v5024 = vunpack.c.h.b16 %v4906
  %v5025 = vpack.c.b16 %v4965, %v4961
  %v5026 = vpack.c.b16 %v4966, %v4962
  %v5027 = vpack.c.b16 %v4967, %v4963
  %v5028 = vpack.c.b16 %v4968, %v4964
  %v5029 = vpack.c.b16 %v4973, %v4969
  %v5030 = vpack.c.b16 %v4974, %v4970
  %v5031 = vpack.c.b16 %v4975, %v4971
  %v5032 = vpack.c.b16 %v4976, %v4972
  %v5033 = vpack.c.b16 %v4981, %v4977
  %v5034 = vpack.c.b16 %v4982, %v4978
  %v5035 = vpack.c.b16 %v4983, %v4979
  %v5036 = vpack.c.b16 %v4984, %v4980
  %v5037 = vpack.c.b16 %v4989, %v4985
  %v5038 = vpack.c.b16 %v4990, %v4986
  %v5039 = vpack.c.b16 %v4991, %v4987
  %v5040 = vpack.c.b16 %v4992, %v4988
  %v5041 = vpack.c.b16 %v4997, %v4993
  %v5042 = vpack.c.b16 %v4998, %v4994
  %v5043 = vpack.c.b16 %v4999, %v4995
  %v5044 = vpack.c.b16 %v5000, %v4996
  %v5045 = vpack.c.b16 %v5005, %v5001
  %v5046 = vpack.c.b16 %v5006, %v5002
  %v5047 = vpack.c.b16 %v5007, %v5003
  %v5048 = vpack.c.b16 %v5008, %v5004
  %v5049 = vpack.c.b16 %v5013, %v5009
  %v5050 = vpack.c.b16 %v5014, %v5010
  %v5051 = vpack.c.b16 %v5015, %v5011
  %v5052 = vpack.c.b16 %v5016, %v5012
  %v5053 = vpack.c.b16 %v5021, %v5017
  %v5054 = vpack.c.b16 %v5022, %v5018
  %v5055 = vpack.c.b16 %v5023, %v5019
  %v5056 = vpack.c.b16 %v5024, %v5020
  %5089 = vmatprep.subr.bf16.mxu0 %v5026
  %5090 = vmatpush1.bf16.msra.mxu0 %v5025
  %5091 = vmatprep.subr.bf16.mxu0 %v5030
  %5092 = vmatpush1.bf16.msra.mxu0 %v5029
  %5093 = vmatprep.subr.bf16.mxu0 %v5034
  %5094 = vmatpush1.bf16.msra.mxu0 %v5033
  %5095 = vmatprep.subr.bf16.mxu0 %v5038
  %5096 = vmatpush1.bf16.msra.mxu0 %v5037
  %5097 = vmatprep.subr.bf16.mxu0 %v5042
  %5098 = vmatpush1.bf16.msra.mxu0 %v5041
  %5099 = vmatprep.subr.bf16.mxu0 %v5046
  %5100 = vmatpush1.bf16.msra.mxu0 %v5045
  %5101 = vmatprep.subr.bf16.mxu0 %v5050
  %5102 = vmatpush1.bf16.msra.mxu0 %v5049
  %5103 = vmatprep.subr.bf16.mxu0 %v5054
  %5104 = vmatpush1.bf16.msra.mxu0 %v5053
  %5105 = vmatprep.subr.bf16.mxu0 0
  %5106 = vmatpush1.bf16.msra.mxu0 0
  %5107 = vmatprep.subr.bf16.mxu0 0
  %5108 = vmatpush1.bf16.msra.mxu0 0
  %5109 = vmatprep.subr.bf16.mxu0 0
  %5110 = vmatpush1.bf16.msra.mxu0 0
  %5111 = vmatprep.subr.bf16.mxu0 0
  %5112 = vmatpush1.bf16.msra.mxu0 0
  %5113 = vmatprep.subr.bf16.mxu0 0
  %5114 = vmatpush1.bf16.msra.mxu0 0
  %5115 = vmatprep.subr.bf16.mxu0 0
  %5116 = vmatpush1.bf16.msra.mxu0 0
  %5117 = vmatprep.subr.bf16.mxu0 0
  %5118 = vmatpush1.bf16.msra.mxu0 0
  %5119 = vmatprep.subr.bf16.mxu0 0
  %5120 = vmatpush1.bf16.msra.mxu0 0
  %5121 = vmatprep.mubr.bf16.mxu0 0
  %5122 = vmatmul.mubr.bf16.gmra.mrb[0].mxu0 %v4874
  %v5123 = vpop.f32.mrb[0].mxu0
  %v5124 = vadd.f32 %v4912, %v5123
  %v5125 = vpop.f32.mrb[0].mxu0
  %v5126 = vadd.f32 %v4916, %v5125
  %v5127 = vpop.f32.mrb[0].mxu0
  %v5128 = vadd.f32 %v4912, %v5127
  %v5129 = vpop.f32.mrb[0].mxu0
  %v5130 = vadd.f32 %v4916, %v5129
  %5131 = vdwg.mxu0
  %5132 = vmatprep.subr.bf16.mxu0 %v5028
  %5133 = vmatpush1.bf16.msra.mxu0 %v5027
  %5134 = vmatprep.subr.bf16.mxu0 %v5032
  %5135 = vmatpush1.bf16.msra.mxu0 %v5031
  %5136 = vmatprep.subr.bf16.mxu0 %v5036
  %5137 = vmatpush1.bf16.msra.mxu0 %v5035
  %5138 = vmatprep.subr.bf16.mxu0 %v5040
  %5139 = vmatpush1.bf16.msra.mxu0 %v5039
  %5140 = vmatprep.subr.bf16.mxu0 %v5044
  %5141 = vmatpush1.bf16.msra.mxu0 %v5043
  %5142 = vmatprep.subr.bf16.mxu0 %v5048
  %5143 = vmatpush1.bf16.msra.mxu0 %v5047
  %5144 = vmatprep.subr.bf16.mxu0 %v5052
  %5145 = vmatpush1.bf16.msra.mxu0 %v5051
  %5146 = vmatprep.subr.bf16.mxu0 %v5056
  %5147 = vmatpush1.bf16.msra.mxu0 %v5055
  %5148 = vmatprep.subr.bf16.mxu0 0
  %5149 = vmatpush1.bf16.msra.mxu0 0
  %5150 = vmatprep.subr.bf16.mxu0 0
  %5151 = vmatpush1.bf16.msra.mxu0 0
  %5152 = vmatprep.subr.bf16.mxu0 0
  %5153 = vmatpush1.bf16.msra.mxu0 0
  %5154 = vmatprep.subr.bf16.mxu0 0
  %5155 = vmatpush1.bf16.msra.mxu0 0
  %5156 = vmatprep.subr.bf16.mxu0 0
  %5157 = vmatpush1.bf16.msra.mxu0 0
  %5158 = vmatprep.subr.bf16.mxu0 0
  %5159 = vmatpush1.bf16.msra.mxu0 0
  %5160 = vmatprep.subr.bf16.mxu0 0
  %5161 = vmatpush1.bf16.msra.mxu0 0
  %5162 = vmatprep.subr.bf16.mxu0 0
  %5163 = vmatpush1.bf16.msra.mxu0 0
  %5164 = vmatprep.mubr.bf16.mxu0 0
  %5165 = vmatmul.mubr.bf16.gmra.mrb[0].mxu0 %v4874
  %v5166 = vpop.f32.mrb[0].mxu0
  %v5167 = vadd.f32 %v4920, %v5166
  %v5168 = vpop.f32.mrb[0].mxu0
  %v5169 = vadd.f32 %v4924, %v5168
  %v5170 = vpop.f32.mrb[0].mxu0
  %v5171 = vadd.f32 %v4920, %v5170
  %v5172 = vpop.f32.mrb[0].mxu0
  %v5173 = vadd.f32 %v4924, %v5172
  %5174 = vdwg.mxu0
  %v5175 = vmul.f32 %v5124, 0.5
  %v5176 = vmul.f32 %v5126, 0.5
  %v5177 = vmul.f32 %v5167, 0.5
  %v5178 = vmul.f32 %v5169, 0.5
  %v5179 = vmul.f32 %v5128, 0.5
  %v5180 = vmul.f32 %v5130, 0.5
  %v5181 = vmul.f32 %v5171, 0.5
  %v5182 = vmul.f32 %v5173, 0.5
  %v5183 = vmul.f32 %v5124, 0.70710677
  %v5184 = vmul.f32 %v5126, 0.70710677
  %v5185 = vmul.f32 %v5167, 0.70710677
  %v5186 = vmul.f32 %v5169, 0.70710677
  %v5187 = vmul.f32 %v5128, 0.70710677
  %v5188 = vmul.f32 %v5130, 0.70710677
  %v5189 = vmul.f32 %v5171, 0.70710677
  %v5190 = vmul.f32 %v5173, 0.70710677
  %v5191 = verf.f32.pop %v5183
  %v5192 = verf.f32.pop %v5184
  %v5193 = verf.f32.pop %v5185
  %v5194 = verf.f32.pop %v5186
  %v5195 = verf.f32.pop %v5187
  %v5196 = verf.f32.pop %v5188
  %v5197 = verf.f32.pop %v5189
  %v5198 = verf.f32.pop %v5190
  %v5199 = vadd.f32 %v5191, 1.0
  %v5200 = vadd.f32 %v5192, 1.0
  %v5201 = vadd.f32 %v5193, 1.0
  %v5202 = vadd.f32 %v5194, 1.0
  %v5203 = vadd.f32 %v5195, 1.0
  %v5204 = vadd.f32 %v5196, 1.0
  %v5205 = vadd.f32 %v5197, 1.0
  %v5206 = vadd.f32 %v5198, 1.0
  %v5207 = vmul.f32 %v5175, %v5199
  %v5208 = vmul.f32 %v5176, %v5200
  %v5209 = vmul.f32 %v5177, %v5201
  %v5210 = vmul.f32 %v5178, %v5202
  %v5211 = vmul.f32 %v5179, %v5203
  %v5212 = vmul.f32 %v5180, %v5204
  %v5213 = vmul.f32 %v5181, %v5205
  %v5214 = vmul.f32 %v5182, %v5206
  %v5215 = vpack.c.bf16 %v5211, %v5207
  %v5216 = vpack.c.bf16 %v5212, %v5208
  %v5217 = vpack.c.bf16 %v5213, %v5209
  %v5218 = vpack.c.bf16 %v5214, %v5210
  %v5219 = vld [vmem:[%s57] sm:$0xf]
  %v5220 = vld [vmem:[%s57 + $0x4] sm:$0xf]
  %v5221 = vld [vmem:[%s57 + $0x8] sm:$0xf]
  %v5222 = vld [vmem:[%s57 + $0xc] sm:$0xf]
  %v5223 = vld [vmem:[%s57 + $0x10] sm:$0xf]
  %v5224 = vld [vmem:[%s57 + $0x14] sm:$0xf]
  %v5225 = vld [vmem:[%s57 + $0x18] sm:$0xf]
  %v5226 = vld [vmem:[%s57 + $0x1c] sm:$0xf]
  %v5227 = vld [vmem:[%s57 + $0x20] sm:$0xf]
  %v5228 = vld [vmem:[%s57 + $0x24] sm:$0xf]
  %v5229 = vld [vmem:[%s57 + $0x28] sm:$0xf]
  %v5230 = vld [vmem:[%s57 + $0x2c] sm:$0xf]
  %v5231 = vld [vmem:[%s57 + $0x30] sm:$0xf]
  %v5232 = vld [vmem:[%s57 + $0x34] sm:$0xf]
  %v5233 = vld [vmem:[%s57 + $0x38] sm:$0xf]
  %v5234 = vld [vmem:[%s57 + $0x3c] sm:$0xf]
  %v5235 = vld [vmem:[%s57 + $0x40] sm:$0xf]
  %v5236 = vld [vmem:[%s57 + $0x44] sm:$0xf]
  %v5237 = vld [vmem:[%s57 + $0x48] sm:$0xf]
  %v5238 = vld [vmem:[%s57 + $0x4c] sm:$0xf]
  %v5239 = vld [vmem:[%s57 + $0x50] sm:$0xf]
  %v5240 = vld [vmem:[%s57 + $0x54] sm:$0xf]
  %v5241 = vld [vmem:[%s57 + $0x58] sm:$0xf]
  %v5242 = vld [vmem:[%s57 + $0x5c] sm:$0xf]
  %v5243 = vld [vmem:[%s57 + $0x60] sm:$0xf]
  %v5244 = vld [vmem:[%s57 + $0x64] sm:$0xf]
  %v5245 = vld [vmem:[%s57 + $0x68] sm:$0xf]
  %v5246 = vld [vmem:[%s57 + $0x6c] sm:$0xf]
  %v5247 = vld [vmem:[%s57 + $0x70] sm:$0xf]
  %v5248 = vld [vmem:[%s57 + $0x74] sm:$0xf]
  %v5249 = vld [vmem:[%s57 + $0x78] sm:$0xf]
  %v5250 = vld [vmem:[%s57 + $0x7c] sm:$0xf]
  %v5251 = vld [vmem:[%s57 + $0x80] sm:$0xf]
  %v5252 = vld [vmem:[%s57 + $0x84] sm:$0xf]
  %v5253 = vld [vmem:[%s57 + $0x88] sm:$0xf]
  %v5254 = vld [vmem:[%s57 + $0x8c] sm:$0xf]
  %v5255 = vld [vmem:[%s57 + $0x90] sm:$0xf]
  %v5256 = vld [vmem:[%s57 + $0x94] sm:$0xf]
  %v5257 = vld [vmem:[%s57 + $0x98] sm:$0xf]
  %v5258 = vld [vmem:[%s57 + $0x9c] sm:$0xf]
  %v5259 = vld [vmem:[%s57 + $0xa0] sm:$0xf]
  %v5260 = vld [vmem:[%s57 + $0xa4] sm:$0xf]
  %v5261 = vld [vmem:[%s57 + $0xa8] sm:$0xf]
  %v5262 = vld [vmem:[%s57 + $0xac] sm:$0xf]
  %v5263 = vld [vmem:[%s57 + $0xb0] sm:$0xf]
  %v5264 = vld [vmem:[%s57 + $0xb4] sm:$0xf]
  %v5265 = vld [vmem:[%s57 + $0xb8] sm:$0xf]
  %v5266 = vld [vmem:[%s57 + $0xbc] sm:$0xf]
  %v5267 = vld [vmem:[%s57 + $0xc0] sm:$0xf]
  %v5268 = vld [vmem:[%s57 + $0xc4] sm:$0xf]
  %v5269 = vld [vmem:[%s57 + $0xc8] sm:$0xf]
  %v5270 = vld [vmem:[%s57 + $0xcc] sm:$0xf]
  %v5271 = vld [vmem:[%s57 + $0xd0] sm:$0xf]
  %v5272 = vld [vmem:[%s57 + $0xd4] sm:$0xf]
  %v5273 = vld [vmem:[%s57 + $0xd8] sm:$0xf]
  %v5274 = vld [vmem:[%s57 + $0xdc] sm:$0xf]
  %v5275 = vld [vmem:[%s57 + $0xe0] sm:$0xf]
  %v5276 = vld [vmem:[%s57 + $0xe4] sm:$0xf]
  %v5277 = vld [vmem:[%s57 + $0xe8] sm:$0xf]
  %v5278 = vld [vmem:[%s57 + $0xec] sm:$0xf]
  %v5279 = vld [vmem:[%s57 + $0xf0] sm:$0xf]
  %v5280 = vld [vmem:[%s57 + $0xf4] sm:$0xf]
  %v5281 = vld [vmem:[%s57 + $0xf8] sm:$0xf]
  %v5282 = vld [vmem:[%s57 + $0xfc] sm:$0xf]
  %v5283 = vld [vmem:[%s59] sm:$0x1]
  %v5285 = vlaneseq
  %v5286 = vshrl.u32 %v5285, 7
  %v5287 = vsub.s32 0, %v5286
  %v5288 = vrot.slane %v5283, %v5287
  %v5354 = vunpack.c.l.b16 %v5219
  %v5355 = vunpack.c.l.b16 %v5220
  %v5356 = vunpack.c.l.b16 %v5221
  %v5357 = vunpack.c.l.b16 %v5222
  %v5358 = vunpack.c.l.b16 %v5223
  %v5359 = vunpack.c.l.b16 %v5224
  %v5360 = vunpack.c.l.b16 %v5225
  %v5361 = vunpack.c.l.b16 %v5226
  %v5362 = vunpack.c.l.b16 %v5227
  %v5363 = vunpack.c.l.b16 %v5228
  %v5364 = vunpack.c.l.b16 %v5229
  %v5365 = vunpack.c.l.b16 %v5230
  %v5366 = vunpack.c.l.b16 %v5231
  %v5367 = vunpack.c.l.b16 %v5232
  %v5368 = vunpack.c.l.b16 %v5233
  %v5369 = vunpack.c.l.b16 %v5234
  %v5370 = vunpack.c.l.b16 %v5235
  %v5371 = vunpack.c.l.b16 %v5236
  %v5372 = vunpack.c.l.b16 %v5237
  %v5373 = vunpack.c.l.b16 %v5238
  %v5374 = vunpack.c.l.b16 %v5239
  %v5375 = vunpack.c.l.b16 %v5240
  %v5376 = vunpack.c.l.b16 %v5241
  %v5377 = vunpack.c.l.b16 %v5242
  %v5378 = vunpack.c.l.b16 %v5243
  %v5379 = vunpack.c.l.b16 %v5244
  %v5380 = vunpack.c.l.b16 %v5245
  %v5381 = vunpack.c.l.b16 %v5246
  %v5382 = vunpack.c.l.b16 %v5247
  %v5383 = vunpack.c.l.b16 %v5248
  %v5384 = vunpack.c.l.b16 %v5249
  %v5385 = vunpack.c.l.b16 %v5250
  %v5386 = vunpack.c.l.b16 %v5251
  %v5387 = vunpack.c.l.b16 %v5252
  %v5388 = vunpack.c.l.b16 %v5253
  %v5389 = vunpack.c.l.b16 %v5254
  %v5390 = vunpack.c.l.b16 %v5255
  %v5391 = vunpack.c.l.b16 %v5256
  %v5392 = vunpack.c.l.b16 %v5257
  %v5393 = vunpack.c.l.b16 %v5258
  %v5394 = vunpack.c.l.b16 %v5259
  %v5395 = vunpack.c.l.b16 %v5260
  %v5396 = vunpack.c.l.b16 %v5261
  %v5397 = vunpack.c.l.b16 %v5262
  %v5398 = vunpack.c.l.b16 %v5263
  %v5399 = vunpack.c.l.b16 %v5264
  %v5400 = vunpack.c.l.b16 %v5265
  %v5401 = vunpack.c.l.b16 %v5266
  %v5402 = vunpack.c.l.b16 %v5267
  %v5403 = vunpack.c.l.b16 %v5268
  %v5404 = vunpack.c.l.b16 %v5269
  %v5405 = vunpack.c.l.b16 %v5270
  %v5406 = vunpack.c.l.b16 %v5271
  %v5407 = vunpack.c.l.b16 %v5272
  %v5408 = vunpack.c.l.b16 %v5273
  %v5409 = vunpack.c.l.b16 %v5274
  %v5410 = vunpack.c.l.b16 %v5275
  %v5411 = vunpack.c.l.b16 %v5276
  %v5412 = vunpack.c.l.b16 %v5277
  %v5413 = vunpack.c.l.b16 %v5278
  %v5414 = vunpack.c.l.b16 %v5279
  %v5415 = vunpack.c.l.b16 %v5280
  %v5416 = vunpack.c.l.b16 %v5281
  %v5417 = vunpack.c.l.b16 %v5282
  %v5418 = vpack.c.b16 %v5355, %v5354
  %v5419 = vpack.c.b16 %v5357, %v5356
  %v5420 = vpack.c.b16 %v5359, %v5358
  %v5421 = vpack.c.b16 %v5361, %v5360
  %v5422 = vpack.c.b16 %v5363, %v5362
  %v5423 = vpack.c.b16 %v5365, %v5364
  %v5424 = vpack.c.b16 %v5367, %v5366
  %v5425 = vpack.c.b16 %v5369, %v5368
  %v5426 = vpack.c.b16 %v5371, %v5370
  %v5427 = vpack.c.b16 %v5373, %v5372
  %v5428 = vpack.c.b16 %v5375, %v5374
  %v5429 = vpack.c.b16 %v5377, %v5376
  %v5430 = vpack.c.b16 %v5379, %v5378
  %v5431 = vpack.c.b16 %v5381, %v5380
  %v5432 = vpack.c.b16 %v5383, %v5382
  %v5433 = vpack.c.b16 %v5385, %v5384
  %v5434 = vpack.c.b16 %v5387, %v5386
  %v5435 = vpack.c.b16 %v5389, %v5388
  %v5436 = vpack.c.b16 %v5391, %v5390
  %v5437 = vpack.c.b16 %v5393, %v5392
  %v5438 = vpack.c.b16 %v5395, %v5394
  %v5439 = vpack.c.b16 %v5397, %v5396
  %v5440 = vpack.c.b16 %v5399, %v5398
  %v5441 = vpack.c.b16 %v5401, %v5400
  %v5442 = vpack.c.b16 %v5403, %v5402
  %v5443 = vpack.c.b16 %v5405, %v5404
  %v5444 = vpack.c.b16 %v5407, %v5406
  %v5445 = vpack.c.b16 %v5409, %v5408
  %v5446 = vpack.c.b16 %v5411, %v5410
  %v5447 = vpack.c.b16 %v5413, %v5412
  %v5448 = vpack.c.b16 %v5415, %v5414
  %v5449 = vpack.c.b16 %v5417, %v5416
  %5482 = vmatprep.subr.bf16.mxu0 0
  %5483 = vmatpush1.bf16.msra.mxu0 %v5418
  %5484 = vmatprep.subr.bf16.mxu0 0
  %5485 = vmatpush1.bf16.msra.mxu0 %v5419
  %5486 = vmatprep.subr.bf16.mxu0 0
  %5487 = vmatpush1.bf16.msra.mxu0 %v5420
  %5488 = vmatprep.subr.bf16.mxu0 0
  %5489 = vmatpush1.bf16.msra.mxu0 %v5421
  %5490 = vmatprep.subr.bf16.mxu0 0
  %5491 = vmatpush1.bf16.msra.mxu0 %v5422
  %5492 = vmatprep.subr.bf16.mxu0 0
  %5493 = vmatpush1.bf16.msra.mxu0 %v5423
  %5494 = vmatprep.subr.bf16.mxu0 0
  %5495 = vmatpush1.bf16.msra.mxu0 %v5424
  %5496 = vmatprep.subr.bf16.mxu0 0
  %5497 = vmatpush1.bf16.msra.mxu0 %v5425
  %5498 = vmatprep.subr.bf16.mxu0 0
  %5499 = vmatpush1.bf16.msra.mxu0 %v5426
  %5500 = vmatprep.subr.bf16.mxu0 0
  %5501 = vmatpush1.bf16.msra.mxu0 %v5427
  %5502 = vmatprep.subr.bf16.mxu0 0
  %5503 = vmatpush1.bf16.msra.mxu0 %v5428
  %5504 = vmatprep.subr.bf16.mxu0 0
  %5505 = vmatpush1.bf16.msra.mxu0 %v5429
  %5506 = vmatprep.subr.bf16.mxu0 0
  %5507 = vmatpush1.bf16.msra.mxu0 %v5430
  %5508 = vmatprep.subr.bf16.mxu0 0
  %5509 = vmatpush1.bf16.msra.mxu0 %v5431
  %5510 = vmatprep.subr.bf16.mxu0 0
  %5511 = vmatpush1.bf16.msra.mxu0 %v5432
  %5512 = vmatprep.subr.bf16.mxu0 0
  %5513 = vmatpush1.bf16.msra.mxu0 %v5433
  %5514 = vmatprep.mubr.bf16.mxu0 %v5216
  %5515 = vmatmul.mubr.bf16.gmra.mrb[0].mxu0 %v5215
  %v5516 = vpop.f32.mrb[0].mxu0
  %v5517 = vadd.f32 %v5288, %v5516
  %v5518 = vpop.f32.mrb[0].mxu0
  %v5519 = vpop.f32.mrb[0].mxu0
  %v5520 = vadd.f32 %v5288, %v5519
  %v5521 = vpop.f32.mrb[0].mxu0
  %5522 = vdwg.mxu0
  %5523 = vmatprep.subr.bf16.mxu0 0
  %5524 = vmatpush1.bf16.msra.mxu0 %v5434
  %5525 = vmatprep.subr.bf16.mxu0 0
  %5526 = vmatpush1.bf16.msra.mxu0 %v5435
  %5527 = vmatprep.subr.bf16.mxu0 0
  %5528 = vmatpush1.bf16.msra.mxu0 %v5436
  %5529 = vmatprep.subr.bf16.mxu0 0
  %5530 = vmatpush1.bf16.msra.mxu0 %v5437
  %5531 = vmatprep.subr.bf16.mxu0 0
  %5532 = vmatpush1.bf16.msra.mxu0 %v5438
  %5533 = vmatprep.subr.bf16.mxu0 0
  %5534 = vmatpush1.bf16.msra.mxu0 %v5439
  %5535 = vmatprep.subr.bf16.mxu0 0
  %5536 = vmatpush1.bf16.msra.mxu0 %v5440
  %5537 = vmatprep.subr.bf16.mxu0 0
  %5538 = vmatpush1.bf16.msra.mxu0 %v5441
  %5539 = vmatprep.subr.bf16.mxu0 0
  %5540 = vmatpush1.bf16.msra.mxu0 %v5442
  %5541 = vmatprep.subr.bf16.mxu0 0
  %5542 = vmatpush1.bf16.msra.mxu0 %v5443
  %5543 = vmatprep.subr.bf16.mxu0 0
  %5544 = vmatpush1.bf16.msra.mxu0 %v5444
  %5545 = vmatprep.subr.bf16.mxu0 0
  %5546 = vmatpush1.bf16.msra.mxu0 %v5445
  %5547 = vmatprep.subr.bf16.mxu0 0
  %5548 = vmatpush1.bf16.msra.mxu0 %v5446
  %5549 = vmatprep.subr.bf16.mxu0 0
  %5550 = vmatpush1.bf16.msra.mxu0 %v5447
  %5551 = vmatprep.subr.bf16.mxu0 0
  %5552 = vmatpush1.bf16.msra.mxu0 %v5448
  %5553 = vmatprep.subr.bf16.mxu0 0
  %5554 = vmatpush1.bf16.msra.mxu0 %v5449
  %5555 = vmatprep.mubr.bf16.mxu0 %v5218
  %5556 = vmatmul.mubr.bf16.gmra.mrb[0].mxu0 %v5217
  %v5557 = vpop.f32.mrb[0].mxu0
  %v5558 = vadd.f32 %v5517, %v5557
  %v5559 = vpop.f32.mrb[0].mxu0
  %v5560 = vpop.f32.mrb[0].mxu0
  %v5561 = vadd.f32 %v5520, %v5560
  %v5562 = vpop.f32.mrb[0].mxu0
  %5563 = vdwg.mxu0
  %v5564 = vadd.f32 %v4848, %v5558
  %v5565 = vadd.f32 %v4849, %v5561
  %5566 = vadd.xlane.f32.xlu0 %v5564
  %v5567 = vpop.xlane.xlu0 %5566
  %v5568 = vsel %vm956, %v5565, 0.0
  %5569 = vadd.xlane.f32.xlu0 %v5568
  %v5570 = vpop.xlane.xlu0 %5569
  %v5571 = vmul.f32 %v5567, %v3609
  %v5572 = vmul.f32 %v5570, %v3609
  %v5573 = vsub.f32 %v5564, %v5571
  %v5574 = vsub.f32 %v5565, %v5572
  %v5575 = vmul.f32 %v5573, %v5573
  %v5576 = vmul.f32 %v5574, %v5574
  %5577 = vadd.xlane.f32.xlu0 %v5575
  %v5578 = vpop.xlane.xlu0 %5577
  %v5579 = vsel %vm956, %v5576, 0.0
  %5580 = vadd.xlane.f32.xlu0 %v5579
  %v5581 = vpop.xlane.xlu0 %5580
  %v5582 = vmul.f32 %v5578, %v3609
  %v5583 = vmul.f32 %v5581, %v3609
  %v5584 = vadd.f32 %v5582, 1e-06
  %v5585 = vadd.f32 %v5583, 1e-06
  %v5586 = vrsqrt.pop %v5584
  %v5587 = vrsqrt.pop %v5585
  %v5588 = vmul.f32 %v5573, %v5586
  %v5589 = vmul.f32 %v5574, %v5587
  %v5590 = vpack.c.bf16 %v5589, %v5588
  %v5591 = vld [vmem:[%s61] sm:$0xff]
  %v5592 = vld [vmem:[%s61 + $0x8] sm:$0xf]
  %v5593 = vld [vmem:[%s61 + $0xc] sm:$0xff]
  %v5594 = vld [vmem:[%s61 + $0x14] sm:$0xf]
  %v5595 = vld [vmem:[%s61 + $0x18] sm:$0xff]
  %v5596 = vld [vmem:[%s61 + $0x20] sm:$0xf]
  %v5597 = vld [vmem:[%s61 + $0x24] sm:$0xff]
  %v5598 = vld [vmem:[%s61 + $0x2c] sm:$0xf]
  %v5599 = vld [vmem:[%s61 + $0x30] sm:$0xff]
  %v5600 = vld [vmem:[%s61 + $0x38] sm:$0xf]
  %v5601 = vld [vmem:[%s61 + $0x3c] sm:$0xff]
  %v5602 = vld [vmem:[%s61 + $0x44] sm:$0xf]
  %v5603 = vld [vmem:[%s61 + $0x48] sm:$0xff]
  %v5604 = vld [vmem:[%s61 + $0x50] sm:$0xf]
  %v5605 = vld [vmem:[%s61 + $0x54] sm:$0xff]
  %v5606 = vld [vmem:[%s61 + $0x5c] sm:$0xf]
  %v5607 = vld [vmem:[%s61 + $0x60] sm:$0xff]
  %v5608 = vld [vmem:[%s61 + $0x68] sm:$0xf]
  %v5609 = vld [vmem:[%s61 + $0x6c] sm:$0xff]
  %v5610 = vld [vmem:[%s61 + $0x74] sm:$0xf]
  %v5611 = vld [vmem:[%s61 + $0x78] sm:$0xff]
  %v5612 = vld [vmem:[%s61 + $0x80] sm:$0xf]
  %v5613 = vld [vmem:[%s61 + $0x84] sm:$0xff]
  %v5614 = vld [vmem:[%s61 + $0x8c] sm:$0xf]
  %v5615 = vld [vmem:[%s61 + $0x90] sm:$0xff]
  %v5616 = vld [vmem:[%s61 + $0x98] sm:$0xf]
  %v5617 = vld [vmem:[%s61 + $0x9c] sm:$0xff]
  %v5618 = vld [vmem:[%s61 + $0xa4] sm:$0xf]
  %v5619 = vld [vmem:[%s61 + $0xa8] sm:$0xff]
  %v5620 = vld [vmem:[%s61 + $0xb0] sm:$0xf]
  %v5621 = vld [vmem:[%s61 + $0xb4] sm:$0xff]
  %v5622 = vld [vmem:[%s61 + $0xbc] sm:$0xf]
  %v5623 = vld [vmem:[%s63] sm:$0x7]
  %v5625 = vlaneseq
  %v5626 = vshrl.u32 %v5625, 7
  %v5627 = vsub.s32 0, %v5626
  %v5628 = vrot.slane %v5623, %v5627
  %v5629 = vlaneseq
  %v5630 = vshrl.u32 %v5629, 7
  %v5631 = vsub.s32 1, %v5630
  %v5632 = vrot.slane %v5623, %v5631
  %v5633 = vlaneseq
  %v5634 = vshrl.u32 %v5633, 7
  %v5635 = vsub.s32 2, %v5634
  %v5636 = vrot.slane %v5623, %v5635
  %v5672 = vunpack.c.l.b16 %v5591
  %v5673 = vunpack.c.h.b16 %v5591
  %v5674 = vunpack.c.l.b16 %v5592
  %v5675 = vunpack.c.l.b16 %v5593
  %v5676 = vunpack.c.h.b16 %v5593
  %v5677 = vunpack.c.l.b16 %v5594
  %v5678 = vunpack.c.l.b16 %v5595
  %v5679 = vunpack.c.h.b16 %v5595
  %v5680 = vunpack.c.l.b16 %v5596
  %v5681 = vunpack.c.l.b16 %v5597
  %v5682 = vunpack.c.h.b16 %v5597
  %v5683 = vunpack.c.l.b16 %v5598
  %v5684 = vunpack.c.l.b16 %v5599
  %v5685 = vunpack.c.h.b16 %v5599
  %v5686 = vunpack.c.l.b16 %v5600
  %v5687 = vunpack.c.l.b16 %v5601
  %v5688 = vunpack.c.h.b16 %v5601
  %v5689 = vunpack.c.l.b16 %v5602
  %v5690 = vunpack.c.l.b16 %v5603
  %v5691 = vunpack.c.h.b16 %v5603
  %v5692 = vunpack.c.l.b16 %v5604
  %v5693 = vunpack.c.l.b16 %v5605
  %v5694 = vunpack.c.h.b16 %v5605
  %v5695 = vunpack.c.l.b16 %v5606
  %v5696 = vunpack.c.l.b16 %v5607
  %v5697 = vunpack.c.h.b16 %v5607
  %v5698 = vunpack.c.l.b16 %v5608
  %v5699 = vunpack.c.l.b16 %v5609
  %v5700 = vunpack.c.h.b16 %v5609
  %v5701 = vunpack.c.l.b16 %v5610
  %v5702 = vunpack.c.l.b16 %v5611
  %v5703 = vunpack.c.h.b16 %v5611
  %v5704 = vunpack.c.l.b16 %v5612
  %v5705 = vunpack.c.l.b16 %v5613
  %v5706 = vunpack.c.h.b16 %v5613
  %v5707 = vunpack.c.l.b16 %v5614
  %v5708 = vunpack.c.l.b16 %v5615
  %v5709 = vunpack.c.h.b16 %v5615
  %v5710 = vunpack.c.l.b16 %v5616
  %v5711 = vunpack.c.l.b16 %v5617
  %v5712 = vunpack.c.h.b16 %v5617
  %v5713 = vunpack.c.l.b16 %v5618
  %v5714 = vunpack.c.l.b16 %v5619
  %v5715 = vunpack.c.h.b16 %v5619
  %v5716 = vunpack.c.l.b16 %v5620
  %v5717 = vunpack.c.l.b16 %v5621
  %v5718 = vunpack.c.h.b16 %v5621
  %v5719 = vunpack.c.l.b16 %v5622
  %v5720 = vpack.c.b16 %v5675, %v5672
  %v5721 = vpack.c.b16 %v5676, %v5673
  %v5722 = vpack.c.b16 %v5677, %v5674
  %v5723 = vpack.c.b16 %v5681, %v5678
  %v5724 = vpack.c.b16 %v5682, %v5679
  %v5725 = vpack.c.b16 %v5683, %v5680
  %v5726 = vpack.c.b16 %v5687, %v5684
  %v5727 = vpack.c.b16 %v5688, %v5685
  %v5728 = vpack.c.b16 %v5689, %v5686
  %v5729 = vpack.c.b16 %v5693, %v5690
  %v5730 = vpack.c.b16 %v5694, %v5691
  %v5731 = vpack.c.b16 %v5695, %v5692
  %v5732 = vpack.c.b16 %v5699, %v5696
  %v5733 = vpack.c.b16 %v5700, %v5697
  %v5734 = vpack.c.b16 %v5701, %v5698
  %v5735 = vpack.c.b16 %v5705, %v5702
  %v5736 = vpack.c.b16 %v5706, %v5703
  %v5737 = vpack.c.b16 %v5707, %v5704
  %v5738 = vpack.c.b16 %v5711, %v5708
  %v5739 = vpack.c.b16 %v5712, %v5709
  %v5740 = vpack.c.b16 %v5713, %v5710
  %v5741 = vpack.c.b16 %v5717, %v5714
  %v5742 = vpack.c.b16 %v5718, %v5715
  %v5743 = vpack.c.b16 %v5719, %v5716
  %5768 = vmatprep.subr.bf16.mxu0 %v5721
  %5769 = vmatpush1.bf16.msra.mxu0 %v5720
  %5770 = vmatprep.subr.bf16.mxu0 %v5724
  %5771 = vmatpush1.bf16.msra.mxu0 %v5723
  %5772 = vmatprep.subr.bf16.mxu0 %v5727
  %5773 = vmatpush1.bf16.msra.mxu0 %v5726
  %5774 = vmatprep.subr.bf16.mxu0 %v5730
  %5775 = vmatpush1.bf16.msra.mxu0 %v5729
  %5776 = vmatprep.subr.bf16.mxu0 %v5733
  %5777 = vmatpush1.bf16.msra.mxu0 %v5732
  %5778 = vmatprep.subr.bf16.mxu0 %v5736
  %5779 = vmatpush1.bf16.msra.mxu0 %v5735
  %5780 = vmatprep.subr.bf16.mxu0 %v5739
  %5781 = vmatpush1.bf16.msra.mxu0 %v5738
  %5782 = vmatprep.subr.bf16.mxu0 %v5742
  %5783 = vmatpush1.bf16.msra.mxu0 %v5741
  %5784 = vmatprep.subr.bf16.mxu0 0
  %5785 = vmatpush1.bf16.msra.mxu0 0
  %5786 = vmatprep.subr.bf16.mxu0 0
  %5787 = vmatpush1.bf16.msra.mxu0 0
  %5788 = vmatprep.subr.bf16.mxu0 0
  %5789 = vmatpush1.bf16.msra.mxu0 0
  %5790 = vmatprep.subr.bf16.mxu0 0
  %5791 = vmatpush1.bf16.msra.mxu0 0
  %5792 = vmatprep.subr.bf16.mxu0 0
  %5793 = vmatpush1.bf16.msra.mxu0 0
  %5794 = vmatprep.subr.bf16.mxu0 0
  %5795 = vmatpush1.bf16.msra.mxu0 0
  %5796 = vmatprep.subr.bf16.mxu0 0
  %5797 = vmatpush1.bf16.msra.mxu0 0
  %5798 = vmatprep.subr.bf16.mxu0 0
  %5799 = vmatpush1.bf16.msra.mxu0 0
  %5800 = vmatprep.mubr.bf16.mxu0 0
  %5801 = vmatmul.mubr.bf16.gmra.mrb[0].mxu0 %v5590
  %v5802 = vpop.f32.mrb[0].mxu0
  %v5803 = vadd.f32 %v5628, %v5802
  %v5804 = vpop.f32.mrb[0].mxu0
  %v5805 = vadd.f32 %v5632, %v5804
  %v5806 = vpop.f32.mrb[0].mxu0
  %v5807 = vadd.f32 %v5628, %v5806
  %v5808 = vpop.f32.mrb[0].mxu0
  %v5809 = vadd.f32 %v5632, %v5808
  %5810 = vdwg.mxu0
  %5811 = vmatprep.subr.bf16.mxu0 0
  %5812 = vmatpush1.bf16.msra.mxu0 %v5722
  %5813 = vmatprep.subr.bf16.mxu0 0
  %5814 = vmatpush1.bf16.msra.mxu0 %v5725
  %5815 = vmatprep.subr.bf16.mxu0 0
  %5816 = vmatpush1.bf16.msra.mxu0 %v5728
  %5817 = vmatprep.subr.bf16.mxu0 0
  %5818 = vmatpush1.bf16.msra.mxu0 %v5731
  %5819 = vmatprep.subr.bf16.mxu0 0
  %5820 = vmatpush1.bf16.msra.mxu0 %v5734
  %5821 = vmatprep.subr.bf16.mxu0 0
  %5822 = vmatpush1.bf16.msra.mxu0 %v5737
  %5823 = vmatprep.subr.bf16.mxu0 0
  %5824 = vmatpush1.bf16.msra.mxu0 %v5740
  %5825 = vmatprep.subr.bf16.mxu0 0
  %5826 = vmatpush1.bf16.msra.mxu0 %v5743
  %5827 = vmatprep.subr.bf16.mxu0 0
  %5828 = vmatpush1.bf16.msra.mxu0 0
  %5829 = vmatprep.subr.bf16.mxu0 0
  %5830 = vmatpush1.bf16.msra.mxu0 0
  %5831 = vmatprep.subr.bf16.mxu0 0
  %5832 = vmatpush1.bf16.msra.mxu0 0
  %5833 = vmatprep.subr.bf16.mxu0 0
  %5834 = vmatpush1.bf16.msra.mxu0 0
  %5835 = vmatprep.subr.bf16.mxu0 0
  %5836 = vmatpush1.bf16.msra.mxu0 0
  %5837 = vmatprep.subr.bf16.mxu0 0
  %5838 = vmatpush1.bf16.msra.mxu0 0
  %5839 = vmatprep.subr.bf16.mxu0 0
  %5840 = vmatpush1.bf16.msra.mxu0 0
  %5841 = vmatprep.subr.bf16.mxu0 0
  %5842 = vmatpush1.bf16.msra.mxu0 0
  %5843 = vmatprep.mubr.bf16.mxu0 0
  %5844 = vmatmul.mubr.bf16.gmra.mrb[0].mxu0 %v5590
  %v5845 = vpop.f32.mrb[0].mxu0
  %v5846 = vadd.f32 %v5636, %v5845
  %v5847 = vpop.f32.mrb[0].mxu0
  %v5848 = vpop.f32.mrb[0].mxu0
  %v5849 = vadd.f32 %v5636, %v5848
  %v5850 = vpop.f32.mrb[0].mxu0
  %5851 = vdwg.mxu0
  %v5853 = vsel %vm1677, %v5803, 0
  %v5856 = vsel %vm1677, %v5807, 0
  %v5859 = vsel %vm1677, %v5805, 0
  %v5862 = vsel %vm1677, %v5809, 0
  %5864 = vmatprep.subr.mxu0 0.0
  %5865 = vmatpush1.xpose.msra.mxu0 %v5859
  %5866 = vmatprep.subr.mxu0 0.0
  %5867 = vmatpush1.xpose.msra.mxu0 %v5862
  %5868 = vmatprep.subr.mxu0 0.0
  %5869 = vmatpush1.xpose.msra.mxu0 0.0
  %5870 = vmatprep.subr.mxu0 0.0
  %5871 = vmatpush1.xpose.msra.mxu0 0.0
  %5872 = vmatprep.subr.mxu0 0.0
  %5873 = vmatpush1.xpose.msra.mxu0 0.0
  %5874 = vmatprep.subr.mxu0 0.0
  %5875 = vmatpush1.xpose.msra.mxu0 0.0
  %5876 = vmatprep.subr.mxu0 0.0
  %5877 = vmatpush1.xpose.msra.mxu0 0.0
  %5878 = vmatprep.subr.mxu0 0.0
  %5879 = vmatpush1.xpose.msra.mxu0 0.0
  %5880 = vmatprep.subr.mxu0 0.0
  %5881 = vmatpush1.xpose.msra.mxu0 0.0
  %5882 = vmatprep.subr.mxu0 0.0
  %5883 = vmatpush1.xpose.msra.mxu0 0.0
  %5884 = vmatprep.subr.mxu0 0.0
  %5885 = vmatpush1.xpose.msra.mxu0 0.0
  %5886 = vmatprep.subr.mxu0 0.0
  %5887 = vmatpush1.xpose.msra.mxu0 0.0
  %5888 = vmatprep.subr.mxu0 0.0
  %5889 = vmatpush1.xpose.msra.mxu0 0.0
  %5890 = vmatprep.subr.mxu0 0.0
  %5891 = vmatpush1.xpose.msra.mxu0 0.0
  %5892 = vmatprep.subr.mxu0 0.0
  %5893 = vmatpush1.xpose.msra.mxu0 0.0
  %5894 = vmatprep.subr.mxu0 0.0
  %5895 = vmatpush1.xpose.msra.mxu0 0.0
  %5896 = vmatprep.subr.mxu0 0.0
  %5897 = vmatpush1.xpose.msra.mxu0 0.0
  %5898 = vmatprep.subr.mxu0 0.0
  %5899 = vmatpush1.xpose.msra.mxu0 0.0
  %5900 = vmatprep.subr.mxu0 0.0
  %5901 = vmatpush1.xpose.msra.mxu0 0.0
  %5902 = vmatprep.subr.mxu0 0.0
  %5903 = vmatpush1.xpose.msra.mxu0 0.0
  %5904 = vmatprep.subr.mxu0 0.0
  %5905 = vmatpush1.xpose.msra.mxu0 0.0
  %5906 = vmatprep.subr.mxu0 0.0
  %5907 = vmatpush1.xpose.msra.mxu0 0.0
  %5908 = vmatprep.subr.mxu0 0.0
  %5909 = vmatpush1.xpose.msra.mxu0 0.0
  %5910 = vmatprep.subr.mxu0 0.0
  %5911 = vmatpush1.xpose.msra.mxu0 0.0
  %5912 = vmatprep.subr.mxu0 0.0
  %5913 = vmatpush1.xpose.msra.mxu0 0.0
  %5914 = vmatprep.subr.mxu0 0.0
  %5915 = vmatpush1.xpose.msra.mxu0 0.0
  %5916 = vmatprep.subr.mxu0 0.0
  %5917 = vmatpush1.xpose.msra.mxu0 0.0
  %5918 = vmatprep.subr.mxu0 0.0
  %5919 = vmatpush1.xpose.msra.mxu0 0.0
  %5920 = vmatprep.subr.mxu0 0.0
  %5921 = vmatpush1.xpose.msra.mxu0 0.0
  %5922 = vmatprep.subr.mxu0 0.0
  %5923 = vmatpush1.xpose.msra.mxu0 0.0
  %5924 = vmatprep.subr.mxu0 0.0
  %5925 = vmatpush1.xpose.msra.mxu0 0.0
  %5926 = vmatprep.subr.mxu0 0.0
  %5927 = vmatpush1.xpose.msra.mxu0 0.0
  %5928 = vmatprep.mubr.f32.mxu0 0.0
  %5929 = vmatmul.mubr.f32.gmra.mrb[0].mxu0 %v5853
  %v5930 = vpop.f32.mrb[0].mxu0
  %v5931 = vadd.f32 0.0, %v5930
  %v5932 = vpop.f32.mrb[0].mxu0
  %5933 = vmatprep.mubr.f32.mxu0 0.0
  %5934 = vmatmul.mubr.f32.gmra.mrb[0].mxu0 %v5856
  %v5935 = vpop.f32.mrb[0].mxu0
  %v5936 = vadd.f32 0.0, %v5935
  %v5937 = vpop.f32.mrb[0].mxu0
  %5938 = vdwg.mxu0
  %v5939 = vmul.f32 %v5931, 0.17677669
  %v5940 = vmul.f32 %v5936, 0.17677669
  %v5941 = vadd.f32 %v5939, %v167
  %v5942 = vadd.f32 %v5940, %v168
  %v5943 = vsel %vm926, %v5941, -inf
  %5944 = vmax.xlane.f32.xlu0 %v5943
  %v5945 = vpop.xlane.xlu0 %5944
  %v5946 = vsel %vm930, %v5942, -inf
  %5947 = vmax.xlane.f32.xlu0 %v5946
  %v5948 = vpop.xlane.xlu0 %5947
  %v5949 = vsub.f32 %v5941, %v5945
  %v5950 = vsub.f32 %v5942, %v5948
  %v5951 = vmul.f32 %v5949, 1.442695
  %v5952 = vpow.pop %v5951
  %v5953 = vmul.f32 %v5950, 1.442695
  %v5954 = vpow.pop %v5953
  %v5955 = vsel %vm926, %v5952, 0.0
  %5956 = vadd.xlane.f32.xlu0 %v5955
  %v5957 = vpop.xlane.xlu0 %5956
  %v5958 = vsel %vm930, %v5954, 0.0
  %5959 = vadd.xlane.f32.xlu0 %v5958
  %v5960 = vpop.xlane.xlu0 %5959
  %v5961 = vrcp.pop %v5957
  %v5962 = vmul.f32 %v5952, %v5961
  %v5963 = vrcp.pop %v5960
  %v5964 = vmul.f32 %v5954, %v5963
  %v5966 = vsel %vm926, %v5962, 0
  %v5969 = vsel %vm926, %v5964, 0
  %v5972 = vsel %vm956, %v5849, 0
  %5974 = vmatprep.subr.mxu0 0.0
  %5975 = vmatpush1.msra.mxu0 %v5846
  %5976 = vmatprep.subr.mxu0 0.0
  %5977 = vmatpush1.msra.mxu0 %v5972
  %5978 = vmatprep.subr.mxu0 0.0
  %5979 = vmatpush1.msra.mxu0 0.0
  %5980 = vmatprep.subr.mxu0 0.0
  %5981 = vmatpush1.msra.mxu0 0.0
  %5982 = vmatprep.subr.mxu0 0.0
  %5983 = vmatpush1.msra.mxu0 0.0
  %5984 = vmatprep.subr.mxu0 0.0
  %5985 = vmatpush1.msra.mxu0 0.0
  %5986 = vmatprep.subr.mxu0 0.0
  %5987 = vmatpush1.msra.mxu0 0.0
  %5988 = vmatprep.subr.mxu0 0.0
  %5989 = vmatpush1.msra.mxu0 0.0
  %5990 = vmatprep.subr.mxu0 0.0
  %5991 = vmatpush1.msra.mxu0 0.0
  %5992 = vmatprep.subr.mxu0 0.0
  %5993 = vmatpush1.msra.mxu0 0.0
  %5994 = vmatprep.subr.mxu0 0.0
  %5995 = vmatpush1.msra.mxu0 0.0
  %5996 = vmatprep.subr.mxu0 0.0
  %5997 = vmatpush1.msra.mxu0 0.0
  %5998 = vmatprep.subr.mxu0 0.0
  %5999 = vmatpush1.msra.mxu0 0.0
  %6000 = vmatprep.subr.mxu0 0.0
  %6001 = vmatpush1.msra.mxu0 0.0
  %6002 = vmatprep.subr.mxu0 0.0
  %6003 = vmatpush1.msra.mxu0 0.0
  %6004 = vmatprep.subr.mxu0 0.0
  %6005 = vmatpush1.msra.mxu0 0.0
  %6006 = vmatprep.subr.mxu0 0.0
  %6007 = vmatpush1.msra.mxu0 0.0
  %6008 = vmatprep.subr.mxu0 0.0
  %6009 = vmatpush1.msra.mxu0 0.0
  %6010 = vmatprep.subr.mxu0 0.0
  %6011 = vmatpush1.msra.mxu0 0.0
  %6012 = vmatprep.subr.mxu0 0.0
  %6013 = vmatpush1.msra.mxu0 0.0
  %6014 = vmatprep.subr.mxu0 0.0
  %6015 = vmatpush1.msra.mxu0 0.0
  %6016 = vmatprep.subr.mxu0 0.0
  %6017 = vmatpush1.msra.mxu0 0.0
  %6018 = vmatprep.subr.mxu0 0.0
  %6019 = vmatpush1.msra.mxu0 0.0
  %6020 = vmatprep.subr.mxu0 0.0
  %6021 = vmatpush1.msra.mxu0 0.0
  %6022 = vmatprep.subr.mxu0 0.0
  %6023 = vmatpush1.msra.mxu0 0.0
  %6024 = vmatprep.subr.mxu0 0.0
  %6025 = vmatpush1.msra.mxu0 0.0
  %6026 = vmatprep.subr.mxu0 0.0
  %6027 = vmatpush1.msra.mxu0 0.0
  %6028 = vmatprep.subr.mxu0 0.0
  %6029 = vmatpush1.msra.mxu0 0.0
  %6030 = vmatprep.subr.mxu0 0.0
  %6031 = vmatpush1.msra.mxu0 0.0
  %6032 = vmatprep.subr.mxu0 0.0
  %6033 = vmatpush1.msra.mxu0 0.0
  %6034 = vmatprep.subr.mxu0 0.0
  %6035 = vmatpush1.msra.mxu0 0.0
  %6036 = vmatprep.subr.mxu0 0.0
  %6037 = vmatpush1.msra.mxu0 0.0
  %6038 = vmatprep.mubr.f32.mxu0 0.0
  %6039 = vmatmul.mubr.f32.gmra.mrb[0].mxu0 %v5966
  %v6040 = vpop.f32.mrb[0].mxu0
  %v6041 = vadd.f32 0.0, %v6040
  %v6042 = vpop.f32.mrb[0].mxu0
  %6043 = vmatprep.mubr.f32.mxu0 0.0
  %6044 = vmatmul.mubr.f32.gmra.mrb[0].mxu0 %v5969
  %v6045 = vpop.f32.mrb[0].mxu0
  %v6046 = vadd.f32 0.0, %v6045
  %v6047 = vpop.f32.mrb[0].mxu0
  %6048 = vdwg.mxu0
  %6049 = vrot.lane.b32.xlu0 %v5803, 96
  %v6050 = vpop.permute.xlu0 %6049
  %6051 = vrot.lane.b32.xlu0 %v5807, 96
  %v6052 = vpop.permute.xlu0 %6051
  %6053 = vrot.lane.b32.xlu0 %v5805, 96
  %v6054 = vpop.permute.xlu0 %6053
  %6055 = vrot.lane.b32.xlu0 %v5809, 96
  %v6056 = vpop.permute.xlu0 %6055
  %v6057 = vsel %vm1677, %v6050, 0
  %v6059 = vsel %vm1677, %v6052, 0
  %v6061 = vsel %vm1677, %v6054, 0
  %v6063 = vsel %vm1677, %v6056, 0
  %6065 = vmatprep.subr.mxu0 0.0
  %6066 = vmatpush1.xpose.msra.mxu0 %v6061
  %6067 = vmatprep.subr.mxu0 0.0
  %6068 = vmatpush1.xpose.msra.mxu0 %v6063
  %6069 = vmatprep.subr.mxu0 0.0
  %6070 = vmatpush1.xpose.msra.mxu0 0.0
  %6071 = vmatprep.subr.mxu0 0.0
  %6072 = vmatpush1.xpose.msra.mxu0 0.0
  %6073 = vmatprep.subr.mxu0 0.0
  %6074 = vmatpush1.xpose.msra.mxu0 0.0
  %6075 = vmatprep.subr.mxu0 0.0
  %6076 = vmatpush1.xpose.msra.mxu0 0.0
  %6077 = vmatprep.subr.mxu0 0.0
  %6078 = vmatpush1.xpose.msra.mxu0 0.0
  %6079 = vmatprep.subr.mxu0 0.0
  %6080 = vmatpush1.xpose.msra.mxu0 0.0
  %6081 = vmatprep.subr.mxu0 0.0
  %6082 = vmatpush1.xpose.msra.mxu0 0.0
  %6083 = vmatprep.subr.mxu0 0.0
  %6084 = vmatpush1.xpose.msra.mxu0 0.0
  %6085 = vmatprep.subr.mxu0 0.0
  %6086 = vmatpush1.xpose.msra.mxu0 0.0
  %6087 = vmatprep.subr.mxu0 0.0
  %6088 = vmatpush1.xpose.msra.mxu0 0.0
  %6089 = vmatprep.subr.mxu0 0.0
  %6090 = vmatpush1.xpose.msra.mxu0 0.0
  %6091 = vmatprep.subr.mxu0 0.0
  %6092 = vmatpush1.xpose.msra.mxu0 0.0
  %6093 = vmatprep.subr.mxu0 0.0
  %6094 = vmatpush1.xpose.msra.mxu0 0.0
  %6095 = vmatprep.subr.mxu0 0.0
  %6096 = vmatpush1.xpose.msra.mxu0 0.0
  %6097 = vmatprep.subr.mxu0 0.0
  %6098 = vmatpush1.xpose.msra.mxu0 0.0
  %6099 = vmatprep.subr.mxu0 0.0
  %6100 = vmatpush1.xpose.msra.mxu0 0.0
  %6101 = vmatprep.subr.mxu0 0.0
  %6102 = vmatpush1.xpose.msra.mxu0 0.0
  %6103 = vmatprep.subr.mxu0 0.0
  %6104 = vmatpush1.xpose.msra.mxu0 0.0
  %6105 = vmatprep.subr.mxu0 0.0
  %6106 = vmatpush1.xpose.msra.mxu0 0.0
  %6107 = vmatprep.subr.mxu0 0.0
  %6108 = vmatpush1.xpose.msra.mxu0 0.0
  %6109 = vmatprep.subr.mxu0 0.0
  %6110 = vmatpush1.xpose.msra.mxu0 0.0
  %6111 = vmatprep.subr.mxu0 0.0
  %6112 = vmatpush1.xpose.msra.mxu0 0.0
  %6113 = vmatprep.subr.mxu0 0.0
  %6114 = vmatpush1.xpose.msra.mxu0 0.0
  %6115 = vmatprep.subr.mxu0 0.0
  %6116 = vmatpush1.xpose.msra.mxu0 0.0
  %6117 = vmatprep.subr.mxu0 0.0
  %6118 = vmatpush1.xpose.msra.mxu0 0.0
  %6119 = vmatprep.subr.mxu0 0.0
  %6120 = vmatpush1.xpose.msra.mxu0 0.0
  %6121 = vmatprep.subr.mxu0 0.0
  %6122 = vmatpush1.xpose.msra.mxu0 0.0
  %6123 = vmatprep.subr.mxu0 0.0
  %6124 = vmatpush1.xpose.msra.mxu0 0.0
  %6125 = vmatprep.subr.mxu0 0.0
  %6126 = vmatpush1.xpose.msra.mxu0 0.0
  %6127 = vmatprep.subr.mxu0 0.0
  %6128 = vmatpush1.xpose.msra.mxu0 0.0
  %6129 = vmatprep.mubr.f32.mxu0 0.0
  %6130 = vmatmul.mubr.f32.gmra.mrb[0].mxu0 %v6057
  %v6131 = vpop.f32.mrb[0].mxu0
  %v6132 = vadd.f32 0.0, %v6131
  %v6133 = vpop.f32.mrb[0].mxu0
  %6134 = vmatprep.mubr.f32.mxu0 0.0
  %6135 = vmatmul.mubr.f32.gmra.mrb[0].mxu0 %v6059
  %v6136 = vpop.f32.mrb[0].mxu0
  %v6137 = vadd.f32 0.0, %v6136
  %v6138 = vpop.f32.mrb[0].mxu0
  %6139 = vdwg.mxu0
  %v6140 = vmul.f32 %v6132, 0.17677669
  %v6141 = vmul.f32 %v6137, 0.17677669
  %v6142 = vadd.f32 %v6140, %v167
  %v6143 = vadd.f32 %v6141, %v168
  %v6144 = vsel %vm926, %v6142, -inf
  %6145 = vmax.xlane.f32.xlu0 %v6144
  %v6146 = vpop.xlane.xlu0 %6145
  %v6147 = vsel %vm930, %v6143, -inf
  %6148 = vmax.xlane.f32.xlu0 %v6147
  %v6149 = vpop.xlane.xlu0 %6148
  %v6150 = vsub.f32 %v6142, %v6146
  %v6151 = vsub.f32 %v6143, %v6149
  %v6152 = vmul.f32 %v6150, 1.442695
  %v6153 = vpow.pop %v6152
  %v6154 = vmul.f32 %v6151, 1.442695
  %v6155 = vpow.pop %v6154
  %v6156 = vsel %vm926, %v6153, 0.0
  %6157 = vadd.xlane.f32.xlu0 %v6156
  %v6158 = vpop.xlane.xlu0 %6157
  %v6159 = vsel %vm930, %v6155, 0.0
  %6160 = vadd.xlane.f32.xlu0 %v6159
  %v6161 = vpop.xlane.xlu0 %6160
  %v6162 = vrcp.pop %v6158
  %v6163 = vmul.f32 %v6153, %v6162
  %v6164 = vrcp.pop %v6161
  %v6165 = vmul.f32 %v6155, %v6164
  %6167 = vrot.lane.b32.xlu0 %v5846, 96
  %v6168 = vpop.permute.xlu0 %6167
  %6169 = vrot.lane.b32.xlu0 %v5849, 96
  %v6170 = vpop.permute.xlu0 %6169
  %v6173 = vsel %vm926, %v6163, 0
  %v6176 = vsel %vm926, %v6165, 0
  %v6178 = vsel %vm956, %v6170, 0
  %6180 = vmatprep.subr.mxu0 0.0
  %6181 = vmatpush1.msra.mxu0 %v6168
  %6182 = vmatprep.subr.mxu0 0.0
  %6183 = vmatpush1.msra.mxu0 %v6178
  %6184 = vmatprep.subr.mxu0 0.0
  %6185 = vmatpush1.msra.mxu0 0.0
  %6186 = vmatprep.subr.mxu0 0.0
  %6187 = vmatpush1.msra.mxu0 0.0
  %6188 = vmatprep.subr.mxu0 0.0
  %6189 = vmatpush1.msra.mxu0 0.0
  %6190 = vmatprep.subr.mxu0 0.0
  %6191 = vmatpush1.msra.mxu0 0.0
  %6192 = vmatprep.subr.mxu0 0.0
  %6193 = vmatpush1.msra.mxu0 0.0
  %6194 = vmatprep.subr.mxu0 0.0
  %6195 = vmatpush1.msra.mxu0 0.0
  %6196 = vmatprep.subr.mxu0 0.0
  %6197 = vmatpush1.msra.mxu0 0.0
  %6198 = vmatprep.subr.mxu0 0.0
  %6199 = vmatpush1.msra.mxu0 0.0
  %6200 = vmatprep.subr.mxu0 0.0
  %6201 = vmatpush1.msra.mxu0 0.0
  %6202 = vmatprep.subr.mxu0 0.0
  %6203 = vmatpush1.msra.mxu0 0.0
  %6204 = vmatprep.subr.mxu0 0.0
  %6205 = vmatpush1.msra.mxu0 0.0
  %6206 = vmatprep.subr.mxu0 0.0
  %6207 = vmatpush1.msra.mxu0 0.0
  %6208 = vmatprep.subr.mxu0 0.0
  %6209 = vmatpush1.msra.mxu0 0.0
  %6210 = vmatprep.subr.mxu0 0.0
  %6211 = vmatpush1.msra.mxu0 0.0
  %6212 = vmatprep.subr.mxu0 0.0
  %6213 = vmatpush1.msra.mxu0 0.0
  %6214 = vmatprep.subr.mxu0 0.0
  %6215 = vmatpush1.msra.mxu0 0.0
  %6216 = vmatprep.subr.mxu0 0.0
  %6217 = vmatpush1.msra.mxu0 0.0
  %6218 = vmatprep.subr.mxu0 0.0
  %6219 = vmatpush1.msra.mxu0 0.0
  %6220 = vmatprep.subr.mxu0 0.0
  %6221 = vmatpush1.msra.mxu0 0.0
  %6222 = vmatprep.subr.mxu0 0.0
  %6223 = vmatpush1.msra.mxu0 0.0
  %6224 = vmatprep.subr.mxu0 0.0
  %6225 = vmatpush1.msra.mxu0 0.0
  %6226 = vmatprep.subr.mxu0 0.0
  %6227 = vmatpush1.msra.mxu0 0.0
  %6228 = vmatprep.subr.mxu0 0.0
  %6229 = vmatpush1.msra.mxu0 0.0
  %6230 = vmatprep.subr.mxu0 0.0
  %6231 = vmatpush1.msra.mxu0 0.0
  %6232 = vmatprep.subr.mxu0 0.0
  %6233 = vmatpush1.msra.mxu0 0.0
  %6234 = vmatprep.subr.mxu0 0.0
  %6235 = vmatpush1.msra.mxu0 0.0
  %6236 = vmatprep.subr.mxu0 0.0
  %6237 = vmatpush1.msra.mxu0 0.0
  %6238 = vmatprep.subr.mxu0 0.0
  %6239 = vmatpush1.msra.mxu0 0.0
  %6240 = vmatprep.subr.mxu0 0.0
  %6241 = vmatpush1.msra.mxu0 0.0
  %6242 = vmatprep.subr.mxu0 0.0
  %6243 = vmatpush1.msra.mxu0 0.0
  %6244 = vmatprep.mubr.f32.mxu0 0.0
  %6245 = vmatmul.mubr.f32.gmra.mrb[0].mxu0 %v6173
  %v6246 = vpop.f32.mrb[0].mxu0
  %v6247 = vadd.f32 0.0, %v6246
  %v6248 = vpop.f32.mrb[0].mxu0
  %6249 = vmatprep.mubr.f32.mxu0 0.0
  %6250 = vmatmul.mubr.f32.gmra.mrb[0].mxu0 %v6176
  %v6251 = vpop.f32.mrb[0].mxu0
  %v6252 = vadd.f32 0.0, %v6251
  %v6253 = vpop.f32.mrb[0].mxu0
  %6254 = vdwg.mxu0
  %6255 = vrot.lane.b32.xlu0 %v5803, 64
  %v6256 = vpop.permute.xlu0 %6255
  %6257 = vrot.lane.b32.xlu0 %v5807, 64
  %v6258 = vpop.permute.xlu0 %6257
  %6259 = vrot.lane.b32.xlu0 %v5805, 64
  %v6260 = vpop.permute.xlu0 %6259
  %6261 = vrot.lane.b32.xlu0 %v5809, 64
  %v6262 = vpop.permute.xlu0 %6261
  %v6263 = vsel %vm1677, %v6256, 0
  %v6265 = vsel %vm1677, %v6258, 0
  %v6267 = vsel %vm1677, %v6260, 0
  %v6269 = vsel %vm1677, %v6262, 0
  %6271 = vmatprep.subr.mxu0 0.0
  %6272 = vmatpush1.xpose.msra.mxu0 %v6267
  %6273 = vmatprep.subr.mxu0 0.0
  %6274 = vmatpush1.xpose.msra.mxu0 %v6269
  %6275 = vmatprep.subr.mxu0 0.0
  %6276 = vmatpush1.xpose.msra.mxu0 0.0
  %6277 = vmatprep.subr.mxu0 0.0
  %6278 = vmatpush1.xpose.msra.mxu0 0.0
  %6279 = vmatprep.subr.mxu0 0.0
  %6280 = vmatpush1.xpose.msra.mxu0 0.0
  %6281 = vmatprep.subr.mxu0 0.0
  %6282 = vmatpush1.xpose.msra.mxu0 0.0
  %6283 = vmatprep.subr.mxu0 0.0
  %6284 = vmatpush1.xpose.msra.mxu0 0.0
  %6285 = vmatprep.subr.mxu0 0.0
  %6286 = vmatpush1.xpose.msra.mxu0 0.0
  %6287 = vmatprep.subr.mxu0 0.0
  %6288 = vmatpush1.xpose.msra.mxu0 0.0
  %6289 = vmatprep.subr.mxu0 0.0
  %6290 = vmatpush1.xpose.msra.mxu0 0.0
  %6291 = vmatprep.subr.mxu0 0.0
  %6292 = vmatpush1.xpose.msra.mxu0 0.0
  %6293 = vmatprep.subr.mxu0 0.0
  %6294 = vmatpush1.xpose.msra.mxu0 0.0
  %6295 = vmatprep.subr.mxu0 0.0
  %6296 = vmatpush1.xpose.msra.mxu0 0.0
  %6297 = vmatprep.subr.mxu0 0.0
  %6298 = vmatpush1.xpose.msra.mxu0 0.0
  %6299 = vmatprep.subr.mxu0 0.0
  %6300 = vmatpush1.xpose.msra.mxu0 0.0
  %6301 = vmatprep.subr.mxu0 0.0
  %6302 = vmatpush1.xpose.msra.mxu0 0.0
  %6303 = vmatprep.subr.mxu0 0.0
  %6304 = vmatpush1.xpose.msra.mxu0 0.0
  %6305 = vmatprep.subr.mxu0 0.0
  %6306 = vmatpush1.xpose.msra.mxu0 0.0
  %6307 = vmatprep.subr.mxu0 0.0
  %6308 = vmatpush1.xpose.msra.mxu0 0.0
  %6309 = vmatprep.subr.mxu0 0.0
  %6310 = vmatpush1.xpose.msra.mxu0 0.0
  %6311 = vmatprep.subr.mxu0 0.0
  %6312 = vmatpush1.xpose.msra.mxu0 0.0
  %6313 = vmatprep.subr.mxu0 0.0
  %6314 = vmatpush1.xpose.msra.mxu0 0.0
  %6315 = vmatprep.subr.mxu0 0.0
  %6316 = vmatpush1.xpose.msra.mxu0 0.0
  %6317 = vmatprep.subr.mxu0 0.0
  %6318 = vmatpush1.xpose.msra.mxu0 0.0
  %6319 = vmatprep.subr.mxu0 0.0
  %6320 = vmatpush1.xpose.msra.mxu0 0.0
  %6321 = vmatprep.subr.mxu0 0.0
  %6322 = vmatpush1.xpose.msra.mxu0 0.0
  %6323 = vmatprep.subr.mxu0 0.0
  %6324 = vmatpush1.xpose.msra.mxu0 0.0
  %6325 = vmatprep.subr.mxu0 0.0
  %6326 = vmatpush1.xpose.msra.mxu0 0.0
  %6327 = vmatprep.subr.mxu0 0.0
  %6328 = vmatpush1.xpose.msra.mxu0 0.0
  %6329 = vmatprep.subr.mxu0 0.0
  %6330 = vmatpush1.xpose.msra.mxu0 0.0
  %6331 = vmatprep.subr.mxu0 0.0
  %6332 = vmatpush1.xpose.msra.mxu0 0.0
  %6333 = vmatprep.subr.mxu0 0.0
  %6334 = vmatpush1.xpose.msra.mxu0 0.0
  %6335 = vmatprep.mubr.f32.mxu0 0.0
  %6336 = vmatmul.mubr.f32.gmra.mrb[0].mxu0 %v6263
  %v6337 = vpop.f32.mrb[0].mxu0
  %v6338 = vadd.f32 0.0, %v6337
  %v6339 = vpop.f32.mrb[0].mxu0
  %6340 = vmatprep.mubr.f32.mxu0 0.0
  %6341 = vmatmul.mubr.f32.gmra.mrb[0].mxu0 %v6265
  %v6342 = vpop.f32.mrb[0].mxu0
  %v6343 = vadd.f32 0.0, %v6342
  %v6344 = vpop.f32.mrb[0].mxu0
  %6345 = vdwg.mxu0
  %v6346 = vmul.f32 %v6338, 0.17677669
  %v6347 = vmul.f32 %v6343, 0.17677669
  %v6348 = vadd.f32 %v6346, %v167
  %v6349 = vadd.f32 %v6347, %v168
  %v6350 = vsel %vm926, %v6348, -inf
  %6351 = vmax.xlane.f32.xlu0 %v6350
  %v6352 = vpop.xlane.xlu0 %6351
  %v6353 = vsel %vm930, %v6349, -inf
  %6354 = vmax.xlane.f32.xlu0 %v6353
  %v6355 = vpop.xlane.xlu0 %6354
  %v6356 = vsub.f32 %v6348, %v6352
  %v6357 = vsub.f32 %v6349, %v6355
  %v6358 = vmul.f32 %v6356, 1.442695
  %v6359 = vpow.pop %v6358
  %v6360 = vmul.f32 %v6357, 1.442695
  %v6361 = vpow.pop %v6360
  %v6362 = vsel %vm926, %v6359, 0.0
  %6363 = vadd.xlane.f32.xlu0 %v6362
  %v6364 = vpop.xlane.xlu0 %6363
  %v6365 = vsel %vm930, %v6361, 0.0
  %6366 = vadd.xlane.f32.xlu0 %v6365
  %v6367 = vpop.xlane.xlu0 %6366
  %v6368 = vrcp.pop %v6364
  %v6369 = vmul.f32 %v6359, %v6368
  %v6370 = vrcp.pop %v6367
  %v6371 = vmul.f32 %v6361, %v6370
  %6372 = vrot.lane.b32.xlu0 %v5846, 64
  %v6373 = vpop.permute.xlu0 %6372
  %6374 = vrot.lane.b32.xlu0 %v5849, 64
  %v6375 = vpop.permute.xlu0 %6374
  %v6378 = vsel %vm926, %v6369, 0
  %v6381 = vsel %vm926, %v6371, 0
  %v6383 = vsel %vm956, %v6375, 0
  %6385 = vmatprep.subr.mxu0 0.0
  %6386 = vmatpush1.msra.mxu0 %v6373
  %6387 = vmatprep.subr.mxu0 0.0
  %6388 = vmatpush1.msra.mxu0 %v6383
  %6389 = vmatprep.subr.mxu0 0.0
  %6390 = vmatpush1.msra.mxu0 0.0
  %6391 = vmatprep.subr.mxu0 0.0
  %6392 = vmatpush1.msra.mxu0 0.0
  %6393 = vmatprep.subr.mxu0 0.0
  %6394 = vmatpush1.msra.mxu0 0.0
  %6395 = vmatprep.subr.mxu0 0.0
  %6396 = vmatpush1.msra.mxu0 0.0
  %6397 = vmatprep.subr.mxu0 0.0
  %6398 = vmatpush1.msra.mxu0 0.0
  %6399 = vmatprep.subr.mxu0 0.0
  %6400 = vmatpush1.msra.mxu0 0.0
  %6401 = vmatprep.subr.mxu0 0.0
  %6402 = vmatpush1.msra.mxu0 0.0
  %6403 = vmatprep.subr.mxu0 0.0
  %6404 = vmatpush1.msra.mxu0 0.0
  %6405 = vmatprep.subr.mxu0 0.0
  %6406 = vmatpush1.msra.mxu0 0.0
  %6407 = vmatprep.subr.mxu0 0.0
  %6408 = vmatpush1.msra.mxu0 0.0
  %6409 = vmatprep.subr.mxu0 0.0
  %6410 = vmatpush1.msra.mxu0 0.0
  %6411 = vmatprep.subr.mxu0 0.0
  %6412 = vmatpush1.msra.mxu0 0.0
  %6413 = vmatprep.subr.mxu0 0.0
  %6414 = vmatpush1.msra.mxu0 0.0
  %6415 = vmatprep.subr.mxu0 0.0
  %6416 = vmatpush1.msra.mxu0 0.0
  %6417 = vmatprep.subr.mxu0 0.0
  %6418 = vmatpush1.msra.mxu0 0.0
  %6419 = vmatprep.subr.mxu0 0.0
  %6420 = vmatpush1.msra.mxu0 0.0
  %6421 = vmatprep.subr.mxu0 0.0
  %6422 = vmatpush1.msra.mxu0 0.0
  %6423 = vmatprep.subr.mxu0 0.0
  %6424 = vmatpush1.msra.mxu0 0.0
  %6425 = vmatprep.subr.mxu0 0.0
  %6426 = vmatpush1.msra.mxu0 0.0
  %6427 = vmatprep.subr.mxu0 0.0
  %6428 = vmatpush1.msra.mxu0 0.0
  %6429 = vmatprep.subr.mxu0 0.0
  %6430 = vmatpush1.msra.mxu0 0.0
  %6431 = vmatprep.subr.mxu0 0.0
  %6432 = vmatpush1.msra.mxu0 0.0
  %6433 = vmatprep.subr.mxu0 0.0
  %6434 = vmatpush1.msra.mxu0 0.0
  %6435 = vmatprep.subr.mxu0 0.0
  %6436 = vmatpush1.msra.mxu0 0.0
  %6437 = vmatprep.subr.mxu0 0.0
  %6438 = vmatpush1.msra.mxu0 0.0
  %6439 = vmatprep.subr.mxu0 0.0
  %6440 = vmatpush1.msra.mxu0 0.0
  %6441 = vmatprep.subr.mxu0 0.0
  %6442 = vmatpush1.msra.mxu0 0.0
  %6443 = vmatprep.subr.mxu0 0.0
  %6444 = vmatpush1.msra.mxu0 0.0
  %6445 = vmatprep.subr.mxu0 0.0
  %6446 = vmatpush1.msra.mxu0 0.0
  %6447 = vmatprep.subr.mxu0 0.0
  %6448 = vmatpush1.msra.mxu0 0.0
  %6449 = vmatprep.mubr.f32.mxu0 0.0
  %6450 = vmatmul.mubr.f32.gmra.mrb[0].mxu0 %v6378
  %v6451 = vpop.f32.mrb[0].mxu0
  %v6452 = vadd.f32 0.0, %v6451
  %v6453 = vpop.f32.mrb[0].mxu0
  %6454 = vmatprep.mubr.f32.mxu0 0.0
  %6455 = vmatmul.mubr.f32.gmra.mrb[0].mxu0 %v6381
  %v6456 = vpop.f32.mrb[0].mxu0
  %v6457 = vadd.f32 0.0, %v6456
  %v6458 = vpop.f32.mrb[0].mxu0
  %6459 = vdwg.mxu0
  %6460 = vrot.lane.b32.xlu0 %v5803, 32
  %v6461 = vpop.permute.xlu0 %6460
  %6462 = vrot.lane.b32.xlu0 %v5807, 32
  %v6463 = vpop.permute.xlu0 %6462
  %6464 = vrot.lane.b32.xlu0 %v5805, 32
  %v6465 = vpop.permute.xlu0 %6464
  %6466 = vrot.lane.b32.xlu0 %v5809, 32
  %v6467 = vpop.permute.xlu0 %6466
  %v6468 = vsel %vm1677, %v6461, 0
  %v6470 = vsel %vm1677, %v6463, 0
  %v6472 = vsel %vm1677, %v6465, 0
  %v6474 = vsel %vm1677, %v6467, 0
  %6476 = vmatprep.subr.mxu0 0.0
  %6477 = vmatpush1.xpose.msra.mxu0 %v6472
  %6478 = vmatprep.subr.mxu0 0.0
  %6479 = vmatpush1.xpose.msra.mxu0 %v6474
  %6480 = vmatprep.subr.mxu0 0.0
  %6481 = vmatpush1.xpose.msra.mxu0 0.0
  %6482 = vmatprep.subr.mxu0 0.0
  %6483 = vmatpush1.xpose.msra.mxu0 0.0
  %6484 = vmatprep.subr.mxu0 0.0
  %6485 = vmatpush1.xpose.msra.mxu0 0.0
  %6486 = vmatprep.subr.mxu0 0.0
  %6487 = vmatpush1.xpose.msra.mxu0 0.0
  %6488 = vmatprep.subr.mxu0 0.0
  %6489 = vmatpush1.xpose.msra.mxu0 0.0
  %6490 = vmatprep.subr.mxu0 0.0
  %6491 = vmatpush1.xpose.msra.mxu0 0.0
  %6492 = vmatprep.subr.mxu0 0.0
  %6493 = vmatpush1.xpose.msra.mxu0 0.0
  %6494 = vmatprep.subr.mxu0 0.0
  %6495 = vmatpush1.xpose.msra.mxu0 0.0
  %6496 = vmatprep.subr.mxu0 0.0
  %6497 = vmatpush1.xpose.msra.mxu0 0.0
  %6498 = vmatprep.subr.mxu0 0.0
  %6499 = vmatpush1.xpose.msra.mxu0 0.0
  %6500 = vmatprep.subr.mxu0 0.0
  %6501 = vmatpush1.xpose.msra.mxu0 0.0
  %6502 = vmatprep.subr.mxu0 0.0
  %6503 = vmatpush1.xpose.msra.mxu0 0.0
  %6504 = vmatprep.subr.mxu0 0.0
  %6505 = vmatpush1.xpose.msra.mxu0 0.0
  %6506 = vmatprep.subr.mxu0 0.0
  %6507 = vmatpush1.xpose.msra.mxu0 0.0
  %6508 = vmatprep.subr.mxu0 0.0
  %6509 = vmatpush1.xpose.msra.mxu0 0.0
  %6510 = vmatprep.subr.mxu0 0.0
  %6511 = vmatpush1.xpose.msra.mxu0 0.0
  %6512 = vmatprep.subr.mxu0 0.0
  %6513 = vmatpush1.xpose.msra.mxu0 0.0
  %6514 = vmatprep.subr.mxu0 0.0
  %6515 = vmatpush1.xpose.msra.mxu0 0.0
  %6516 = vmatprep.subr.mxu0 0.0
  %6517 = vmatpush1.xpose.msra.mxu0 0.0
  %6518 = vmatprep.subr.mxu0 0.0
  %6519 = vmatpush1.xpose.msra.mxu0 0.0
  %6520 = vmatprep.subr.mxu0 0.0
  %6521 = vmatpush1.xpose.msra.mxu0 0.0
  %6522 = vmatprep.subr.mxu0 0.0
  %6523 = vmatpush1.xpose.msra.mxu0 0.0
  %6524 = vmatprep.subr.mxu0 0.0
  %6525 = vmatpush1.xpose.msra.mxu0 0.0
  %6526 = vmatprep.subr.mxu0 0.0
  %6527 = vmatpush1.xpose.msra.mxu0 0.0
  %6528 = vmatprep.subr.mxu0 0.0
  %6529 = vmatpush1.xpose.msra.mxu0 0.0
  %6530 = vmatprep.subr.mxu0 0.0
  %6531 = vmatpush1.xpose.msra.mxu0 0.0
  %6532 = vmatprep.subr.mxu0 0.0
  %6533 = vmatpush1.xpose.msra.mxu0 0.0
  %6534 = vmatprep.subr.mxu0 0.0
  %6535 = vmatpush1.xpose.msra.mxu0 0.0
  %6536 = vmatprep.subr.mxu0 0.0
  %6537 = vmatpush1.xpose.msra.mxu0 0.0
  %6538 = vmatprep.subr.mxu0 0.0
  %6539 = vmatpush1.xpose.msra.mxu0 0.0
  %6540 = vmatprep.mubr.f32.mxu0 0.0
  %6541 = vmatmul.mubr.f32.gmra.mrb[0].mxu0 %v6468
  %v6542 = vpop.f32.mrb[0].mxu0
  %v6543 = vadd.f32 0.0, %v6542
  %v6544 = vpop.f32.mrb[0].mxu0
  %6545 = vmatprep.mubr.f32.mxu0 0.0
  %6546 = vmatmul.mubr.f32.gmra.mrb[0].mxu0 %v6470
  %v6547 = vpop.f32.mrb[0].mxu0
  %v6548 = vadd.f32 0.0, %v6547
  %v6549 = vpop.f32.mrb[0].mxu0
  %6550 = vdwg.mxu0
  %v6551 = vmul.f32 %v6543, 0.17677669
  %v6552 = vmul.f32 %v6548, 0.17677669
  %v6553 = vadd.f32 %v6551, %v167
  %v6554 = vadd.f32 %v6552, %v168
  %v6555 = vsel %vm926, %v6553, -inf
  %6556 = vmax.xlane.f32.xlu0 %v6555
  %v6557 = vpop.xlane.xlu0 %6556
  %v6558 = vsel %vm930, %v6554, -inf
  %6559 = vmax.xlane.f32.xlu0 %v6558
  %v6560 = vpop.xlane.xlu0 %6559
  %v6561 = vsub.f32 %v6553, %v6557
  %v6562 = vsub.f32 %v6554, %v6560
  %v6563 = vmul.f32 %v6561, 1.442695
  %v6564 = vpow.pop %v6563
  %v6565 = vmul.f32 %v6562, 1.442695
  %v6566 = vpow.pop %v6565
  %v6567 = vsel %vm926, %v6564, 0.0
  %6568 = vadd.xlane.f32.xlu0 %v6567
  %v6569 = vpop.xlane.xlu0 %6568
  %v6570 = vsel %vm930, %v6566, 0.0
  %6571 = vadd.xlane.f32.xlu0 %v6570
  %v6572 = vpop.xlane.xlu0 %6571
  %v6573 = vrcp.pop %v6569
  %v6574 = vmul.f32 %v6564, %v6573
  %v6575 = vrcp.pop %v6572
  %v6576 = vmul.f32 %v6566, %v6575
  %6577 = vrot.lane.b32.xlu0 %v5846, 32
  %v6578 = vpop.permute.xlu0 %6577
  %6579 = vrot.lane.b32.xlu0 %v5849, 32
  %v6580 = vpop.permute.xlu0 %6579
  %v6583 = vsel %vm926, %v6574, 0
  %v6586 = vsel %vm926, %v6576, 0
  %v6588 = vsel %vm956, %v6580, 0
  %6590 = vmatprep.subr.mxu0 0.0
  %6591 = vmatpush1.msra.mxu0 %v6578
  %6592 = vmatprep.subr.mxu0 0.0
  %6593 = vmatpush1.msra.mxu0 %v6588
  %6594 = vmatprep.subr.mxu0 0.0
  %6595 = vmatpush1.msra.mxu0 0.0
  %6596 = vmatprep.subr.mxu0 0.0
  %6597 = vmatpush1.msra.mxu0 0.0
  %6598 = vmatprep.subr.mxu0 0.0
  %6599 = vmatpush1.msra.mxu0 0.0
  %6600 = vmatprep.subr.mxu0 0.0
  %6601 = vmatpush1.msra.mxu0 0.0
  %6602 = vmatprep.subr.mxu0 0.0
  %6603 = vmatpush1.msra.mxu0 0.0
  %6604 = vmatprep.subr.mxu0 0.0
  %6605 = vmatpush1.msra.mxu0 0.0
  %6606 = vmatprep.subr.mxu0 0.0
  %6607 = vmatpush1.msra.mxu0 0.0
  %6608 = vmatprep.subr.mxu0 0.0
  %6609 = vmatpush1.msra.mxu0 0.0
  %6610 = vmatprep.subr.mxu0 0.0
  %6611 = vmatpush1.msra.mxu0 0.0
  %6612 = vmatprep.subr.mxu0 0.0
  %6613 = vmatpush1.msra.mxu0 0.0
  %6614 = vmatprep.subr.mxu0 0.0
  %6615 = vmatpush1.msra.mxu0 0.0
  %6616 = vmatprep.subr.mxu0 0.0
  %6617 = vmatpush1.msra.mxu0 0.0
  %6618 = vmatprep.subr.mxu0 0.0
  %6619 = vmatpush1.msra.mxu0 0.0
  %6620 = vmatprep.subr.mxu0 0.0
  %6621 = vmatpush1.msra.mxu0 0.0
  %6622 = vmatprep.subr.mxu0 0.0
  %6623 = vmatpush1.msra.mxu0 0.0
  %6624 = vmatprep.subr.mxu0 0.0
  %6625 = vmatpush1.msra.mxu0 0.0
  %6626 = vmatprep.subr.mxu0 0.0
  %6627 = vmatpush1.msra.mxu0 0.0
  %6628 = vmatprep.subr.mxu0 0.0
  %6629 = vmatpush1.msra.mxu0 0.0
  %6630 = vmatprep.subr.mxu0 0.0
  %6631 = vmatpush1.msra.mxu0 0.0
  %6632 = vmatprep.subr.mxu0 0.0
  %6633 = vmatpush1.msra.mxu0 0.0
  %6634 = vmatprep.subr.mxu0 0.0
  %6635 = vmatpush1.msra.mxu0 0.0
  %6636 = vmatprep.subr.mxu0 0.0
  %6637 = vmatpush1.msra.mxu0 0.0
  %6638 = vmatprep.subr.mxu0 0.0
  %6639 = vmatpush1.msra.mxu0 0.0
  %6640 = vmatprep.subr.mxu0 0.0
  %6641 = vmatpush1.msra.mxu0 0.0
  %6642 = vmatprep.subr.mxu0 0.0
  %6643 = vmatpush1.msra.mxu0 0.0
  %6644 = vmatprep.subr.mxu0 0.0
  %6645 = vmatpush1.msra.mxu0 0.0
  %6646 = vmatprep.subr.mxu0 0.0
  %6647 = vmatpush1.msra.mxu0 0.0
  %6648 = vmatprep.subr.mxu0 0.0
  %6649 = vmatpush1.msra.mxu0 0.0
  %6650 = vmatprep.subr.mxu0 0.0
  %6651 = vmatpush1.msra.mxu0 0.0
  %6652 = vmatprep.subr.mxu0 0.0
  %6653 = vmatpush1.msra.mxu0 0.0
  %6654 = vmatprep.mubr.f32.mxu0 0.0
  %6655 = vmatmul.mubr.f32.gmra.mrb[0].mxu0 %v6583
  %v6656 = vpop.f32.mrb[0].mxu0
  %v6657 = vadd.f32 0.0, %v6656
  %v6658 = vpop.f32.mrb[0].mxu0
  %6659 = vmatprep.mubr.f32.mxu0 0.0
  %6660 = vmatmul.mubr.f32.gmra.mrb[0].mxu0 %v6586
  %v6661 = vpop.f32.mrb[0].mxu0
  %v6662 = vadd.f32 0.0, %v6661
  %v6663 = vpop.f32.mrb[0].mxu0
  %6664 = vdwg.mxu0
  %6667 = vrot.lane.b32.xlu0 %v6247, 32
  %v6668 = vpop.permute.xlu0 %6667
  %6669 = vrot.lane.b32.xlu0 %v6252, 32
  %v6670 = vpop.permute.xlu0 %6669
  %6675 = vrot.lane.b32.xlu0 %v6452, 64
  %v6676 = vpop.permute.xlu0 %6675
  %6677 = vrot.lane.b32.xlu0 %v6457, 64
  %v6678 = vpop.permute.xlu0 %6677
  %6683 = vrot.lane.b32.xlu0 %v6657, 96
  %v6684 = vpop.permute.xlu0 %6683
  %6685 = vrot.lane.b32.xlu0 %v6662, 96
  %v6686 = vpop.permute.xlu0 %6685
  %v6689 = vsel %vm1677, %v6041, %v6668
  %v6690 = vsel %vm1677, %v6046, %v6670
  %v6691 = vsel %vm696, %v6689, %v6676
  %v6692 = vsel %vm696, %v6690, %v6678
  %v6693 = vsel %vm4732, %v6691, %v6684
  %v6694 = vsel %vm4732, %v6692, %v6686
  %v6695 = vpack.c.bf16 %v6694, %v6693
  %v6696 = vld [vmem:[%s65] sm:$0xf]
  %v6697 = vld [vmem:[%s65 + $0x4] sm:$0xf]
  %v6698 = vld [vmem:[%s65 + $0x8] sm:$0xf]
  %v6699 = vld [vmem:[%s65 + $0xc] sm:$0xf]
  %v6700 = vld [vmem:[%s65 + $0x10] sm:$0xf]
  %v6701 = vld [vmem:[%s65 + $0x14] sm:$0xf]
  %v6702 = vld [vmem:[%s65 + $0x18] sm:$0xf]
  %v6703 = vld [vmem:[%s65 + $0x1c] sm:$0xf]
  %v6704 = vld [vmem:[%s65 + $0x20] sm:$0xf]
  %v6705 = vld [vmem:[%s65 + $0x24] sm:$0xf]
  %v6706 = vld [vmem:[%s65 + $0x28] sm:$0xf]
  %v6707 = vld [vmem:[%s65 + $0x2c] sm:$0xf]
  %v6708 = vld [vmem:[%s65 + $0x30] sm:$0xf]
  %v6709 = vld [vmem:[%s65 + $0x34] sm:$0xf]
  %v6710 = vld [vmem:[%s65 + $0x38] sm:$0xf]
  %v6711 = vld [vmem:[%s65 + $0x3c] sm:$0xf]
  %v6712 = vld [vmem:[%s67] sm:$0x1]
  %v6714 = vlaneseq
  %v6715 = vshrl.u32 %v6714, 7
  %v6716 = vsub.s32 0, %v6715
  %v6717 = vrot.slane %v6712, %v6716
  %v6735 = vunpack.c.l.b16 %v6696
  %v6736 = vunpack.c.l.b16 %v6697
  %v6737 = vunpack.c.l.b16 %v6698
  %v6738 = vunpack.c.l.b16 %v6699
  %v6739 = vunpack.c.l.b16 %v6700
  %v6740 = vunpack.c.l.b16 %v6701
  %v6741 = vunpack.c.l.b16 %v6702
  %v6742 = vunpack.c.l.b16 %v6703
  %v6743 = vunpack.c.l.b16 %v6704
  %v6744 = vunpack.c.l.b16 %v6705
  %v6745 = vunpack.c.l.b16 %v6706
  %v6746 = vunpack.c.l.b16 %v6707
  %v6747 = vunpack.c.l.b16 %v6708
  %v6748 = vunpack.c.l.b16 %v6709
  %v6749 = vunpack.c.l.b16 %v6710
  %v6750 = vunpack.c.l.b16 %v6711
  %v6751 = vpack.c.b16 %v6736, %v6735
  %v6752 = vpack.c.b16 %v6738, %v6737
  %v6753 = vpack.c.b16 %v6740, %v6739
  %v6754 = vpack.c.b16 %v6742, %v6741
  %v6755 = vpack.c.b16 %v6744, %v6743
  %v6756 = vpack.c.b16 %v6746, %v6745
  %v6757 = vpack.c.b16 %v6748, %v6747
  %v6758 = vpack.c.b16 %v6750, %v6749
  %6767 = vmatprep.subr.bf16.mxu0 0
  %6768 = vmatpush1.bf16.msra.mxu0 %v6751
  %6769 = vmatprep.subr.bf16.mxu0 0
  %6770 = vmatpush1.bf16.msra.mxu0 %v6752
  %6771 = vmatprep.subr.bf16.mxu0 0
  %6772 = vmatpush1.bf16.msra.mxu0 %v6753
  %6773 = vmatprep.subr.bf16.mxu0 0
  %6774 = vmatpush1.bf16.msra.mxu0 %v6754
  %6775 = vmatprep.subr.bf16.mxu0 0
  %6776 = vmatpush1.bf16.msra.mxu0 %v6755
  %6777 = vmatprep.subr.bf16.mxu0 0
  %6778 = vmatpush1.bf16.msra.mxu0 %v6756
  %6779 = vmatprep.subr.bf16.mxu0 0
  %6780 = vmatpush1.bf16.msra.mxu0 %v6757
  %6781 = vmatprep.subr.bf16.mxu0 0
  %6782 = vmatpush1.bf16.msra.mxu0 %v6758
  %6783 = vmatprep.subr.bf16.mxu0 0
  %6784 = vmatpush1.bf16.msra.mxu0 0
  %6785 = vmatprep.subr.bf16.mxu0 0
  %6786 = vmatpush1.bf16.msra.mxu0 0
  %6787 = vmatprep.subr.bf16.mxu0 0
  %6788 = vmatpush1.bf16.msra.mxu0 0
  %6789 = vmatprep.subr.bf16.mxu0 0
  %6790 = vmatpush1.bf16.msra.mxu0 0
  %6791 = vmatprep.subr.bf16.mxu0 0
  %6792 = vmatpush1.bf16.msra.mxu0 0
  %6793 = vmatprep.subr.bf16.mxu0 0
  %6794 = vmatpush1.bf16.msra.mxu0 0
  %6795 = vmatprep.subr.bf16.mxu0 0
  %6796 = vmatpush1.bf16.msra.mxu0 0
  %6797 = vmatprep.subr.bf16.mxu0 0
  %6798 = vmatpush1.bf16.msra.mxu0 0
  %6799 = vmatprep.mubr.bf16.mxu0 0
  %6800 = vmatmul.mubr.bf16.gmra.mrb[0].mxu0 %v6695
  %v6801 = vpop.f32.mrb[0].mxu0
  %v6802 = vadd.f32 %v6717, %v6801
  %v6803 = vpop.f32.mrb[0].mxu0
  %v6804 = vpop.f32.mrb[0].mxu0
  %v6805 = vadd.f32 %v6717, %v6804
  %v6806 = vpop.f32.mrb[0].mxu0
  %6807 = vdwg.mxu0
  %v6808 = vadd.f32 %v5564, %v6802
  %v6809 = vadd.f32 %v5565, %v6805
  %6810 = vadd.xlane.f32.xlu0 %v6808
  %v6811 = vpop.xlane.xlu0 %6810
  %v6812 = vsel %vm956, %v6809, 0.0
  %6813 = vadd.xlane.f32.xlu0 %v6812
  %v6814 = vpop.xlane.xlu0 %6813
  %v6815 = vmul.f32 %v6811, %v3609
  %v6816 = vmul.f32 %v6814, %v3609
  %v6817 = vsub.f32 %v6808, %v6815
  %v6818 = vsub.f32 %v6809, %v6816
  %v6819 = vmul.f32 %v6817, %v6817
  %v6820 = vmul.f32 %v6818, %v6818
  %6821 = vadd.xlane.f32.xlu0 %v6819
  %v6822 = vpop.xlane.xlu0 %6821
  %v6823 = vsel %vm956, %v6820, 0.0
  %6824 = vadd.xlane.f32.xlu0 %v6823
  %v6825 = vpop.xlane.xlu0 %6824
  %v6826 = vmul.f32 %v6822, %v3609
  %v6827 = vmul.f32 %v6825, %v3609
  %v6828 = vadd.f32 %v6826, 1e-06
  %v6829 = vadd.f32 %v6827, 1e-06
  %v6830 = vrsqrt.pop %v6828
  %v6831 = vrsqrt.pop %v6829
  %v6832 = vmul.f32 %v6817, %v6830
  %v6833 = vmul.f32 %v6818, %v6831
  %v6834 = vpack.c.bf16 %v6833, %v6832
  %v6835 = vld [vmem:[%s69] sm:$0xff]
  %v6836 = vld [vmem:[%s69 + $0x8] sm:$0xff]
  %v6837 = vld [vmem:[%s69 + $0x10] sm:$0xff]
  %v6838 = vld [vmem:[%s69 + $0x18] sm:$0xff]
  %v6839 = vld [vmem:[%s69 + $0x20] sm:$0xff]
  %v6840 = vld [vmem:[%s69 + $0x28] sm:$0xff]
  %v6841 = vld [vmem:[%s69 + $0x30] sm:$0xff]
  %v6842 = vld [vmem:[%s69 + $0x38] sm:$0xff]
  %v6843 = vld [vmem:[%s69 + $0x40] sm:$0xff]
  %v6844 = vld [vmem:[%s69 + $0x48] sm:$0xff]
  %v6845 = vld [vmem:[%s69 + $0x50] sm:$0xff]
  %v6846 = vld [vmem:[%s69 + $0x58] sm:$0xff]
  %v6847 = vld [vmem:[%s69 + $0x60] sm:$0xff]
  %v6848 = vld [vmem:[%s69 + $0x68] sm:$0xff]
  %v6849 = vld [vmem:[%s69 + $0x70] sm:$0xff]
  %v6850 = vld [vmem:[%s69 + $0x78] sm:$0xff]
  %v6851 = vld [vmem:[%s69 + $0x80] sm:$0xff]
  %v6852 = vld [vmem:[%s69 + $0x88] sm:$0xff]
  %v6853 = vld [vmem:[%s69 + $0x90] sm:$0xff]
  %v6854 = vld [vmem:[%s69 + $0x98] sm:$0xff]
  %v6855 = vld [vmem:[%s69 + $0xa0] sm:$0xff]
  %v6856 = vld [vmem:[%s69 + $0xa8] sm:$0xff]
  %v6857 = vld [vmem:[%s69 + $0xb0] sm:$0xff]
  %v6858 = vld [vmem:[%s69 + $0xb8] sm:$0xff]
  %v6859 = vld [vmem:[%s69 + $0xc0] sm:$0xff]
  %v6860 = vld [vmem:[%s69 + $0xc8] sm:$0xff]
  %v6861 = vld [vmem:[%s69 + $0xd0] sm:$0xff]
  %v6862 = vld [vmem:[%s69 + $0xd8] sm:$0xff]
  %v6863 = vld [vmem:[%s69 + $0xe0] sm:$0xff]
  %v6864 = vld [vmem:[%s69 + $0xe8] sm:$0xff]
  %v6865 = vld [vmem:[%s69 + $0xf0] sm:$0xff]
  %v6866 = vld [vmem:[%s69 + $0xf8] sm:$0xff]
  %v6867 = vld [vmem:[%s71] sm:$0xf]
  %v6869 = vlaneseq
  %v6870 = vshrl.u32 %v6869, 7
  %v6871 = vsub.s32 0, %v6870
  %v6872 = vrot.slane %v6867, %v6871
  %v6873 = vlaneseq
  %v6874 = vshrl.u32 %v6873, 7
  %v6875 = vsub.s32 1, %v6874
  %v6876 = vrot.slane %v6867, %v6875
  %v6877 = vlaneseq
  %v6878 = vshrl.u32 %v6877, 7
  %v6879 = vsub.s32 2, %v6878
  %v6880 = vrot.slane %v6867, %v6879
  %v6881 = vlaneseq
  %v6882 = vshrl.u32 %v6881, 7
  %v6883 = vsub.s32 3, %v6882
  %v6884 = vrot.slane %v6867, %v6883
  %v6921 = vunpack.c.l.b16 %v6835
  %v6922 = vunpack.c.h.b16 %v6835
  %v6923 = vunpack.c.l.b16 %v6836
  %v6924 = vunpack.c.h.b16 %v6836
  %v6925 = vunpack.c.l.b16 %v6837
  %v6926 = vunpack.c.h.b16 %v6837
  %v6927 = vunpack.c.l.b16 %v6838
  %v6928 = vunpack.c.h.b16 %v6838
  %v6929 = vunpack.c.l.b16 %v6839
  %v6930 = vunpack.c.h.b16 %v6839
  %v6931 = vunpack.c.l.b16 %v6840
  %v6932 = vunpack.c.h.b16 %v6840
  %v6933 = vunpack.c.l.b16 %v6841
  %v6934 = vunpack.c.h.b16 %v6841
  %v6935 = vunpack.c.l.b16 %v6842
  %v6936 = vunpack.c.h.b16 %v6842
  %v6937 = vunpack.c.l.b16 %v6843
  %v6938 = vunpack.c.h.b16 %v6843
  %v6939 = vunpack.c.l.b16 %v6844
  %v6940 = vunpack.c.h.b16 %v6844
  %v6941 = vunpack.c.l.b16 %v6845
  %v6942 = vunpack.c.h.b16 %v6845
  %v6943 = vunpack.c.l.b16 %v6846
  %v6944 = vunpack.c.h.b16 %v6846
  %v6945 = vunpack.c.l.b16 %v6847
  %v6946 = vunpack.c.h.b16 %v6847
  %v6947 = vunpack.c.l.b16 %v6848
  %v6948 = vunpack.c.h.b16 %v6848
  %v6949 = vunpack.c.l.b16 %v6849
  %v6950 = vunpack.c.h.b16 %v6849
  %v6951 = vunpack.c.l.b16 %v6850
  %v6952 = vunpack.c.h.b16 %v6850
  %v6953 = vunpack.c.l.b16 %v6851
  %v6954 = vunpack.c.h.b16 %v6851
  %v6955 = vunpack.c.l.b16 %v6852
  %v6956 = vunpack.c.h.b16 %v6852
  %v6957 = vunpack.c.l.b16 %v6853
  %v6958 = vunpack.c.h.b16 %v6853
  %v6959 = vunpack.c.l.b16 %v6854
  %v6960 = vunpack.c.h.b16 %v6854
  %v6961 = vunpack.c.l.b16 %v6855
  %v6962 = vunpack.c.h.b16 %v6855
  %v6963 = vunpack.c.l.b16 %v6856
  %v6964 = vunpack.c.h.b16 %v6856
  %v6965 = vunpack.c.l.b16 %v6857
  %v6966 = vunpack.c.h.b16 %v6857
  %v6967 = vunpack.c.l.b16 %v6858
  %v6968 = vunpack.c.h.b16 %v6858
  %v6969 = vunpack.c.l.b16 %v6859
  %v6970 = vunpack.c.h.b16 %v6859
  %v6971 = vunpack.c.l.b16 %v6860
  %v6972 = vunpack.c.h.b16 %v6860
  %v6973 = vunpack.c.l.b16 %v6861
  %v6974 = vunpack.c.h.b16 %v6861
  %v6975 = vunpack.c.l.b16 %v6862
  %v6976 = vunpack.c.h.b16 %v6862
  %v6977 = vunpack.c.l.b16 %v6863
  %v6978 = vunpack.c.h.b16 %v6863
  %v6979 = vunpack.c.l.b16 %v6864
  %v6980 = vunpack.c.h.b16 %v6864
  %v6981 = vunpack.c.l.b16 %v6865
  %v6982 = vunpack.c.h.b16 %v6865
  %v6983 = vunpack.c.l.b16 %v6866
  %v6984 = vunpack.c.h.b16 %v6866
  %v6985 = vpack.c.b16 %v6925, %v6921
  %v6986 = vpack.c.b16 %v6926, %v6922
  %v6987 = vpack.c.b16 %v6927, %v6923
  %v6988 = vpack.c.b16 %v6928, %v6924
  %v6989 = vpack.c.b16 %v6933, %v6929
  %v6990 = vpack.c.b16 %v6934, %v6930
  %v6991 = vpack.c.b16 %v6935, %v6931
  %v6992 = vpack.c.b16 %v6936, %v6932
  %v6993 = vpack.c.b16 %v6941, %v6937
  %v6994 = vpack.c.b16 %v6942, %v6938
  %v6995 = vpack.c.b16 %v6943, %v6939
  %v6996 = vpack.c.b16 %v6944, %v6940
  %v6997 = vpack.c.b16 %v6949, %v6945
  %v6998 = vpack.c.b16 %v6950, %v6946
  %v6999 = vpack.c.b16 %v6951, %v6947
  %v7000 = vpack.c.b16 %v6952, %v6948
  %v7001 = vpack.c.b16 %v6957, %v6953
  %v7002 = vpack.c.b16 %v6958, %v6954
  %v7003 = vpack.c.b16 %v6959, %v6955
  %v7004 = vpack.c.b16 %v6960, %v6956
  %v7005 = vpack.c.b16 %v6965, %v6961
  %v7006 = vpack.c.b16 %v6966, %v6962
  %v7007 = vpack.c.b16 %v6967, %v6963
  %v7008 = vpack.c.b16 %v6968, %v6964
  %v7009 = vpack.c.b16 %v6973, %v6969
  %v7010 = vpack.c.b16 %v6974, %v6970
  %v7011 = vpack.c.b16 %v6975, %v6971
  %v7012 = vpack.c.b16 %v6976, %v6972
  %v7013 = vpack.c.b16 %v6981, %v6977
  %v7014 = vpack.c.b16 %v6982, %v6978
  %v7015 = vpack.c.b16 %v6983, %v6979
  %v7016 = vpack.c.b16 %v6984, %v6980
  %7049 = vmatprep.subr.bf16.mxu0 %v6986
  %7050 = vmatpush1.bf16.msra.mxu0 %v6985
  %7051 = vmatprep.subr.bf16.mxu0 %v6990
  %7052 = vmatpush1.bf16.msra.mxu0 %v6989
  %7053 = vmatprep.subr.bf16.mxu0 %v6994
  %7054 = vmatpush1.bf16.msra.mxu0 %v6993
  %7055 = vmatprep.subr.bf16.mxu0 %v6998
  %7056 = vmatpush1.bf16.msra.mxu0 %v6997
  %7057 = vmatprep.subr.bf16.mxu0 %v7002
  %7058 = vmatpush1.bf16.msra.mxu0 %v7001
  %7059 = vmatprep.subr.bf16.mxu0 %v7006
  %7060 = vmatpush1.bf16.msra.mxu0 %v7005
  %7061 = vmatprep.subr.bf16.mxu0 %v7010
  %7062 = vmatpush1.bf16.msra.mxu0 %v7009
  %7063 = vmatprep.subr.bf16.mxu0 %v7014
  %7064 = vmatpush1.bf16.msra.mxu0 %v7013
  %7065 = vmatprep.subr.bf16.mxu0 0
  %7066 = vmatpush1.bf16.msra.mxu0 0
  %7067 = vmatprep.subr.bf16.mxu0 0
  %7068 = vmatpush1.bf16.msra.mxu0 0
  %7069 = vmatprep.subr.bf16.mxu0 0
  %7070 = vmatpush1.bf16.msra.mxu0 0
  %7071 = vmatprep.subr.bf16.mxu0 0
  %7072 = vmatpush1.bf16.msra.mxu0 0
  %7073 = vmatprep.subr.bf16.mxu0 0
  %7074 = vmatpush1.bf16.msra.mxu0 0
  %7075 = vmatprep.subr.bf16.mxu0 0
  %7076 = vmatpush1.bf16.msra.mxu0 0
  %7077 = vmatprep.subr.bf16.mxu0 0
  %7078 = vmatpush1.bf16.msra.mxu0 0
  %7079 = vmatprep.subr.bf16.mxu0 0
  %7080 = vmatpush1.bf16.msra.mxu0 0
  %7081 = vmatprep.mubr.bf16.mxu0 0
  %7082 = vmatmul.mubr.bf16.gmra.mrb[0].mxu0 %v6834
  %v7083 = vpop.f32.mrb[0].mxu0
  %v7084 = vadd.f32 %v6872, %v7083
  %v7085 = vpop.f32.mrb[0].mxu0
  %v7086 = vadd.f32 %v6876, %v7085
  %v7087 = vpop.f32.mrb[0].mxu0
  %v7088 = vadd.f32 %v6872, %v7087
  %v7089 = vpop.f32.mrb[0].mxu0
  %v7090 = vadd.f32 %v6876, %v7089
  %7091 = vdwg.mxu0
  %7092 = vmatprep.subr.bf16.mxu0 %v6988
  %7093 = vmatpush1.bf16.msra.mxu0 %v6987
  %7094 = vmatprep.subr.bf16.mxu0 %v6992
  %7095 = vmatpush1.bf16.msra.mxu0 %v6991
  %7096 = vmatprep.subr.bf16.mxu0 %v6996
  %7097 = vmatpush1.bf16.msra.mxu0 %v6995
  %7098 = vmatprep.subr.bf16.mxu0 %v7000
  %7099 = vmatpush1.bf16.msra.mxu0 %v6999
  %7100 = vmatprep.subr.bf16.mxu0 %v7004
  %7101 = vmatpush1.bf16.msra.mxu0 %v7003
  %7102 = vmatprep.subr.bf16.mxu0 %v7008
  %7103 = vmatpush1.bf16.msra.mxu0 %v7007
  %7104 = vmatprep.subr.bf16.mxu0 %v7012
  %7105 = vmatpush1.bf16.msra.mxu0 %v7011
  %7106 = vmatprep.subr.bf16.mxu0 %v7016
  %7107 = vmatpush1.bf16.msra.mxu0 %v7015
  %7108 = vmatprep.subr.bf16.mxu0 0
  %7109 = vmatpush1.bf16.msra.mxu0 0
  %7110 = vmatprep.subr.bf16.mxu0 0
  %7111 = vmatpush1.bf16.msra.mxu0 0
  %7112 = vmatprep.subr.bf16.mxu0 0
  %7113 = vmatpush1.bf16.msra.mxu0 0
  %7114 = vmatprep.subr.bf16.mxu0 0
  %7115 = vmatpush1.bf16.msra.mxu0 0
  %7116 = vmatprep.subr.bf16.mxu0 0
  %7117 = vmatpush1.bf16.msra.mxu0 0
  %7118 = vmatprep.subr.bf16.mxu0 0
  %7119 = vmatpush1.bf16.msra.mxu0 0
  %7120 = vmatprep.subr.bf16.mxu0 0
  %7121 = vmatpush1.bf16.msra.mxu0 0
  %7122 = vmatprep.subr.bf16.mxu0 0
  %7123 = vmatpush1.bf16.msra.mxu0 0
  %7124 = vmatprep.mubr.bf16.mxu0 0
  %7125 = vmatmul.mubr.bf16.gmra.mrb[0].mxu0 %v6834
  %v7126 = vpop.f32.mrb[0].mxu0
  %v7127 = vadd.f32 %v6880, %v7126
  %v7128 = vpop.f32.mrb[0].mxu0
  %v7129 = vadd.f32 %v6884, %v7128
  %v7130 = vpop.f32.mrb[0].mxu0
  %v7131 = vadd.f32 %v6880, %v7130
  %v7132 = vpop.f32.mrb[0].mxu0
  %v7133 = vadd.f32 %v6884, %v7132
  %7134 = vdwg.mxu0
  %v7135 = vmul.f32 %v7084, 0.5
  %v7136 = vmul.f32 %v7086, 0.5
  %v7137 = vmul.f32 %v7127, 0.5
  %v7138 = vmul.f32 %v7129, 0.5
  %v7139 = vmul.f32 %v7088, 0.5
  %v7140 = vmul.f32 %v7090, 0.5
  %v7141 = vmul.f32 %v7131, 0.5
  %v7142 = vmul.f32 %v7133, 0.5
  %v7143 = vmul.f32 %v7084, 0.70710677
  %v7144 = vmul.f32 %v7086, 0.70710677
  %v7145 = vmul.f32 %v7127, 0.70710677
  %v7146 = vmul.f32 %v7129, 0.70710677
  %v7147 = vmul.f32 %v7088, 0.70710677
  %v7148 = vmul.f32 %v7090, 0.70710677
  %v7149 = vmul.f32 %v7131, 0.70710677
  %v7150 = vmul.f32 %v7133, 0.70710677
  %v7151 = verf.f32.pop %v7143
  %v7152 = verf.f32.pop %v7144
  %v7153 = verf.f32.pop %v7145
  %v7154 = verf.f32.pop %v7146
  %v7155 = verf.f32.pop %v7147
  %v7156 = verf.f32.pop %v7148
  %v7157 = verf.f32.pop %v7149
  %v7158 = verf.f32.pop %v7150
  %v7159 = vadd.f32 %v7151, 1.0
  %v7160 = vadd.f32 %v7152, 1.0
  %v7161 = vadd.f32 %v7153, 1.0
  %v7162 = vadd.f32 %v7154, 1.0
  %v7163 = vadd.f32 %v7155, 1.0
  %v7164 = vadd.f32 %v7156, 1.0
  %v7165 = vadd.f32 %v7157, 1.0
  %v7166 = vadd.f32 %v7158, 1.0
  %v7167 = vmul.f32 %v7135, %v7159
  %v7168 = vmul.f32 %v7136, %v7160
  %v7169 = vmul.f32 %v7137, %v7161
  %v7170 = vmul.f32 %v7138, %v7162
  %v7171 = vmul.f32 %v7139, %v7163
  %v7172 = vmul.f32 %v7140, %v7164
  %v7173 = vmul.f32 %v7141, %v7165
  %v7174 = vmul.f32 %v7142, %v7166
  %v7175 = vpack.c.bf16 %v7171, %v7167
  %v7176 = vpack.c.bf16 %v7172, %v7168
  %v7177 = vpack.c.bf16 %v7173, %v7169
  %v7178 = vpack.c.bf16 %v7174, %v7170
  %v7179 = vld [vmem:[%s73] sm:$0xf]
  %v7180 = vld [vmem:[%s73 + $0x4] sm:$0xf]
  %v7181 = vld [vmem:[%s73 + $0x8] sm:$0xf]
  %v7182 = vld [vmem:[%s73 + $0xc] sm:$0xf]
  %v7183 = vld [vmem:[%s73 + $0x10] sm:$0xf]
  %v7184 = vld [vmem:[%s73 + $0x14] sm:$0xf]
  %v7185 = vld [vmem:[%s73 + $0x18] sm:$0xf]
  %v7186 = vld [vmem:[%s73 + $0x1c] sm:$0xf]
  %v7187 = vld [vmem:[%s73 + $0x20] sm:$0xf]
  %v7188 = vld [vmem:[%s73 + $0x24] sm:$0xf]
  %v7189 = vld [vmem:[%s73 + $0x28] sm:$0xf]
  %v7190 = vld [vmem:[%s73 + $0x2c] sm:$0xf]
  %v7191 = vld [vmem:[%s73 + $0x30] sm:$0xf]
  %v7192 = vld [vmem:[%s73 + $0x34] sm:$0xf]
  %v7193 = vld [vmem:[%s73 + $0x38] sm:$0xf]
  %v7194 = vld [vmem:[%s73 + $0x3c] sm:$0xf]
  %v7195 = vld [vmem:[%s73 + $0x40] sm:$0xf]
  %v7196 = vld [vmem:[%s73 + $0x44] sm:$0xf]
  %v7197 = vld [vmem:[%s73 + $0x48] sm:$0xf]
  %v7198 = vld [vmem:[%s73 + $0x4c] sm:$0xf]
  %v7199 = vld [vmem:[%s73 + $0x50] sm:$0xf]
  %v7200 = vld [vmem:[%s73 + $0x54] sm:$0xf]
  %v7201 = vld [vmem:[%s73 + $0x58] sm:$0xf]
  %v7202 = vld [vmem:[%s73 + $0x5c] sm:$0xf]
  %v7203 = vld [vmem:[%s73 + $0x60] sm:$0xf]
  %v7204 = vld [vmem:[%s73 + $0x64] sm:$0xf]
  %v7205 = vld [vmem:[%s73 + $0x68] sm:$0xf]
  %v7206 = vld [vmem:[%s73 + $0x6c] sm:$0xf]
  %v7207 = vld [vmem:[%s73 + $0x70] sm:$0xf]
  %v7208 = vld [vmem:[%s73 + $0x74] sm:$0xf]
  %v7209 = vld [vmem:[%s73 + $0x78] sm:$0xf]
  %v7210 = vld [vmem:[%s73 + $0x7c] sm:$0xf]
  %v7211 = vld [vmem:[%s73 + $0x80] sm:$0xf]
  %v7212 = vld [vmem:[%s73 + $0x84] sm:$0xf]
  %v7213 = vld [vmem:[%s73 + $0x88] sm:$0xf]
  %v7214 = vld [vmem:[%s73 + $0x8c] sm:$0xf]
  %v7215 = vld [vmem:[%s73 + $0x90] sm:$0xf]
  %v7216 = vld [vmem:[%s73 + $0x94] sm:$0xf]
  %v7217 = vld [vmem:[%s73 + $0x98] sm:$0xf]
  %v7218 = vld [vmem:[%s73 + $0x9c] sm:$0xf]
  %v7219 = vld [vmem:[%s73 + $0xa0] sm:$0xf]
  %v7220 = vld [vmem:[%s73 + $0xa4] sm:$0xf]
  %v7221 = vld [vmem:[%s73 + $0xa8] sm:$0xf]
  %v7222 = vld [vmem:[%s73 + $0xac] sm:$0xf]
  %v7223 = vld [vmem:[%s73 + $0xb0] sm:$0xf]
  %v7224 = vld [vmem:[%s73 + $0xb4] sm:$0xf]
  %v7225 = vld [vmem:[%s73 + $0xb8] sm:$0xf]
  %v7226 = vld [vmem:[%s73 + $0xbc] sm:$0xf]
  %v7227 = vld [vmem:[%s73 + $0xc0] sm:$0xf]
  %v7228 = vld [vmem:[%s73 + $0xc4] sm:$0xf]
  %v7229 = vld [vmem:[%s73 + $0xc8] sm:$0xf]
  %v7230 = vld [vmem:[%s73 + $0xcc] sm:$0xf]
  %v7231 = vld [vmem:[%s73 + $0xd0] sm:$0xf]
  %v7232 = vld [vmem:[%s73 + $0xd4] sm:$0xf]
  %v7233 = vld [vmem:[%s73 + $0xd8] sm:$0xf]
  %v7234 = vld [vmem:[%s73 + $0xdc] sm:$0xf]
  %v7235 = vld [vmem:[%s73 + $0xe0] sm:$0xf]
  %v7236 = vld [vmem:[%s73 + $0xe4] sm:$0xf]
  %v7237 = vld [vmem:[%s73 + $0xe8] sm:$0xf]
  %v7238 = vld [vmem:[%s73 + $0xec] sm:$0xf]
  %v7239 = vld [vmem:[%s73 + $0xf0] sm:$0xf]
  %v7240 = vld [vmem:[%s73 + $0xf4] sm:$0xf]
  %v7241 = vld [vmem:[%s73 + $0xf8] sm:$0xf]
  %v7242 = vld [vmem:[%s73 + $0xfc] sm:$0xf]
  %v7243 = vld [vmem:[%s75] sm:$0x1]
  %v7245 = vlaneseq
  %v7246 = vshrl.u32 %v7245, 7
  %v7247 = vsub.s32 0, %v7246
  %v7248 = vrot.slane %v7243, %v7247
  %v7314 = vunpack.c.l.b16 %v7179
  %v7315 = vunpack.c.l.b16 %v7180
  %v7316 = vunpack.c.l.b16 %v7181
  %v7317 = vunpack.c.l.b16 %v7182
  %v7318 = vunpack.c.l.b16 %v7183
  %v7319 = vunpack.c.l.b16 %v7184
  %v7320 = vunpack.c.l.b16 %v7185
  %v7321 = vunpack.c.l.b16 %v7186
  %v7322 = vunpack.c.l.b16 %v7187
  %v7323 = vunpack.c.l.b16 %v7188
  %v7324 = vunpack.c.l.b16 %v7189
  %v7325 = vunpack.c.l.b16 %v7190
  %v7326 = vunpack.c.l.b16 %v7191
  %v7327 = vunpack.c.l.b16 %v7192
  %v7328 = vunpack.c.l.b16 %v7193
  %v7329 = vunpack.c.l.b16 %v7194
  %v7330 = vunpack.c.l.b16 %v7195
  %v7331 = vunpack.c.l.b16 %v7196
  %v7332 = vunpack.c.l.b16 %v7197
  %v7333 = vunpack.c.l.b16 %v7198
  %v7334 = vunpack.c.l.b16 %v7199
  %v7335 = vunpack.c.l.b16 %v7200
  %v7336 = vunpack.c.l.b16 %v7201
  %v7337 = vunpack.c.l.b16 %v7202
  %v7338 = vunpack.c.l.b16 %v7203
  %v7339 = vunpack.c.l.b16 %v7204
  %v7340 = vunpack.c.l.b16 %v7205
  %v7341 = vunpack.c.l.b16 %v7206
  %v7342 = vunpack.c.l.b16 %v7207
  %v7343 = vunpack.c.l.b16 %v7208
  %v7344 = vunpack.c.l.b16 %v7209
  %v7345 = vunpack.c.l.b16 %v7210
  %v7346 = vunpack.c.l.b16 %v7211
  %v7347 = vunpack.c.l.b16 %v7212
  %v7348 = vunpack.c.l.b16 %v7213
  %v7349 = vunpack.c.l.b16 %v7214
  %v7350 = vunpack.c.l.b16 %v7215
  %v7351 = vunpack.c.l.b16 %v7216
  %v7352 = vunpack.c.l.b16 %v7217
  %v7353 = vunpack.c.l.b16 %v7218
  %v7354 = vunpack.c.l.b16 %v7219
  %v7355 = vunpack.c.l.b16 %v7220
  %v7356 = vunpack.c.l.b16 %v7221
  %v7357 = vunpack.c.l.b16 %v7222
  %v7358 = vunpack.c.l.b16 %v7223
  %v7359 = vunpack.c.l.b16 %v7224
  %v7360 = vunpack.c.l.b16 %v7225
  %v7361 = vunpack.c.l.b16 %v7226
  %v7362 = vunpack.c.l.b16 %v7227
  %v7363 = vunpack.c.l.b16 %v7228
  %v7364 = vunpack.c.l.b16 %v7229
  %v7365 = vunpack.c.l.b16 %v7230
  %v7366 = vunpack.c.l.b16 %v7231
  %v7367 = vunpack.c.l.b16 %v7232
  %v7368 = vunpack.c.l.b16 %v7233
  %v7369 = vunpack.c.l.b16 %v7234
  %v7370 = vunpack.c.l.b16 %v7235
  %v7371 = vunpack.c.l.b16 %v7236
  %v7372 = vunpack.c.l.b16 %v7237
  %v7373 = vunpack.c.l.b16 %v7238
  %v7374 = vunpack.c.l.b16 %v7239
  %v7375 = vunpack.c.l.b16 %v7240
  %v7376 = vunpack.c.l.b16 %v7241
  %v7377 = vunpack.c.l.b16 %v7242
  %v7378 = vpack.c.b16 %v7315, %v7314
  %v7379 = vpack.c.b16 %v7317, %v7316
  %v7380 = vpack.c.b16 %v7319, %v7318
  %v7381 = vpack.c.b16 %v7321, %v7320
  %v7382 = vpack.c.b16 %v7323, %v7322
  %v7383 = vpack.c.b16 %v7325, %v7324
  %v7384 = vpack.c.b16 %v7327, %v7326
  %v7385 = vpack.c.b16 %v7329, %v7328
  %v7386 = vpack.c.b16 %v7331, %v7330
  %v7387 = vpack.c.b16 %v7333, %v7332
  %v7388 = vpack.c.b16 %v7335, %v7334
  %v7389 = vpack.c.b16 %v7337, %v7336
  %v7390 = vpack.c.b16 %v7339, %v7338
  %v7391 = vpack.c.b16 %v7341, %v7340
  %v7392 = vpack.c.b16 %v7343, %v7342
  %v7393 = vpack.c.b16 %v7345, %v7344
  %v7394 = vpack.c.b16 %v7347, %v7346
  %v7395 = vpack.c.b16 %v7349, %v7348
  %v7396 = vpack.c.b16 %v7351, %v7350
  %v7397 = vpack.c.b16 %v7353, %v7352
  %v7398 = vpack.c.b16 %v7355, %v7354
  %v7399 = vpack.c.b16 %v7357, %v7356
  %v7400 = vpack.c.b16 %v7359, %v7358
  %v7401 = vpack.c.b16 %v7361, %v7360
  %v7402 = vpack.c.b16 %v7363, %v7362
  %v7403 = vpack.c.b16 %v7365, %v7364
  %v7404 = vpack.c.b16 %v7367, %v7366
  %v7405 = vpack.c.b16 %v7369, %v7368
  %v7406 = vpack.c.b16 %v7371, %v7370
  %v7407 = vpack.c.b16 %v7373, %v7372
  %v7408 = vpack.c.b16 %v7375, %v7374
  %v7409 = vpack.c.b16 %v7377, %v7376
  %7442 = vmatprep.subr.bf16.mxu0 0
  %7443 = vmatpush1.bf16.msra.mxu0 %v7378
  %7444 = vmatprep.subr.bf16.mxu0 0
  %7445 = vmatpush1.bf16.msra.mxu0 %v7379
  %7446 = vmatprep.subr.bf16.mxu0 0
  %7447 = vmatpush1.bf16.msra.mxu0 %v7380
  %7448 = vmatprep.subr.bf16.mxu0 0
  %7449 = vmatpush1.bf16.msra.mxu0 %v7381
  %7450 = vmatprep.subr.bf16.mxu0 0
  %7451 = vmatpush1.bf16.msra.mxu0 %v7382
  %7452 = vmatprep.subr.bf16.mxu0 0
  %7453 = vmatpush1.bf16.msra.mxu0 %v7383
  %7454 = vmatprep.subr.bf16.mxu0 0
  %7455 = vmatpush1.bf16.msra.mxu0 %v7384
  %7456 = vmatprep.subr.bf16.mxu0 0
  %7457 = vmatpush1.bf16.msra.mxu0 %v7385
  %7458 = vmatprep.subr.bf16.mxu0 0
  %7459 = vmatpush1.bf16.msra.mxu0 %v7386
  %7460 = vmatprep.subr.bf16.mxu0 0
  %7461 = vmatpush1.bf16.msra.mxu0 %v7387
  %7462 = vmatprep.subr.bf16.mxu0 0
  %7463 = vmatpush1.bf16.msra.mxu0 %v7388
  %7464 = vmatprep.subr.bf16.mxu0 0
  %7465 = vmatpush1.bf16.msra.mxu0 %v7389
  %7466 = vmatprep.subr.bf16.mxu0 0
  %7467 = vmatpush1.bf16.msra.mxu0 %v7390
  %7468 = vmatprep.subr.bf16.mxu0 0
  %7469 = vmatpush1.bf16.msra.mxu0 %v7391
  %7470 = vmatprep.subr.bf16.mxu0 0
  %7471 = vmatpush1.bf16.msra.mxu0 %v7392
  %7472 = vmatprep.subr.bf16.mxu0 0
  %7473 = vmatpush1.bf16.msra.mxu0 %v7393
  %7474 = vmatprep.mubr.bf16.mxu0 %v7176
  %7475 = vmatmul.mubr.bf16.gmra.mrb[0].mxu0 %v7175
  %v7476 = vpop.f32.mrb[0].mxu0
  %v7477 = vadd.f32 %v7248, %v7476
  %v7478 = vpop.f32.mrb[0].mxu0
  %v7479 = vpop.f32.mrb[0].mxu0
  %v7480 = vadd.f32 %v7248, %v7479
  %v7481 = vpop.f32.mrb[0].mxu0
  %7482 = vdwg.mxu0
  %7483 = vmatprep.subr.bf16.mxu0 0
  %7484 = vmatpush1.bf16.msra.mxu0 %v7394
  %7485 = vmatprep.subr.bf16.mxu0 0
  %7486 = vmatpush1.bf16.msra.mxu0 %v7395
  %7487 = vmatprep.subr.bf16.mxu0 0
  %7488 = vmatpush1.bf16.msra.mxu0 %v7396
  %7489 = vmatprep.subr.bf16.mxu0 0
  %7490 = vmatpush1.bf16.msra.mxu0 %v7397
  %7491 = vmatprep.subr.bf16.mxu0 0
  %7492 = vmatpush1.bf16.msra.mxu0 %v7398
  %7493 = vmatprep.subr.bf16.mxu0 0
  %7494 = vmatpush1.bf16.msra.mxu0 %v7399
  %7495 = vmatprep.subr.bf16.mxu0 0
  %7496 = vmatpush1.bf16.msra.mxu0 %v7400
  %7497 = vmatprep.subr.bf16.mxu0 0
  %7498 = vmatpush1.bf16.msra.mxu0 %v7401
  %7499 = vmatprep.subr.bf16.mxu0 0
  %7500 = vmatpush1.bf16.msra.mxu0 %v7402
  %7501 = vmatprep.subr.bf16.mxu0 0
  %7502 = vmatpush1.bf16.msra.mxu0 %v7403
  %7503 = vmatprep.subr.bf16.mxu0 0
  %7504 = vmatpush1.bf16.msra.mxu0 %v7404
  %7505 = vmatprep.subr.bf16.mxu0 0
  %7506 = vmatpush1.bf16.msra.mxu0 %v7405
  %7507 = vmatprep.subr.bf16.mxu0 0
  %7508 = vmatpush1.bf16.msra.mxu0 %v7406
  %7509 = vmatprep.subr.bf16.mxu0 0
  %7510 = vmatpush1.bf16.msra.mxu0 %v7407
  %7511 = vmatprep.subr.bf16.mxu0 0
  %7512 = vmatpush1.bf16.msra.mxu0 %v7408
  %7513 = vmatprep.subr.bf16.mxu0 0
  %7514 = vmatpush1.bf16.msra.mxu0 %v7409
  %7515 = vmatprep.mubr.bf16.mxu0 %v7178
  %7516 = vmatmul.mubr.bf16.gmra.mrb[0].mxu0 %v7177
  %v7517 = vpop.f32.mrb[0].mxu0
  %v7518 = vadd.f32 %v7477, %v7517
  %v7519 = vpop.f32.mrb[0].mxu0
  %v7520 = vpop.f32.mrb[0].mxu0
  %v7521 = vadd.f32 %v7480, %v7520
  %v7522 = vpop.f32.mrb[0].mxu0
  %7523 = vdwg.mxu0
  %v7524 = vadd.f32 %v6808, %v7518
  %v7525 = vadd.f32 %v6809, %v7521
  %7526 = vadd.xlane.f32.xlu0 %v7524
  %v7527 = vpop.xlane.xlu0 %7526
  %v7528 = vsel %vm956, %v7525, 0.0
  %7529 = vadd.xlane.f32.xlu0 %v7528
  %v7530 = vpop.xlane.xlu0 %7529
  %v7531 = vmul.f32 %v7527, %v3609
  %v7532 = vmul.f32 %v7530, %v3609
  %v7533 = vsub.f32 %v7524, %v7531
  %v7534 = vsub.f32 %v7525, %v7532
  %v7535 = vmul.f32 %v7533, %v7533
  %v7536 = vmul.f32 %v7534, %v7534
  %7537 = vadd.xlane.f32.xlu0 %v7535
  %v7538 = vpop.xlane.xlu0 %7537
  %v7539 = vsel %vm956, %v7536, 0.0
  %7540 = vadd.xlane.f32.xlu0 %v7539
  %v7541 = vpop.xlane.xlu0 %7540
  %v7542 = vmul.f32 %v7538, %v3609
  %v7543 = vmul.f32 %v7541, %v3609
  %v7544 = vadd.f32 %v7542, 1e-06
  %v7545 = vadd.f32 %v7543, 1e-06
  %v7546 = vrsqrt.pop %v7544
  %v7547 = vrsqrt.pop %v7545
  %v7548 = vmul.f32 %v7533, %v7546
  %v7549 = vmul.f32 %v7534, %v7547
  %v7550 = vpack.c.bf16 %v7549, %v7548
  %v7551 = vld [vmem:[%s77] sm:$0xff]
  %v7552 = vld [vmem:[%s77 + $0x8] sm:$0xff]
  %v7553 = vld [vmem:[%s77 + $0x10] sm:$0xff]
  %v7554 = vld [vmem:[%s77 + $0x18] sm:$0xff]
  %v7555 = vld [vmem:[%s77 + $0x20] sm:$0xff]
  %v7556 = vld [vmem:[%s77 + $0x28] sm:$0xff]
  %v7557 = vld [vmem:[%s77 + $0x30] sm:$0xff]
  %v7558 = vld [vmem:[%s77 + $0x38] sm:$0xff]
  %v7559 = vld [vmem:[%s77 + $0x40] sm:$0xff]
  %v7560 = vld [vmem:[%s77 + $0x48] sm:$0xff]
  %v7561 = vld [vmem:[%s77 + $0x50] sm:$0xff]
  %v7562 = vld [vmem:[%s77 + $0x58] sm:$0xff]
  %v7563 = vld [vmem:[%s77 + $0x60] sm:$0xff]
  %v7564 = vld [vmem:[%s77 + $0x68] sm:$0xff]
  %v7565 = vld [vmem:[%s77 + $0x70] sm:$0xff]
  %v7566 = vld [vmem:[%s77 + $0x78] sm:$0xff]
  %v7567 = vld [vmem:[%s77 + $0x80] sm:$0xff]
  %v7568 = vld [vmem:[%s77 + $0x88] sm:$0xff]
  %v7569 = vld [vmem:[%s77 + $0x90] sm:$0xff]
  %v7570 = vld [vmem:[%s77 + $0x98] sm:$0xff]
  %v7571 = vld [vmem:[%s77 + $0xa0] sm:$0xff]
  %v7572 = vld [vmem:[%s77 + $0xa8] sm:$0xff]
  %v7573 = vld [vmem:[%s77 + $0xb0] sm:$0xff]
  %v7574 = vld [vmem:[%s77 + $0xb8] sm:$0xff]
  %v7575 = vld [vmem:[%s77 + $0xc0] sm:$0xff]
  %v7576 = vld [vmem:[%s77 + $0xc8] sm:$0xff]
  %v7577 = vld [vmem:[%s77 + $0xd0] sm:$0xff]
  %v7578 = vld [vmem:[%s77 + $0xd8] sm:$0xff]
  %v7579 = vld [vmem:[%s77 + $0xe0] sm:$0xff]
  %v7580 = vld [vmem:[%s77 + $0xe8] sm:$0xff]
  %v7581 = vld [vmem:[%s77 + $0xf0] sm:$0xff]
  %v7582 = vld [vmem:[%s77 + $0xf8] sm:$0xff]
  %v7583 = vld [vmem:[%s79] sm:$0xf]
  %v7585 = vlaneseq
  %v7586 = vshrl.u32 %v7585, 7
  %v7587 = vsub.s32 0, %v7586
  %v7588 = vrot.slane %v7583, %v7587
  %v7589 = vlaneseq
  %v7590 = vshrl.u32 %v7589, 7
  %v7591 = vsub.s32 1, %v7590
  %v7592 = vrot.slane %v7583, %v7591
  %v7593 = vlaneseq
  %v7594 = vshrl.u32 %v7593, 7
  %v7595 = vsub.s32 2, %v7594
  %v7596 = vrot.slane %v7583, %v7595
  %v7597 = vlaneseq
  %v7598 = vshrl.u32 %v7597, 7
  %v7599 = vsub.s32 3, %v7598
  %v7600 = vrot.slane %v7583, %v7599
  %v7637 = vunpack.c.l.b16 %v7551
  %v7638 = vunpack.c.h.b16 %v7551
  %v7639 = vunpack.c.l.b16 %v7552
  %v7640 = vunpack.c.h.b16 %v7552
  %v7641 = vunpack.c.l.b16 %v7553
  %v7642 = vunpack.c.h.b16 %v7553
  %v7643 = vunpack.c.l.b16 %v7554
  %v7644 = vunpack.c.h.b16 %v7554
  %v7645 = vunpack.c.l.b16 %v7555
  %v7646 = vunpack.c.h.b16 %v7555
  %v7647 = vunpack.c.l.b16 %v7556
  %v7648 = vunpack.c.h.b16 %v7556
  %v7649 = vunpack.c.l.b16 %v7557
  %v7650 = vunpack.c.h.b16 %v7557
  %v7651 = vunpack.c.l.b16 %v7558
  %v7652 = vunpack.c.h.b16 %v7558
  %v7653 = vunpack.c.l.b16 %v7559
  %v7654 = vunpack.c.h.b16 %v7559
  %v7655 = vunpack.c.l.b16 %v7560
  %v7656 = vunpack.c.h.b16 %v7560
  %v7657 = vunpack.c.l.b16 %v7561
  %v7658 = vunpack.c.h.b16 %v7561
  %v7659 = vunpack.c.l.b16 %v7562
  %v7660 = vunpack.c.h.b16 %v7562
  %v7661 = vunpack.c.l.b16 %v7563
  %v7662 = vunpack.c.h.b16 %v7563
  %v7663 = vunpack.c.l.b16 %v7564
  %v7664 = vunpack.c.h.b16 %v7564
  %v7665 = vunpack.c.l.b16 %v7565
  %v7666 = vunpack.c.h.b16 %v7565
  %v7667 = vunpack.c.l.b16 %v7566
  %v7668 = vunpack.c.h.b16 %v7566
  %v7669 = vunpack.c.l.b16 %v7567
  %v7670 = vunpack.c.h.b16 %v7567
  %v7671 = vunpack.c.l.b16 %v7568
  %v7672 = vunpack.c.h.b16 %v7568
  %v7673 = vunpack.c.l.b16 %v7569
  %v7674 = vunpack.c.h.b16 %v7569
  %v7675 = vunpack.c.l.b16 %v7570
  %v7676 = vunpack.c.h.b16 %v7570
  %v7677 = vunpack.c.l.b16 %v7571
  %v7678 = vunpack.c.h.b16 %v7571
  %v7679 = vunpack.c.l.b16 %v7572
  %v7680 = vunpack.c.h.b16 %v7572
  %v7681 = vunpack.c.l.b16 %v7573
  %v7682 = vunpack.c.h.b16 %v7573
  %v7683 = vunpack.c.l.b16 %v7574
  %v7684 = vunpack.c.h.b16 %v7574
  %v7685 = vunpack.c.l.b16 %v7575
  %v7686 = vunpack.c.h.b16 %v7575
  %v7687 = vunpack.c.l.b16 %v7576
  %v7688 = vunpack.c.h.b16 %v7576
  %v7689 = vunpack.c.l.b16 %v7577
  %v7690 = vunpack.c.h.b16 %v7577
  %v7691 = vunpack.c.l.b16 %v7578
  %v7692 = vunpack.c.h.b16 %v7578
  %v7693 = vunpack.c.l.b16 %v7579
  %v7694 = vunpack.c.h.b16 %v7579
  %v7695 = vunpack.c.l.b16 %v7580
  %v7696 = vunpack.c.h.b16 %v7580
  %v7697 = vunpack.c.l.b16 %v7581
  %v7698 = vunpack.c.h.b16 %v7581
  %v7699 = vunpack.c.l.b16 %v7582
  %v7700 = vunpack.c.h.b16 %v7582
  %v7701 = vpack.c.b16 %v7641, %v7637
  %v7702 = vpack.c.b16 %v7642, %v7638
  %v7703 = vpack.c.b16 %v7643, %v7639
  %v7704 = vpack.c.b16 %v7644, %v7640
  %v7705 = vpack.c.b16 %v7649, %v7645
  %v7706 = vpack.c.b16 %v7650, %v7646
  %v7707 = vpack.c.b16 %v7651, %v7647
  %v7708 = vpack.c.b16 %v7652, %v7648
  %v7709 = vpack.c.b16 %v7657, %v7653
  %v7710 = vpack.c.b16 %v7658, %v7654
  %v7711 = vpack.c.b16 %v7659, %v7655
  %v7712 = vpack.c.b16 %v7660, %v7656
  %v7713 = vpack.c.b16 %v7665, %v7661
  %v7714 = vpack.c.b16 %v7666, %v7662
  %v7715 = vpack.c.b16 %v7667, %v7663
  %v7716 = vpack.c.b16 %v7668, %v7664
  %v7717 = vpack.c.b16 %v7673, %v7669
  %v7718 = vpack.c.b16 %v7674, %v7670
  %v7719 = vpack.c.b16 %v7675, %v7671
  %v7720 = vpack.c.b16 %v7676, %v7672
  %v7721 = vpack.c.b16 %v7681, %v7677
  %v7722 = vpack.c.b16 %v7682, %v7678
  %v7723 = vpack.c.b16 %v7683, %v7679
  %v7724 = vpack.c.b16 %v7684, %v7680
  %v7725 = vpack.c.b16 %v7689, %v7685
  %v7726 = vpack.c.b16 %v7690, %v7686
  %v7727 = vpack.c.b16 %v7691, %v7687
  %v7728 = vpack.c.b16 %v7692, %v7688
  %v7729 = vpack.c.b16 %v7697, %v7693
  %v7730 = vpack.c.b16 %v7698, %v7694
  %v7731 = vpack.c.b16 %v7699, %v7695
  %v7732 = vpack.c.b16 %v7700, %v7696
  %7765 = vmatprep.subr.bf16.mxu0 %v7702
  %7766 = vmatpush1.bf16.msra.mxu0 %v7701
  %7767 = vmatprep.subr.bf16.mxu0 %v7706
  %7768 = vmatpush1.bf16.msra.mxu0 %v7705
  %7769 = vmatprep.subr.bf16.mxu0 %v7710
  %7770 = vmatpush1.bf16.msra.mxu0 %v7709
  %7771 = vmatprep.subr.bf16.mxu0 %v7714
  %7772 = vmatpush1.bf16.msra.mxu0 %v7713
  %7773 = vmatprep.subr.bf16.mxu0 %v7718
  %7774 = vmatpush1.bf16.msra.mxu0 %v7717
  %7775 = vmatprep.subr.bf16.mxu0 %v7722
  %7776 = vmatpush1.bf16.msra.mxu0 %v7721
  %7777 = vmatprep.subr.bf16.mxu0 %v7726
  %7778 = vmatpush1.bf16.msra.mxu0 %v7725
  %7779 = vmatprep.subr.bf16.mxu0 %v7730
  %7780 = vmatpush1.bf16.msra.mxu0 %v7729
  %7781 = vmatprep.subr.bf16.mxu0 0
  %7782 = vmatpush1.bf16.msra.mxu0 0
  %7783 = vmatprep.subr.bf16.mxu0 0
  %7784 = vmatpush1.bf16.msra.mxu0 0
  %7785 = vmatprep.subr.bf16.mxu0 0
  %7786 = vmatpush1.bf16.msra.mxu0 0
  %7787 = vmatprep.subr.bf16.mxu0 0
  %7788 = vmatpush1.bf16.msra.mxu0 0
  %7789 = vmatprep.subr.bf16.mxu0 0
  %7790 = vmatpush1.bf16.msra.mxu0 0
  %7791 = vmatprep.subr.bf16.mxu0 0
  %7792 = vmatpush1.bf16.msra.mxu0 0
  %7793 = vmatprep.subr.bf16.mxu0 0
  %7794 = vmatpush1.bf16.msra.mxu0 0
  %7795 = vmatprep.subr.bf16.mxu0 0
  %7796 = vmatpush1.bf16.msra.mxu0 0
  %7797 = vmatprep.mubr.bf16.mxu0 0
  %7798 = vmatmul.mubr.bf16.gmra.mrb[0].mxu0 %v7550
  %v7799 = vpop.f32.mrb[0].mxu0
  %v7800 = vadd.f32 %v7588, %v7799
  %v7801 = vpop.f32.mrb[0].mxu0
  %v7802 = vadd.f32 %v7592, %v7801
  %v7803 = vpop.f32.mrb[0].mxu0
  %v7804 = vadd.f32 %v7588, %v7803
  %v7805 = vpop.f32.mrb[0].mxu0
  %v7806 = vadd.f32 %v7592, %v7805
  %7807 = vdwg.mxu0
  %7808 = vmatprep.subr.bf16.mxu0 %v7704
  %7809 = vmatpush1.bf16.msra.mxu0 %v7703
  %7810 = vmatprep.subr.bf16.mxu0 %v7708
  %7811 = vmatpush1.bf16.msra.mxu0 %v7707
  %7812 = vmatprep.subr.bf16.mxu0 %v7712
  %7813 = vmatpush1.bf16.msra.mxu0 %v7711
  %7814 = vmatprep.subr.bf16.mxu0 %v7716
  %7815 = vmatpush1.bf16.msra.mxu0 %v7715
  %7816 = vmatprep.subr.bf16.mxu0 %v7720
  %7817 = vmatpush1.bf16.msra.mxu0 %v7719
  %7818 = vmatprep.subr.bf16.mxu0 %v7724
  %7819 = vmatpush1.bf16.msra.mxu0 %v7723
  %7820 = vmatprep.subr.bf16.mxu0 %v7728
  %7821 = vmatpush1.bf16.msra.mxu0 %v7727
  %7822 = vmatprep.subr.bf16.mxu0 %v7732
  %7823 = vmatpush1.bf16.msra.mxu0 %v7731
  %7824 = vmatprep.subr.bf16.mxu0 0
  %7825 = vmatpush1.bf16.msra.mxu0 0
  %7826 = vmatprep.subr.bf16.mxu0 0
  %7827 = vmatpush1.bf16.msra.mxu0 0
  %7828 = vmatprep.subr.bf16.mxu0 0
  %7829 = vmatpush1.bf16.msra.mxu0 0
  %7830 = vmatprep.subr.bf16.mxu0 0
  %7831 = vmatpush1.bf16.msra.mxu0 0
  %7832 = vmatprep.subr.bf16.mxu0 0
  %7833 = vmatpush1.bf16.msra.mxu0 0
  %7834 = vmatprep.subr.bf16.mxu0 0
  %7835 = vmatpush1.bf16.msra.mxu0 0
  %7836 = vmatprep.subr.bf16.mxu0 0
  %7837 = vmatpush1.bf16.msra.mxu0 0
  %7838 = vmatprep.subr.bf16.mxu0 0
  %7839 = vmatpush1.bf16.msra.mxu0 0
  %7840 = vmatprep.mubr.bf16.mxu0 0
  %7841 = vmatmul.mubr.bf16.gmra.mrb[0].mxu0 %v7550
  %v7842 = vpop.f32.mrb[0].mxu0
  %v7843 = vadd.f32 %v7596, %v7842
  %v7844 = vpop.f32.mrb[0].mxu0
  %v7845 = vadd.f32 %v7600, %v7844
  %v7846 = vpop.f32.mrb[0].mxu0
  %v7847 = vadd.f32 %v7596, %v7846
  %v7848 = vpop.f32.mrb[0].mxu0
  %v7849 = vadd.f32 %v7600, %v7848
  %7850 = vdwg.mxu0
  %7851 = vst [vmem:[%s81] sm:$0xff] %v7800
  %7852 = vst [vmem:[%s81 + $0x8] sm:$0xff] %v7802
  %7853 = vst [vmem:[%s81 + $0x10] sm:$0xff] %v7843
  %7854 = vst [vmem:[%s81 + $0x18] sm:$0xff] %v7845
  %7855 = vst [vmem:[%s81 + $0x20] sm:$0x3] %v7804
  %7856 = vst [vmem:[%s81 + $0x28] sm:$0x3] %v7806
  %7857 = vst [vmem:[%s81 + $0x30] sm:$0x3] %v7847
  %7858 = vst [vmem:[%s81 + $0x38] sm:$0x3] %v7849
  // Predicated region
  $region162: #{_lambda_.1} parent=0 // pred_check
    _
  $region163: #{_lambda_.1} parent=0 // pred_check_branch
    %7860 = sbr.rel (0) target = $region165
  $region164: #{_lambda_.1} parent=0 // pred_region
    _
  $region165: #{_lambda_.1} parent=0 // pred_fallthru
    _
  // Predicated region
  $region166: #{_lambda_.1} parent=0 // pred_check
    _
  $region167: #{_lambda_.1} parent=0 // pred_check_branch
    %7862 = sbr.rel (0) target = $region169
  $region168: #{_lambda_.1} parent=0 // pred_region
    _
  $region169: #{_lambda_.1} parent=0 // pred_fallthru
    _

</llo_original>
